<compile_context>
chip_gen: v6e
topology: v6e:2x2x1
jax: 0.10.0
libtpu: 0.0.40
codegen_flags: <defaults>
</compile_context>

<pallas_src>
import functools

import jax
import jax.numpy as jnp
from jax.experimental import pallas as pl
from jax.experimental.pallas import tpu as pltpu

_EPS = 1e-5


# ----------------------------------------------------------------------------
# Fully fused kernel: one grid step == one sample, C on the lane axis.
# ----------------------------------------------------------------------------
def _residual_block_kernel(xp_ref, w1_ref, w2_ref, g1_ref, b1_ref,
                           g2_ref, b2_ref, out_ref, patch_ref, y1p_ref,
                           *, h, w, c, eps):
    hw = h * w
    inv_hw = 1.0 / float(hw)

    # ---- conv1: build im2col patch [HW, 9C] in VMEM from the padded sample --
    for k in range(9):
        dh, dw = divmod(k, 3)
        sl = xp_ref[pl.ds(dh, h), pl.ds(dw, w), :]            # (h, w, c) f32
        patch_ref[:, pl.ds(k * c, c)] = sl.reshape(hw, c).astype(jnp.bfloat16)

    acc1 = jnp.dot(patch_ref[...], w1_ref[...],
                   preferred_element_type=jnp.float32)        # (hw, c) f32

    # ---- InstanceNorm1 (one-pass stats, folded scale/shift) + ReLU ----------
    s1 = jnp.sum(acc1, axis=0, keepdims=True)                 # (1, c)
    ss1 = jnp.sum(acc1 * acc1, axis=0, keepdims=True)
    mean1 = s1 * inv_hw
    var1 = ss1 * inv_hw - mean1 * mean1                       # biased variance
    scale1 = g1_ref[...] * jax.lax.rsqrt(var1 + eps)
    shift1 = b1_ref[...] - mean1 * scale1
    y1 = jnp.maximum(acc1 * scale1 + shift1, 0.0)

    # ---- stage ReLU output into a zero-padded VMEM scratch for conv2 --------
    # Full re-zero each step keeps the halo correct regardless of how the
    # "parallel" batch axis is split across cores.
    y1p_ref[...] = jnp.zeros_like(y1p_ref)
    y1p_ref[pl.ds(1, h), pl.ds(1, w), :] = (
        y1.reshape(h, w, c).astype(jnp.bfloat16))

    # ---- conv2: im2col from the padded scratch (y1 never touches HBM) -------
    for k in range(9):
        dh, dw = divmod(k, 3)
        patch_ref[:, pl.ds(k * c, c)] = (
            y1p_ref[pl.ds(dh, h), pl.ds(dw, w), :].reshape(hw, c))

    acc2 = jnp.dot(patch_ref[...], w2_ref[...],
                   preferred_element_type=jnp.float32)        # (hw, c) f32

    # ---- InstanceNorm2 + residual add ----------------------------------------
    s2 = jnp.sum(acc2, axis=0, keepdims=True)
    ss2 = jnp.sum(acc2 * acc2, axis=0, keepdims=True)
    mean2 = s2 * inv_hw
    var2 = ss2 * inv_hw - mean2 * mean2
    scale2 = g2_ref[...] * jax.lax.rsqrt(var2 + eps)
    shift2 = b2_ref[...] - mean2 * scale2
    y2 = acc2 * scale2 + shift2

    x_res = xp_ref[pl.ds(1, h), pl.ds(1, w), :].reshape(hw, c)   # f32 residual
    out_ref[...] = x_res + y2


# ----------------------------------------------------------------------------
# Wrapper
# ----------------------------------------------------------------------------
def _conv_weight_matrix(wt):
    """torch layout (Cout, Cin, 3, 3) -> [9*Cin, Cout], matching the patch order."""
    cout, cin, kh, kw = wt.shape
    return jnp.transpose(wt, (2, 3, 1, 0)).reshape(kh * kw * cin, cout)


def residual_block_forward(params, x_nchw):
    """x + IN2(conv2(relu(IN1(conv1(x))))) — matches the PyTorch ResidualBlock."""
    n, c, h, w = x_nchw.shape
    hw = h * w

    # Layout plumbing (NCHW -> padded NHWC). See TODO(synk) above about NHWC.
    x_nhwc = jnp.transpose(x_nchw, (0, 2, 3, 1)).astype(jnp.float32)
    xp = jnp.pad(x_nhwc, ((0, 0), (1, 1), (1, 1), (0, 0)))
    xp = xp.reshape(n * (h + 2), w + 2, c)

    w1 = _conv_weight_matrix(params["w1"]).astype(jnp.bfloat16)
    w2 = _conv_weight_matrix(params["w2"]).astype(jnp.bfloat16)
    g1 = params["g1"].reshape(1, c).astype(jnp.float32)
    b1 = params["b1"].reshape(1, c).astype(jnp.float32)
    g2 = params["g2"].reshape(1, c).astype(jnp.float32)
    b2 = params["b2"].reshape(1, c).astype(jnp.float32)

    out_flat = pl.pallas_call(
        functools.partial(_residual_block_kernel, h=h, w=w, c=c, eps=_EPS),
        out_shape=jax.ShapeDtypeStruct((n * hw, c), jnp.float32),
        grid=(n,),
        in_specs=[
            pl.BlockSpec((h + 2, w + 2, c), lambda i: (i, 0, 0)),  # padded x sample
            pl.BlockSpec((9 * c, c), lambda i: (0, 0)),            # conv1 weight
            pl.BlockSpec((9 * c, c), lambda i: (0, 0)),            # conv2 weight
            pl.BlockSpec((1, c), lambda i: (0, 0)),                # IN1 gamma
            pl.BlockSpec((1, c), lambda i: (0, 0)),                # IN1 beta
            pl.BlockSpec((1, c), lambda i: (0, 0)),                # IN2 gamma
            pl.BlockSpec((1, c), lambda i: (0, 0)),                # IN2 beta
        ],
        out_specs=pl.BlockSpec((hw, c), lambda i: (i, 0)),
        scratch_shapes=[
            pltpu.VMEM((hw, 9 * c), jnp.bfloat16),                 # im2col patch
            pltpu.VMEM((h + 2, w + 2, c), jnp.bfloat16),           # padded y1
        ],
        compiler_params=pltpu.CompilerParams(
            dimension_semantics=("parallel",)),
    )(xp, w1, w2, g1, b1, g2, b2)

    return out_flat.reshape(n, h, w, c).transpose(0, 3, 1, 2)


# ----------------------------------------------------------------------------
def init_params(key, c):
    ks = jax.random.split(key, 6)
    return {
        "w1": 0.05 * jax.random.normal(ks[0], (c, c, 3, 3), dtype=jnp.float32),
        "g1": 1.0 + 0.1 * jax.random.normal(ks[1], (c,), dtype=jnp.float32),
        "b1": 0.1 * jax.random.normal(ks[2], (c,), dtype=jnp.float32),
        "w2": 0.05 * jax.random.normal(ks[3], (c, c, 3, 3), dtype=jnp.float32),
        "g2": 1.0 + 0.1 * jax.random.normal(ks[4], (c,), dtype=jnp.float32),
        "b2": 0.1 * jax.random.normal(ks[5], (c,), dtype=jnp.float32),
    }


if __name__ == "__main__":
    key = jax.random.PRNGKey(0)
    k_x, k_p = jax.random.split(key)

    # Small shapes consistent with a StarGAN residual block: batch=2,
    # in_features=128 (lane-dense), 16x16 spatial.
    N, C, H, W = 2, 128, 16, 16
    x = jax.random.normal(k_x, (N, C, H, W), dtype=jnp.float32)
    params = init_params(k_p, C)

    fwd = jax.jit(residual_block_forward)
    out = fwd(params, x)
    jax.block_until_ready(out)

    assert out.shape == (N, C, H, W)
    assert bool(jnp.all(jnp.isfinite(out)))
    print("KERNEL_OK")
</pallas_src>

<mosaic_0001>
module attributes {stable_mosaic.version = 11 : i64} {
  func.func @_residual_block_kernel(%arg0: i32, %arg1: memref<18x18x128xf32, #tpu.memory_space<vmem>>, %arg2: memref<1152x128xbf16, #tpu.memory_space<vmem>>, %arg3: memref<1152x128xbf16, #tpu.memory_space<vmem>>, %arg4: memref<1x128xf32, #tpu.memory_space<vmem>>, %arg5: memref<1x128xf32, #tpu.memory_space<vmem>>, %arg6: memref<1x128xf32, #tpu.memory_space<vmem>>, %arg7: memref<1x128xf32, #tpu.memory_space<vmem>>, %arg8: memref<256x128xf32, #tpu.memory_space<vmem>>, %arg9: memref<256x1152xbf16, #tpu.memory_space<vmem>>, %arg10: memref<18x18x128xbf16, #tpu.memory_space<vmem>>) attributes {dimension_semantics = [#tpu.dimension_semantics<parallel>], iteration_bounds = array<i64: 2>, scalar_prefetch = 0 : i64, scratch_operands = 2 : i64, tpu.core_type = #tpu.core_type<tc>, window_params = [{transform_indices = @transform_0, window_bounds = array<i64: 18, 18, 128>}, {pipeline_mode = #tpu.pipeline_mode<synchronous>, transform_indices = @transform_1, window_bounds = array<i64: 1152, 128>}, {pipeline_mode = #tpu.pipeline_mode<synchronous>, transform_indices = @transform_2, window_bounds = array<i64: 1152, 128>}, {pipeline_mode = #tpu.pipeline_mode<synchronous>, transform_indices = @transform_3, window_bounds = array<i64: 1, 128>}, {pipeline_mode = #tpu.pipeline_mode<synchronous>, transform_indices = @transform_4, window_bounds = array<i64: 1, 128>}, {pipeline_mode = #tpu.pipeline_mode<synchronous>, transform_indices = @transform_5, window_bounds = array<i64: 1, 128>}, {pipeline_mode = #tpu.pipeline_mode<synchronous>, transform_indices = @transform_6, window_bounds = array<i64: 1, 128>}, {transform_indices = @transform_7, window_bounds = array<i64: 256, 128>}]} {
    %c0 = arith.constant 0 : index
    %c0_0 = arith.constant 0 : index
    %c0_1 = arith.constant 0 : index
    %0 = vector.load %arg1[%c0, %c0_0, %c0_1] : memref<18x18x128xf32, #tpu.memory_space<vmem>>, vector<16x16x128xf32>
    %1 = vector.shape_cast %0 : vector<16x16x128xf32> to vector<256x128xf32>
    %2 = arith.truncf %1 : vector<256x128xf32> to vector<256x128xbf16>
    %c0_2 = arith.constant 0 : index
    %c0_3 = arith.constant 0 : index
    %3 = vector.load %arg9[%c0_2, %c0_3] : memref<256x1152xbf16, #tpu.memory_space<vmem>>, vector<256x128xbf16>
    tpu.vector_store %arg9[%c0_2, %c0_3], %2 {strides = array<i32>} : memref<256x1152xbf16, #tpu.memory_space<vmem>>, vector<256x128xbf16>,
    %c0_4 = arith.constant 0 : index
    %c1 = arith.constant 1 : index
    %c0_5 = arith.constant 0 : index
    %4 = vector.load %arg1[%c0_4, %c1, %c0_5] : memref<18x18x128xf32, #tpu.memory_space<vmem>>, vector<16x16x128xf32>
    %5 = vector.shape_cast %4 : vector<16x16x128xf32> to vector<256x128xf32>
    %6 = arith.truncf %5 : vector<256x128xf32> to vector<256x128xbf16>
    %c0_6 = arith.constant 0 : index
    %c128 = arith.constant 128 : index
    %7 = vector.load %arg9[%c0_6, %c128] : memref<256x1152xbf16, #tpu.memory_space<vmem>>, vector<256x128xbf16>
    tpu.vector_store %arg9[%c0_6, %c128], %6 {strides = array<i32>} : memref<256x1152xbf16, #tpu.memory_space<vmem>>, vector<256x128xbf16>,
    %c0_7 = arith.constant 0 : index
    %c2 = arith.constant 2 : index
    %c0_8 = arith.constant 0 : index
    %8 = vector.load %arg1[%c0_7, %c2, %c0_8] : memref<18x18x128xf32, #tpu.memory_space<vmem>>, vector<16x16x128xf32>
    %9 = vector.shape_cast %8 : vector<16x16x128xf32> to vector<256x128xf32>
    %10 = arith.truncf %9 : vector<256x128xf32> to vector<256x128xbf16>
    %c0_9 = arith.constant 0 : index
    %c256 = arith.constant 256 : index
    %11 = vector.load %arg9[%c0_9, %c256] : memref<256x1152xbf16, #tpu.memory_space<vmem>>, vector<256x128xbf16>
    tpu.vector_store %arg9[%c0_9, %c256], %10 {strides = array<i32>} : memref<256x1152xbf16, #tpu.memory_space<vmem>>, vector<256x128xbf16>,
    %c1_10 = arith.constant 1 : index
    %c0_11 = arith.constant 0 : index
    %c0_12 = arith.constant 0 : index
    %12 = vector.load %arg1[%c1_10, %c0_11, %c0_12] : memref<18x18x128xf32, #tpu.memory_space<vmem>>, vector<16x16x128xf32>
    %13 = vector.shape_cast %12 : vector<16x16x128xf32> to vector<256x128xf32>
    %14 = arith.truncf %13 : vector<256x128xf32> to vector<256x128xbf16>
    %c0_13 = arith.constant 0 : index
    %c384 = arith.constant 384 : index
    %15 = vector.load %arg9[%c0_13, %c384] : memref<256x1152xbf16, #tpu.memory_space<vmem>>, vector<256x128xbf16>
    tpu.vector_store %arg9[%c0_13, %c384], %14 {strides = array<i32>} : memref<256x1152xbf16, #tpu.memory_space<vmem>>, vector<256x128xbf16>,
    %c1_14 = arith.constant 1 : index
    %c1_15 = arith.constant 1 : index
    %c0_16 = arith.constant 0 : index
    %16 = vector.load %arg1[%c1_14, %c1_15, %c0_16] : memref<18x18x128xf32, #tpu.memory_space<vmem>>, vector<16x16x128xf32>
    %17 = vector.shape_cast %16 : vector<16x16x128xf32> to vector<256x128xf32>
    %18 = arith.truncf %17 : vector<256x128xf32> to vector<256x128xbf16>
    %c0_17 = arith.constant 0 : index
    %c512 = arith.constant 512 : index
    %19 = vector.load %arg9[%c0_17, %c512] : memref<256x1152xbf16, #tpu.memory_space<vmem>>, vector<256x128xbf16>
    tpu.vector_store %arg9[%c0_17, %c512], %18 {strides = array<i32>} : memref<256x1152xbf16, #tpu.memory_space<vmem>>, vector<256x128xbf16>,
    %c1_18 = arith.constant 1 : index
    %c2_19 = arith.constant 2 : index
    %c0_20 = arith.constant 0 : index
    %20 = vector.load %arg1[%c1_18, %c2_19, %c0_20] : memref<18x18x128xf32, #tpu.memory_space<vmem>>, vector<16x16x128xf32>
    %21 = vector.shape_cast %20 : vector<16x16x128xf32> to vector<256x128xf32>
    %22 = arith.truncf %21 : vector<256x128xf32> to vector<256x128xbf16>
    %c0_21 = arith.constant 0 : index
    %c640 = arith.constant 640 : index
    %23 = vector.load %arg9[%c0_21, %c640] : memref<256x1152xbf16, #tpu.memory_space<vmem>>, vector<256x128xbf16>
    tpu.vector_store %arg9[%c0_21, %c640], %22 {strides = array<i32>} : memref<256x1152xbf16, #tpu.memory_space<vmem>>, vector<256x128xbf16>,
    %c2_22 = arith.constant 2 : index
    %c0_23 = arith.constant 0 : index
    %c0_24 = arith.constant 0 : index
    %24 = vector.load %arg1[%c2_22, %c0_23, %c0_24] : memref<18x18x128xf32, #tpu.memory_space<vmem>>, vector<16x16x128xf32>
    %25 = vector.shape_cast %24 : vector<16x16x128xf32> to vector<256x128xf32>
    %26 = arith.truncf %25 : vector<256x128xf32> to vector<256x128xbf16>
    %c0_25 = arith.constant 0 : index
    %c768 = arith.constant 768 : index
    %27 = vector.load %arg9[%c0_25, %c768] : memref<256x1152xbf16, #tpu.memory_space<vmem>>, vector<256x128xbf16>
    tpu.vector_store %arg9[%c0_25, %c768], %26 {strides = array<i32>} : memref<256x1152xbf16, #tpu.memory_space<vmem>>, vector<256x128xbf16>,
    %c2_26 = arith.constant 2 : index
    %c1_27 = arith.constant 1 : index
    %c0_28 = arith.constant 0 : index
    %28 = vector.load %arg1[%c2_26, %c1_27, %c0_28] : memref<18x18x128xf32, #tpu.memory_space<vmem>>, vector<16x16x128xf32>
    %29 = vector.shape_cast %28 : vector<16x16x128xf32> to vector<256x128xf32>
    %30 = arith.truncf %29 : vector<256x128xf32> to vector<256x128xbf16>
    %c0_29 = arith.constant 0 : index
    %c896 = arith.constant 896 : index
    %31 = vector.load %arg9[%c0_29, %c896] : memref<256x1152xbf16, #tpu.memory_space<vmem>>, vector<256x128xbf16>
    tpu.vector_store %arg9[%c0_29, %c896], %30 {strides = array<i32>} : memref<256x1152xbf16, #tpu.memory_space<vmem>>, vector<256x128xbf16>,
    %c2_30 = arith.constant 2 : index
    %c2_31 = arith.constant 2 : index
    %c0_32 = arith.constant 0 : index
    %32 = vector.load %arg1[%c2_30, %c2_31, %c0_32] : memref<18x18x128xf32, #tpu.memory_space<vmem>>, vector<16x16x128xf32>
    %33 = vector.shape_cast %32 : vector<16x16x128xf32> to vector<256x128xf32>
    %34 = arith.truncf %33 : vector<256x128xf32> to vector<256x128xbf16>
    %c0_33 = arith.constant 0 : index
    %c1024 = arith.constant 1024 : index
    %35 = vector.load %arg9[%c0_33, %c1024] : memref<256x1152xbf16, #tpu.memory_space<vmem>>, vector<256x128xbf16>
    tpu.vector_store %arg9[%c0_33, %c1024], %34 {strides = array<i32>} : memref<256x1152xbf16, #tpu.memory_space<vmem>>, vector<256x128xbf16>,
    %c0_34 = arith.constant 0 : index
    %c0_35 = arith.constant 0 : index
    %36 = vector.load %arg9[%c0_34, %c0_35] : memref<256x1152xbf16, #tpu.memory_space<vmem>>, vector<256x1152xbf16>
    %c0_36 = arith.constant 0 : index
    %c0_37 = arith.constant 0 : index
    %37 = vector.load %arg2[%c0_36, %c0_37] : memref<1152x128xbf16, #tpu.memory_space<vmem>>, vector<1152x128xbf16>
    %cst = arith.constant dense<0.000000e+00> : vector<256x128xf32>
    %38 = tpu.matmul %36, %37, %cst {dimension_numbers = #tpu.dot_dimension_numbers<[1], [0], [0], [1], [0, 0, 1, 1], [], []>} : vector<256x1152xbf16>, vector<1152x128xbf16>, vector<256x128xf32> -> vector<256x128xf32>
    %cst_38 = arith.constant dense<0.000000e+00> : vector<128xf32>
    %39 = vector.multi_reduction <add>, %38, %cst_38 [0] : vector<256x128xf32> to vector<128xf32>
    %40 = vector.shape_cast %39 : vector<128xf32> to vector<1x128xf32>
    %41 = arith.mulf %38, %38 : vector<256x128xf32>
    %cst_39 = arith.constant dense<0.000000e+00> : vector<128xf32>
    %42 = vector.multi_reduction <add>, %41, %cst_39 [0] : vector<256x128xf32> to vector<128xf32>
    %43 = vector.shape_cast %42 : vector<128xf32> to vector<1x128xf32>
    %cst_40 = arith.constant 3.906250e-03 : f32
    %44 = vector.broadcast %cst_40 : f32 to vector<1x128xf32>
    %45 = arith.mulf %40, %44 : vector<1x128xf32>
    %cst_41 = arith.constant 3.906250e-03 : f32
    %46 = vector.broadcast %cst_41 : f32 to vector<1x128xf32>
    %47 = arith.mulf %43, %46 : vector<1x128xf32>
    %48 = arith.mulf %45, %45 : vector<1x128xf32>
    %49 = arith.subf %47, %48 : vector<1x128xf32>
    %c0_42 = arith.constant 0 : index
    %c0_43 = arith.constant 0 : index
    %50 = vector.load %arg4[%c0_42, %c0_43] : memref<1x128xf32, #tpu.memory_space<vmem>>, vector<1x128xf32>
    %cst_44 = arith.constant 9.99999974E-6 : f32
    %51 = vector.broadcast %cst_44 : f32 to vector<1x128xf32>
    %52 = arith.addf %49, %51 : vector<1x128xf32>
    %53 = math.rsqrt %52 : vector<1x128xf32>
    %54 = arith.mulf %50, %53 : vector<1x128xf32>
    %c0_45 = arith.constant 0 : index
    %c0_46 = arith.constant 0 : index
    %55 = vector.load %arg5[%c0_45, %c0_46] : memref<1x128xf32, #tpu.memory_space<vmem>>, vector<1x128xf32>
    %56 = arith.mulf %45, %54 : vector<1x128xf32>
    %57 = arith.subf %55, %56 : vector<1x128xf32>
    %58 = vector.broadcast %54 : vector<1x128xf32> to vector<256x128xf32>
    %59 = arith.mulf %38, %58 : vector<256x128xf32>
    %60 = vector.broadcast %57 : vector<1x128xf32> to vector<256x128xf32>
    %61 = arith.addf %59, %60 : vector<256x128xf32>
    %cst_47 = arith.constant 0.000000e+00 : f32
    %62 = vector.broadcast %cst_47 : f32 to vector<256x128xf32>
    %63 = arith.maximumf %61, %62 : vector<256x128xf32>
    %cst_48 = arith.constant 0.000000e+00 : bf16
    %64 = vector.broadcast %cst_48 : bf16 to vector<18x18x128xbf16>
    %c0_49 = arith.constant 0 : index
    %c0_50 = arith.constant 0 : index
    %c0_51 = arith.constant 0 : index
    %65 = vector.load %arg10[%c0_49, %c0_50, %c0_51] : memref<18x18x128xbf16, #tpu.memory_space<vmem>>, vector<18x18x128xbf16>
    tpu.vector_store %arg10[%c0_49, %c0_50, %c0_51], %64 {strides = array<i32>} : memref<18x18x128xbf16, #tpu.memory_space<vmem>>, vector<18x18x128xbf16>,
    %66 = vector.shape_cast %63 : vector<256x128xf32> to vector<16x16x128xf32>
    %67 = arith.truncf %66 : vector<16x16x128xf32> to vector<16x16x128xbf16>
    %c1_52 = arith.constant 1 : index
    %c1_53 = arith.constant 1 : index
    %c0_54 = arith.constant 0 : index
    %68 = vector.load %arg10[%c1_52, %c1_53, %c0_54] : memref<18x18x128xbf16, #tpu.memory_space<vmem>>, vector<16x16x128xbf16>
    tpu.vector_store %arg10[%c1_52, %c1_53, %c0_54], %67 {strides = array<i32>} : memref<18x18x128xbf16, #tpu.memory_space<vmem>>, vector<16x16x128xbf16>,
    %c0_55 = arith.constant 0 : index
    %c0_56 = arith.constant 0 : index
    %c0_57 = arith.constant 0 : index
    %69 = vector.load %arg10[%c0_55, %c0_56, %c0_57] : memref<18x18x128xbf16, #tpu.memory_space<vmem>>, vector<16x16x128xbf16>
    %70 = vector.shape_cast %69 : vector<16x16x128xbf16> to vector<256x128xbf16>
    %c0_58 = arith.constant 0 : index
    %c0_59 = arith.constant 0 : index
    %71 = vector.load %arg9[%c0_58, %c0_59] : memref<256x1152xbf16, #tpu.memory_space<vmem>>, vector<256x128xbf16>
    tpu.vector_store %arg9[%c0_58, %c0_59], %70 {strides = array<i32>} : memref<256x1152xbf16, #tpu.memory_space<vmem>>, vector<256x128xbf16>,
    %c0_60 = arith.constant 0 : index
    %c1_61 = arith.constant 1 : index
    %c0_62 = arith.constant 0 : index
    %72 = vector.load %arg10[%c0_60, %c1_61, %c0_62] : memref<18x18x128xbf16, #tpu.memory_space<vmem>>, vector<16x16x128xbf16>
    %73 = vector.shape_cast %72 : vector<16x16x128xbf16> to vector<256x128xbf16>
    %c0_63 = arith.constant 0 : index
    %c128_64 = arith.constant 128 : index
    %74 = vector.load %arg9[%c0_63, %c128_64] : memref<256x1152xbf16, #tpu.memory_space<vmem>>, vector<256x128xbf16>
    tpu.vector_store %arg9[%c0_63, %c128_64], %73 {strides = array<i32>} : memref<256x1152xbf16, #tpu.memory_space<vmem>>, vector<256x128xbf16>,
    %c0_65 = arith.constant 0 : index
    %c2_66 = arith.constant 2 : index
    %c0_67 = arith.constant 0 : index
    %75 = vector.load %arg10[%c0_65, %c2_66, %c0_67] : memref<18x18x128xbf16, #tpu.memory_space<vmem>>, vector<16x16x128xbf16>
    %76 = vector.shape_cast %75 : vector<16x16x128xbf16> to vector<256x128xbf16>
    %c0_68 = arith.constant 0 : index
    %c256_69 = arith.constant 256 : index
    %77 = vector.load %arg9[%c0_68, %c256_69] : memref<256x1152xbf16, #tpu.memory_space<vmem>>, vector<256x128xbf16>
    tpu.vector_store %arg9[%c0_68, %c256_69], %76 {strides = array<i32>} : memref<256x1152xbf16, #tpu.memory_space<vmem>>, vector<256x128xbf16>,
    %c1_70 = arith.constant 1 : index
    %c0_71 = arith.constant 0 : index
    %c0_72 = arith.constant 0 : index
    %78 = vector.load %arg10[%c1_70, %c0_71, %c0_72] : memref<18x18x128xbf16, #tpu.memory_space<vmem>>, vector<16x16x128xbf16>
    %79 = vector.shape_cast %78 : vector<16x16x128xbf16> to vector<256x128xbf16>
    %c0_73 = arith.constant 0 : index
    %c384_74 = arith.constant 384 : index
    %80 = vector.load %arg9[%c0_73, %c384_74] : memref<256x1152xbf16, #tpu.memory_space<vmem>>, vector<256x128xbf16>
    tpu.vector_store %arg9[%c0_73, %c384_74], %79 {strides = array<i32>} : memref<256x1152xbf16, #tpu.memory_space<vmem>>, vector<256x128xbf16>,
    %c1_75 = arith.constant 1 : index
    %c1_76 = arith.constant 1 : index
    %c0_77 = arith.constant 0 : index
    %81 = vector.load %arg10[%c1_75, %c1_76, %c0_77] : memref<18x18x128xbf16, #tpu.memory_space<vmem>>, vector<16x16x128xbf16>
    %82 = vector.shape_cast %81 : vector<16x16x128xbf16> to vector<256x128xbf16>
    %c0_78 = arith.constant 0 : index
    %c512_79 = arith.constant 512 : index
    %83 = vector.load %arg9[%c0_78, %c512_79] : memref<256x1152xbf16, #tpu.memory_space<vmem>>, vector<256x128xbf16>
    tpu.vector_store %arg9[%c0_78, %c512_79], %82 {strides = array<i32>} : memref<256x1152xbf16, #tpu.memory_space<vmem>>, vector<256x128xbf16>,
    %c1_80 = arith.constant 1 : index
    %c2_81 = arith.constant 2 : index
    %c0_82 = arith.constant 0 : index
    %84 = vector.load %arg10[%c1_80, %c2_81, %c0_82] : memref<18x18x128xbf16, #tpu.memory_space<vmem>>, vector<16x16x128xbf16>
    %85 = vector.shape_cast %84 : vector<16x16x128xbf16> to vector<256x128xbf16>
    %c0_83 = arith.constant 0 : index
    %c640_84 = arith.constant 640 : index
    %86 = vector.load %arg9[%c0_83, %c640_84] : memref<256x1152xbf16, #tpu.memory_space<vmem>>, vector<256x128xbf16>
    tpu.vector_store %arg9[%c0_83, %c640_84], %85 {strides = array<i32>} : memref<256x1152xbf16, #tpu.memory_space<vmem>>, vector<256x128xbf16>,
    %c2_85 = arith.constant 2 : index
    %c0_86 = arith.constant 0 : index
    %c0_87 = arith.constant 0 : index
    %87 = vector.load %arg10[%c2_85, %c0_86, %c0_87] : memref<18x18x128xbf16, #tpu.memory_space<vmem>>, vector<16x16x128xbf16>
    %88 = vector.shape_cast %87 : vector<16x16x128xbf16> to vector<256x128xbf16>
    %c0_88 = arith.constant 0 : index
    %c768_89 = arith.constant 768 : index
    %89 = vector.load %arg9[%c0_88, %c768_89] : memref<256x1152xbf16, #tpu.memory_space<vmem>>, vector<256x128xbf16>
    tpu.vector_store %arg9[%c0_88, %c768_89], %88 {strides = array<i32>} : memref<256x1152xbf16, #tpu.memory_space<vmem>>, vector<256x128xbf16>,
    %c2_90 = arith.constant 2 : index
    %c1_91 = arith.constant 1 : index
    %c0_92 = arith.constant 0 : index
    %90 = vector.load %arg10[%c2_90, %c1_91, %c0_92] : memref<18x18x128xbf16, #tpu.memory_space<vmem>>, vector<16x16x128xbf16>
    %91 = vector.shape_cast %90 : vector<16x16x128xbf16> to vector<256x128xbf16>
    %c0_93 = arith.constant 0 : index
    %c896_94 = arith.constant 896 : index
    %92 = vector.load %arg9[%c0_93, %c896_94] : memref<256x1152xbf16, #tpu.memory_space<vmem>>, vector<256x128xbf16>
    tpu.vector_store %arg9[%c0_93, %c896_94], %91 {strides = array<i32>} : memref<256x1152xbf16, #tpu.memory_space<vmem>>, vector<256x128xbf16>,
    %c2_95 = arith.constant 2 : index
    %c2_96 = arith.constant 2 : index
    %c0_97 = arith.constant 0 : index
    %93 = vector.load %arg10[%c2_95, %c2_96, %c0_97] : memref<18x18x128xbf16, #tpu.memory_space<vmem>>, vector<16x16x128xbf16>
    %94 = vector.shape_cast %93 : vector<16x16x128xbf16> to vector<256x128xbf16>
    %c0_98 = arith.constant 0 : index
    %c1024_99 = arith.constant 1024 : index
    %95 = vector.load %arg9[%c0_98, %c1024_99] : memref<256x1152xbf16, #tpu.memory_space<vmem>>, vector<256x128xbf16>
    tpu.vector_store %arg9[%c0_98, %c1024_99], %94 {strides = array<i32>} : memref<256x1152xbf16, #tpu.memory_space<vmem>>, vector<256x128xbf16>,
    %c0_100 = arith.constant 0 : index
    %c0_101 = arith.constant 0 : index
    %96 = vector.load %arg9[%c0_100, %c0_101] : memref<256x1152xbf16, #tpu.memory_space<vmem>>, vector<256x1152xbf16>
    %c0_102 = arith.constant 0 : index
    %c0_103 = arith.constant 0 : index
    %97 = vector.load %arg3[%c0_102, %c0_103] : memref<1152x128xbf16, #tpu.memory_space<vmem>>, vector<1152x128xbf16>
    %cst_104 = arith.constant dense<0.000000e+00> : vector<256x128xf32>
    %98 = tpu.matmul %96, %97, %cst_104 {dimension_numbers = #tpu.dot_dimension_numbers<[1], [0], [0], [1], [0, 0, 1, 1], [], []>} : vector<256x1152xbf16>, vector<1152x128xbf16>, vector<256x128xf32> -> vector<256x128xf32>
    %cst_105 = arith.constant dense<0.000000e+00> : vector<128xf32>
    %99 = vector.multi_reduction <add>, %98, %cst_105 [0] : vector<256x128xf32> to vector<128xf32>
    %100 = vector.shape_cast %99 : vector<128xf32> to vector<1x128xf32>
    %101 = arith.mulf %98, %98 : vector<256x128xf32>
    %cst_106 = arith.constant dense<0.000000e+00> : vector<128xf32>
    %102 = vector.multi_reduction <add>, %101, %cst_106 [0] : vector<256x128xf32> to vector<128xf32>
    %103 = vector.shape_cast %102 : vector<128xf32> to vector<1x128xf32>
    %cst_107 = arith.constant 3.906250e-03 : f32
    %104 = vector.broadcast %cst_107 : f32 to vector<1x128xf32>
    %105 = arith.mulf %100, %104 : vector<1x128xf32>
    %cst_108 = arith.constant 3.906250e-03 : f32
    %106 = vector.broadcast %cst_108 : f32 to vector<1x128xf32>
    %107 = arith.mulf %103, %106 : vector<1x128xf32>
    %108 = arith.mulf %105, %105 : vector<1x128xf32>
    %109 = arith.subf %107, %108 : vector<1x128xf32>
    %c0_109 = arith.constant 0 : index
    %c0_110 = arith.constant 0 : index
    %110 = vector.load %arg6[%c0_109, %c0_110] : memref<1x128xf32, #tpu.memory_space<vmem>>, vector<1x128xf32>
    %cst_111 = arith.constant 9.99999974E-6 : f32
    %111 = vector.broadcast %cst_111 : f32 to vector<1x128xf32>
    %112 = arith.addf %109, %111 : vector<1x128xf32>
    %113 = math.rsqrt %112 : vector<1x128xf32>
    %114 = arith.mulf %110, %113 : vector<1x128xf32>
    %c0_112 = arith.constant 0 : index
    %c0_113 = arith.constant 0 : index
    %115 = vector.load %arg7[%c0_112, %c0_113] : memref<1x128xf32, #tpu.memory_space<vmem>>, vector<1x128xf32>
    %116 = arith.mulf %105, %114 : vector<1x128xf32>
    %117 = arith.subf %115, %116 : vector<1x128xf32>
    %118 = vector.broadcast %114 : vector<1x128xf32> to vector<256x128xf32>
    %119 = arith.mulf %98, %118 : vector<256x128xf32>
    %120 = vector.broadcast %117 : vector<1x128xf32> to vector<256x128xf32>
    %121 = arith.addf %119, %120 : vector<256x128xf32>
    %c1_114 = arith.constant 1 : index
    %c1_115 = arith.constant 1 : index
    %c0_116 = arith.constant 0 : index
    %122 = vector.load %arg1[%c1_114, %c1_115, %c0_116] : memref<18x18x128xf32, #tpu.memory_space<vmem>>, vector<16x16x128xf32>
    %123 = vector.shape_cast %122 : vector<16x16x128xf32> to vector<256x128xf32>
    %124 = arith.addf %123, %121 : vector<256x128xf32>
    %c0_117 = arith.constant 0 : index
    %c0_118 = arith.constant 0 : index
    %125 = vector.load %arg8[%c0_117, %c0_118] : memref<256x128xf32, #tpu.memory_space<vmem>>, vector<256x128xf32>
    tpu.vector_store %arg8[%c0_117, %c0_118], %124 {strides = array<i32>} : memref<256x128xf32, #tpu.memory_space<vmem>>, vector<256x128xf32>,
    return
  }
  func.func @transform_0(%arg0: i32) -> (i32, i32, i32) {
    %c0_i32 = arith.constant 0 : i32
    %c0_i32_0 = arith.constant 0 : i32
    %c0_i32_1 = arith.constant 0 : i32
    return %arg0, %c0_i32, %c0_i32_0 : i32, i32, i32
  }
  func.func @transform_1(%arg0: i32) -> (i32, i32) {
    %c0_i32 = arith.constant 0 : i32
    %c0_i32_0 = arith.constant 0 : i32
    %c0_i32_1 = arith.constant 0 : i32
    return %c0_i32, %c0_i32_0 : i32, i32
  }
  func.func @transform_2(%arg0: i32) -> (i32, i32) {
    %c0_i32 = arith.constant 0 : i32
    %c0_i32_0 = arith.constant 0 : i32
    %c0_i32_1 = arith.constant 0 : i32
    return %c0_i32, %c0_i32_0 : i32, i32
  }
  func.func @transform_3(%arg0: i32) -> (i32, i32) {
    %c0_i32 = arith.constant 0 : i32
    %c0_i32_0 = arith.constant 0 : i32
    %c0_i32_1 = arith.constant 0 : i32
    return %c0_i32, %c0_i32_0 : i32, i32
  }
  func.func @transform_4(%arg0: i32) -> (i32, i32) {
    %c0_i32 = arith.constant 0 : i32
    %c0_i32_0 = arith.constant 0 : i32
    %c0_i32_1 = arith.constant 0 : i32
    return %c0_i32, %c0_i32_0 : i32, i32
  }
  func.func @transform_5(%arg0: i32) -> (i32, i32) {
    %c0_i32 = arith.constant 0 : i32
    %c0_i32_0 = arith.constant 0 : i32
    %c0_i32_1 = arith.constant 0 : i32
    return %c0_i32, %c0_i32_0 : i32, i32
  }
  func.func @transform_6(%arg0: i32) -> (i32, i32) {
    %c0_i32 = arith.constant 0 : i32
    %c0_i32_0 = arith.constant 0 : i32
    %c0_i32_1 = arith.constant 0 : i32
    return %c0_i32, %c0_i32_0 : i32, i32
  }
  func.func @transform_7(%arg0: i32) -> (i32, i32) {
    %c0_i32 = arith.constant 0 : i32
    %c0_i32_0 = arith.constant 0 : i32
    return %arg0, %c0_i32 : i32, i32
  }
}

</mosaic_0001>

<llo_original>
// kernel: residual_block_forward.1
$region0: #{residual_block_forward.1}
  #allocation0 [shape = 'u32[]', space=smem, size = 0x4, offset = 0x4, fixed_abs, tag = 'smem constant byte address 0x4 - core index']
  #allocation1 [shape = 'u32[144,128]{1,0:T(1,128)}', space=vmem, size = 0x12000, scoped, tag = 'internal scratch']
  #allocation2 [shape = 'bf16[256,1152]{1,0:T(8,128)(2,1)}', space=vmem, size = 0x90000, scoped, tag = 'scratch operand']
  #allocation3 [shape = 'bf16[18,18,128]{2,1,0:T(8,128)(2,1)}', space=vmem, size = 0x1b000, scoped, tag = 'scratch operand']
  %s0 = inlined_call_operand.vmem [shape: f32[36,18,128], index: 0, kind: input, shape index: {}]
  %s1 = inlined_call_operand.vmem [shape: bf16[1152,128], index: 1, kind: input, shape index: {}]
  %s2 = inlined_call_operand.vmem [shape: bf16[1152,128], index: 2, kind: input, shape index: {}]
  %s3 = inlined_call_operand.vmem [shape: f32[1,128], index: 3, kind: input, shape index: {}]
  %s4 = inlined_call_operand.vmem [shape: f32[1,128], index: 4, kind: input, shape index: {}]
  %s5 = inlined_call_operand.vmem [shape: f32[1,128], index: 5, kind: input, shape index: {}]
  %s6 = inlined_call_operand.vmem [shape: f32[1,128], index: 6, kind: input, shape index: {}]
  %s7 = inlined_call_operand.hbm [shape: f32[512,128], index: 7, kind: output, shape index: {}]
  %s8 = sld [smem:[#allocation0]]
  $region61: #{residual_block_forward.1} parent=0
    _
  %s10 = ssub.s32 1, %s8
  %s11 = scalar_select 0, %s10, %s8
  $region1: #{residual_block_forward.1} parent=0
    #allocation4 [shape = 'u8[262144]{0}', space=vmem, size = 0x40000, scoped, tag = 'output window, operand 0']
    #allocation5 [shape = 's32[2]{0}', space=sflag, size = 0x8, scoped, tag = 'scoped memory for residual_block_forward.1']
    %12 = vsyncpa [#allocation5], 0
    %s13 = scalar_lea.sflag [#allocation5], 1
    %14 = vsyncpa %s13, 0
    loop: start=0, step=1, limit=4
    $region2: #{residual_block_forward.1} parent=1 // loop_pre_header
      _
    $region3: #{residual_block_forward.1} parent=1 // loop_header
      %s16 = sphi 0, %s20
      %p17 = scmp.ge.s32.totalorder %s16, 4
      %s26 = sphi 0, %s28
      %s29 = sphi 0, %s26
      %s30 = sphi 0, %s29
      %s46 = sphi 0, %s30
      %s50 = sphi 0, %s50
      %s52 = sphi 0, %s50
      %s53 = sphi 0, %s52
      %s67 = sphi 0, %s53
      %s71 = sphi 0, %s71
      %s73 = sphi 0, %s71
      %s74 = sphi 0, %s73
      %s88 = sphi 0, %s74
      %s92 = sphi 0, %s92
      %s94 = sphi 0, %s92
      %s95 = sphi 0, %s94
      %s109 = sphi 0, %s95
      %s113 = sphi 0, %s113
      %s115 = sphi 0, %s113
      %s116 = sphi 0, %s115
      %s130 = sphi 0, %s116
      %s134 = sphi 0, %s134
      %s136 = sphi 0, %s134
      %s137 = sphi 0, %s136
      %s151 = sphi 0, %s137
      %s155 = sphi 0, %s155
      %s157 = sphi 0, %s155
      %s158 = sphi 0, %s157
      %s172 = sphi 0, %s158
      %s178 = sphi 0, %s180
      %s181 = sphi 0, %s178
      %s182 = sphi 0, %s181
      %s198 = sphi 0, %s182
    $region4: #{residual_block_forward.1} parent=1 // loop_header_branch
      %19 = sbr.rel (%p17) target = $region8
    $region5: #{residual_block_forward.1} parent=1 // loop_body
      %s21 = ssub.s32 %s16, 1
      %s22 = ssub.s32 %s16, 2
      %s23 = sadd.s32 %s16, 1
      %s24 = ssub.s32 %s16, %s23
      %p25 = scmp.eq.s32.totalorder %s24, 0
      %s27 = sadd.s32 %s26, 1
      %s28 = scalar_select %p25, %s26, %s27
      %p31 = pneg %p25
      %p32 = scmp.eq.s32.totalorder %s16, 1
      %p33 = por %p31, %p32
      %p34 = scmp.ne.s32.totalorder %s26, %s29
      %p35 = scmp.eq.s32.totalorder %s16, 0
      %p36 = por %p34, %p35
      %p37 = scmp.ne.s32.totalorder %s26, %s29
      %p38 = scmp.eq.s32.totalorder %s21, 1
      %p39 = por %p37, %p38
      %p40 = scmp.ne.s32.totalorder %s29, %s30
      %p41 = scmp.eq.s32.totalorder %s21, 0
      %p42 = por %p40, %p41
      %p43 = scmp.ne.s32.totalorder %s29, %s30
      %p44 = scmp.eq.s32.totalorder %s22, 1
      %p45 = por %p43, %p44
      %p47 = scmp.ne.s32.totalorder %s30, %s46
      %p48 = scmp.eq.s32.totalorder %s22, 0
      %p49 = por %p47, %p48
      %s51 = sadd.s32 %s50, 1
      %p54 = scmp.eq.s32.totalorder %s16, 1
      %p55 = scmp.ne.s32.totalorder %s50, %s52
      %p56 = scmp.eq.s32.totalorder %s16, 0
      %p57 = por %p55, %p56
      %p58 = scmp.ne.s32.totalorder %s50, %s52
      %p59 = scmp.eq.s32.totalorder %s21, 1
      %p60 = por %p58, %p59
      %p61 = scmp.ne.s32.totalorder %s52, %s53
      %p62 = scmp.eq.s32.totalorder %s21, 0
      %p63 = por %p61, %p62
      %p64 = scmp.ne.s32.totalorder %s52, %s53
      %p65 = scmp.eq.s32.totalorder %s22, 1
      %p66 = por %p64, %p65
      %p68 = scmp.ne.s32.totalorder %s53, %s67
      %p69 = scmp.eq.s32.totalorder %s22, 0
      %p70 = por %p68, %p69
      %s72 = sadd.s32 %s71, 1
      %p75 = scmp.eq.s32.totalorder %s16, 1
      %p76 = scmp.ne.s32.totalorder %s71, %s73
      %p77 = scmp.eq.s32.totalorder %s16, 0
      %p78 = por %p76, %p77
      %p79 = scmp.ne.s32.totalorder %s71, %s73
      %p80 = scmp.eq.s32.totalorder %s21, 1
      %p81 = por %p79, %p80
      %p82 = scmp.ne.s32.totalorder %s73, %s74
      %p83 = scmp.eq.s32.totalorder %s21, 0
      %p84 = por %p82, %p83
      %p85 = scmp.ne.s32.totalorder %s73, %s74
      %p86 = scmp.eq.s32.totalorder %s22, 1
      %p87 = por %p85, %p86
      %p89 = scmp.ne.s32.totalorder %s74, %s88
      %p90 = scmp.eq.s32.totalorder %s22, 0
      %p91 = por %p89, %p90
      %s93 = sadd.s32 %s92, 1
      %p96 = scmp.eq.s32.totalorder %s16, 1
      %p97 = scmp.ne.s32.totalorder %s92, %s94
      %p98 = scmp.eq.s32.totalorder %s16, 0
      %p99 = por %p97, %p98
      %p100 = scmp.ne.s32.totalorder %s92, %s94
      %p101 = scmp.eq.s32.totalorder %s21, 1
      %p102 = por %p100, %p101
      %p103 = scmp.ne.s32.totalorder %s94, %s95
      %p104 = scmp.eq.s32.totalorder %s21, 0
      %p105 = por %p103, %p104
      %p106 = scmp.ne.s32.totalorder %s94, %s95
      %p107 = scmp.eq.s32.totalorder %s22, 1
      %p108 = por %p106, %p107
      %p110 = scmp.ne.s32.totalorder %s95, %s109
      %p111 = scmp.eq.s32.totalorder %s22, 0
      %p112 = por %p110, %p111
      %s114 = sadd.s32 %s113, 1
      %p117 = scmp.eq.s32.totalorder %s16, 1
      %p118 = scmp.ne.s32.totalorder %s113, %s115
      %p119 = scmp.eq.s32.totalorder %s16, 0
      %p120 = por %p118, %p119
      %p121 = scmp.ne.s32.totalorder %s113, %s115
      %p122 = scmp.eq.s32.totalorder %s21, 1
      %p123 = por %p121, %p122
      %p124 = scmp.ne.s32.totalorder %s115, %s116
      %p125 = scmp.eq.s32.totalorder %s21, 0
      %p126 = por %p124, %p125
      %p127 = scmp.ne.s32.totalorder %s115, %s116
      %p128 = scmp.eq.s32.totalorder %s22, 1
      %p129 = por %p127, %p128
      %p131 = scmp.ne.s32.totalorder %s116, %s130
      %p132 = scmp.eq.s32.totalorder %s22, 0
      %p133 = por %p131, %p132
      %s135 = sadd.s32 %s134, 1
      %p138 = scmp.eq.s32.totalorder %s16, 1
      %p139 = scmp.ne.s32.totalorder %s134, %s136
      %p140 = scmp.eq.s32.totalorder %s16, 0
      %p141 = por %p139, %p140
      %p142 = scmp.ne.s32.totalorder %s134, %s136
      %p143 = scmp.eq.s32.totalorder %s21, 1
      %p144 = por %p142, %p143
      %p145 = scmp.ne.s32.totalorder %s136, %s137
      %p146 = scmp.eq.s32.totalorder %s21, 0
      %p147 = por %p145, %p146
      %p148 = scmp.ne.s32.totalorder %s136, %s137
      %p149 = scmp.eq.s32.totalorder %s22, 1
      %p150 = por %p148, %p149
      %p152 = scmp.ne.s32.totalorder %s137, %s151
      %p153 = scmp.eq.s32.totalorder %s22, 0
      %p154 = por %p152, %p153
      %s156 = sadd.s32 %s155, 1
      %p159 = scmp.eq.s32.totalorder %s16, 1
      %p160 = scmp.ne.s32.totalorder %s155, %s157
      %p161 = scmp.eq.s32.totalorder %s16, 0
      %p162 = por %p160, %p161
      %p163 = scmp.ne.s32.totalorder %s155, %s157
      %p164 = scmp.eq.s32.totalorder %s21, 1
      %p165 = por %p163, %p164
      %p166 = scmp.ne.s32.totalorder %s157, %s158
      %p167 = scmp.eq.s32.totalorder %s21, 0
      %p168 = por %p166, %p167
      %p169 = scmp.ne.s32.totalorder %s157, %s158
      %p170 = scmp.eq.s32.totalorder %s22, 1
      %p171 = por %p169, %p170
      %p173 = scmp.ne.s32.totalorder %s158, %s172
      %p174 = scmp.eq.s32.totalorder %s22, 0
      %p175 = por %p173, %p174
      %s176 = ssub.s32 %s16, %s23
      %p177 = scmp.eq.s32.totalorder %s176, 0
      %s179 = sadd.s32 %s178, 1
      %s180 = scalar_select %p177, %s178, %s179
      %p183 = pneg %p177
      %p184 = scmp.eq.s32.totalorder %s16, 1
      %p185 = por %p183, %p184
      %p186 = scmp.ne.s32.totalorder %s178, %s181
      %p187 = scmp.eq.s32.totalorder %s16, 0
      %p188 = por %p186, %p187
      %p189 = scmp.ne.s32.totalorder %s178, %s181
      %p190 = scmp.eq.s32.totalorder %s21, 1
      %p191 = por %p189, %p190
      %p192 = scmp.ne.s32.totalorder %s181, %s182
      %p193 = scmp.eq.s32.totalorder %s21, 0
      %p194 = por %p192, %p193
      %p195 = scmp.ne.s32.totalorder %s181, %s182
      %p196 = scmp.eq.s32.totalorder %s22, 1
      %p197 = por %p195, %p196
      %p199 = scmp.ne.s32.totalorder %s182, %s198
      %p200 = scmp.eq.s32.totalorder %s22, 0
      %p201 = por %p199, %p200
      %p202 = scmp.le.s32.totalorder 1, %s16
      %p203 = scmp.lt.s32.totalorder %s16, 3
      %p204 = pnand %p202, %p203
      %p205 = pneg %p204
      // Predicated region
      $region9: #{residual_block_forward.1} parent=5 // pred_check
        _
      $region10: #{residual_block_forward.1} parent=5 // pred_check_branch
        %207 = sbr.rel (%p204) target = $region12
      $region11: #{residual_block_forward.1} parent=5 // pred_region
        %s208 = ssub.s32 %s16, 1
        // Predicated region
        $region13: #{residual_block_forward.1} parent=11 // pred_check
          %p209 = pneg %p63
        $region14: #{residual_block_forward.1} parent=11 // pred_check_branch
          %211 = sbr.rel (%p209) target = $region16
        $region15: #{residual_block_forward.1} parent=11 // pred_region
          _
        $region16: #{residual_block_forward.1} parent=11 // pred_fallthru
          _
        // Predicated region
        $region17: #{residual_block_forward.1} parent=11 // pred_check
          %p212 = pneg %p84
        $region18: #{residual_block_forward.1} parent=11 // pred_check_branch
          %214 = sbr.rel (%p212) target = $region20
        $region19: #{residual_block_forward.1} parent=11 // pred_region
          _
        $region20: #{residual_block_forward.1} parent=11 // pred_fallthru
          _
        // Predicated region
        $region21: #{residual_block_forward.1} parent=11 // pred_check
          %p215 = pneg %p105
        $region22: #{residual_block_forward.1} parent=11 // pred_check_branch
          %217 = sbr.rel (%p215) target = $region24
        $region23: #{residual_block_forward.1} parent=11 // pred_region
          _
        $region24: #{residual_block_forward.1} parent=11 // pred_fallthru
          _
        // Predicated region
        $region25: #{residual_block_forward.1} parent=11 // pred_check
          %p218 = pneg %p126
        $region26: #{residual_block_forward.1} parent=11 // pred_check_branch
          %220 = sbr.rel (%p218) target = $region28
        $region27: #{residual_block_forward.1} parent=11 // pred_region
          _
        $region28: #{residual_block_forward.1} parent=11 // pred_fallthru
          _
        // Predicated region
        $region29: #{residual_block_forward.1} parent=11 // pred_check
          %p221 = pneg %p147
        $region30: #{residual_block_forward.1} parent=11 // pred_check_branch
          %223 = sbr.rel (%p221) target = $region32
        $region31: #{residual_block_forward.1} parent=11 // pred_region
          _
        $region32: #{residual_block_forward.1} parent=11 // pred_fallthru
          _
        // Predicated region
        $region33: #{residual_block_forward.1} parent=11 // pred_check
          %p224 = pneg %p168
        $region34: #{residual_block_forward.1} parent=11 // pred_check_branch
          %226 = sbr.rel (%p224) target = $region36
        $region35: #{residual_block_forward.1} parent=11 // pred_region
          _
        $region36: #{residual_block_forward.1} parent=11 // pred_fallthru
          _
      $region12: #{residual_block_forward.1} parent=5 // pred_fallthru
        _
      %p227 = scmp.lt.s32.totalorder %s16, 2
      // Predicated region
      $region37: #{residual_block_forward.1} parent=5 // pred_check
        %p228 = pneg %p227
      $region38: #{residual_block_forward.1} parent=5 // pred_check_branch
        %230 = sbr.rel (%p228) target = $region40
      $region39: #{residual_block_forward.1} parent=5 // pred_region
        // Predicated region
        $region41: #{residual_block_forward.1} parent=39 // pred_check
          %p231 = pneg %p36
        $region42: #{residual_block_forward.1} parent=39 // pred_check_branch
          %233 = sbr.rel (%p231) target = $region44
        $region43: #{residual_block_forward.1} parent=39 // pred_region
          %s234 = smul.u32 18, %s16
          %p235 = scmp.lt.s32.totalorder %s234, 35
          %s236 = scalar_select %p235, %s234, 35
          %s237 = smul.addr %s236, 3
          %s238 = smul.addr %s237, 8
          %s239 = scalar_lea.vmem %s0, %s238
          %s240 = smul.u32 18, %s16
        $region44: #{residual_block_forward.1} parent=39 // pred_fallthru
          _
      $region40: #{residual_block_forward.1} parent=5 // pred_fallthru
        _
      %p241 = scmp.le.s32.totalorder 1, %s16
      %p242 = scmp.lt.s32.totalorder %s16, 3
      %p243 = pnand %p241, %p242
      %p244 = pneg %p243
      // Predicated region
      $region45: #{residual_block_forward.1} parent=5 // pred_check
        _
      $region46: #{residual_block_forward.1} parent=5 // pred_check_branch
        %246 = sbr.rel (%p243) target = $region48
      $region47: #{residual_block_forward.1} parent=5 // pred_region
        %s247 = ssub.s32 %s16, 1
        %s248 = smul.u32 18, %s21
        %p249 = scmp.lt.s32.totalorder %s248, 35
        %s250 = scalar_select %p249, %s248, 35
        %s251 = smul.addr %s250, 3
        %s252 = smul.addr %s251, 8
        %s253 = scalar_lea.vmem %s0, %s252
        %p254 = pneg %p42
        %p255 = pneg %p39
        %p256 = pneg %p63
        %p257 = pneg %p60
        %p258 = pneg %p84
        %p259 = pneg %p81
        %p260 = pneg %p105
        %p261 = pneg %p102
        %p262 = pneg %p126
        %p263 = pneg %p123
        %p264 = pneg %p147
        %p265 = pneg %p144
        %p266 = pneg %p168
        %p267 = pneg %p165
        %p268 = pneg %p194
        %p269 = pneg %p191
        %s270 = sand.u32 %s181, 1
        %s271 = scalar_lea.sflag [#allocation5], %s270
        %s272 = sand.u32 %s181, 1
        %s273 = smul.addr %s272, 256
        %s274 = scalar_lea.vmem [#allocation4], %s273
        %s275 = smul.u32 18, %s21
        %p276 = scmp.lt.s32.totalorder %s275, 35
        %s277 = scalar_select %p276, %s275, 35
        %s278 = smul.addr %s277, 3
        %s279 = smul.addr %s278, 8
        %s280 = scalar_lea.vmem %s0, %s279
        %s281 = smul.u32 18, %s21
        %s282 = smul.u32 32, %s21
        %v284 = vld [vmem:[%s280] sm:$0xff]
        %v285 = vld [vmem:[%s280 + $0x8] sm:$0xff]
        %v286 = vld [vmem:[%s280 + $0x18] sm:$0xff]
        %v287 = vld [vmem:[%s280 + $0x20] sm:$0xff]
        %v288 = vld [vmem:[%s280 + $0x30] sm:$0xff]
        %v289 = vld [vmem:[%s280 + $0x38] sm:$0xff]
        %v290 = vld [vmem:[%s280 + $0x48] sm:$0xff]
        %v291 = vld [vmem:[%s280 + $0x50] sm:$0xff]
        %v292 = vld [vmem:[%s280 + $0x60] sm:$0xff]
        %v293 = vld [vmem:[%s280 + $0x68] sm:$0xff]
        %v294 = vld [vmem:[%s280 + $0x78] sm:$0xff]
        %v295 = vld [vmem:[%s280 + $0x80] sm:$0xff]
        %v296 = vld [vmem:[%s280 + $0x90] sm:$0xff]
        %v297 = vld [vmem:[%s280 + $0x98] sm:$0xff]
        %v298 = vld [vmem:[%s280 + $0xa8] sm:$0xff]
        %v299 = vld [vmem:[%s280 + $0xb0] sm:$0xff]
        %v300 = vld [vmem:[%s280 + $0xc0] sm:$0xff]
        %v301 = vld [vmem:[%s280 + $0xc8] sm:$0xff]
        %v302 = vld [vmem:[%s280 + $0xd8] sm:$0xff]
        %v303 = vld [vmem:[%s280 + $0xe0] sm:$0xff]
        %v304 = vld [vmem:[%s280 + $0xf0] sm:$0xff]
        %v305 = vld [vmem:[%s280 + $0xf8] sm:$0xff]
        %v306 = vld [vmem:[%s280 + $0x108] sm:$0xff]
        %v307 = vld [vmem:[%s280 + $0x110] sm:$0xff]
        %v308 = vld [vmem:[%s280 + $0x120] sm:$0xff]
        %v309 = vld [vmem:[%s280 + $0x128] sm:$0xff]
        %v310 = vld [vmem:[%s280 + $0x138] sm:$0xff]
        %v311 = vld [vmem:[%s280 + $0x140] sm:$0xff]
        %v312 = vld [vmem:[%s280 + $0x150] sm:$0xff]
        %v313 = vld [vmem:[%s280 + $0x158] sm:$0xff]
        %v314 = vld [vmem:[%s280 + $0x168] sm:$0xff]
        %v315 = vld [vmem:[%s280 + $0x170] sm:$0xff]
        %v316 = vpack.c.bf16 %v285, %v284
        %v317 = vpack.c.bf16 %v287, %v286
        %v318 = vpack.c.bf16 %v289, %v288
        %v319 = vpack.c.bf16 %v291, %v290
        %v320 = vpack.c.bf16 %v293, %v292
        %v321 = vpack.c.bf16 %v295, %v294
        %v322 = vpack.c.bf16 %v297, %v296
        %v323 = vpack.c.bf16 %v299, %v298
        %v324 = vpack.c.bf16 %v301, %v300
        %v325 = vpack.c.bf16 %v303, %v302
        %v326 = vpack.c.bf16 %v305, %v304
        %v327 = vpack.c.bf16 %v307, %v306
        %v328 = vpack.c.bf16 %v309, %v308
        %v329 = vpack.c.bf16 %v311, %v310
        %v330 = vpack.c.bf16 %v313, %v312
        %v331 = vpack.c.bf16 %v315, %v314
        %v348 = vunpack.c.l.b16 %v316
        %v349 = vunpack.c.h.b16 %v316
        %v350 = vunpack.c.l.b16 %v317
        %v351 = vunpack.c.h.b16 %v317
        %v352 = vunpack.c.l.b16 %v318
        %v353 = vunpack.c.h.b16 %v318
        %v354 = vunpack.c.l.b16 %v319
        %v355 = vunpack.c.h.b16 %v319
        %v356 = vunpack.c.l.b16 %v320
        %v357 = vunpack.c.h.b16 %v320
        %v358 = vunpack.c.l.b16 %v321
        %v359 = vunpack.c.h.b16 %v321
        %v360 = vunpack.c.l.b16 %v322
        %v361 = vunpack.c.h.b16 %v322
        %v362 = vunpack.c.l.b16 %v323
        %v363 = vunpack.c.h.b16 %v323
        %v364 = vunpack.c.l.b16 %v324
        %v365 = vunpack.c.h.b16 %v324
        %v366 = vunpack.c.l.b16 %v325
        %v367 = vunpack.c.h.b16 %v325
        %v368 = vunpack.c.l.b16 %v326
        %v369 = vunpack.c.h.b16 %v326
        %v370 = vunpack.c.l.b16 %v327
        %v371 = vunpack.c.h.b16 %v327
        %v372 = vunpack.c.l.b16 %v328
        %v373 = vunpack.c.h.b16 %v328
        %v374 = vunpack.c.l.b16 %v329
        %v375 = vunpack.c.h.b16 %v329
        %v376 = vunpack.c.l.b16 %v330
        %v377 = vunpack.c.h.b16 %v330
        %v378 = vunpack.c.l.b16 %v331
        %v379 = vunpack.c.h.b16 %v331
        %v380 = vpack.c.b16 %v348, %v348
        %v381 = vpack.c.b16 %v349, %v349
        %v382 = vpack.c.b16 %v350, %v350
        %v383 = vpack.c.b16 %v351, %v351
        %v384 = vpack.c.b16 %v352, %v352
        %v385 = vpack.c.b16 %v353, %v353
        %v386 = vpack.c.b16 %v354, %v354
        %v387 = vpack.c.b16 %v355, %v355
        %v388 = vpack.c.b16 %v356, %v356
        %v389 = vpack.c.b16 %v357, %v357
        %v390 = vpack.c.b16 %v358, %v358
        %v391 = vpack.c.b16 %v359, %v359
        %v392 = vpack.c.b16 %v360, %v360
        %v393 = vpack.c.b16 %v361, %v361
        %v394 = vpack.c.b16 %v362, %v362
        %v395 = vpack.c.b16 %v363, %v363
        %v396 = vpack.c.b16 %v364, %v364
        %v397 = vpack.c.b16 %v365, %v365
        %v398 = vpack.c.b16 %v366, %v366
        %v399 = vpack.c.b16 %v367, %v367
        %v400 = vpack.c.b16 %v368, %v368
        %v401 = vpack.c.b16 %v369, %v369
        %v402 = vpack.c.b16 %v370, %v370
        %v403 = vpack.c.b16 %v371, %v371
        %v404 = vpack.c.b16 %v372, %v372
        %v405 = vpack.c.b16 %v373, %v373
        %v406 = vpack.c.b16 %v374, %v374
        %v407 = vpack.c.b16 %v375, %v375
        %v408 = vpack.c.b16 %v376, %v376
        %v409 = vpack.c.b16 %v377, %v377
        %v410 = vpack.c.b16 %v378, %v378
        %v411 = vpack.c.b16 %v379, %v379
        %444 = vst [vmem:[#allocation2] sm:$0xf] %v380
        %445 = vst [vmem:[#allocation2 + $0x24] sm:$0xf] %v381
        %446 = vst [vmem:[#allocation2 + $0x48] sm:$0xf] %v382
        %447 = vst [vmem:[#allocation2 + $0x6c] sm:$0xf] %v383
        %448 = vst [vmem:[#allocation2 + $0x90] sm:$0xf] %v384
        %449 = vst [vmem:[#allocation2 + $0xb4] sm:$0xf] %v385
        %450 = vst [vmem:[#allocation2 + $0xd8] sm:$0xf] %v386
        %451 = vst [vmem:[#allocation2 + $0xfc] sm:$0xf] %v387
        %452 = vst [vmem:[#allocation2 + $0x120] sm:$0xf] %v388
        %453 = vst [vmem:[#allocation2 + $0x144] sm:$0xf] %v389
        %454 = vst [vmem:[#allocation2 + $0x168] sm:$0xf] %v390
        %455 = vst [vmem:[#allocation2 + $0x18c] sm:$0xf] %v391
        %456 = vst [vmem:[#allocation2 + $0x1b0] sm:$0xf] %v392
        %457 = vst [vmem:[#allocation2 + $0x1d4] sm:$0xf] %v393
        %458 = vst [vmem:[#allocation2 + $0x1f8] sm:$0xf] %v394
        %459 = vst [vmem:[#allocation2 + $0x21c] sm:$0xf] %v395
        %460 = vst [vmem:[#allocation2 + $0x240] sm:$0xf] %v396
        %461 = vst [vmem:[#allocation2 + $0x264] sm:$0xf] %v397
        %462 = vst [vmem:[#allocation2 + $0x288] sm:$0xf] %v398
        %463 = vst [vmem:[#allocation2 + $0x2ac] sm:$0xf] %v399
        %464 = vst [vmem:[#allocation2 + $0x2d0] sm:$0xf] %v400
        %465 = vst [vmem:[#allocation2 + $0x2f4] sm:$0xf] %v401
        %466 = vst [vmem:[#allocation2 + $0x318] sm:$0xf] %v402
        %467 = vst [vmem:[#allocation2 + $0x33c] sm:$0xf] %v403
        %468 = vst [vmem:[#allocation2 + $0x360] sm:$0xf] %v404
        %469 = vst [vmem:[#allocation2 + $0x384] sm:$0xf] %v405
        %470 = vst [vmem:[#allocation2 + $0x3a8] sm:$0xf] %v406
        %471 = vst [vmem:[#allocation2 + $0x3cc] sm:$0xf] %v407
        %472 = vst [vmem:[#allocation2 + $0x3f0] sm:$0xf] %v408
        %473 = vst [vmem:[#allocation2 + $0x414] sm:$0xf] %v409
        %474 = vst [vmem:[#allocation2 + $0x438] sm:$0xf] %v410
        %475 = vst [vmem:[#allocation2 + $0x45c] sm:$0xf] %v411
        %v476 = vld [vmem:[%s280 + $0x1] sm:$0xff]
        %v477 = vld [vmem:[%s280 + $0x9] sm:$0xff]
        %v478 = vld [vmem:[%s280 + $0x19] sm:$0xff]
        %v479 = vld [vmem:[%s280 + $0x21] sm:$0xff]
        %v480 = vld [vmem:[%s280 + $0x31] sm:$0xff]
        %v481 = vld [vmem:[%s280 + $0x39] sm:$0xff]
        %v482 = vld [vmem:[%s280 + $0x49] sm:$0xff]
        %v483 = vld [vmem:[%s280 + $0x51] sm:$0xff]
        %v484 = vld [vmem:[%s280 + $0x61] sm:$0xff]
        %v485 = vld [vmem:[%s280 + $0x69] sm:$0xff]
        %v486 = vld [vmem:[%s280 + $0x79] sm:$0xff]
        %v487 = vld [vmem:[%s280 + $0x81] sm:$0xff]
        %v488 = vld [vmem:[%s280 + $0x91] sm:$0xff]
        %v489 = vld [vmem:[%s280 + $0x99] sm:$0xff]
        %v490 = vld [vmem:[%s280 + $0xa9] sm:$0xff]
        %v491 = vld [vmem:[%s280 + $0xb1] sm:$0xff]
        %v492 = vld [vmem:[%s280 + $0xc1] sm:$0xff]
        %v493 = vld [vmem:[%s280 + $0xc9] sm:$0xff]
        %v494 = vld [vmem:[%s280 + $0xd9] sm:$0xff]
        %v495 = vld [vmem:[%s280 + $0xe1] sm:$0xff]
        %v496 = vld [vmem:[%s280 + $0xf1] sm:$0xff]
        %v497 = vld [vmem:[%s280 + $0xf9] sm:$0xff]
        %v498 = vld [vmem:[%s280 + $0x109] sm:$0xff]
        %v499 = vld [vmem:[%s280 + $0x111] sm:$0xff]
        %v500 = vld [vmem:[%s280 + $0x121] sm:$0xff]
        %v501 = vld [vmem:[%s280 + $0x129] sm:$0xff]
        %v502 = vld [vmem:[%s280 + $0x139] sm:$0xff]
        %v503 = vld [vmem:[%s280 + $0x141] sm:$0xff]
        %v504 = vld [vmem:[%s280 + $0x151] sm:$0xff]
        %v505 = vld [vmem:[%s280 + $0x159] sm:$0xff]
        %v506 = vld [vmem:[%s280 + $0x169] sm:$0xff]
        %v507 = vld [vmem:[%s280 + $0x171] sm:$0xff]
        %v508 = vpack.c.bf16 %v477, %v476
        %v509 = vpack.c.bf16 %v479, %v478
        %v510 = vpack.c.bf16 %v481, %v480
        %v511 = vpack.c.bf16 %v483, %v482
        %v512 = vpack.c.bf16 %v485, %v484
        %v513 = vpack.c.bf16 %v487, %v486
        %v514 = vpack.c.bf16 %v489, %v488
        %v515 = vpack.c.bf16 %v491, %v490
        %v516 = vpack.c.bf16 %v493, %v492
        %v517 = vpack.c.bf16 %v495, %v494
        %v518 = vpack.c.bf16 %v497, %v496
        %v519 = vpack.c.bf16 %v499, %v498
        %v520 = vpack.c.bf16 %v501, %v500
        %v521 = vpack.c.bf16 %v503, %v502
        %v522 = vpack.c.bf16 %v505, %v504
        %v523 = vpack.c.bf16 %v507, %v506
        %v540 = vunpack.c.l.b16 %v508
        %v541 = vunpack.c.h.b16 %v508
        %v542 = vunpack.c.l.b16 %v509
        %v543 = vunpack.c.h.b16 %v509
        %v544 = vunpack.c.l.b16 %v510
        %v545 = vunpack.c.h.b16 %v510
        %v546 = vunpack.c.l.b16 %v511
        %v547 = vunpack.c.h.b16 %v511
        %v548 = vunpack.c.l.b16 %v512
        %v549 = vunpack.c.h.b16 %v512
        %v550 = vunpack.c.l.b16 %v513
        %v551 = vunpack.c.h.b16 %v513
        %v552 = vunpack.c.l.b16 %v514
        %v553 = vunpack.c.h.b16 %v514
        %v554 = vunpack.c.l.b16 %v515
        %v555 = vunpack.c.h.b16 %v515
        %v556 = vunpack.c.l.b16 %v516
        %v557 = vunpack.c.h.b16 %v516
        %v558 = vunpack.c.l.b16 %v517
        %v559 = vunpack.c.h.b16 %v517
        %v560 = vunpack.c.l.b16 %v518
        %v561 = vunpack.c.h.b16 %v518
        %v562 = vunpack.c.l.b16 %v519
        %v563 = vunpack.c.h.b16 %v519
        %v564 = vunpack.c.l.b16 %v520
        %v565 = vunpack.c.h.b16 %v520
        %v566 = vunpack.c.l.b16 %v521
        %v567 = vunpack.c.h.b16 %v521
        %v568 = vunpack.c.l.b16 %v522
        %v569 = vunpack.c.h.b16 %v522
        %v570 = vunpack.c.l.b16 %v523
        %v571 = vunpack.c.h.b16 %v523
        %v572 = vpack.c.b16 %v540, %v540
        %v573 = vpack.c.b16 %v541, %v541
        %v574 = vpack.c.b16 %v542, %v542
        %v575 = vpack.c.b16 %v543, %v543
        %v576 = vpack.c.b16 %v544, %v544
        %v577 = vpack.c.b16 %v545, %v545
        %v578 = vpack.c.b16 %v546, %v546
        %v579 = vpack.c.b16 %v547, %v547
        %v580 = vpack.c.b16 %v548, %v548
        %v581 = vpack.c.b16 %v549, %v549
        %v582 = vpack.c.b16 %v550, %v550
        %v583 = vpack.c.b16 %v551, %v551
        %v584 = vpack.c.b16 %v552, %v552
        %v585 = vpack.c.b16 %v553, %v553
        %v586 = vpack.c.b16 %v554, %v554
        %v587 = vpack.c.b16 %v555, %v555
        %v588 = vpack.c.b16 %v556, %v556
        %v589 = vpack.c.b16 %v557, %v557
        %v590 = vpack.c.b16 %v558, %v558
        %v591 = vpack.c.b16 %v559, %v559
        %v592 = vpack.c.b16 %v560, %v560
        %v593 = vpack.c.b16 %v561, %v561
        %v594 = vpack.c.b16 %v562, %v562
        %v595 = vpack.c.b16 %v563, %v563
        %v596 = vpack.c.b16 %v564, %v564
        %v597 = vpack.c.b16 %v565, %v565
        %v598 = vpack.c.b16 %v566, %v566
        %v599 = vpack.c.b16 %v567, %v567
        %v600 = vpack.c.b16 %v568, %v568
        %v601 = vpack.c.b16 %v569, %v569
        %v602 = vpack.c.b16 %v570, %v570
        %v603 = vpack.c.b16 %v571, %v571
        %636 = vst [vmem:[#allocation2 + $0x4] sm:$0xf] %v572
        %637 = vst [vmem:[#allocation2 + $0x28] sm:$0xf] %v573
        %638 = vst [vmem:[#allocation2 + $0x4c] sm:$0xf] %v574
        %639 = vst [vmem:[#allocation2 + $0x70] sm:$0xf] %v575
        %640 = vst [vmem:[#allocation2 + $0x94] sm:$0xf] %v576
        %641 = vst [vmem:[#allocation2 + $0xb8] sm:$0xf] %v577
        %642 = vst [vmem:[#allocation2 + $0xdc] sm:$0xf] %v578
        %643 = vst [vmem:[#allocation2 + $0x100] sm:$0xf] %v579
        %644 = vst [vmem:[#allocation2 + $0x124] sm:$0xf] %v580
        %645 = vst [vmem:[#allocation2 + $0x148] sm:$0xf] %v581
        %646 = vst [vmem:[#allocation2 + $0x16c] sm:$0xf] %v582
        %647 = vst [vmem:[#allocation2 + $0x190] sm:$0xf] %v583
        %648 = vst [vmem:[#allocation2 + $0x1b4] sm:$0xf] %v584
        %649 = vst [vmem:[#allocation2 + $0x1d8] sm:$0xf] %v585
        %650 = vst [vmem:[#allocation2 + $0x1fc] sm:$0xf] %v586
        %651 = vst [vmem:[#allocation2 + $0x220] sm:$0xf] %v587
        %652 = vst [vmem:[#allocation2 + $0x244] sm:$0xf] %v588
        %653 = vst [vmem:[#allocation2 + $0x268] sm:$0xf] %v589
        %654 = vst [vmem:[#allocation2 + $0x28c] sm:$0xf] %v590
        %655 = vst [vmem:[#allocation2 + $0x2b0] sm:$0xf] %v591
        %656 = vst [vmem:[#allocation2 + $0x2d4] sm:$0xf] %v592
        %657 = vst [vmem:[#allocation2 + $0x2f8] sm:$0xf] %v593
        %658 = vst [vmem:[#allocation2 + $0x31c] sm:$0xf] %v594
        %659 = vst [vmem:[#allocation2 + $0x340] sm:$0xf] %v595
        %660 = vst [vmem:[#allocation2 + $0x364] sm:$0xf] %v596
        %661 = vst [vmem:[#allocation2 + $0x388] sm:$0xf] %v597
        %662 = vst [vmem:[#allocation2 + $0x3ac] sm:$0xf] %v598
        %663 = vst [vmem:[#allocation2 + $0x3d0] sm:$0xf] %v599
        %664 = vst [vmem:[#allocation2 + $0x3f4] sm:$0xf] %v600
        %665 = vst [vmem:[#allocation2 + $0x418] sm:$0xf] %v601
        %666 = vst [vmem:[#allocation2 + $0x43c] sm:$0xf] %v602
        %667 = vst [vmem:[#allocation2 + $0x460] sm:$0xf] %v603
        %v668 = vld [vmem:[%s280 + $0x2] sm:$0xff]
        %v669 = vld [vmem:[%s280 + $0xa] sm:$0xff]
        %v670 = vld [vmem:[%s280 + $0x1a] sm:$0xff]
        %v671 = vld [vmem:[%s280 + $0x22] sm:$0xff]
        %v672 = vld [vmem:[%s280 + $0x32] sm:$0xff]
        %v673 = vld [vmem:[%s280 + $0x3a] sm:$0xff]
        %v674 = vld [vmem:[%s280 + $0x4a] sm:$0xff]
        %v675 = vld [vmem:[%s280 + $0x52] sm:$0xff]
        %v676 = vld [vmem:[%s280 + $0x62] sm:$0xff]
        %v677 = vld [vmem:[%s280 + $0x6a] sm:$0xff]
        %v678 = vld [vmem:[%s280 + $0x7a] sm:$0xff]
        %v679 = vld [vmem:[%s280 + $0x82] sm:$0xff]
        %v680 = vld [vmem:[%s280 + $0x92] sm:$0xff]
        %v681 = vld [vmem:[%s280 + $0x9a] sm:$0xff]
        %v682 = vld [vmem:[%s280 + $0xaa] sm:$0xff]
        %v683 = vld [vmem:[%s280 + $0xb2] sm:$0xff]
        %v684 = vld [vmem:[%s280 + $0xc2] sm:$0xff]
        %v685 = vld [vmem:[%s280 + $0xca] sm:$0xff]
        %v686 = vld [vmem:[%s280 + $0xda] sm:$0xff]
        %v687 = vld [vmem:[%s280 + $0xe2] sm:$0xff]
        %v688 = vld [vmem:[%s280 + $0xf2] sm:$0xff]
        %v689 = vld [vmem:[%s280 + $0xfa] sm:$0xff]
        %v690 = vld [vmem:[%s280 + $0x10a] sm:$0xff]
        %v691 = vld [vmem:[%s280 + $0x112] sm:$0xff]
        %v692 = vld [vmem:[%s280 + $0x122] sm:$0xff]
        %v693 = vld [vmem:[%s280 + $0x12a] sm:$0xff]
        %v694 = vld [vmem:[%s280 + $0x13a] sm:$0xff]
        %v695 = vld [vmem:[%s280 + $0x142] sm:$0xff]
        %v696 = vld [vmem:[%s280 + $0x152] sm:$0xff]
        %v697 = vld [vmem:[%s280 + $0x15a] sm:$0xff]
        %v698 = vld [vmem:[%s280 + $0x16a] sm:$0xff]
        %v699 = vld [vmem:[%s280 + $0x172] sm:$0xff]
        %v700 = vpack.c.bf16 %v669, %v668
        %v701 = vpack.c.bf16 %v671, %v670
        %v702 = vpack.c.bf16 %v673, %v672
        %v703 = vpack.c.bf16 %v675, %v674
        %v704 = vpack.c.bf16 %v677, %v676
        %v705 = vpack.c.bf16 %v679, %v678
        %v706 = vpack.c.bf16 %v681, %v680
        %v707 = vpack.c.bf16 %v683, %v682
        %v708 = vpack.c.bf16 %v685, %v684
        %v709 = vpack.c.bf16 %v687, %v686
        %v710 = vpack.c.bf16 %v689, %v688
        %v711 = vpack.c.bf16 %v691, %v690
        %v712 = vpack.c.bf16 %v693, %v692
        %v713 = vpack.c.bf16 %v695, %v694
        %v714 = vpack.c.bf16 %v697, %v696
        %v715 = vpack.c.bf16 %v699, %v698
        %v732 = vunpack.c.l.b16 %v700
        %v733 = vunpack.c.h.b16 %v700
        %v734 = vunpack.c.l.b16 %v701
        %v735 = vunpack.c.h.b16 %v701
        %v736 = vunpack.c.l.b16 %v702
        %v737 = vunpack.c.h.b16 %v702
        %v738 = vunpack.c.l.b16 %v703
        %v739 = vunpack.c.h.b16 %v703
        %v740 = vunpack.c.l.b16 %v704
        %v741 = vunpack.c.h.b16 %v704
        %v742 = vunpack.c.l.b16 %v705
        %v743 = vunpack.c.h.b16 %v705
        %v744 = vunpack.c.l.b16 %v706
        %v745 = vunpack.c.h.b16 %v706
        %v746 = vunpack.c.l.b16 %v707
        %v747 = vunpack.c.h.b16 %v707
        %v748 = vunpack.c.l.b16 %v708
        %v749 = vunpack.c.h.b16 %v708
        %v750 = vunpack.c.l.b16 %v709
        %v751 = vunpack.c.h.b16 %v709
        %v752 = vunpack.c.l.b16 %v710
        %v753 = vunpack.c.h.b16 %v710
        %v754 = vunpack.c.l.b16 %v711
        %v755 = vunpack.c.h.b16 %v711
        %v756 = vunpack.c.l.b16 %v712
        %v757 = vunpack.c.h.b16 %v712
        %v758 = vunpack.c.l.b16 %v713
        %v759 = vunpack.c.h.b16 %v713
        %v760 = vunpack.c.l.b16 %v714
        %v761 = vunpack.c.h.b16 %v714
        %v762 = vunpack.c.l.b16 %v715
        %v763 = vunpack.c.h.b16 %v715
        %v764 = vpack.c.b16 %v732, %v732
        %v765 = vpack.c.b16 %v733, %v733
        %v766 = vpack.c.b16 %v734, %v734
        %v767 = vpack.c.b16 %v735, %v735
        %v768 = vpack.c.b16 %v736, %v736
        %v769 = vpack.c.b16 %v737, %v737
        %v770 = vpack.c.b16 %v738, %v738
        %v771 = vpack.c.b16 %v739, %v739
        %v772 = vpack.c.b16 %v740, %v740
        %v773 = vpack.c.b16 %v741, %v741
        %v774 = vpack.c.b16 %v742, %v742
        %v775 = vpack.c.b16 %v743, %v743
        %v776 = vpack.c.b16 %v744, %v744
        %v777 = vpack.c.b16 %v745, %v745
        %v778 = vpack.c.b16 %v746, %v746
        %v779 = vpack.c.b16 %v747, %v747
        %v780 = vpack.c.b16 %v748, %v748
        %v781 = vpack.c.b16 %v749, %v749
        %v782 = vpack.c.b16 %v750, %v750
        %v783 = vpack.c.b16 %v751, %v751
        %v784 = vpack.c.b16 %v752, %v752
        %v785 = vpack.c.b16 %v753, %v753
        %v786 = vpack.c.b16 %v754, %v754
        %v787 = vpack.c.b16 %v755, %v755
        %v788 = vpack.c.b16 %v756, %v756
        %v789 = vpack.c.b16 %v757, %v757
        %v790 = vpack.c.b16 %v758, %v758
        %v791 = vpack.c.b16 %v759, %v759
        %v792 = vpack.c.b16 %v760, %v760
        %v793 = vpack.c.b16 %v761, %v761
        %v794 = vpack.c.b16 %v762, %v762
        %v795 = vpack.c.b16 %v763, %v763
        %828 = vst [vmem:[#allocation2 + $0x8] sm:$0xf] %v764
        %829 = vst [vmem:[#allocation2 + $0x2c] sm:$0xf] %v765
        %830 = vst [vmem:[#allocation2 + $0x50] sm:$0xf] %v766
        %831 = vst [vmem:[#allocation2 + $0x74] sm:$0xf] %v767
        %832 = vst [vmem:[#allocation2 + $0x98] sm:$0xf] %v768
        %833 = vst [vmem:[#allocation2 + $0xbc] sm:$0xf] %v769
        %834 = vst [vmem:[#allocation2 + $0xe0] sm:$0xf] %v770
        %835 = vst [vmem:[#allocation2 + $0x104] sm:$0xf] %v771
        %836 = vst [vmem:[#allocation2 + $0x128] sm:$0xf] %v772
        %837 = vst [vmem:[#allocation2 + $0x14c] sm:$0xf] %v773
        %838 = vst [vmem:[#allocation2 + $0x170] sm:$0xf] %v774
        %839 = vst [vmem:[#allocation2 + $0x194] sm:$0xf] %v775
        %840 = vst [vmem:[#allocation2 + $0x1b8] sm:$0xf] %v776
        %841 = vst [vmem:[#allocation2 + $0x1dc] sm:$0xf] %v777
        %842 = vst [vmem:[#allocation2 + $0x200] sm:$0xf] %v778
        %843 = vst [vmem:[#allocation2 + $0x224] sm:$0xf] %v779
        %844 = vst [vmem:[#allocation2 + $0x248] sm:$0xf] %v780
        %845 = vst [vmem:[#allocation2 + $0x26c] sm:$0xf] %v781
        %846 = vst [vmem:[#allocation2 + $0x290] sm:$0xf] %v782
        %847 = vst [vmem:[#allocation2 + $0x2b4] sm:$0xf] %v783
        %848 = vst [vmem:[#allocation2 + $0x2d8] sm:$0xf] %v784
        %849 = vst [vmem:[#allocation2 + $0x2fc] sm:$0xf] %v785
        %850 = vst [vmem:[#allocation2 + $0x320] sm:$0xf] %v786
        %851 = vst [vmem:[#allocation2 + $0x344] sm:$0xf] %v787
        %852 = vst [vmem:[#allocation2 + $0x368] sm:$0xf] %v788
        %853 = vst [vmem:[#allocation2 + $0x38c] sm:$0xf] %v789
        %854 = vst [vmem:[#allocation2 + $0x3b0] sm:$0xf] %v790
        %855 = vst [vmem:[#allocation2 + $0x3d4] sm:$0xf] %v791
        %856 = vst [vmem:[#allocation2 + $0x3f8] sm:$0xf] %v792
        %857 = vst [vmem:[#allocation2 + $0x41c] sm:$0xf] %v793
        %858 = vst [vmem:[#allocation2 + $0x440] sm:$0xf] %v794
        %859 = vst [vmem:[#allocation2 + $0x464] sm:$0xf] %v795
        %s860 = scalar_lea.vmem %s280, 24
        %v861 = vld [vmem:[%s860] sm:$0xff]
        %v862 = vld [vmem:[%s860 + $0x8] sm:$0xff]
        %v863 = vld [vmem:[%s860 + $0x18] sm:$0xff]
        %v864 = vld [vmem:[%s860 + $0x20] sm:$0xff]
        %v865 = vld [vmem:[%s860 + $0x30] sm:$0xff]
        %v866 = vld [vmem:[%s860 + $0x38] sm:$0xff]
        %v867 = vld [vmem:[%s860 + $0x48] sm:$0xff]
        %v868 = vld [vmem:[%s860 + $0x50] sm:$0xff]
        %v869 = vld [vmem:[%s860 + $0x60] sm:$0xff]
        %v870 = vld [vmem:[%s860 + $0x68] sm:$0xff]
        %v871 = vld [vmem:[%s860 + $0x78] sm:$0xff]
        %v872 = vld [vmem:[%s860 + $0x80] sm:$0xff]
        %v873 = vld [vmem:[%s860 + $0x90] sm:$0xff]
        %v874 = vld [vmem:[%s860 + $0x98] sm:$0xff]
        %v875 = vld [vmem:[%s860 + $0xa8] sm:$0xff]
        %v876 = vld [vmem:[%s860 + $0xb0] sm:$0xff]
        %v877 = vld [vmem:[%s860 + $0xc0] sm:$0xff]
        %v878 = vld [vmem:[%s860 + $0xc8] sm:$0xff]
        %v879 = vld [vmem:[%s860 + $0xd8] sm:$0xff]
        %v880 = vld [vmem:[%s860 + $0xe0] sm:$0xff]
        %v881 = vld [vmem:[%s860 + $0xf0] sm:$0xff]
        %v882 = vld [vmem:[%s860 + $0xf8] sm:$0xff]
        %v883 = vld [vmem:[%s860 + $0x108] sm:$0xff]
        %v884 = vld [vmem:[%s860 + $0x110] sm:$0xff]
        %v885 = vld [vmem:[%s860 + $0x120] sm:$0xff]
        %v886 = vld [vmem:[%s860 + $0x128] sm:$0xff]
        %v887 = vld [vmem:[%s860 + $0x138] sm:$0xff]
        %v888 = vld [vmem:[%s860 + $0x140] sm:$0xff]
        %v889 = vld [vmem:[%s860 + $0x150] sm:$0xff]
        %v890 = vld [vmem:[%s860 + $0x158] sm:$0xff]
        %v891 = vld [vmem:[%s860 + $0x168] sm:$0xff]
        %v892 = vld [vmem:[%s860 + $0x170] sm:$0xff]
        %v893 = vpack.c.bf16 %v862, %v861
        %v894 = vpack.c.bf16 %v864, %v863
        %v895 = vpack.c.bf16 %v866, %v865
        %v896 = vpack.c.bf16 %v868, %v867
        %v897 = vpack.c.bf16 %v870, %v869
        %v898 = vpack.c.bf16 %v872, %v871
        %v899 = vpack.c.bf16 %v874, %v873
        %v900 = vpack.c.bf16 %v876, %v875
        %v901 = vpack.c.bf16 %v878, %v877
        %v902 = vpack.c.bf16 %v880, %v879
        %v903 = vpack.c.bf16 %v882, %v881
        %v904 = vpack.c.bf16 %v884, %v883
        %v905 = vpack.c.bf16 %v886, %v885
        %v906 = vpack.c.bf16 %v888, %v887
        %v907 = vpack.c.bf16 %v890, %v889
        %v908 = vpack.c.bf16 %v892, %v891
        %v925 = vunpack.c.l.b16 %v893
        %v926 = vunpack.c.h.b16 %v893
        %v927 = vunpack.c.l.b16 %v894
        %v928 = vunpack.c.h.b16 %v894
        %v929 = vunpack.c.l.b16 %v895
        %v930 = vunpack.c.h.b16 %v895
        %v931 = vunpack.c.l.b16 %v896
        %v932 = vunpack.c.h.b16 %v896
        %v933 = vunpack.c.l.b16 %v897
        %v934 = vunpack.c.h.b16 %v897
        %v935 = vunpack.c.l.b16 %v898
        %v936 = vunpack.c.h.b16 %v898
        %v937 = vunpack.c.l.b16 %v899
        %v938 = vunpack.c.h.b16 %v899
        %v939 = vunpack.c.l.b16 %v900
        %v940 = vunpack.c.h.b16 %v900
        %v941 = vunpack.c.l.b16 %v901
        %v942 = vunpack.c.h.b16 %v901
        %v943 = vunpack.c.l.b16 %v902
        %v944 = vunpack.c.h.b16 %v902
        %v945 = vunpack.c.l.b16 %v903
        %v946 = vunpack.c.h.b16 %v903
        %v947 = vunpack.c.l.b16 %v904
        %v948 = vunpack.c.h.b16 %v904
        %v949 = vunpack.c.l.b16 %v905
        %v950 = vunpack.c.h.b16 %v905
        %v951 = vunpack.c.l.b16 %v906
        %v952 = vunpack.c.h.b16 %v906
        %v953 = vunpack.c.l.b16 %v907
        %v954 = vunpack.c.h.b16 %v907
        %v955 = vunpack.c.l.b16 %v908
        %v956 = vunpack.c.h.b16 %v908
        %v957 = vpack.c.b16 %v925, %v925
        %v958 = vpack.c.b16 %v926, %v926
        %v959 = vpack.c.b16 %v927, %v927
        %v960 = vpack.c.b16 %v928, %v928
        %v961 = vpack.c.b16 %v929, %v929
        %v962 = vpack.c.b16 %v930, %v930
        %v963 = vpack.c.b16 %v931, %v931
        %v964 = vpack.c.b16 %v932, %v932
        %v965 = vpack.c.b16 %v933, %v933
        %v966 = vpack.c.b16 %v934, %v934
        %v967 = vpack.c.b16 %v935, %v935
        %v968 = vpack.c.b16 %v936, %v936
        %v969 = vpack.c.b16 %v937, %v937
        %v970 = vpack.c.b16 %v938, %v938
        %v971 = vpack.c.b16 %v939, %v939
        %v972 = vpack.c.b16 %v940, %v940
        %v973 = vpack.c.b16 %v941, %v941
        %v974 = vpack.c.b16 %v942, %v942
        %v975 = vpack.c.b16 %v943, %v943
        %v976 = vpack.c.b16 %v944, %v944
        %v977 = vpack.c.b16 %v945, %v945
        %v978 = vpack.c.b16 %v946, %v946
        %v979 = vpack.c.b16 %v947, %v947
        %v980 = vpack.c.b16 %v948, %v948
        %v981 = vpack.c.b16 %v949, %v949
        %v982 = vpack.c.b16 %v950, %v950
        %v983 = vpack.c.b16 %v951, %v951
        %v984 = vpack.c.b16 %v952, %v952
        %v985 = vpack.c.b16 %v953, %v953
        %v986 = vpack.c.b16 %v954, %v954
        %v987 = vpack.c.b16 %v955, %v955
        %v988 = vpack.c.b16 %v956, %v956
        %1021 = vst [vmem:[#allocation2 + $0xc] sm:$0xf] %v957
        %1022 = vst [vmem:[#allocation2 + $0x30] sm:$0xf] %v958
        %1023 = vst [vmem:[#allocation2 + $0x54] sm:$0xf] %v959
        %1024 = vst [vmem:[#allocation2 + $0x78] sm:$0xf] %v960
        %1025 = vst [vmem:[#allocation2 + $0x9c] sm:$0xf] %v961
        %1026 = vst [vmem:[#allocation2 + $0xc0] sm:$0xf] %v962
        %1027 = vst [vmem:[#allocation2 + $0xe4] sm:$0xf] %v963
        %1028 = vst [vmem:[#allocation2 + $0x108] sm:$0xf] %v964
        %1029 = vst [vmem:[#allocation2 + $0x12c] sm:$0xf] %v965
        %1030 = vst [vmem:[#allocation2 + $0x150] sm:$0xf] %v966
        %1031 = vst [vmem:[#allocation2 + $0x174] sm:$0xf] %v967
        %1032 = vst [vmem:[#allocation2 + $0x198] sm:$0xf] %v968
        %1033 = vst [vmem:[#allocation2 + $0x1bc] sm:$0xf] %v969
        %1034 = vst [vmem:[#allocation2 + $0x1e0] sm:$0xf] %v970
        %1035 = vst [vmem:[#allocation2 + $0x204] sm:$0xf] %v971
        %1036 = vst [vmem:[#allocation2 + $0x228] sm:$0xf] %v972
        %1037 = vst [vmem:[#allocation2 + $0x24c] sm:$0xf] %v973
        %1038 = vst [vmem:[#allocation2 + $0x270] sm:$0xf] %v974
        %1039 = vst [vmem:[#allocation2 + $0x294] sm:$0xf] %v975
        %1040 = vst [vmem:[#allocation2 + $0x2b8] sm:$0xf] %v976
        %1041 = vst [vmem:[#allocation2 + $0x2dc] sm:$0xf] %v977
        %1042 = vst [vmem:[#allocation2 + $0x300] sm:$0xf] %v978
        %1043 = vst [vmem:[#allocation2 + $0x324] sm:$0xf] %v979
        %1044 = vst [vmem:[#allocation2 + $0x348] sm:$0xf] %v980
        %1045 = vst [vmem:[#allocation2 + $0x36c] sm:$0xf] %v981
        %1046 = vst [vmem:[#allocation2 + $0x390] sm:$0xf] %v982
        %1047 = vst [vmem:[#allocation2 + $0x3b4] sm:$0xf] %v983
        %1048 = vst [vmem:[#allocation2 + $0x3d8] sm:$0xf] %v984
        %1049 = vst [vmem:[#allocation2 + $0x3fc] sm:$0xf] %v985
        %1050 = vst [vmem:[#allocation2 + $0x420] sm:$0xf] %v986
        %1051 = vst [vmem:[#allocation2 + $0x444] sm:$0xf] %v987
        %1052 = vst [vmem:[#allocation2 + $0x468] sm:$0xf] %v988
        %v1053 = vld [vmem:[%s860 + $0x1] sm:$0xff]
        %v1054 = vld [vmem:[%s860 + $0x9] sm:$0xff]
        %v1055 = vld [vmem:[%s860 + $0x19] sm:$0xff]
        %v1056 = vld [vmem:[%s860 + $0x21] sm:$0xff]
        %v1057 = vld [vmem:[%s860 + $0x31] sm:$0xff]
        %v1058 = vld [vmem:[%s860 + $0x39] sm:$0xff]
        %v1059 = vld [vmem:[%s860 + $0x49] sm:$0xff]
        %v1060 = vld [vmem:[%s860 + $0x51] sm:$0xff]
        %v1061 = vld [vmem:[%s860 + $0x61] sm:$0xff]
        %v1062 = vld [vmem:[%s860 + $0x69] sm:$0xff]
        %v1063 = vld [vmem:[%s860 + $0x79] sm:$0xff]
        %v1064 = vld [vmem:[%s860 + $0x81] sm:$0xff]
        %v1065 = vld [vmem:[%s860 + $0x91] sm:$0xff]
        %v1066 = vld [vmem:[%s860 + $0x99] sm:$0xff]
        %v1067 = vld [vmem:[%s860 + $0xa9] sm:$0xff]
        %v1068 = vld [vmem:[%s860 + $0xb1] sm:$0xff]
        %v1069 = vld [vmem:[%s860 + $0xc1] sm:$0xff]
        %v1070 = vld [vmem:[%s860 + $0xc9] sm:$0xff]
        %v1071 = vld [vmem:[%s860 + $0xd9] sm:$0xff]
        %v1072 = vld [vmem:[%s860 + $0xe1] sm:$0xff]
        %v1073 = vld [vmem:[%s860 + $0xf1] sm:$0xff]
        %v1074 = vld [vmem:[%s860 + $0xf9] sm:$0xff]
        %v1075 = vld [vmem:[%s860 + $0x109] sm:$0xff]
        %v1076 = vld [vmem:[%s860 + $0x111] sm:$0xff]
        %v1077 = vld [vmem:[%s860 + $0x121] sm:$0xff]
        %v1078 = vld [vmem:[%s860 + $0x129] sm:$0xff]
        %v1079 = vld [vmem:[%s860 + $0x139] sm:$0xff]
        %v1080 = vld [vmem:[%s860 + $0x141] sm:$0xff]
        %v1081 = vld [vmem:[%s860 + $0x151] sm:$0xff]
        %v1082 = vld [vmem:[%s860 + $0x159] sm:$0xff]
        %v1083 = vld [vmem:[%s860 + $0x169] sm:$0xff]
        %v1084 = vld [vmem:[%s860 + $0x171] sm:$0xff]
        %v1085 = vpack.c.bf16 %v1054, %v1053
        %v1086 = vpack.c.bf16 %v1056, %v1055
        %v1087 = vpack.c.bf16 %v1058, %v1057
        %v1088 = vpack.c.bf16 %v1060, %v1059
        %v1089 = vpack.c.bf16 %v1062, %v1061
        %v1090 = vpack.c.bf16 %v1064, %v1063
        %v1091 = vpack.c.bf16 %v1066, %v1065
        %v1092 = vpack.c.bf16 %v1068, %v1067
        %v1093 = vpack.c.bf16 %v1070, %v1069
        %v1094 = vpack.c.bf16 %v1072, %v1071
        %v1095 = vpack.c.bf16 %v1074, %v1073
        %v1096 = vpack.c.bf16 %v1076, %v1075
        %v1097 = vpack.c.bf16 %v1078, %v1077
        %v1098 = vpack.c.bf16 %v1080, %v1079
        %v1099 = vpack.c.bf16 %v1082, %v1081
        %v1100 = vpack.c.bf16 %v1084, %v1083
        %v1117 = vunpack.c.l.b16 %v1085
        %v1118 = vunpack.c.h.b16 %v1085
        %v1119 = vunpack.c.l.b16 %v1086
        %v1120 = vunpack.c.h.b16 %v1086
        %v1121 = vunpack.c.l.b16 %v1087
        %v1122 = vunpack.c.h.b16 %v1087
        %v1123 = vunpack.c.l.b16 %v1088
        %v1124 = vunpack.c.h.b16 %v1088
        %v1125 = vunpack.c.l.b16 %v1089
        %v1126 = vunpack.c.h.b16 %v1089
        %v1127 = vunpack.c.l.b16 %v1090
        %v1128 = vunpack.c.h.b16 %v1090
        %v1129 = vunpack.c.l.b16 %v1091
        %v1130 = vunpack.c.h.b16 %v1091
        %v1131 = vunpack.c.l.b16 %v1092
        %v1132 = vunpack.c.h.b16 %v1092
        %v1133 = vunpack.c.l.b16 %v1093
        %v1134 = vunpack.c.h.b16 %v1093
        %v1135 = vunpack.c.l.b16 %v1094
        %v1136 = vunpack.c.h.b16 %v1094
        %v1137 = vunpack.c.l.b16 %v1095
        %v1138 = vunpack.c.h.b16 %v1095
        %v1139 = vunpack.c.l.b16 %v1096
        %v1140 = vunpack.c.h.b16 %v1096
        %v1141 = vunpack.c.l.b16 %v1097
        %v1142 = vunpack.c.h.b16 %v1097
        %v1143 = vunpack.c.l.b16 %v1098
        %v1144 = vunpack.c.h.b16 %v1098
        %v1145 = vunpack.c.l.b16 %v1099
        %v1146 = vunpack.c.h.b16 %v1099
        %v1147 = vunpack.c.l.b16 %v1100
        %v1148 = vunpack.c.h.b16 %v1100
        %v1149 = vpack.c.b16 %v1117, %v1117
        %v1150 = vpack.c.b16 %v1118, %v1118
        %v1151 = vpack.c.b16 %v1119, %v1119
        %v1152 = vpack.c.b16 %v1120, %v1120
        %v1153 = vpack.c.b16 %v1121, %v1121
        %v1154 = vpack.c.b16 %v1122, %v1122
        %v1155 = vpack.c.b16 %v1123, %v1123
        %v1156 = vpack.c.b16 %v1124, %v1124
        %v1157 = vpack.c.b16 %v1125, %v1125
        %v1158 = vpack.c.b16 %v1126, %v1126
        %v1159 = vpack.c.b16 %v1127, %v1127
        %v1160 = vpack.c.b16 %v1128, %v1128
        %v1161 = vpack.c.b16 %v1129, %v1129
        %v1162 = vpack.c.b16 %v1130, %v1130
        %v1163 = vpack.c.b16 %v1131, %v1131
        %v1164 = vpack.c.b16 %v1132, %v1132
        %v1165 = vpack.c.b16 %v1133, %v1133
        %v1166 = vpack.c.b16 %v1134, %v1134
        %v1167 = vpack.c.b16 %v1135, %v1135
        %v1168 = vpack.c.b16 %v1136, %v1136
        %v1169 = vpack.c.b16 %v1137, %v1137
        %v1170 = vpack.c.b16 %v1138, %v1138
        %v1171 = vpack.c.b16 %v1139, %v1139
        %v1172 = vpack.c.b16 %v1140, %v1140
        %v1173 = vpack.c.b16 %v1141, %v1141
        %v1174 = vpack.c.b16 %v1142, %v1142
        %v1175 = vpack.c.b16 %v1143, %v1143
        %v1176 = vpack.c.b16 %v1144, %v1144
        %v1177 = vpack.c.b16 %v1145, %v1145
        %v1178 = vpack.c.b16 %v1146, %v1146
        %v1179 = vpack.c.b16 %v1147, %v1147
        %v1180 = vpack.c.b16 %v1148, %v1148
        %1213 = vst [vmem:[#allocation2 + $0x10] sm:$0xf] %v1149
        %1214 = vst [vmem:[#allocation2 + $0x34] sm:$0xf] %v1150
        %1215 = vst [vmem:[#allocation2 + $0x58] sm:$0xf] %v1151
        %1216 = vst [vmem:[#allocation2 + $0x7c] sm:$0xf] %v1152
        %1217 = vst [vmem:[#allocation2 + $0xa0] sm:$0xf] %v1153
        %1218 = vst [vmem:[#allocation2 + $0xc4] sm:$0xf] %v1154
        %1219 = vst [vmem:[#allocation2 + $0xe8] sm:$0xf] %v1155
        %1220 = vst [vmem:[#allocation2 + $0x10c] sm:$0xf] %v1156
        %1221 = vst [vmem:[#allocation2 + $0x130] sm:$0xf] %v1157
        %1222 = vst [vmem:[#allocation2 + $0x154] sm:$0xf] %v1158
        %1223 = vst [vmem:[#allocation2 + $0x178] sm:$0xf] %v1159
        %1224 = vst [vmem:[#allocation2 + $0x19c] sm:$0xf] %v1160
        %1225 = vst [vmem:[#allocation2 + $0x1c0] sm:$0xf] %v1161
        %1226 = vst [vmem:[#allocation2 + $0x1e4] sm:$0xf] %v1162
        %1227 = vst [vmem:[#allocation2 + $0x208] sm:$0xf] %v1163
        %1228 = vst [vmem:[#allocation2 + $0x22c] sm:$0xf] %v1164
        %1229 = vst [vmem:[#allocation2 + $0x250] sm:$0xf] %v1165
        %1230 = vst [vmem:[#allocation2 + $0x274] sm:$0xf] %v1166
        %1231 = vst [vmem:[#allocation2 + $0x298] sm:$0xf] %v1167
        %1232 = vst [vmem:[#allocation2 + $0x2bc] sm:$0xf] %v1168
        %1233 = vst [vmem:[#allocation2 + $0x2e0] sm:$0xf] %v1169
        %1234 = vst [vmem:[#allocation2 + $0x304] sm:$0xf] %v1170
        %1235 = vst [vmem:[#allocation2 + $0x328] sm:$0xf] %v1171
        %1236 = vst [vmem:[#allocation2 + $0x34c] sm:$0xf] %v1172
        %1237 = vst [vmem:[#allocation2 + $0x370] sm:$0xf] %v1173
        %1238 = vst [vmem:[#allocation2 + $0x394] sm:$0xf] %v1174
        %1239 = vst [vmem:[#allocation2 + $0x3b8] sm:$0xf] %v1175
        %1240 = vst [vmem:[#allocation2 + $0x3dc] sm:$0xf] %v1176
        %1241 = vst [vmem:[#allocation2 + $0x400] sm:$0xf] %v1177
        %1242 = vst [vmem:[#allocation2 + $0x424] sm:$0xf] %v1178
        %1243 = vst [vmem:[#allocation2 + $0x448] sm:$0xf] %v1179
        %1244 = vst [vmem:[#allocation2 + $0x46c] sm:$0xf] %v1180
        %v1245 = vld [vmem:[%s860 + $0x2] sm:$0xff]
        %v1246 = vld [vmem:[%s860 + $0xa] sm:$0xff]
        %v1247 = vld [vmem:[%s860 + $0x1a] sm:$0xff]
        %v1248 = vld [vmem:[%s860 + $0x22] sm:$0xff]
        %v1249 = vld [vmem:[%s860 + $0x32] sm:$0xff]
        %v1250 = vld [vmem:[%s860 + $0x3a] sm:$0xff]
        %v1251 = vld [vmem:[%s860 + $0x4a] sm:$0xff]
        %v1252 = vld [vmem:[%s860 + $0x52] sm:$0xff]
        %v1253 = vld [vmem:[%s860 + $0x62] sm:$0xff]
        %v1254 = vld [vmem:[%s860 + $0x6a] sm:$0xff]
        %v1255 = vld [vmem:[%s860 + $0x7a] sm:$0xff]
        %v1256 = vld [vmem:[%s860 + $0x82] sm:$0xff]
        %v1257 = vld [vmem:[%s860 + $0x92] sm:$0xff]
        %v1258 = vld [vmem:[%s860 + $0x9a] sm:$0xff]
        %v1259 = vld [vmem:[%s860 + $0xaa] sm:$0xff]
        %v1260 = vld [vmem:[%s860 + $0xb2] sm:$0xff]
        %v1261 = vld [vmem:[%s860 + $0xc2] sm:$0xff]
        %v1262 = vld [vmem:[%s860 + $0xca] sm:$0xff]
        %v1263 = vld [vmem:[%s860 + $0xda] sm:$0xff]
        %v1264 = vld [vmem:[%s860 + $0xe2] sm:$0xff]
        %v1265 = vld [vmem:[%s860 + $0xf2] sm:$0xff]
        %v1266 = vld [vmem:[%s860 + $0xfa] sm:$0xff]
        %v1267 = vld [vmem:[%s860 + $0x10a] sm:$0xff]
        %v1268 = vld [vmem:[%s860 + $0x112] sm:$0xff]
        %v1269 = vld [vmem:[%s860 + $0x122] sm:$0xff]
        %v1270 = vld [vmem:[%s860 + $0x12a] sm:$0xff]
        %v1271 = vld [vmem:[%s860 + $0x13a] sm:$0xff]
        %v1272 = vld [vmem:[%s860 + $0x142] sm:$0xff]
        %v1273 = vld [vmem:[%s860 + $0x152] sm:$0xff]
        %v1274 = vld [vmem:[%s860 + $0x15a] sm:$0xff]
        %v1275 = vld [vmem:[%s860 + $0x16a] sm:$0xff]
        %v1276 = vld [vmem:[%s860 + $0x172] sm:$0xff]
        %v1277 = vpack.c.bf16 %v1246, %v1245
        %v1278 = vpack.c.bf16 %v1248, %v1247
        %v1279 = vpack.c.bf16 %v1250, %v1249
        %v1280 = vpack.c.bf16 %v1252, %v1251
        %v1281 = vpack.c.bf16 %v1254, %v1253
        %v1282 = vpack.c.bf16 %v1256, %v1255
        %v1283 = vpack.c.bf16 %v1258, %v1257
        %v1284 = vpack.c.bf16 %v1260, %v1259
        %v1285 = vpack.c.bf16 %v1262, %v1261
        %v1286 = vpack.c.bf16 %v1264, %v1263
        %v1287 = vpack.c.bf16 %v1266, %v1265
        %v1288 = vpack.c.bf16 %v1268, %v1267
        %v1289 = vpack.c.bf16 %v1270, %v1269
        %v1290 = vpack.c.bf16 %v1272, %v1271
        %v1291 = vpack.c.bf16 %v1274, %v1273
        %v1292 = vpack.c.bf16 %v1276, %v1275
        %v1309 = vunpack.c.l.b16 %v1277
        %v1310 = vunpack.c.h.b16 %v1277
        %v1311 = vunpack.c.l.b16 %v1278
        %v1312 = vunpack.c.h.b16 %v1278
        %v1313 = vunpack.c.l.b16 %v1279
        %v1314 = vunpack.c.h.b16 %v1279
        %v1315 = vunpack.c.l.b16 %v1280
        %v1316 = vunpack.c.h.b16 %v1280
        %v1317 = vunpack.c.l.b16 %v1281
        %v1318 = vunpack.c.h.b16 %v1281
        %v1319 = vunpack.c.l.b16 %v1282
        %v1320 = vunpack.c.h.b16 %v1282
        %v1321 = vunpack.c.l.b16 %v1283
        %v1322 = vunpack.c.h.b16 %v1283
        %v1323 = vunpack.c.l.b16 %v1284
        %v1324 = vunpack.c.h.b16 %v1284
        %v1325 = vunpack.c.l.b16 %v1285
        %v1326 = vunpack.c.h.b16 %v1285
        %v1327 = vunpack.c.l.b16 %v1286
        %v1328 = vunpack.c.h.b16 %v1286
        %v1329 = vunpack.c.l.b16 %v1287
        %v1330 = vunpack.c.h.b16 %v1287
        %v1331 = vunpack.c.l.b16 %v1288
        %v1332 = vunpack.c.h.b16 %v1288
        %v1333 = vunpack.c.l.b16 %v1289
        %v1334 = vunpack.c.h.b16 %v1289
        %v1335 = vunpack.c.l.b16 %v1290
        %v1336 = vunpack.c.h.b16 %v1290
        %v1337 = vunpack.c.l.b16 %v1291
        %v1338 = vunpack.c.h.b16 %v1291
        %v1339 = vunpack.c.l.b16 %v1292
        %v1340 = vunpack.c.h.b16 %v1292
        %v1341 = vpack.c.b16 %v1309, %v1309
        %v1342 = vpack.c.b16 %v1310, %v1310
        %v1343 = vpack.c.b16 %v1311, %v1311
        %v1344 = vpack.c.b16 %v1312, %v1312
        %v1345 = vpack.c.b16 %v1313, %v1313
        %v1346 = vpack.c.b16 %v1314, %v1314
        %v1347 = vpack.c.b16 %v1315, %v1315
        %v1348 = vpack.c.b16 %v1316, %v1316
        %v1349 = vpack.c.b16 %v1317, %v1317
        %v1350 = vpack.c.b16 %v1318, %v1318
        %v1351 = vpack.c.b16 %v1319, %v1319
        %v1352 = vpack.c.b16 %v1320, %v1320
        %v1353 = vpack.c.b16 %v1321, %v1321
        %v1354 = vpack.c.b16 %v1322, %v1322
        %v1355 = vpack.c.b16 %v1323, %v1323
        %v1356 = vpack.c.b16 %v1324, %v1324
        %v1357 = vpack.c.b16 %v1325, %v1325
        %v1358 = vpack.c.b16 %v1326, %v1326
        %v1359 = vpack.c.b16 %v1327, %v1327
        %v1360 = vpack.c.b16 %v1328, %v1328
        %v1361 = vpack.c.b16 %v1329, %v1329
        %v1362 = vpack.c.b16 %v1330, %v1330
        %v1363 = vpack.c.b16 %v1331, %v1331
        %v1364 = vpack.c.b16 %v1332, %v1332
        %v1365 = vpack.c.b16 %v1333, %v1333
        %v1366 = vpack.c.b16 %v1334, %v1334
        %v1367 = vpack.c.b16 %v1335, %v1335
        %v1368 = vpack.c.b16 %v1336, %v1336
        %v1369 = vpack.c.b16 %v1337, %v1337
        %v1370 = vpack.c.b16 %v1338, %v1338
        %v1371 = vpack.c.b16 %v1339, %v1339
        %v1372 = vpack.c.b16 %v1340, %v1340
        %1405 = vst [vmem:[#allocation2 + $0x14] sm:$0xf] %v1341
        %1406 = vst [vmem:[#allocation2 + $0x38] sm:$0xf] %v1342
        %1407 = vst [vmem:[#allocation2 + $0x5c] sm:$0xf] %v1343
        %1408 = vst [vmem:[#allocation2 + $0x80] sm:$0xf] %v1344
        %1409 = vst [vmem:[#allocation2 + $0xa4] sm:$0xf] %v1345
        %1410 = vst [vmem:[#allocation2 + $0xc8] sm:$0xf] %v1346
        %1411 = vst [vmem:[#allocation2 + $0xec] sm:$0xf] %v1347
        %1412 = vst [vmem:[#allocation2 + $0x110] sm:$0xf] %v1348
        %1413 = vst [vmem:[#allocation2 + $0x134] sm:$0xf] %v1349
        %1414 = vst [vmem:[#allocation2 + $0x158] sm:$0xf] %v1350
        %1415 = vst [vmem:[#allocation2 + $0x17c] sm:$0xf] %v1351
        %1416 = vst [vmem:[#allocation2 + $0x1a0] sm:$0xf] %v1352
        %1417 = vst [vmem:[#allocation2 + $0x1c4] sm:$0xf] %v1353
        %1418 = vst [vmem:[#allocation2 + $0x1e8] sm:$0xf] %v1354
        %1419 = vst [vmem:[#allocation2 + $0x20c] sm:$0xf] %v1355
        %1420 = vst [vmem:[#allocation2 + $0x230] sm:$0xf] %v1356
        %1421 = vst [vmem:[#allocation2 + $0x254] sm:$0xf] %v1357
        %1422 = vst [vmem:[#allocation2 + $0x278] sm:$0xf] %v1358
        %1423 = vst [vmem:[#allocation2 + $0x29c] sm:$0xf] %v1359
        %1424 = vst [vmem:[#allocation2 + $0x2c0] sm:$0xf] %v1360
        %1425 = vst [vmem:[#allocation2 + $0x2e4] sm:$0xf] %v1361
        %1426 = vst [vmem:[#allocation2 + $0x308] sm:$0xf] %v1362
        %1427 = vst [vmem:[#allocation2 + $0x32c] sm:$0xf] %v1363
        %1428 = vst [vmem:[#allocation2 + $0x350] sm:$0xf] %v1364
        %1429 = vst [vmem:[#allocation2 + $0x374] sm:$0xf] %v1365
        %1430 = vst [vmem:[#allocation2 + $0x398] sm:$0xf] %v1366
        %1431 = vst [vmem:[#allocation2 + $0x3bc] sm:$0xf] %v1367
        %1432 = vst [vmem:[#allocation2 + $0x3e0] sm:$0xf] %v1368
        %1433 = vst [vmem:[#allocation2 + $0x404] sm:$0xf] %v1369
        %1434 = vst [vmem:[#allocation2 + $0x428] sm:$0xf] %v1370
        %1435 = vst [vmem:[#allocation2 + $0x44c] sm:$0xf] %v1371
        %1436 = vst [vmem:[#allocation2 + $0x470] sm:$0xf] %v1372
        %s1437 = scalar_lea.vmem %s280, 48
        %v1438 = vld [vmem:[%s1437] sm:$0xff]
        %v1439 = vld [vmem:[%s1437 + $0x8] sm:$0xff]
        %v1440 = vld [vmem:[%s1437 + $0x18] sm:$0xff]
        %v1441 = vld [vmem:[%s1437 + $0x20] sm:$0xff]
        %v1442 = vld [vmem:[%s1437 + $0x30] sm:$0xff]
        %v1443 = vld [vmem:[%s1437 + $0x38] sm:$0xff]
        %v1444 = vld [vmem:[%s1437 + $0x48] sm:$0xff]
        %v1445 = vld [vmem:[%s1437 + $0x50] sm:$0xff]
        %v1446 = vld [vmem:[%s1437 + $0x60] sm:$0xff]
        %v1447 = vld [vmem:[%s1437 + $0x68] sm:$0xff]
        %v1448 = vld [vmem:[%s1437 + $0x78] sm:$0xff]
        %v1449 = vld [vmem:[%s1437 + $0x80] sm:$0xff]
        %v1450 = vld [vmem:[%s1437 + $0x90] sm:$0xff]
        %v1451 = vld [vmem:[%s1437 + $0x98] sm:$0xff]
        %v1452 = vld [vmem:[%s1437 + $0xa8] sm:$0xff]
        %v1453 = vld [vmem:[%s1437 + $0xb0] sm:$0xff]
        %v1454 = vld [vmem:[%s1437 + $0xc0] sm:$0xff]
        %v1455 = vld [vmem:[%s1437 + $0xc8] sm:$0xff]
        %v1456 = vld [vmem:[%s1437 + $0xd8] sm:$0xff]
        %v1457 = vld [vmem:[%s1437 + $0xe0] sm:$0xff]
        %v1458 = vld [vmem:[%s1437 + $0xf0] sm:$0xff]
        %v1459 = vld [vmem:[%s1437 + $0xf8] sm:$0xff]
        %v1460 = vld [vmem:[%s1437 + $0x108] sm:$0xff]
        %v1461 = vld [vmem:[%s1437 + $0x110] sm:$0xff]
        %v1462 = vld [vmem:[%s1437 + $0x120] sm:$0xff]
        %v1463 = vld [vmem:[%s1437 + $0x128] sm:$0xff]
        %v1464 = vld [vmem:[%s1437 + $0x138] sm:$0xff]
        %v1465 = vld [vmem:[%s1437 + $0x140] sm:$0xff]
        %v1466 = vld [vmem:[%s1437 + $0x150] sm:$0xff]
        %v1467 = vld [vmem:[%s1437 + $0x158] sm:$0xff]
        %v1468 = vld [vmem:[%s1437 + $0x168] sm:$0xff]
        %v1469 = vld [vmem:[%s1437 + $0x170] sm:$0xff]
        %v1470 = vpack.c.bf16 %v1439, %v1438
        %v1471 = vpack.c.bf16 %v1441, %v1440
        %v1472 = vpack.c.bf16 %v1443, %v1442
        %v1473 = vpack.c.bf16 %v1445, %v1444
        %v1474 = vpack.c.bf16 %v1447, %v1446
        %v1475 = vpack.c.bf16 %v1449, %v1448
        %v1476 = vpack.c.bf16 %v1451, %v1450
        %v1477 = vpack.c.bf16 %v1453, %v1452
        %v1478 = vpack.c.bf16 %v1455, %v1454
        %v1479 = vpack.c.bf16 %v1457, %v1456
        %v1480 = vpack.c.bf16 %v1459, %v1458
        %v1481 = vpack.c.bf16 %v1461, %v1460
        %v1482 = vpack.c.bf16 %v1463, %v1462
        %v1483 = vpack.c.bf16 %v1465, %v1464
        %v1484 = vpack.c.bf16 %v1467, %v1466
        %v1485 = vpack.c.bf16 %v1469, %v1468
        %v1502 = vunpack.c.l.b16 %v1470
        %v1503 = vunpack.c.h.b16 %v1470
        %v1504 = vunpack.c.l.b16 %v1471
        %v1505 = vunpack.c.h.b16 %v1471
        %v1506 = vunpack.c.l.b16 %v1472
        %v1507 = vunpack.c.h.b16 %v1472
        %v1508 = vunpack.c.l.b16 %v1473
        %v1509 = vunpack.c.h.b16 %v1473
        %v1510 = vunpack.c.l.b16 %v1474
        %v1511 = vunpack.c.h.b16 %v1474
        %v1512 = vunpack.c.l.b16 %v1475
        %v1513 = vunpack.c.h.b16 %v1475
        %v1514 = vunpack.c.l.b16 %v1476
        %v1515 = vunpack.c.h.b16 %v1476
        %v1516 = vunpack.c.l.b16 %v1477
        %v1517 = vunpack.c.h.b16 %v1477
        %v1518 = vunpack.c.l.b16 %v1478
        %v1519 = vunpack.c.h.b16 %v1478
        %v1520 = vunpack.c.l.b16 %v1479
        %v1521 = vunpack.c.h.b16 %v1479
        %v1522 = vunpack.c.l.b16 %v1480
        %v1523 = vunpack.c.h.b16 %v1480
        %v1524 = vunpack.c.l.b16 %v1481
        %v1525 = vunpack.c.h.b16 %v1481
        %v1526 = vunpack.c.l.b16 %v1482
        %v1527 = vunpack.c.h.b16 %v1482
        %v1528 = vunpack.c.l.b16 %v1483
        %v1529 = vunpack.c.h.b16 %v1483
        %v1530 = vunpack.c.l.b16 %v1484
        %v1531 = vunpack.c.h.b16 %v1484
        %v1532 = vunpack.c.l.b16 %v1485
        %v1533 = vunpack.c.h.b16 %v1485
        %v1534 = vpack.c.b16 %v1502, %v1502
        %v1535 = vpack.c.b16 %v1503, %v1503
        %v1536 = vpack.c.b16 %v1504, %v1504
        %v1537 = vpack.c.b16 %v1505, %v1505
        %v1538 = vpack.c.b16 %v1506, %v1506
        %v1539 = vpack.c.b16 %v1507, %v1507
        %v1540 = vpack.c.b16 %v1508, %v1508
        %v1541 = vpack.c.b16 %v1509, %v1509
        %v1542 = vpack.c.b16 %v1510, %v1510
        %v1543 = vpack.c.b16 %v1511, %v1511
        %v1544 = vpack.c.b16 %v1512, %v1512
        %v1545 = vpack.c.b16 %v1513, %v1513
        %v1546 = vpack.c.b16 %v1514, %v1514
        %v1547 = vpack.c.b16 %v1515, %v1515
        %v1548 = vpack.c.b16 %v1516, %v1516
        %v1549 = vpack.c.b16 %v1517, %v1517
        %v1550 = vpack.c.b16 %v1518, %v1518
        %v1551 = vpack.c.b16 %v1519, %v1519
        %v1552 = vpack.c.b16 %v1520, %v1520
        %v1553 = vpack.c.b16 %v1521, %v1521
        %v1554 = vpack.c.b16 %v1522, %v1522
        %v1555 = vpack.c.b16 %v1523, %v1523
        %v1556 = vpack.c.b16 %v1524, %v1524
        %v1557 = vpack.c.b16 %v1525, %v1525
        %v1558 = vpack.c.b16 %v1526, %v1526
        %v1559 = vpack.c.b16 %v1527, %v1527
        %v1560 = vpack.c.b16 %v1528, %v1528
        %v1561 = vpack.c.b16 %v1529, %v1529
        %v1562 = vpack.c.b16 %v1530, %v1530
        %v1563 = vpack.c.b16 %v1531, %v1531
        %v1564 = vpack.c.b16 %v1532, %v1532
        %v1565 = vpack.c.b16 %v1533, %v1533
        %1598 = vst [vmem:[#allocation2 + $0x18] sm:$0xf] %v1534
        %1599 = vst [vmem:[#allocation2 + $0x3c] sm:$0xf] %v1535
        %1600 = vst [vmem:[#allocation2 + $0x60] sm:$0xf] %v1536
        %1601 = vst [vmem:[#allocation2 + $0x84] sm:$0xf] %v1537
        %1602 = vst [vmem:[#allocation2 + $0xa8] sm:$0xf] %v1538
        %1603 = vst [vmem:[#allocation2 + $0xcc] sm:$0xf] %v1539
        %1604 = vst [vmem:[#allocation2 + $0xf0] sm:$0xf] %v1540
        %1605 = vst [vmem:[#allocation2 + $0x114] sm:$0xf] %v1541
        %1606 = vst [vmem:[#allocation2 + $0x138] sm:$0xf] %v1542
        %1607 = vst [vmem:[#allocation2 + $0x15c] sm:$0xf] %v1543
        %1608 = vst [vmem:[#allocation2 + $0x180] sm:$0xf] %v1544
        %1609 = vst [vmem:[#allocation2 + $0x1a4] sm:$0xf] %v1545
        %1610 = vst [vmem:[#allocation2 + $0x1c8] sm:$0xf] %v1546
        %1611 = vst [vmem:[#allocation2 + $0x1ec] sm:$0xf] %v1547
        %1612 = vst [vmem:[#allocation2 + $0x210] sm:$0xf] %v1548
        %1613 = vst [vmem:[#allocation2 + $0x234] sm:$0xf] %v1549
        %1614 = vst [vmem:[#allocation2 + $0x258] sm:$0xf] %v1550
        %1615 = vst [vmem:[#allocation2 + $0x27c] sm:$0xf] %v1551
        %1616 = vst [vmem:[#allocation2 + $0x2a0] sm:$0xf] %v1552
        %1617 = vst [vmem:[#allocation2 + $0x2c4] sm:$0xf] %v1553
        %1618 = vst [vmem:[#allocation2 + $0x2e8] sm:$0xf] %v1554
        %1619 = vst [vmem:[#allocation2 + $0x30c] sm:$0xf] %v1555
        %1620 = vst [vmem:[#allocation2 + $0x330] sm:$0xf] %v1556
        %1621 = vst [vmem:[#allocation2 + $0x354] sm:$0xf] %v1557
        %1622 = vst [vmem:[#allocation2 + $0x378] sm:$0xf] %v1558
        %1623 = vst [vmem:[#allocation2 + $0x39c] sm:$0xf] %v1559
        %1624 = vst [vmem:[#allocation2 + $0x3c0] sm:$0xf] %v1560
        %1625 = vst [vmem:[#allocation2 + $0x3e4] sm:$0xf] %v1561
        %1626 = vst [vmem:[#allocation2 + $0x408] sm:$0xf] %v1562
        %1627 = vst [vmem:[#allocation2 + $0x42c] sm:$0xf] %v1563
        %1628 = vst [vmem:[#allocation2 + $0x450] sm:$0xf] %v1564
        %1629 = vst [vmem:[#allocation2 + $0x474] sm:$0xf] %v1565
        %v1630 = vld [vmem:[%s1437 + $0x1] sm:$0xff]
        %v1631 = vld [vmem:[%s1437 + $0x9] sm:$0xff]
        %v1632 = vld [vmem:[%s1437 + $0x19] sm:$0xff]
        %v1633 = vld [vmem:[%s1437 + $0x21] sm:$0xff]
        %v1634 = vld [vmem:[%s1437 + $0x31] sm:$0xff]
        %v1635 = vld [vmem:[%s1437 + $0x39] sm:$0xff]
        %v1636 = vld [vmem:[%s1437 + $0x49] sm:$0xff]
        %v1637 = vld [vmem:[%s1437 + $0x51] sm:$0xff]
        %v1638 = vld [vmem:[%s1437 + $0x61] sm:$0xff]
        %v1639 = vld [vmem:[%s1437 + $0x69] sm:$0xff]
        %v1640 = vld [vmem:[%s1437 + $0x79] sm:$0xff]
        %v1641 = vld [vmem:[%s1437 + $0x81] sm:$0xff]
        %v1642 = vld [vmem:[%s1437 + $0x91] sm:$0xff]
        %v1643 = vld [vmem:[%s1437 + $0x99] sm:$0xff]
        %v1644 = vld [vmem:[%s1437 + $0xa9] sm:$0xff]
        %v1645 = vld [vmem:[%s1437 + $0xb1] sm:$0xff]
        %v1646 = vld [vmem:[%s1437 + $0xc1] sm:$0xff]
        %v1647 = vld [vmem:[%s1437 + $0xc9] sm:$0xff]
        %v1648 = vld [vmem:[%s1437 + $0xd9] sm:$0xff]
        %v1649 = vld [vmem:[%s1437 + $0xe1] sm:$0xff]
        %v1650 = vld [vmem:[%s1437 + $0xf1] sm:$0xff]
        %v1651 = vld [vmem:[%s1437 + $0xf9] sm:$0xff]
        %v1652 = vld [vmem:[%s1437 + $0x109] sm:$0xff]
        %v1653 = vld [vmem:[%s1437 + $0x111] sm:$0xff]
        %v1654 = vld [vmem:[%s1437 + $0x121] sm:$0xff]
        %v1655 = vld [vmem:[%s1437 + $0x129] sm:$0xff]
        %v1656 = vld [vmem:[%s1437 + $0x139] sm:$0xff]
        %v1657 = vld [vmem:[%s1437 + $0x141] sm:$0xff]
        %v1658 = vld [vmem:[%s1437 + $0x151] sm:$0xff]
        %v1659 = vld [vmem:[%s1437 + $0x159] sm:$0xff]
        %v1660 = vld [vmem:[%s1437 + $0x169] sm:$0xff]
        %v1661 = vld [vmem:[%s1437 + $0x171] sm:$0xff]
        %v1662 = vpack.c.bf16 %v1631, %v1630
        %v1663 = vpack.c.bf16 %v1633, %v1632
        %v1664 = vpack.c.bf16 %v1635, %v1634
        %v1665 = vpack.c.bf16 %v1637, %v1636
        %v1666 = vpack.c.bf16 %v1639, %v1638
        %v1667 = vpack.c.bf16 %v1641, %v1640
        %v1668 = vpack.c.bf16 %v1643, %v1642
        %v1669 = vpack.c.bf16 %v1645, %v1644
        %v1670 = vpack.c.bf16 %v1647, %v1646
        %v1671 = vpack.c.bf16 %v1649, %v1648
        %v1672 = vpack.c.bf16 %v1651, %v1650
        %v1673 = vpack.c.bf16 %v1653, %v1652
        %v1674 = vpack.c.bf16 %v1655, %v1654
        %v1675 = vpack.c.bf16 %v1657, %v1656
        %v1676 = vpack.c.bf16 %v1659, %v1658
        %v1677 = vpack.c.bf16 %v1661, %v1660
        %v1694 = vunpack.c.l.b16 %v1662
        %v1695 = vunpack.c.h.b16 %v1662
        %v1696 = vunpack.c.l.b16 %v1663
        %v1697 = vunpack.c.h.b16 %v1663
        %v1698 = vunpack.c.l.b16 %v1664
        %v1699 = vunpack.c.h.b16 %v1664
        %v1700 = vunpack.c.l.b16 %v1665
        %v1701 = vunpack.c.h.b16 %v1665
        %v1702 = vunpack.c.l.b16 %v1666
        %v1703 = vunpack.c.h.b16 %v1666
        %v1704 = vunpack.c.l.b16 %v1667
        %v1705 = vunpack.c.h.b16 %v1667
        %v1706 = vunpack.c.l.b16 %v1668
        %v1707 = vunpack.c.h.b16 %v1668
        %v1708 = vunpack.c.l.b16 %v1669
        %v1709 = vunpack.c.h.b16 %v1669
        %v1710 = vunpack.c.l.b16 %v1670
        %v1711 = vunpack.c.h.b16 %v1670
        %v1712 = vunpack.c.l.b16 %v1671
        %v1713 = vunpack.c.h.b16 %v1671
        %v1714 = vunpack.c.l.b16 %v1672
        %v1715 = vunpack.c.h.b16 %v1672
        %v1716 = vunpack.c.l.b16 %v1673
        %v1717 = vunpack.c.h.b16 %v1673
        %v1718 = vunpack.c.l.b16 %v1674
        %v1719 = vunpack.c.h.b16 %v1674
        %v1720 = vunpack.c.l.b16 %v1675
        %v1721 = vunpack.c.h.b16 %v1675
        %v1722 = vunpack.c.l.b16 %v1676
        %v1723 = vunpack.c.h.b16 %v1676
        %v1724 = vunpack.c.l.b16 %v1677
        %v1725 = vunpack.c.h.b16 %v1677
        %v1726 = vpack.c.b16 %v1694, %v1694
        %v1727 = vpack.c.b16 %v1695, %v1695
        %v1728 = vpack.c.b16 %v1696, %v1696
        %v1729 = vpack.c.b16 %v1697, %v1697
        %v1730 = vpack.c.b16 %v1698, %v1698
        %v1731 = vpack.c.b16 %v1699, %v1699
        %v1732 = vpack.c.b16 %v1700, %v1700
        %v1733 = vpack.c.b16 %v1701, %v1701
        %v1734 = vpack.c.b16 %v1702, %v1702
        %v1735 = vpack.c.b16 %v1703, %v1703
        %v1736 = vpack.c.b16 %v1704, %v1704
        %v1737 = vpack.c.b16 %v1705, %v1705
        %v1738 = vpack.c.b16 %v1706, %v1706
        %v1739 = vpack.c.b16 %v1707, %v1707
        %v1740 = vpack.c.b16 %v1708, %v1708
        %v1741 = vpack.c.b16 %v1709, %v1709
        %v1742 = vpack.c.b16 %v1710, %v1710
        %v1743 = vpack.c.b16 %v1711, %v1711
        %v1744 = vpack.c.b16 %v1712, %v1712
        %v1745 = vpack.c.b16 %v1713, %v1713
        %v1746 = vpack.c.b16 %v1714, %v1714
        %v1747 = vpack.c.b16 %v1715, %v1715
        %v1748 = vpack.c.b16 %v1716, %v1716
        %v1749 = vpack.c.b16 %v1717, %v1717
        %v1750 = vpack.c.b16 %v1718, %v1718
        %v1751 = vpack.c.b16 %v1719, %v1719
        %v1752 = vpack.c.b16 %v1720, %v1720
        %v1753 = vpack.c.b16 %v1721, %v1721
        %v1754 = vpack.c.b16 %v1722, %v1722
        %v1755 = vpack.c.b16 %v1723, %v1723
        %v1756 = vpack.c.b16 %v1724, %v1724
        %v1757 = vpack.c.b16 %v1725, %v1725
        %1790 = vst [vmem:[#allocation2 + $0x1c] sm:$0xf] %v1726
        %1791 = vst [vmem:[#allocation2 + $0x40] sm:$0xf] %v1727
        %1792 = vst [vmem:[#allocation2 + $0x64] sm:$0xf] %v1728
        %1793 = vst [vmem:[#allocation2 + $0x88] sm:$0xf] %v1729
        %1794 = vst [vmem:[#allocation2 + $0xac] sm:$0xf] %v1730
        %1795 = vst [vmem:[#allocation2 + $0xd0] sm:$0xf] %v1731
        %1796 = vst [vmem:[#allocation2 + $0xf4] sm:$0xf] %v1732
        %1797 = vst [vmem:[#allocation2 + $0x118] sm:$0xf] %v1733
        %1798 = vst [vmem:[#allocation2 + $0x13c] sm:$0xf] %v1734
        %1799 = vst [vmem:[#allocation2 + $0x160] sm:$0xf] %v1735
        %1800 = vst [vmem:[#allocation2 + $0x184] sm:$0xf] %v1736
        %1801 = vst [vmem:[#allocation2 + $0x1a8] sm:$0xf] %v1737
        %1802 = vst [vmem:[#allocation2 + $0x1cc] sm:$0xf] %v1738
        %1803 = vst [vmem:[#allocation2 + $0x1f0] sm:$0xf] %v1739
        %1804 = vst [vmem:[#allocation2 + $0x214] sm:$0xf] %v1740
        %1805 = vst [vmem:[#allocation2 + $0x238] sm:$0xf] %v1741
        %1806 = vst [vmem:[#allocation2 + $0x25c] sm:$0xf] %v1742
        %1807 = vst [vmem:[#allocation2 + $0x280] sm:$0xf] %v1743
        %1808 = vst [vmem:[#allocation2 + $0x2a4] sm:$0xf] %v1744
        %1809 = vst [vmem:[#allocation2 + $0x2c8] sm:$0xf] %v1745
        %1810 = vst [vmem:[#allocation2 + $0x2ec] sm:$0xf] %v1746
        %1811 = vst [vmem:[#allocation2 + $0x310] sm:$0xf] %v1747
        %1812 = vst [vmem:[#allocation2 + $0x334] sm:$0xf] %v1748
        %1813 = vst [vmem:[#allocation2 + $0x358] sm:$0xf] %v1749
        %1814 = vst [vmem:[#allocation2 + $0x37c] sm:$0xf] %v1750
        %1815 = vst [vmem:[#allocation2 + $0x3a0] sm:$0xf] %v1751
        %1816 = vst [vmem:[#allocation2 + $0x3c4] sm:$0xf] %v1752
        %1817 = vst [vmem:[#allocation2 + $0x3e8] sm:$0xf] %v1753
        %1818 = vst [vmem:[#allocation2 + $0x40c] sm:$0xf] %v1754
        %1819 = vst [vmem:[#allocation2 + $0x430] sm:$0xf] %v1755
        %1820 = vst [vmem:[#allocation2 + $0x454] sm:$0xf] %v1756
        %1821 = vst [vmem:[#allocation2 + $0x478] sm:$0xf] %v1757
        %v1822 = vld [vmem:[%s1437 + $0x2] sm:$0xff]
        %v1823 = vld [vmem:[%s1437 + $0xa] sm:$0xff]
        %v1824 = vld [vmem:[%s1437 + $0x1a] sm:$0xff]
        %v1825 = vld [vmem:[%s1437 + $0x22] sm:$0xff]
        %v1826 = vld [vmem:[%s1437 + $0x32] sm:$0xff]
        %v1827 = vld [vmem:[%s1437 + $0x3a] sm:$0xff]
        %v1828 = vld [vmem:[%s1437 + $0x4a] sm:$0xff]
        %v1829 = vld [vmem:[%s1437 + $0x52] sm:$0xff]
        %v1830 = vld [vmem:[%s1437 + $0x62] sm:$0xff]
        %v1831 = vld [vmem:[%s1437 + $0x6a] sm:$0xff]
        %v1832 = vld [vmem:[%s1437 + $0x7a] sm:$0xff]
        %v1833 = vld [vmem:[%s1437 + $0x82] sm:$0xff]
        %v1834 = vld [vmem:[%s1437 + $0x92] sm:$0xff]
        %v1835 = vld [vmem:[%s1437 + $0x9a] sm:$0xff]
        %v1836 = vld [vmem:[%s1437 + $0xaa] sm:$0xff]
        %v1837 = vld [vmem:[%s1437 + $0xb2] sm:$0xff]
        %v1838 = vld [vmem:[%s1437 + $0xc2] sm:$0xff]
        %v1839 = vld [vmem:[%s1437 + $0xca] sm:$0xff]
        %v1840 = vld [vmem:[%s1437 + $0xda] sm:$0xff]
        %v1841 = vld [vmem:[%s1437 + $0xe2] sm:$0xff]
        %v1842 = vld [vmem:[%s1437 + $0xf2] sm:$0xff]
        %v1843 = vld [vmem:[%s1437 + $0xfa] sm:$0xff]
        %v1844 = vld [vmem:[%s1437 + $0x10a] sm:$0xff]
        %v1845 = vld [vmem:[%s1437 + $0x112] sm:$0xff]
        %v1846 = vld [vmem:[%s1437 + $0x122] sm:$0xff]
        %v1847 = vld [vmem:[%s1437 + $0x12a] sm:$0xff]
        %v1848 = vld [vmem:[%s1437 + $0x13a] sm:$0xff]
        %v1849 = vld [vmem:[%s1437 + $0x142] sm:$0xff]
        %v1850 = vld [vmem:[%s1437 + $0x152] sm:$0xff]
        %v1851 = vld [vmem:[%s1437 + $0x15a] sm:$0xff]
        %v1852 = vld [vmem:[%s1437 + $0x16a] sm:$0xff]
        %v1853 = vld [vmem:[%s1437 + $0x172] sm:$0xff]
        %v1854 = vpack.c.bf16 %v1823, %v1822
        %v1855 = vpack.c.bf16 %v1825, %v1824
        %v1856 = vpack.c.bf16 %v1827, %v1826
        %v1857 = vpack.c.bf16 %v1829, %v1828
        %v1858 = vpack.c.bf16 %v1831, %v1830
        %v1859 = vpack.c.bf16 %v1833, %v1832
        %v1860 = vpack.c.bf16 %v1835, %v1834
        %v1861 = vpack.c.bf16 %v1837, %v1836
        %v1862 = vpack.c.bf16 %v1839, %v1838
        %v1863 = vpack.c.bf16 %v1841, %v1840
        %v1864 = vpack.c.bf16 %v1843, %v1842
        %v1865 = vpack.c.bf16 %v1845, %v1844
        %v1866 = vpack.c.bf16 %v1847, %v1846
        %v1867 = vpack.c.bf16 %v1849, %v1848
        %v1868 = vpack.c.bf16 %v1851, %v1850
        %v1869 = vpack.c.bf16 %v1853, %v1852
        %v1886 = vunpack.c.l.b16 %v1854
        %v1887 = vunpack.c.h.b16 %v1854
        %v1888 = vunpack.c.l.b16 %v1855
        %v1889 = vunpack.c.h.b16 %v1855
        %v1890 = vunpack.c.l.b16 %v1856
        %v1891 = vunpack.c.h.b16 %v1856
        %v1892 = vunpack.c.l.b16 %v1857
        %v1893 = vunpack.c.h.b16 %v1857
        %v1894 = vunpack.c.l.b16 %v1858
        %v1895 = vunpack.c.h.b16 %v1858
        %v1896 = vunpack.c.l.b16 %v1859
        %v1897 = vunpack.c.h.b16 %v1859
        %v1898 = vunpack.c.l.b16 %v1860
        %v1899 = vunpack.c.h.b16 %v1860
        %v1900 = vunpack.c.l.b16 %v1861
        %v1901 = vunpack.c.h.b16 %v1861
        %v1902 = vunpack.c.l.b16 %v1862
        %v1903 = vunpack.c.h.b16 %v1862
        %v1904 = vunpack.c.l.b16 %v1863
        %v1905 = vunpack.c.h.b16 %v1863
        %v1906 = vunpack.c.l.b16 %v1864
        %v1907 = vunpack.c.h.b16 %v1864
        %v1908 = vunpack.c.l.b16 %v1865
        %v1909 = vunpack.c.h.b16 %v1865
        %v1910 = vunpack.c.l.b16 %v1866
        %v1911 = vunpack.c.h.b16 %v1866
        %v1912 = vunpack.c.l.b16 %v1867
        %v1913 = vunpack.c.h.b16 %v1867
        %v1914 = vunpack.c.l.b16 %v1868
        %v1915 = vunpack.c.h.b16 %v1868
        %v1916 = vunpack.c.l.b16 %v1869
        %v1917 = vunpack.c.h.b16 %v1869
        %v1918 = vpack.c.b16 %v1886, %v1886
        %v1919 = vpack.c.b16 %v1887, %v1887
        %v1920 = vpack.c.b16 %v1888, %v1888
        %v1921 = vpack.c.b16 %v1889, %v1889
        %v1922 = vpack.c.b16 %v1890, %v1890
        %v1923 = vpack.c.b16 %v1891, %v1891
        %v1924 = vpack.c.b16 %v1892, %v1892
        %v1925 = vpack.c.b16 %v1893, %v1893
        %v1926 = vpack.c.b16 %v1894, %v1894
        %v1927 = vpack.c.b16 %v1895, %v1895
        %v1928 = vpack.c.b16 %v1896, %v1896
        %v1929 = vpack.c.b16 %v1897, %v1897
        %v1930 = vpack.c.b16 %v1898, %v1898
        %v1931 = vpack.c.b16 %v1899, %v1899
        %v1932 = vpack.c.b16 %v1900, %v1900
        %v1933 = vpack.c.b16 %v1901, %v1901
        %v1934 = vpack.c.b16 %v1902, %v1902
        %v1935 = vpack.c.b16 %v1903, %v1903
        %v1936 = vpack.c.b16 %v1904, %v1904
        %v1937 = vpack.c.b16 %v1905, %v1905
        %v1938 = vpack.c.b16 %v1906, %v1906
        %v1939 = vpack.c.b16 %v1907, %v1907
        %v1940 = vpack.c.b16 %v1908, %v1908
        %v1941 = vpack.c.b16 %v1909, %v1909
        %v1942 = vpack.c.b16 %v1910, %v1910
        %v1943 = vpack.c.b16 %v1911, %v1911
        %v1944 = vpack.c.b16 %v1912, %v1912
        %v1945 = vpack.c.b16 %v1913, %v1913
        %v1946 = vpack.c.b16 %v1914, %v1914
        %v1947 = vpack.c.b16 %v1915, %v1915
        %v1948 = vpack.c.b16 %v1916, %v1916
        %v1949 = vpack.c.b16 %v1917, %v1917
        %1982 = vst [vmem:[#allocation2 + $0x20] sm:$0xf] %v1918
        %1983 = vst [vmem:[#allocation2 + $0x44] sm:$0xf] %v1919
        %1984 = vst [vmem:[#allocation2 + $0x68] sm:$0xf] %v1920
        %1985 = vst [vmem:[#allocation2 + $0x8c] sm:$0xf] %v1921
        %1986 = vst [vmem:[#allocation2 + $0xb0] sm:$0xf] %v1922
        %1987 = vst [vmem:[#allocation2 + $0xd4] sm:$0xf] %v1923
        %1988 = vst [vmem:[#allocation2 + $0xf8] sm:$0xf] %v1924
        %1989 = vst [vmem:[#allocation2 + $0x11c] sm:$0xf] %v1925
        %1990 = vst [vmem:[#allocation2 + $0x140] sm:$0xf] %v1926
        %1991 = vst [vmem:[#allocation2 + $0x164] sm:$0xf] %v1927
        %1992 = vst [vmem:[#allocation2 + $0x188] sm:$0xf] %v1928
        %1993 = vst [vmem:[#allocation2 + $0x1ac] sm:$0xf] %v1929
        %1994 = vst [vmem:[#allocation2 + $0x1d0] sm:$0xf] %v1930
        %1995 = vst [vmem:[#allocation2 + $0x1f4] sm:$0xf] %v1931
        %1996 = vst [vmem:[#allocation2 + $0x218] sm:$0xf] %v1932
        %1997 = vst [vmem:[#allocation2 + $0x23c] sm:$0xf] %v1933
        %1998 = vst [vmem:[#allocation2 + $0x260] sm:$0xf] %v1934
        %1999 = vst [vmem:[#allocation2 + $0x284] sm:$0xf] %v1935
        %2000 = vst [vmem:[#allocation2 + $0x2a8] sm:$0xf] %v1936
        %2001 = vst [vmem:[#allocation2 + $0x2cc] sm:$0xf] %v1937
        %2002 = vst [vmem:[#allocation2 + $0x2f0] sm:$0xf] %v1938
        %2003 = vst [vmem:[#allocation2 + $0x314] sm:$0xf] %v1939
        %2004 = vst [vmem:[#allocation2 + $0x338] sm:$0xf] %v1940
        %2005 = vst [vmem:[#allocation2 + $0x35c] sm:$0xf] %v1941
        %2006 = vst [vmem:[#allocation2 + $0x380] sm:$0xf] %v1942
        %2007 = vst [vmem:[#allocation2 + $0x3a4] sm:$0xf] %v1943
        %2008 = vst [vmem:[#allocation2 + $0x3c8] sm:$0xf] %v1944
        %2009 = vst [vmem:[#allocation2 + $0x3ec] sm:$0xf] %v1945
        %2010 = vst [vmem:[#allocation2 + $0x410] sm:$0xf] %v1946
        %2011 = vst [vmem:[#allocation2 + $0x434] sm:$0xf] %v1947
        %2012 = vst [vmem:[#allocation2 + $0x458] sm:$0xf] %v1948
        %2013 = vst [vmem:[#allocation2 + $0x47c] sm:$0xf] %v1949
        %v2014 = vld [vmem:[#allocation2] sm:$0xff]
        %v2015 = vld [vmem:[#allocation2 + $0x8] sm:$0xff]
        %v2016 = vld [vmem:[#allocation2 + $0x10] sm:$0xff]
        %v2017 = vld [vmem:[#allocation2 + $0x18] sm:$0xff]
        %v2018 = vld [vmem:[#allocation2 + $0x20] sm:$0xf]
        %v2019 = vld [vmem:[#allocation2 + $0x24] sm:$0xff]
        %v2020 = vld [vmem:[#allocation2 + $0x2c] sm:$0xff]
        %v2021 = vld [vmem:[#allocation2 + $0x34] sm:$0xff]
        %v2022 = vld [vmem:[#allocation2 + $0x3c] sm:$0xff]
        %v2023 = vld [vmem:[#allocation2 + $0x44] sm:$0xf]
        %v2024 = vld [vmem:[#allocation2 + $0x48] sm:$0xff]
        %v2025 = vld [vmem:[#allocation2 + $0x50] sm:$0xff]
        %v2026 = vld [vmem:[#allocation2 + $0x58] sm:$0xff]
        %v2027 = vld [vmem:[#allocation2 + $0x60] sm:$0xff]
        %v2028 = vld [vmem:[#allocation2 + $0x68] sm:$0xf]
        %v2029 = vld [vmem:[#allocation2 + $0x6c] sm:$0xff]
        %v2030 = vld [vmem:[#allocation2 + $0x74] sm:$0xff]
        %v2031 = vld [vmem:[#allocation2 + $0x7c] sm:$0xff]
        %v2032 = vld [vmem:[#allocation2 + $0x84] sm:$0xff]
        %v2033 = vld [vmem:[#allocation2 + $0x8c] sm:$0xf]
        %v2034 = vld [vmem:[#allocation2 + $0x90] sm:$0xff]
        %v2035 = vld [vmem:[#allocation2 + $0x98] sm:$0xff]
        %v2036 = vld [vmem:[#allocation2 + $0xa0] sm:$0xff]
        %v2037 = vld [vmem:[#allocation2 + $0xa8] sm:$0xff]
        %v2038 = vld [vmem:[#allocation2 + $0xb0] sm:$0xf]
        %v2039 = vld [vmem:[#allocation2 + $0xb4] sm:$0xff]
        %v2040 = vld [vmem:[#allocation2 + $0xbc] sm:$0xff]
        %v2041 = vld [vmem:[#allocation2 + $0xc4] sm:$0xff]
        %v2042 = vld [vmem:[#allocation2 + $0xcc] sm:$0xff]
        %v2043 = vld [vmem:[#allocation2 + $0xd4] sm:$0xf]
        %v2044 = vld [vmem:[#allocation2 + $0xd8] sm:$0xff]
        %v2045 = vld [vmem:[#allocation2 + $0xe0] sm:$0xff]
        %v2046 = vld [vmem:[#allocation2 + $0xe8] sm:$0xff]
        %v2047 = vld [vmem:[#allocation2 + $0xf0] sm:$0xff]
        %v2048 = vld [vmem:[#allocation2 + $0xf8] sm:$0xf]
        %v2049 = vld [vmem:[#allocation2 + $0xfc] sm:$0xff]
        %v2050 = vld [vmem:[#allocation2 + $0x104] sm:$0xff]
        %v2051 = vld [vmem:[#allocation2 + $0x10c] sm:$0xff]
        %v2052 = vld [vmem:[#allocation2 + $0x114] sm:$0xff]
        %v2053 = vld [vmem:[#allocation2 + $0x11c] sm:$0xf]
        %v2054 = vld [vmem:[#allocation2 + $0x120] sm:$0xff]
        %v2055 = vld [vmem:[#allocation2 + $0x128] sm:$0xff]
        %v2056 = vld [vmem:[#allocation2 + $0x130] sm:$0xff]
        %v2057 = vld [vmem:[#allocation2 + $0x138] sm:$0xff]
        %v2058 = vld [vmem:[#allocation2 + $0x140] sm:$0xf]
        %v2059 = vld [vmem:[#allocation2 + $0x144] sm:$0xff]
        %v2060 = vld [vmem:[#allocation2 + $0x14c] sm:$0xff]
        %v2061 = vld [vmem:[#allocation2 + $0x154] sm:$0xff]
        %v2062 = vld [vmem:[#allocation2 + $0x15c] sm:$0xff]
        %v2063 = vld [vmem:[#allocation2 + $0x164] sm:$0xf]
        %v2064 = vld [vmem:[#allocation2 + $0x168] sm:$0xff]
        %v2065 = vld [vmem:[#allocation2 + $0x170] sm:$0xff]
        %v2066 = vld [vmem:[#allocation2 + $0x178] sm:$0xff]
        %v2067 = vld [vmem:[#allocation2 + $0x180] sm:$0xff]
        %v2068 = vld [vmem:[#allocation2 + $0x188] sm:$0xf]
        %v2069 = vld [vmem:[#allocation2 + $0x18c] sm:$0xff]
        %v2070 = vld [vmem:[#allocation2 + $0x194] sm:$0xff]
        %v2071 = vld [vmem:[#allocation2 + $0x19c] sm:$0xff]
        %v2072 = vld [vmem:[#allocation2 + $0x1a4] sm:$0xff]
        %v2073 = vld [vmem:[#allocation2 + $0x1ac] sm:$0xf]
        %v2074 = vld [vmem:[#allocation2 + $0x1b0] sm:$0xff]
        %v2075 = vld [vmem:[#allocation2 + $0x1b8] sm:$0xff]
        %v2076 = vld [vmem:[#allocation2 + $0x1c0] sm:$0xff]
        %v2077 = vld [vmem:[#allocation2 + $0x1c8] sm:$0xff]
        %v2078 = vld [vmem:[#allocation2 + $0x1d0] sm:$0xf]
        %v2079 = vld [vmem:[#allocation2 + $0x1d4] sm:$0xff]
        %v2080 = vld [vmem:[#allocation2 + $0x1dc] sm:$0xff]
        %v2081 = vld [vmem:[#allocation2 + $0x1e4] sm:$0xff]
        %v2082 = vld [vmem:[#allocation2 + $0x1ec] sm:$0xff]
        %v2083 = vld [vmem:[#allocation2 + $0x1f4] sm:$0xf]
        %v2084 = vld [vmem:[#allocation2 + $0x1f8] sm:$0xff]
        %v2085 = vld [vmem:[#allocation2 + $0x200] sm:$0xff]
        %v2086 = vld [vmem:[#allocation2 + $0x208] sm:$0xff]
        %v2087 = vld [vmem:[#allocation2 + $0x210] sm:$0xff]
        %v2088 = vld [vmem:[#allocation2 + $0x218] sm:$0xf]
        %v2089 = vld [vmem:[#allocation2 + $0x21c] sm:$0xff]
        %v2090 = vld [vmem:[#allocation2 + $0x224] sm:$0xff]
        %v2091 = vld [vmem:[#allocation2 + $0x22c] sm:$0xff]
        %v2092 = vld [vmem:[#allocation2 + $0x234] sm:$0xff]
        %v2093 = vld [vmem:[#allocation2 + $0x23c] sm:$0xf]
        %v2094 = vld [vmem:[#allocation2 + $0x240] sm:$0xff]
        %v2095 = vld [vmem:[#allocation2 + $0x248] sm:$0xff]
        %v2096 = vld [vmem:[#allocation2 + $0x250] sm:$0xff]
        %v2097 = vld [vmem:[#allocation2 + $0x258] sm:$0xff]
        %v2098 = vld [vmem:[#allocation2 + $0x260] sm:$0xf]
        %v2099 = vld [vmem:[#allocation2 + $0x264] sm:$0xff]
        %v2100 = vld [vmem:[#allocation2 + $0x26c] sm:$0xff]
        %v2101 = vld [vmem:[#allocation2 + $0x274] sm:$0xff]
        %v2102 = vld [vmem:[#allocation2 + $0x27c] sm:$0xff]
        %v2103 = vld [vmem:[#allocation2 + $0x284] sm:$0xf]
        %v2104 = vld [vmem:[#allocation2 + $0x288] sm:$0xff]
        %v2105 = vld [vmem:[#allocation2 + $0x290] sm:$0xff]
        %v2106 = vld [vmem:[#allocation2 + $0x298] sm:$0xff]
        %v2107 = vld [vmem:[#allocation2 + $0x2a0] sm:$0xff]
        %v2108 = vld [vmem:[#allocation2 + $0x2a8] sm:$0xf]
        %v2109 = vld [vmem:[#allocation2 + $0x2ac] sm:$0xff]
        %v2110 = vld [vmem:[#allocation2 + $0x2b4] sm:$0xff]
        %v2111 = vld [vmem:[#allocation2 + $0x2bc] sm:$0xff]
        %v2112 = vld [vmem:[#allocation2 + $0x2c4] sm:$0xff]
        %v2113 = vld [vmem:[#allocation2 + $0x2cc] sm:$0xf]
        %v2114 = vld [vmem:[#allocation2 + $0x2d0] sm:$0xff]
        %v2115 = vld [vmem:[#allocation2 + $0x2d8] sm:$0xff]
        %v2116 = vld [vmem:[#allocation2 + $0x2e0] sm:$0xff]
        %v2117 = vld [vmem:[#allocation2 + $0x2e8] sm:$0xff]
        %v2118 = vld [vmem:[#allocation2 + $0x2f0] sm:$0xf]
        %v2119 = vld [vmem:[#allocation2 + $0x2f4] sm:$0xff]
        %v2120 = vld [vmem:[#allocation2 + $0x2fc] sm:$0xff]
        %v2121 = vld [vmem:[#allocation2 + $0x304] sm:$0xff]
        %v2122 = vld [vmem:[#allocation2 + $0x30c] sm:$0xff]
        %v2123 = vld [vmem:[#allocation2 + $0x314] sm:$0xf]
        %v2124 = vld [vmem:[#allocation2 + $0x318] sm:$0xff]
        %v2125 = vld [vmem:[#allocation2 + $0x320] sm:$0xff]
        %v2126 = vld [vmem:[#allocation2 + $0x328] sm:$0xff]
        %v2127 = vld [vmem:[#allocation2 + $0x330] sm:$0xff]
        %v2128 = vld [vmem:[#allocation2 + $0x338] sm:$0xf]
        %v2129 = vld [vmem:[#allocation2 + $0x33c] sm:$0xff]
        %v2130 = vld [vmem:[#allocation2 + $0x344] sm:$0xff]
        %v2131 = vld [vmem:[#allocation2 + $0x34c] sm:$0xff]
        %v2132 = vld [vmem:[#allocation2 + $0x354] sm:$0xff]
        %v2133 = vld [vmem:[#allocation2 + $0x35c] sm:$0xf]
        %v2134 = vld [vmem:[#allocation2 + $0x360] sm:$0xff]
        %v2135 = vld [vmem:[#allocation2 + $0x368] sm:$0xff]
        %v2136 = vld [vmem:[#allocation2 + $0x370] sm:$0xff]
        %v2137 = vld [vmem:[#allocation2 + $0x378] sm:$0xff]
        %v2138 = vld [vmem:[#allocation2 + $0x380] sm:$0xf]
        %v2139 = vld [vmem:[#allocation2 + $0x384] sm:$0xff]
        %v2140 = vld [vmem:[#allocation2 + $0x38c] sm:$0xff]
        %v2141 = vld [vmem:[#allocation2 + $0x394] sm:$0xff]
        %v2142 = vld [vmem:[#allocation2 + $0x39c] sm:$0xff]
        %v2143 = vld [vmem:[#allocation2 + $0x3a4] sm:$0xf]
        %v2144 = vld [vmem:[#allocation2 + $0x3a8] sm:$0xff]
        %v2145 = vld [vmem:[#allocation2 + $0x3b0] sm:$0xff]
        %v2146 = vld [vmem:[#allocation2 + $0x3b8] sm:$0xff]
        %v2147 = vld [vmem:[#allocation2 + $0x3c0] sm:$0xff]
        %v2148 = vld [vmem:[#allocation2 + $0x3c8] sm:$0xf]
        %v2149 = vld [vmem:[#allocation2 + $0x3cc] sm:$0xff]
        %v2150 = vld [vmem:[#allocation2 + $0x3d4] sm:$0xff]
        %v2151 = vld [vmem:[#allocation2 + $0x3dc] sm:$0xff]
        %v2152 = vld [vmem:[#allocation2 + $0x3e4] sm:$0xff]
        %v2153 = vld [vmem:[#allocation2 + $0x3ec] sm:$0xf]
        %v2154 = vld [vmem:[#allocation2 + $0x3f0] sm:$0xff]
        %v2155 = vld [vmem:[#allocation2 + $0x3f8] sm:$0xff]
        %v2156 = vld [vmem:[#allocation2 + $0x400] sm:$0xff]
        %v2157 = vld [vmem:[#allocation2 + $0x408] sm:$0xff]
        %v2158 = vld [vmem:[#allocation2 + $0x410] sm:$0xf]
        %v2159 = vld [vmem:[#allocation2 + $0x414] sm:$0xff]
        %v2160 = vld [vmem:[#allocation2 + $0x41c] sm:$0xff]
        %v2161 = vld [vmem:[#allocation2 + $0x424] sm:$0xff]
        %v2162 = vld [vmem:[#allocation2 + $0x42c] sm:$0xff]
        %v2163 = vld [vmem:[#allocation2 + $0x434] sm:$0xf]
        %v2164 = vld [vmem:[#allocation2 + $0x438] sm:$0xff]
        %v2165 = vld [vmem:[#allocation2 + $0x440] sm:$0xff]
        %v2166 = vld [vmem:[#allocation2 + $0x448] sm:$0xff]
        %v2167 = vld [vmem:[#allocation2 + $0x450] sm:$0xff]
        %v2168 = vld [vmem:[#allocation2 + $0x458] sm:$0xf]
        %v2169 = vld [vmem:[#allocation2 + $0x45c] sm:$0xff]
        %v2170 = vld [vmem:[#allocation2 + $0x464] sm:$0xff]
        %v2171 = vld [vmem:[#allocation2 + $0x46c] sm:$0xff]
        %v2172 = vld [vmem:[#allocation2 + $0x474] sm:$0xff]
        %v2173 = vld [vmem:[#allocation2 + $0x47c] sm:$0xf]
        %v2174 = vld [vmem:[%s1] sm:$0xf]
        %v2175 = vld [vmem:[%s1 + $0x4] sm:$0xf]
        %v2176 = vld [vmem:[%s1 + $0x8] sm:$0xf]
        %v2177 = vld [vmem:[%s1 + $0xc] sm:$0xf]
        %v2178 = vld [vmem:[%s1 + $0x10] sm:$0xf]
        %v2179 = vld [vmem:[%s1 + $0x14] sm:$0xf]
        %v2180 = vld [vmem:[%s1 + $0x18] sm:$0xf]
        %v2181 = vld [vmem:[%s1 + $0x1c] sm:$0xf]
        %v2182 = vld [vmem:[%s1 + $0x20] sm:$0xf]
        %v2183 = vld [vmem:[%s1 + $0x24] sm:$0xf]
        %v2184 = vld [vmem:[%s1 + $0x28] sm:$0xf]
        %v2185 = vld [vmem:[%s1 + $0x2c] sm:$0xf]
        %v2186 = vld [vmem:[%s1 + $0x30] sm:$0xf]
        %v2187 = vld [vmem:[%s1 + $0x34] sm:$0xf]
        %v2188 = vld [vmem:[%s1 + $0x38] sm:$0xf]
        %v2189 = vld [vmem:[%s1 + $0x3c] sm:$0xf]
        %v2190 = vld [vmem:[%s1 + $0x40] sm:$0xf]
        %v2191 = vld [vmem:[%s1 + $0x44] sm:$0xf]
        %v2192 = vld [vmem:[%s1 + $0x48] sm:$0xf]
        %v2193 = vld [vmem:[%s1 + $0x4c] sm:$0xf]
        %v2194 = vld [vmem:[%s1 + $0x50] sm:$0xf]
        %v2195 = vld [vmem:[%s1 + $0x54] sm:$0xf]
        %v2196 = vld [vmem:[%s1 + $0x58] sm:$0xf]
        %v2197 = vld [vmem:[%s1 + $0x5c] sm:$0xf]
        %v2198 = vld [vmem:[%s1 + $0x60] sm:$0xf]
        %v2199 = vld [vmem:[%s1 + $0x64] sm:$0xf]
        %v2200 = vld [vmem:[%s1 + $0x68] sm:$0xf]
        %v2201 = vld [vmem:[%s1 + $0x6c] sm:$0xf]
        %v2202 = vld [vmem:[%s1 + $0x70] sm:$0xf]
        %v2203 = vld [vmem:[%s1 + $0x74] sm:$0xf]
        %v2204 = vld [vmem:[%s1 + $0x78] sm:$0xf]
        %v2205 = vld [vmem:[%s1 + $0x7c] sm:$0xf]
        %v2206 = vld [vmem:[%s1 + $0x80] sm:$0xf]
        %v2207 = vld [vmem:[%s1 + $0x84] sm:$0xf]
        %v2208 = vld [vmem:[%s1 + $0x88] sm:$0xf]
        %v2209 = vld [vmem:[%s1 + $0x8c] sm:$0xf]
        %v2210 = vld [vmem:[%s1 + $0x90] sm:$0xf]
        %v2211 = vld [vmem:[%s1 + $0x94] sm:$0xf]
        %v2212 = vld [vmem:[%s1 + $0x98] sm:$0xf]
        %v2213 = vld [vmem:[%s1 + $0x9c] sm:$0xf]
        %v2214 = vld [vmem:[%s1 + $0xa0] sm:$0xf]
        %v2215 = vld [vmem:[%s1 + $0xa4] sm:$0xf]
        %v2216 = vld [vmem:[%s1 + $0xa8] sm:$0xf]
        %v2217 = vld [vmem:[%s1 + $0xac] sm:$0xf]
        %v2218 = vld [vmem:[%s1 + $0xb0] sm:$0xf]
        %v2219 = vld [vmem:[%s1 + $0xb4] sm:$0xf]
        %v2220 = vld [vmem:[%s1 + $0xb8] sm:$0xf]
        %v2221 = vld [vmem:[%s1 + $0xbc] sm:$0xf]
        %v2222 = vld [vmem:[%s1 + $0xc0] sm:$0xf]
        %v2223 = vld [vmem:[%s1 + $0xc4] sm:$0xf]
        %v2224 = vld [vmem:[%s1 + $0xc8] sm:$0xf]
        %v2225 = vld [vmem:[%s1 + $0xcc] sm:$0xf]
        %v2226 = vld [vmem:[%s1 + $0xd0] sm:$0xf]
        %v2227 = vld [vmem:[%s1 + $0xd4] sm:$0xf]
        %v2228 = vld [vmem:[%s1 + $0xd8] sm:$0xf]
        %v2229 = vld [vmem:[%s1 + $0xdc] sm:$0xf]
        %v2230 = vld [vmem:[%s1 + $0xe0] sm:$0xf]
        %v2231 = vld [vmem:[%s1 + $0xe4] sm:$0xf]
        %v2232 = vld [vmem:[%s1 + $0xe8] sm:$0xf]
        %v2233 = vld [vmem:[%s1 + $0xec] sm:$0xf]
        %v2234 = vld [vmem:[%s1 + $0xf0] sm:$0xf]
        %v2235 = vld [vmem:[%s1 + $0xf4] sm:$0xf]
        %v2236 = vld [vmem:[%s1 + $0xf8] sm:$0xf]
        %v2237 = vld [vmem:[%s1 + $0xfc] sm:$0xf]
        %v2238 = vld [vmem:[%s1 + $0x100] sm:$0xf]
        %v2239 = vld [vmem:[%s1 + $0x104] sm:$0xf]
        %v2240 = vld [vmem:[%s1 + $0x108] sm:$0xf]
        %v2241 = vld [vmem:[%s1 + $0x10c] sm:$0xf]
        %v2242 = vld [vmem:[%s1 + $0x110] sm:$0xf]
        %v2243 = vld [vmem:[%s1 + $0x114] sm:$0xf]
        %v2244 = vld [vmem:[%s1 + $0x118] sm:$0xf]
        %v2245 = vld [vmem:[%s1 + $0x11c] sm:$0xf]
        %v2246 = vld [vmem:[%s1 + $0x120] sm:$0xf]
        %v2247 = vld [vmem:[%s1 + $0x124] sm:$0xf]
        %v2248 = vld [vmem:[%s1 + $0x128] sm:$0xf]
        %v2249 = vld [vmem:[%s1 + $0x12c] sm:$0xf]
        %v2250 = vld [vmem:[%s1 + $0x130] sm:$0xf]
        %v2251 = vld [vmem:[%s1 + $0x134] sm:$0xf]
        %v2252 = vld [vmem:[%s1 + $0x138] sm:$0xf]
        %v2253 = vld [vmem:[%s1 + $0x13c] sm:$0xf]
        %v2254 = vld [vmem:[%s1 + $0x140] sm:$0xf]
        %v2255 = vld [vmem:[%s1 + $0x144] sm:$0xf]
        %v2256 = vld [vmem:[%s1 + $0x148] sm:$0xf]
        %v2257 = vld [vmem:[%s1 + $0x14c] sm:$0xf]
        %v2258 = vld [vmem:[%s1 + $0x150] sm:$0xf]
        %v2259 = vld [vmem:[%s1 + $0x154] sm:$0xf]
        %v2260 = vld [vmem:[%s1 + $0x158] sm:$0xf]
        %v2261 = vld [vmem:[%s1 + $0x15c] sm:$0xf]
        %v2262 = vld [vmem:[%s1 + $0x160] sm:$0xf]
        %v2263 = vld [vmem:[%s1 + $0x164] sm:$0xf]
        %v2264 = vld [vmem:[%s1 + $0x168] sm:$0xf]
        %v2265 = vld [vmem:[%s1 + $0x16c] sm:$0xf]
        %v2266 = vld [vmem:[%s1 + $0x170] sm:$0xf]
        %v2267 = vld [vmem:[%s1 + $0x174] sm:$0xf]
        %v2268 = vld [vmem:[%s1 + $0x178] sm:$0xf]
        %v2269 = vld [vmem:[%s1 + $0x17c] sm:$0xf]
        %v2270 = vld [vmem:[%s1 + $0x180] sm:$0xf]
        %v2271 = vld [vmem:[%s1 + $0x184] sm:$0xf]
        %v2272 = vld [vmem:[%s1 + $0x188] sm:$0xf]
        %v2273 = vld [vmem:[%s1 + $0x18c] sm:$0xf]
        %v2274 = vld [vmem:[%s1 + $0x190] sm:$0xf]
        %v2275 = vld [vmem:[%s1 + $0x194] sm:$0xf]
        %v2276 = vld [vmem:[%s1 + $0x198] sm:$0xf]
        %v2277 = vld [vmem:[%s1 + $0x19c] sm:$0xf]
        %v2278 = vld [vmem:[%s1 + $0x1a0] sm:$0xf]
        %v2279 = vld [vmem:[%s1 + $0x1a4] sm:$0xf]
        %v2280 = vld [vmem:[%s1 + $0x1a8] sm:$0xf]
        %v2281 = vld [vmem:[%s1 + $0x1ac] sm:$0xf]
        %v2282 = vld [vmem:[%s1 + $0x1b0] sm:$0xf]
        %v2283 = vld [vmem:[%s1 + $0x1b4] sm:$0xf]
        %v2284 = vld [vmem:[%s1 + $0x1b8] sm:$0xf]
        %v2285 = vld [vmem:[%s1 + $0x1bc] sm:$0xf]
        %v2286 = vld [vmem:[%s1 + $0x1c0] sm:$0xf]
        %v2287 = vld [vmem:[%s1 + $0x1c4] sm:$0xf]
        %v2288 = vld [vmem:[%s1 + $0x1c8] sm:$0xf]
        %v2289 = vld [vmem:[%s1 + $0x1cc] sm:$0xf]
        %v2290 = vld [vmem:[%s1 + $0x1d0] sm:$0xf]
        %v2291 = vld [vmem:[%s1 + $0x1d4] sm:$0xf]
        %v2292 = vld [vmem:[%s1 + $0x1d8] sm:$0xf]
        %v2293 = vld [vmem:[%s1 + $0x1dc] sm:$0xf]
        %v2294 = vld [vmem:[%s1 + $0x1e0] sm:$0xf]
        %v2295 = vld [vmem:[%s1 + $0x1e4] sm:$0xf]
        %v2296 = vld [vmem:[%s1 + $0x1e8] sm:$0xf]
        %v2297 = vld [vmem:[%s1 + $0x1ec] sm:$0xf]
        %v2298 = vld [vmem:[%s1 + $0x1f0] sm:$0xf]
        %v2299 = vld [vmem:[%s1 + $0x1f4] sm:$0xf]
        %v2300 = vld [vmem:[%s1 + $0x1f8] sm:$0xf]
        %v2301 = vld [vmem:[%s1 + $0x1fc] sm:$0xf]
        %v2302 = vld [vmem:[%s1 + $0x200] sm:$0xf]
        %v2303 = vld [vmem:[%s1 + $0x204] sm:$0xf]
        %v2304 = vld [vmem:[%s1 + $0x208] sm:$0xf]
        %v2305 = vld [vmem:[%s1 + $0x20c] sm:$0xf]
        %v2306 = vld [vmem:[%s1 + $0x210] sm:$0xf]
        %v2307 = vld [vmem:[%s1 + $0x214] sm:$0xf]
        %v2308 = vld [vmem:[%s1 + $0x218] sm:$0xf]
        %v2309 = vld [vmem:[%s1 + $0x21c] sm:$0xf]
        %v2310 = vld [vmem:[%s1 + $0x220] sm:$0xf]
        %v2311 = vld [vmem:[%s1 + $0x224] sm:$0xf]
        %v2312 = vld [vmem:[%s1 + $0x228] sm:$0xf]
        %v2313 = vld [vmem:[%s1 + $0x22c] sm:$0xf]
        %v2314 = vld [vmem:[%s1 + $0x230] sm:$0xf]
        %v2315 = vld [vmem:[%s1 + $0x234] sm:$0xf]
        %v2316 = vld [vmem:[%s1 + $0x238] sm:$0xf]
        %v2317 = vld [vmem:[%s1 + $0x23c] sm:$0xf]
        %v2478 = vunpack.c.l.b16 %v2014
        %v2479 = vunpack.c.h.b16 %v2014
        %v2480 = vunpack.c.l.b16 %v2015
        %v2481 = vunpack.c.h.b16 %v2015
        %v2482 = vunpack.c.l.b16 %v2016
        %v2483 = vunpack.c.h.b16 %v2016
        %v2484 = vunpack.c.l.b16 %v2017
        %v2485 = vunpack.c.h.b16 %v2017
        %v2486 = vunpack.c.l.b16 %v2018
        %v2487 = vunpack.c.l.b16 %v2019
        %v2488 = vunpack.c.h.b16 %v2019
        %v2489 = vunpack.c.l.b16 %v2020
        %v2490 = vunpack.c.h.b16 %v2020
        %v2491 = vunpack.c.l.b16 %v2021
        %v2492 = vunpack.c.h.b16 %v2021
        %v2493 = vunpack.c.l.b16 %v2022
        %v2494 = vunpack.c.h.b16 %v2022
        %v2495 = vunpack.c.l.b16 %v2023
        %v2496 = vunpack.c.l.b16 %v2024
        %v2497 = vunpack.c.h.b16 %v2024
        %v2498 = vunpack.c.l.b16 %v2025
        %v2499 = vunpack.c.h.b16 %v2025
        %v2500 = vunpack.c.l.b16 %v2026
        %v2501 = vunpack.c.h.b16 %v2026
        %v2502 = vunpack.c.l.b16 %v2027
        %v2503 = vunpack.c.h.b16 %v2027
        %v2504 = vunpack.c.l.b16 %v2028
        %v2505 = vunpack.c.l.b16 %v2029
        %v2506 = vunpack.c.h.b16 %v2029
        %v2507 = vunpack.c.l.b16 %v2030
        %v2508 = vunpack.c.h.b16 %v2030
        %v2509 = vunpack.c.l.b16 %v2031
        %v2510 = vunpack.c.h.b16 %v2031
        %v2511 = vunpack.c.l.b16 %v2032
        %v2512 = vunpack.c.h.b16 %v2032
        %v2513 = vunpack.c.l.b16 %v2033
        %v2514 = vunpack.c.l.b16 %v2034
        %v2515 = vunpack.c.h.b16 %v2034
        %v2516 = vunpack.c.l.b16 %v2035
        %v2517 = vunpack.c.h.b16 %v2035
        %v2518 = vunpack.c.l.b16 %v2036
        %v2519 = vunpack.c.h.b16 %v2036
        %v2520 = vunpack.c.l.b16 %v2037
        %v2521 = vunpack.c.h.b16 %v2037
        %v2522 = vunpack.c.l.b16 %v2038
        %v2523 = vunpack.c.l.b16 %v2039
        %v2524 = vunpack.c.h.b16 %v2039
        %v2525 = vunpack.c.l.b16 %v2040
        %v2526 = vunpack.c.h.b16 %v2040
        %v2527 = vunpack.c.l.b16 %v2041
        %v2528 = vunpack.c.h.b16 %v2041
        %v2529 = vunpack.c.l.b16 %v2042
        %v2530 = vunpack.c.h.b16 %v2042
        %v2531 = vunpack.c.l.b16 %v2043
        %v2532 = vunpack.c.l.b16 %v2044
        %v2533 = vunpack.c.h.b16 %v2044
        %v2534 = vunpack.c.l.b16 %v2045
        %v2535 = vunpack.c.h.b16 %v2045
        %v2536 = vunpack.c.l.b16 %v2046
        %v2537 = vunpack.c.h.b16 %v2046
        %v2538 = vunpack.c.l.b16 %v2047
        %v2539 = vunpack.c.h.b16 %v2047
        %v2540 = vunpack.c.l.b16 %v2048
        %v2541 = vunpack.c.l.b16 %v2049
        %v2542 = vunpack.c.h.b16 %v2049
        %v2543 = vunpack.c.l.b16 %v2050
        %v2544 = vunpack.c.h.b16 %v2050
        %v2545 = vunpack.c.l.b16 %v2051
        %v2546 = vunpack.c.h.b16 %v2051
        %v2547 = vunpack.c.l.b16 %v2052
        %v2548 = vunpack.c.h.b16 %v2052
        %v2549 = vunpack.c.l.b16 %v2053
        %v2550 = vunpack.c.l.b16 %v2054
        %v2551 = vunpack.c.h.b16 %v2054
        %v2552 = vunpack.c.l.b16 %v2055
        %v2553 = vunpack.c.h.b16 %v2055
        %v2554 = vunpack.c.l.b16 %v2056
        %v2555 = vunpack.c.h.b16 %v2056
        %v2556 = vunpack.c.l.b16 %v2057
        %v2557 = vunpack.c.h.b16 %v2057
        %v2558 = vunpack.c.l.b16 %v2058
        %v2559 = vunpack.c.l.b16 %v2059
        %v2560 = vunpack.c.h.b16 %v2059
        %v2561 = vunpack.c.l.b16 %v2060
        %v2562 = vunpack.c.h.b16 %v2060
        %v2563 = vunpack.c.l.b16 %v2061
        %v2564 = vunpack.c.h.b16 %v2061
        %v2565 = vunpack.c.l.b16 %v2062
        %v2566 = vunpack.c.h.b16 %v2062
        %v2567 = vunpack.c.l.b16 %v2063
        %v2568 = vunpack.c.l.b16 %v2064
        %v2569 = vunpack.c.h.b16 %v2064
        %v2570 = vunpack.c.l.b16 %v2065
        %v2571 = vunpack.c.h.b16 %v2065
        %v2572 = vunpack.c.l.b16 %v2066
        %v2573 = vunpack.c.h.b16 %v2066
        %v2574 = vunpack.c.l.b16 %v2067
        %v2575 = vunpack.c.h.b16 %v2067
        %v2576 = vunpack.c.l.b16 %v2068
        %v2577 = vunpack.c.l.b16 %v2069
        %v2578 = vunpack.c.h.b16 %v2069
        %v2579 = vunpack.c.l.b16 %v2070
        %v2580 = vunpack.c.h.b16 %v2070
        %v2581 = vunpack.c.l.b16 %v2071
        %v2582 = vunpack.c.h.b16 %v2071
        %v2583 = vunpack.c.l.b16 %v2072
        %v2584 = vunpack.c.h.b16 %v2072
        %v2585 = vunpack.c.l.b16 %v2073
        %v2586 = vunpack.c.l.b16 %v2074
        %v2587 = vunpack.c.h.b16 %v2074
        %v2588 = vunpack.c.l.b16 %v2075
        %v2589 = vunpack.c.h.b16 %v2075
        %v2590 = vunpack.c.l.b16 %v2076
        %v2591 = vunpack.c.h.b16 %v2076
        %v2592 = vunpack.c.l.b16 %v2077
        %v2593 = vunpack.c.h.b16 %v2077
        %v2594 = vunpack.c.l.b16 %v2078
        %v2595 = vunpack.c.l.b16 %v2079
        %v2596 = vunpack.c.h.b16 %v2079
        %v2597 = vunpack.c.l.b16 %v2080
        %v2598 = vunpack.c.h.b16 %v2080
        %v2599 = vunpack.c.l.b16 %v2081
        %v2600 = vunpack.c.h.b16 %v2081
        %v2601 = vunpack.c.l.b16 %v2082
        %v2602 = vunpack.c.h.b16 %v2082
        %v2603 = vunpack.c.l.b16 %v2083
        %v2604 = vunpack.c.l.b16 %v2084
        %v2605 = vunpack.c.h.b16 %v2084
        %v2606 = vunpack.c.l.b16 %v2085
        %v2607 = vunpack.c.h.b16 %v2085
        %v2608 = vunpack.c.l.b16 %v2086
        %v2609 = vunpack.c.h.b16 %v2086
        %v2610 = vunpack.c.l.b16 %v2087
        %v2611 = vunpack.c.h.b16 %v2087
        %v2612 = vunpack.c.l.b16 %v2088
        %v2613 = vunpack.c.l.b16 %v2089
        %v2614 = vunpack.c.h.b16 %v2089
        %v2615 = vunpack.c.l.b16 %v2090
        %v2616 = vunpack.c.h.b16 %v2090
        %v2617 = vunpack.c.l.b16 %v2091
        %v2618 = vunpack.c.h.b16 %v2091
        %v2619 = vunpack.c.l.b16 %v2092
        %v2620 = vunpack.c.h.b16 %v2092
        %v2621 = vunpack.c.l.b16 %v2093
        %v2622 = vunpack.c.l.b16 %v2094
        %v2623 = vunpack.c.h.b16 %v2094
        %v2624 = vunpack.c.l.b16 %v2095
        %v2625 = vunpack.c.h.b16 %v2095
        %v2626 = vunpack.c.l.b16 %v2096
        %v2627 = vunpack.c.h.b16 %v2096
        %v2628 = vunpack.c.l.b16 %v2097
        %v2629 = vunpack.c.h.b16 %v2097
        %v2630 = vunpack.c.l.b16 %v2098
        %v2631 = vunpack.c.l.b16 %v2099
        %v2632 = vunpack.c.h.b16 %v2099
        %v2633 = vunpack.c.l.b16 %v2100
        %v2634 = vunpack.c.h.b16 %v2100
        %v2635 = vunpack.c.l.b16 %v2101
        %v2636 = vunpack.c.h.b16 %v2101
        %v2637 = vunpack.c.l.b16 %v2102
        %v2638 = vunpack.c.h.b16 %v2102
        %v2639 = vunpack.c.l.b16 %v2103
        %v2640 = vunpack.c.l.b16 %v2104
        %v2641 = vunpack.c.h.b16 %v2104
        %v2642 = vunpack.c.l.b16 %v2105
        %v2643 = vunpack.c.h.b16 %v2105
        %v2644 = vunpack.c.l.b16 %v2106
        %v2645 = vunpack.c.h.b16 %v2106
        %v2646 = vunpack.c.l.b16 %v2107
        %v2647 = vunpack.c.h.b16 %v2107
        %v2648 = vunpack.c.l.b16 %v2108
        %v2649 = vunpack.c.l.b16 %v2109
        %v2650 = vunpack.c.h.b16 %v2109
        %v2651 = vunpack.c.l.b16 %v2110
        %v2652 = vunpack.c.h.b16 %v2110
        %v2653 = vunpack.c.l.b16 %v2111
        %v2654 = vunpack.c.h.b16 %v2111
        %v2655 = vunpack.c.l.b16 %v2112
        %v2656 = vunpack.c.h.b16 %v2112
        %v2657 = vunpack.c.l.b16 %v2113
        %v2658 = vunpack.c.l.b16 %v2114
        %v2659 = vunpack.c.h.b16 %v2114
        %v2660 = vunpack.c.l.b16 %v2115
        %v2661 = vunpack.c.h.b16 %v2115
        %v2662 = vunpack.c.l.b16 %v2116
        %v2663 = vunpack.c.h.b16 %v2116
        %v2664 = vunpack.c.l.b16 %v2117
        %v2665 = vunpack.c.h.b16 %v2117
        %v2666 = vunpack.c.l.b16 %v2118
        %v2667 = vunpack.c.l.b16 %v2119
        %v2668 = vunpack.c.h.b16 %v2119
        %v2669 = vunpack.c.l.b16 %v2120
        %v2670 = vunpack.c.h.b16 %v2120
        %v2671 = vunpack.c.l.b16 %v2121
        %v2672 = vunpack.c.h.b16 %v2121
        %v2673 = vunpack.c.l.b16 %v2122
        %v2674 = vunpack.c.h.b16 %v2122
        %v2675 = vunpack.c.l.b16 %v2123
        %v2676 = vunpack.c.l.b16 %v2124
        %v2677 = vunpack.c.h.b16 %v2124
        %v2678 = vunpack.c.l.b16 %v2125
        %v2679 = vunpack.c.h.b16 %v2125
        %v2680 = vunpack.c.l.b16 %v2126
        %v2681 = vunpack.c.h.b16 %v2126
        %v2682 = vunpack.c.l.b16 %v2127
        %v2683 = vunpack.c.h.b16 %v2127
        %v2684 = vunpack.c.l.b16 %v2128
        %v2685 = vunpack.c.l.b16 %v2129
        %v2686 = vunpack.c.h.b16 %v2129
        %v2687 = vunpack.c.l.b16 %v2130
        %v2688 = vunpack.c.h.b16 %v2130
        %v2689 = vunpack.c.l.b16 %v2131
        %v2690 = vunpack.c.h.b16 %v2131
        %v2691 = vunpack.c.l.b16 %v2132
        %v2692 = vunpack.c.h.b16 %v2132
        %v2693 = vunpack.c.l.b16 %v2133
        %v2694 = vunpack.c.l.b16 %v2134
        %v2695 = vunpack.c.h.b16 %v2134
        %v2696 = vunpack.c.l.b16 %v2135
        %v2697 = vunpack.c.h.b16 %v2135
        %v2698 = vunpack.c.l.b16 %v2136
        %v2699 = vunpack.c.h.b16 %v2136
        %v2700 = vunpack.c.l.b16 %v2137
        %v2701 = vunpack.c.h.b16 %v2137
        %v2702 = vunpack.c.l.b16 %v2138
        %v2703 = vunpack.c.l.b16 %v2139
        %v2704 = vunpack.c.h.b16 %v2139
        %v2705 = vunpack.c.l.b16 %v2140
        %v2706 = vunpack.c.h.b16 %v2140
        %v2707 = vunpack.c.l.b16 %v2141
        %v2708 = vunpack.c.h.b16 %v2141
        %v2709 = vunpack.c.l.b16 %v2142
        %v2710 = vunpack.c.h.b16 %v2142
        %v2711 = vunpack.c.l.b16 %v2143
        %v2712 = vunpack.c.l.b16 %v2144
        %v2713 = vunpack.c.h.b16 %v2144
        %v2714 = vunpack.c.l.b16 %v2145
        %v2715 = vunpack.c.h.b16 %v2145
        %v2716 = vunpack.c.l.b16 %v2146
        %v2717 = vunpack.c.h.b16 %v2146
        %v2718 = vunpack.c.l.b16 %v2147
        %v2719 = vunpack.c.h.b16 %v2147
        %v2720 = vunpack.c.l.b16 %v2148
        %v2721 = vunpack.c.l.b16 %v2149
        %v2722 = vunpack.c.h.b16 %v2149
        %v2723 = vunpack.c.l.b16 %v2150
        %v2724 = vunpack.c.h.b16 %v2150
        %v2725 = vunpack.c.l.b16 %v2151
        %v2726 = vunpack.c.h.b16 %v2151
        %v2727 = vunpack.c.l.b16 %v2152
        %v2728 = vunpack.c.h.b16 %v2152
        %v2729 = vunpack.c.l.b16 %v2153
        %v2730 = vunpack.c.l.b16 %v2154
        %v2731 = vunpack.c.h.b16 %v2154
        %v2732 = vunpack.c.l.b16 %v2155
        %v2733 = vunpack.c.h.b16 %v2155
        %v2734 = vunpack.c.l.b16 %v2156
        %v2735 = vunpack.c.h.b16 %v2156
        %v2736 = vunpack.c.l.b16 %v2157
        %v2737 = vunpack.c.h.b16 %v2157
        %v2738 = vunpack.c.l.b16 %v2158
        %v2739 = vunpack.c.l.b16 %v2159
        %v2740 = vunpack.c.h.b16 %v2159
        %v2741 = vunpack.c.l.b16 %v2160
        %v2742 = vunpack.c.h.b16 %v2160
        %v2743 = vunpack.c.l.b16 %v2161
        %v2744 = vunpack.c.h.b16 %v2161
        %v2745 = vunpack.c.l.b16 %v2162
        %v2746 = vunpack.c.h.b16 %v2162
        %v2747 = vunpack.c.l.b16 %v2163
        %v2748 = vunpack.c.l.b16 %v2164
        %v2749 = vunpack.c.h.b16 %v2164
        %v2750 = vunpack.c.l.b16 %v2165
        %v2751 = vunpack.c.h.b16 %v2165
        %v2752 = vunpack.c.l.b16 %v2166
        %v2753 = vunpack.c.h.b16 %v2166
        %v2754 = vunpack.c.l.b16 %v2167
        %v2755 = vunpack.c.h.b16 %v2167
        %v2756 = vunpack.c.l.b16 %v2168
        %v2757 = vunpack.c.l.b16 %v2169
        %v2758 = vunpack.c.h.b16 %v2169
        %v2759 = vunpack.c.l.b16 %v2170
        %v2760 = vunpack.c.h.b16 %v2170
        %v2761 = vunpack.c.l.b16 %v2171
        %v2762 = vunpack.c.h.b16 %v2171
        %v2763 = vunpack.c.l.b16 %v2172
        %v2764 = vunpack.c.h.b16 %v2172
        %v2765 = vunpack.c.l.b16 %v2173
        %v2766 = vpack.c.b16 %v2487, %v2478
        %v2767 = vpack.c.b16 %v2488, %v2479
        %v2768 = vpack.c.b16 %v2489, %v2480
        %v2769 = vpack.c.b16 %v2490, %v2481
        %v2770 = vpack.c.b16 %v2491, %v2482
        %v2771 = vpack.c.b16 %v2492, %v2483
        %v2772 = vpack.c.b16 %v2493, %v2484
        %v2773 = vpack.c.b16 %v2494, %v2485
        %v2774 = vpack.c.b16 %v2495, %v2486
        %v2775 = vpack.c.b16 %v2505, %v2496
        %v2776 = vpack.c.b16 %v2506, %v2497
        %v2777 = vpack.c.b16 %v2507, %v2498
        %v2778 = vpack.c.b16 %v2508, %v2499
        %v2779 = vpack.c.b16 %v2509, %v2500
        %v2780 = vpack.c.b16 %v2510, %v2501
        %v2781 = vpack.c.b16 %v2511, %v2502
        %v2782 = vpack.c.b16 %v2512, %v2503
        %v2783 = vpack.c.b16 %v2513, %v2504
        %v2784 = vpack.c.b16 %v2523, %v2514
        %v2785 = vpack.c.b16 %v2524, %v2515
        %v2786 = vpack.c.b16 %v2525, %v2516
        %v2787 = vpack.c.b16 %v2526, %v2517
        %v2788 = vpack.c.b16 %v2527, %v2518
        %v2789 = vpack.c.b16 %v2528, %v2519
        %v2790 = vpack.c.b16 %v2529, %v2520
        %v2791 = vpack.c.b16 %v2530, %v2521
        %v2792 = vpack.c.b16 %v2531, %v2522
        %v2793 = vpack.c.b16 %v2541, %v2532
        %v2794 = vpack.c.b16 %v2542, %v2533
        %v2795 = vpack.c.b16 %v2543, %v2534
        %v2796 = vpack.c.b16 %v2544, %v2535
        %v2797 = vpack.c.b16 %v2545, %v2536
        %v2798 = vpack.c.b16 %v2546, %v2537
        %v2799 = vpack.c.b16 %v2547, %v2538
        %v2800 = vpack.c.b16 %v2548, %v2539
        %v2801 = vpack.c.b16 %v2549, %v2540
        %v2802 = vpack.c.b16 %v2559, %v2550
        %v2803 = vpack.c.b16 %v2560, %v2551
        %v2804 = vpack.c.b16 %v2561, %v2552
        %v2805 = vpack.c.b16 %v2562, %v2553
        %v2806 = vpack.c.b16 %v2563, %v2554
        %v2807 = vpack.c.b16 %v2564, %v2555
        %v2808 = vpack.c.b16 %v2565, %v2556
        %v2809 = vpack.c.b16 %v2566, %v2557
        %v2810 = vpack.c.b16 %v2567, %v2558
        %v2811 = vpack.c.b16 %v2577, %v2568
        %v2812 = vpack.c.b16 %v2578, %v2569
        %v2813 = vpack.c.b16 %v2579, %v2570
        %v2814 = vpack.c.b16 %v2580, %v2571
        %v2815 = vpack.c.b16 %v2581, %v2572
        %v2816 = vpack.c.b16 %v2582, %v2573
        %v2817 = vpack.c.b16 %v2583, %v2574
        %v2818 = vpack.c.b16 %v2584, %v2575
        %v2819 = vpack.c.b16 %v2585, %v2576
        %v2820 = vpack.c.b16 %v2595, %v2586
        %v2821 = vpack.c.b16 %v2596, %v2587
        %v2822 = vpack.c.b16 %v2597, %v2588
        %v2823 = vpack.c.b16 %v2598, %v2589
        %v2824 = vpack.c.b16 %v2599, %v2590
        %v2825 = vpack.c.b16 %v2600, %v2591
        %v2826 = vpack.c.b16 %v2601, %v2592
        %v2827 = vpack.c.b16 %v2602, %v2593
        %v2828 = vpack.c.b16 %v2603, %v2594
        %v2829 = vpack.c.b16 %v2613, %v2604
        %v2830 = vpack.c.b16 %v2614, %v2605
        %v2831 = vpack.c.b16 %v2615, %v2606
        %v2832 = vpack.c.b16 %v2616, %v2607
        %v2833 = vpack.c.b16 %v2617, %v2608
        %v2834 = vpack.c.b16 %v2618, %v2609
        %v2835 = vpack.c.b16 %v2619, %v2610
        %v2836 = vpack.c.b16 %v2620, %v2611
        %v2837 = vpack.c.b16 %v2621, %v2612
        %v2838 = vpack.c.b16 %v2631, %v2622
        %v2839 = vpack.c.b16 %v2632, %v2623
        %v2840 = vpack.c.b16 %v2633, %v2624
        %v2841 = vpack.c.b16 %v2634, %v2625
        %v2842 = vpack.c.b16 %v2635, %v2626
        %v2843 = vpack.c.b16 %v2636, %v2627
        %v2844 = vpack.c.b16 %v2637, %v2628
        %v2845 = vpack.c.b16 %v2638, %v2629
        %v2846 = vpack.c.b16 %v2639, %v2630
        %v2847 = vpack.c.b16 %v2649, %v2640
        %v2848 = vpack.c.b16 %v2650, %v2641
        %v2849 = vpack.c.b16 %v2651, %v2642
        %v2850 = vpack.c.b16 %v2652, %v2643
        %v2851 = vpack.c.b16 %v2653, %v2644
        %v2852 = vpack.c.b16 %v2654, %v2645
        %v2853 = vpack.c.b16 %v2655, %v2646
        %v2854 = vpack.c.b16 %v2656, %v2647
        %v2855 = vpack.c.b16 %v2657, %v2648
        %v2856 = vpack.c.b16 %v2667, %v2658
        %v2857 = vpack.c.b16 %v2668, %v2659
        %v2858 = vpack.c.b16 %v2669, %v2660
        %v2859 = vpack.c.b16 %v2670, %v2661
        %v2860 = vpack.c.b16 %v2671, %v2662
        %v2861 = vpack.c.b16 %v2672, %v2663
        %v2862 = vpack.c.b16 %v2673, %v2664
        %v2863 = vpack.c.b16 %v2674, %v2665
        %v2864 = vpack.c.b16 %v2675, %v2666
        %v2865 = vpack.c.b16 %v2685, %v2676
        %v2866 = vpack.c.b16 %v2686, %v2677
        %v2867 = vpack.c.b16 %v2687, %v2678
        %v2868 = vpack.c.b16 %v2688, %v2679
        %v2869 = vpack.c.b16 %v2689, %v2680
        %v2870 = vpack.c.b16 %v2690, %v2681
        %v2871 = vpack.c.b16 %v2691, %v2682
        %v2872 = vpack.c.b16 %v2692, %v2683
        %v2873 = vpack.c.b16 %v2693, %v2684
        %v2874 = vpack.c.b16 %v2703, %v2694
        %v2875 = vpack.c.b16 %v2704, %v2695
        %v2876 = vpack.c.b16 %v2705, %v2696
        %v2877 = vpack.c.b16 %v2706, %v2697
        %v2878 = vpack.c.b16 %v2707, %v2698
        %v2879 = vpack.c.b16 %v2708, %v2699
        %v2880 = vpack.c.b16 %v2709, %v2700
        %v2881 = vpack.c.b16 %v2710, %v2701
        %v2882 = vpack.c.b16 %v2711, %v2702
        %v2883 = vpack.c.b16 %v2721, %v2712
        %v2884 = vpack.c.b16 %v2722, %v2713
        %v2885 = vpack.c.b16 %v2723, %v2714
        %v2886 = vpack.c.b16 %v2724, %v2715
        %v2887 = vpack.c.b16 %v2725, %v2716
        %v2888 = vpack.c.b16 %v2726, %v2717
        %v2889 = vpack.c.b16 %v2727, %v2718
        %v2890 = vpack.c.b16 %v2728, %v2719
        %v2891 = vpack.c.b16 %v2729, %v2720
        %v2892 = vpack.c.b16 %v2739, %v2730
        %v2893 = vpack.c.b16 %v2740, %v2731
        %v2894 = vpack.c.b16 %v2741, %v2732
        %v2895 = vpack.c.b16 %v2742, %v2733
        %v2896 = vpack.c.b16 %v2743, %v2734
        %v2897 = vpack.c.b16 %v2744, %v2735
        %v2898 = vpack.c.b16 %v2745, %v2736
        %v2899 = vpack.c.b16 %v2746, %v2737
        %v2900 = vpack.c.b16 %v2747, %v2738
        %v2901 = vpack.c.b16 %v2757, %v2748
        %v2902 = vpack.c.b16 %v2758, %v2749
        %v2903 = vpack.c.b16 %v2759, %v2750
        %v2904 = vpack.c.b16 %v2760, %v2751
        %v2905 = vpack.c.b16 %v2761, %v2752
        %v2906 = vpack.c.b16 %v2762, %v2753
        %v2907 = vpack.c.b16 %v2763, %v2754
        %v2908 = vpack.c.b16 %v2764, %v2755
        %v2909 = vpack.c.b16 %v2765, %v2756
        %v3198 = vunpack.c.l.b16 %v2174
        %v3199 = vunpack.c.l.b16 %v2175
        %v3200 = vunpack.c.l.b16 %v2176
        %v3201 = vunpack.c.l.b16 %v2177
        %v3202 = vunpack.c.l.b16 %v2178
        %v3203 = vunpack.c.l.b16 %v2179
        %v3204 = vunpack.c.l.b16 %v2180
        %v3205 = vunpack.c.l.b16 %v2181
        %v3206 = vunpack.c.l.b16 %v2182
        %v3207 = vunpack.c.l.b16 %v2183
        %v3208 = vunpack.c.l.b16 %v2184
        %v3209 = vunpack.c.l.b16 %v2185
        %v3210 = vunpack.c.l.b16 %v2186
        %v3211 = vunpack.c.l.b16 %v2187
        %v3212 = vunpack.c.l.b16 %v2188
        %v3213 = vunpack.c.l.b16 %v2189
        %v3214 = vunpack.c.l.b16 %v2190
        %v3215 = vunpack.c.l.b16 %v2191
        %v3216 = vunpack.c.l.b16 %v2192
        %v3217 = vunpack.c.l.b16 %v2193
        %v3218 = vunpack.c.l.b16 %v2194
        %v3219 = vunpack.c.l.b16 %v2195
        %v3220 = vunpack.c.l.b16 %v2196
        %v3221 = vunpack.c.l.b16 %v2197
        %v3222 = vunpack.c.l.b16 %v2198
        %v3223 = vunpack.c.l.b16 %v2199
        %v3224 = vunpack.c.l.b16 %v2200
        %v3225 = vunpack.c.l.b16 %v2201
        %v3226 = vunpack.c.l.b16 %v2202
        %v3227 = vunpack.c.l.b16 %v2203
        %v3228 = vunpack.c.l.b16 %v2204
        %v3229 = vunpack.c.l.b16 %v2205
        %v3230 = vunpack.c.l.b16 %v2206
        %v3231 = vunpack.c.l.b16 %v2207
        %v3232 = vunpack.c.l.b16 %v2208
        %v3233 = vunpack.c.l.b16 %v2209
        %v3234 = vunpack.c.l.b16 %v2210
        %v3235 = vunpack.c.l.b16 %v2211
        %v3236 = vunpack.c.l.b16 %v2212
        %v3237 = vunpack.c.l.b16 %v2213
        %v3238 = vunpack.c.l.b16 %v2214
        %v3239 = vunpack.c.l.b16 %v2215
        %v3240 = vunpack.c.l.b16 %v2216
        %v3241 = vunpack.c.l.b16 %v2217
        %v3242 = vunpack.c.l.b16 %v2218
        %v3243 = vunpack.c.l.b16 %v2219
        %v3244 = vunpack.c.l.b16 %v2220
        %v3245 = vunpack.c.l.b16 %v2221
        %v3246 = vunpack.c.l.b16 %v2222
        %v3247 = vunpack.c.l.b16 %v2223
        %v3248 = vunpack.c.l.b16 %v2224
        %v3249 = vunpack.c.l.b16 %v2225
        %v3250 = vunpack.c.l.b16 %v2226
        %v3251 = vunpack.c.l.b16 %v2227
        %v3252 = vunpack.c.l.b16 %v2228
        %v3253 = vunpack.c.l.b16 %v2229
        %v3254 = vunpack.c.l.b16 %v2230
        %v3255 = vunpack.c.l.b16 %v2231
        %v3256 = vunpack.c.l.b16 %v2232
        %v3257 = vunpack.c.l.b16 %v2233
        %v3258 = vunpack.c.l.b16 %v2234
        %v3259 = vunpack.c.l.b16 %v2235
        %v3260 = vunpack.c.l.b16 %v2236
        %v3261 = vunpack.c.l.b16 %v2237
        %v3262 = vunpack.c.l.b16 %v2238
        %v3263 = vunpack.c.l.b16 %v2239
        %v3264 = vunpack.c.l.b16 %v2240
        %v3265 = vunpack.c.l.b16 %v2241
        %v3266 = vunpack.c.l.b16 %v2242
        %v3267 = vunpack.c.l.b16 %v2243
        %v3268 = vunpack.c.l.b16 %v2244
        %v3269 = vunpack.c.l.b16 %v2245
        %v3270 = vunpack.c.l.b16 %v2246
        %v3271 = vunpack.c.l.b16 %v2247
        %v3272 = vunpack.c.l.b16 %v2248
        %v3273 = vunpack.c.l.b16 %v2249
        %v3274 = vunpack.c.l.b16 %v2250
        %v3275 = vunpack.c.l.b16 %v2251
        %v3276 = vunpack.c.l.b16 %v2252
        %v3277 = vunpack.c.l.b16 %v2253
        %v3278 = vunpack.c.l.b16 %v2254
        %v3279 = vunpack.c.l.b16 %v2255
        %v3280 = vunpack.c.l.b16 %v2256
        %v3281 = vunpack.c.l.b16 %v2257
        %v3282 = vunpack.c.l.b16 %v2258
        %v3283 = vunpack.c.l.b16 %v2259
        %v3284 = vunpack.c.l.b16 %v2260
        %v3285 = vunpack.c.l.b16 %v2261
        %v3286 = vunpack.c.l.b16 %v2262
        %v3287 = vunpack.c.l.b16 %v2263
        %v3288 = vunpack.c.l.b16 %v2264
        %v3289 = vunpack.c.l.b16 %v2265
        %v3290 = vunpack.c.l.b16 %v2266
        %v3291 = vunpack.c.l.b16 %v2267
        %v3292 = vunpack.c.l.b16 %v2268
        %v3293 = vunpack.c.l.b16 %v2269
        %v3294 = vunpack.c.l.b16 %v2270
        %v3295 = vunpack.c.l.b16 %v2271
        %v3296 = vunpack.c.l.b16 %v2272
        %v3297 = vunpack.c.l.b16 %v2273
        %v3298 = vunpack.c.l.b16 %v2274
        %v3299 = vunpack.c.l.b16 %v2275
        %v3300 = vunpack.c.l.b16 %v2276
        %v3301 = vunpack.c.l.b16 %v2277
        %v3302 = vunpack.c.l.b16 %v2278
        %v3303 = vunpack.c.l.b16 %v2279
        %v3304 = vunpack.c.l.b16 %v2280
        %v3305 = vunpack.c.l.b16 %v2281
        %v3306 = vunpack.c.l.b16 %v2282
        %v3307 = vunpack.c.l.b16 %v2283
        %v3308 = vunpack.c.l.b16 %v2284
        %v3309 = vunpack.c.l.b16 %v2285
        %v3310 = vunpack.c.l.b16 %v2286
        %v3311 = vunpack.c.l.b16 %v2287
        %v3312 = vunpack.c.l.b16 %v2288
        %v3313 = vunpack.c.l.b16 %v2289
        %v3314 = vunpack.c.l.b16 %v2290
        %v3315 = vunpack.c.l.b16 %v2291
        %v3316 = vunpack.c.l.b16 %v2292
        %v3317 = vunpack.c.l.b16 %v2293
        %v3318 = vunpack.c.l.b16 %v2294
        %v3319 = vunpack.c.l.b16 %v2295
        %v3320 = vunpack.c.l.b16 %v2296
        %v3321 = vunpack.c.l.b16 %v2297
        %v3322 = vunpack.c.l.b16 %v2298
        %v3323 = vunpack.c.l.b16 %v2299
        %v3324 = vunpack.c.l.b16 %v2300
        %v3325 = vunpack.c.l.b16 %v2301
        %v3326 = vunpack.c.l.b16 %v2302
        %v3327 = vunpack.c.l.b16 %v2303
        %v3328 = vunpack.c.l.b16 %v2304
        %v3329 = vunpack.c.l.b16 %v2305
        %v3330 = vunpack.c.l.b16 %v2306
        %v3331 = vunpack.c.l.b16 %v2307
        %v3332 = vunpack.c.l.b16 %v2308
        %v3333 = vunpack.c.l.b16 %v2309
        %v3334 = vunpack.c.l.b16 %v2310
        %v3335 = vunpack.c.l.b16 %v2311
        %v3336 = vunpack.c.l.b16 %v2312
        %v3337 = vunpack.c.l.b16 %v2313
        %v3338 = vunpack.c.l.b16 %v2314
        %v3339 = vunpack.c.l.b16 %v2315
        %v3340 = vunpack.c.l.b16 %v2316
        %v3341 = vunpack.c.l.b16 %v2317
        %v3342 = vpack.c.b16 %v3199, %v3198
        %v3343 = vpack.c.b16 %v3201, %v3200
        %v3344 = vpack.c.b16 %v3203, %v3202
        %v3345 = vpack.c.b16 %v3205, %v3204
        %v3346 = vpack.c.b16 %v3207, %v3206
        %v3347 = vpack.c.b16 %v3209, %v3208
        %v3348 = vpack.c.b16 %v3211, %v3210
        %v3349 = vpack.c.b16 %v3213, %v3212
        %v3350 = vpack.c.b16 %v3215, %v3214
        %v3351 = vpack.c.b16 %v3217, %v3216
        %v3352 = vpack.c.b16 %v3219, %v3218
        %v3353 = vpack.c.b16 %v3221, %v3220
        %v3354 = vpack.c.b16 %v3223, %v3222
        %v3355 = vpack.c.b16 %v3225, %v3224
        %v3356 = vpack.c.b16 %v3227, %v3226
        %v3357 = vpack.c.b16 %v3229, %v3228
        %v3358 = vpack.c.b16 %v3231, %v3230
        %v3359 = vpack.c.b16 %v3233, %v3232
        %v3360 = vpack.c.b16 %v3235, %v3234
        %v3361 = vpack.c.b16 %v3237, %v3236
        %v3362 = vpack.c.b16 %v3239, %v3238
        %v3363 = vpack.c.b16 %v3241, %v3240
        %v3364 = vpack.c.b16 %v3243, %v3242
        %v3365 = vpack.c.b16 %v3245, %v3244
        %v3366 = vpack.c.b16 %v3247, %v3246
        %v3367 = vpack.c.b16 %v3249, %v3248
        %v3368 = vpack.c.b16 %v3251, %v3250
        %v3369 = vpack.c.b16 %v3253, %v3252
        %v3370 = vpack.c.b16 %v3255, %v3254
        %v3371 = vpack.c.b16 %v3257, %v3256
        %v3372 = vpack.c.b16 %v3259, %v3258
        %v3373 = vpack.c.b16 %v3261, %v3260
        %v3374 = vpack.c.b16 %v3263, %v3262
        %v3375 = vpack.c.b16 %v3265, %v3264
        %v3376 = vpack.c.b16 %v3267, %v3266
        %v3377 = vpack.c.b16 %v3269, %v3268
        %v3378 = vpack.c.b16 %v3271, %v3270
        %v3379 = vpack.c.b16 %v3273, %v3272
        %v3380 = vpack.c.b16 %v3275, %v3274
        %v3381 = vpack.c.b16 %v3277, %v3276
        %v3382 = vpack.c.b16 %v3279, %v3278
        %v3383 = vpack.c.b16 %v3281, %v3280
        %v3384 = vpack.c.b16 %v3283, %v3282
        %v3385 = vpack.c.b16 %v3285, %v3284
        %v3386 = vpack.c.b16 %v3287, %v3286
        %v3387 = vpack.c.b16 %v3289, %v3288
        %v3388 = vpack.c.b16 %v3291, %v3290
        %v3389 = vpack.c.b16 %v3293, %v3292
        %v3390 = vpack.c.b16 %v3295, %v3294
        %v3391 = vpack.c.b16 %v3297, %v3296
        %v3392 = vpack.c.b16 %v3299, %v3298
        %v3393 = vpack.c.b16 %v3301, %v3300
        %v3394 = vpack.c.b16 %v3303, %v3302
        %v3395 = vpack.c.b16 %v3305, %v3304
        %v3396 = vpack.c.b16 %v3307, %v3306
        %v3397 = vpack.c.b16 %v3309, %v3308
        %v3398 = vpack.c.b16 %v3311, %v3310
        %v3399 = vpack.c.b16 %v3313, %v3312
        %v3400 = vpack.c.b16 %v3315, %v3314
        %v3401 = vpack.c.b16 %v3317, %v3316
        %v3402 = vpack.c.b16 %v3319, %v3318
        %v3403 = vpack.c.b16 %v3321, %v3320
        %v3404 = vpack.c.b16 %v3323, %v3322
        %v3405 = vpack.c.b16 %v3325, %v3324
        %v3406 = vpack.c.b16 %v3327, %v3326
        %v3407 = vpack.c.b16 %v3329, %v3328
        %v3408 = vpack.c.b16 %v3331, %v3330
        %v3409 = vpack.c.b16 %v3333, %v3332
        %v3410 = vpack.c.b16 %v3335, %v3334
        %v3411 = vpack.c.b16 %v3337, %v3336
        %v3412 = vpack.c.b16 %v3339, %v3338
        %v3413 = vpack.c.b16 %v3341, %v3340
        %3486 = vmatprep.subr.bf16.mxu0 0
        %3487 = vmatpush1.bf16.msra.mxu0 %v3349
        %3488 = vmatprep.subr.bf16.mxu0 0
        %3489 = vmatpush1.bf16.msra.mxu0 %v3348
        %3490 = vmatprep.subr.bf16.mxu0 0
        %3491 = vmatpush1.bf16.msra.mxu0 %v3347
        %3492 = vmatprep.subr.bf16.mxu0 0
        %3493 = vmatpush1.bf16.msra.mxu0 %v3346
        %3494 = vmatprep.subr.bf16.mxu0 0
        %3495 = vmatpush1.bf16.msra.mxu0 %v3345
        %3496 = vmatprep.subr.bf16.mxu0 0
        %3497 = vmatpush1.bf16.msra.mxu0 %v3344
        %3498 = vmatprep.subr.bf16.mxu0 0
        %3499 = vmatpush1.bf16.msra.mxu0 %v3343
        %3500 = vmatprep.subr.bf16.mxu0 0
        %3501 = vmatpush1.bf16.msra.mxu0 %v3342
        %3502 = vmatprep.subr.bf16.mxu0 0
        %3503 = vmatpush2.bf16.msra.mxu0 %v3357
        %3504 = vmatprep.subr.bf16.mxu0 0
        %3505 = vmatpush2.bf16.msra.mxu0 %v3356
        %3506 = vmatprep.subr.bf16.mxu0 0
        %3507 = vmatpush2.bf16.msra.mxu0 %v3355
        %3508 = vmatprep.subr.bf16.mxu0 0
        %3509 = vmatpush2.bf16.msra.mxu0 %v3354
        %3510 = vmatprep.subr.bf16.mxu0 0
        %3511 = vmatpush2.bf16.msra.mxu0 %v3353
        %3512 = vmatprep.subr.bf16.mxu0 0
        %3513 = vmatpush2.bf16.msra.mxu0 %v3352
        %3514 = vmatprep.subr.bf16.mxu0 0
        %3515 = vmatpush2.bf16.msra.mxu0 %v3351
        %3516 = vmatprep.subr.bf16.mxu0 0
        %3517 = vmatpush2.bf16.msra.mxu0 %v3350
        %3518 = vmatprep.mubr.bf16.mxu0 %v2767
        %3519 = vmatmul.mubr.bf16.gmra.mxu0 %v2766
        %v3520 = vpop.f32.mrf.mxu0
        %v3521 = vadd.f32 0.0, %v3520
        %v3522 = vpop.f32.mrf.mxu0
        %v3523 = vpop.f32.mrf.mxu0
        %v3524 = vadd.f32 0.0, %v3523
        %v3525 = vpop.f32.mrf.mxu0
        %3526 = vmatprep.mubr.bf16.mxu0 %v2776
        %3527 = vmatmul.mubr.bf16.gmra.mxu0 %v2775
        %v3528 = vpop.f32.mrf.mxu0
        %v3529 = vadd.f32 0.0, %v3528
        %v3530 = vpop.f32.mrf.mxu0
        %v3531 = vpop.f32.mrf.mxu0
        %v3532 = vadd.f32 0.0, %v3531
        %v3533 = vpop.f32.mrf.mxu0
        %3534 = vmatprep.mubr.bf16.mxu0 %v2785
        %3535 = vmatmul.mubr.bf16.gmra.mxu0 %v2784
        %v3536 = vpop.f32.mrf.mxu0
        %v3537 = vadd.f32 0.0, %v3536
        %v3538 = vpop.f32.mrf.mxu0
        %v3539 = vpop.f32.mrf.mxu0
        %v3540 = vadd.f32 0.0, %v3539
        %v3541 = vpop.f32.mrf.mxu0
        %3542 = vmatprep.mubr.bf16.mxu0 %v2794
        %3543 = vmatmul.mubr.bf16.gmra.mxu0 %v2793
        %v3544 = vpop.f32.mrf.mxu0
        %v3545 = vadd.f32 0.0, %v3544
        %v3546 = vpop.f32.mrf.mxu0
        %v3547 = vpop.f32.mrf.mxu0
        %v3548 = vadd.f32 0.0, %v3547
        %v3549 = vpop.f32.mrf.mxu0
        %3550 = vmatprep.mubr.bf16.mxu0 %v2803
        %3551 = vmatmul.mubr.bf16.gmra.mxu0 %v2802
        %v3552 = vpop.f32.mrf.mxu0
        %v3553 = vadd.f32 0.0, %v3552
        %v3554 = vpop.f32.mrf.mxu0
        %v3555 = vpop.f32.mrf.mxu0
        %v3556 = vadd.f32 0.0, %v3555
        %v3557 = vpop.f32.mrf.mxu0
        %3558 = vmatprep.mubr.bf16.mxu0 %v2812
        %3559 = vmatmul.mubr.bf16.gmra.mxu0 %v2811
        %v3560 = vpop.f32.mrf.mxu0
        %v3561 = vadd.f32 0.0, %v3560
        %v3562 = vpop.f32.mrf.mxu0
        %v3563 = vpop.f32.mrf.mxu0
        %v3564 = vadd.f32 0.0, %v3563
        %v3565 = vpop.f32.mrf.mxu0
        %3566 = vmatprep.mubr.bf16.mxu0 %v2821
        %3567 = vmatmul.mubr.bf16.gmra.mxu0 %v2820
        %v3568 = vpop.f32.mrf.mxu0
        %v3569 = vadd.f32 0.0, %v3568
        %v3570 = vpop.f32.mrf.mxu0
        %v3571 = vpop.f32.mrf.mxu0
        %v3572 = vadd.f32 0.0, %v3571
        %v3573 = vpop.f32.mrf.mxu0
        %3574 = vmatprep.mubr.bf16.mxu0 %v2830
        %3575 = vmatmul.mubr.bf16.gmra.mxu0 %v2829
        %v3576 = vpop.f32.mrf.mxu0
        %v3577 = vadd.f32 0.0, %v3576
        %v3578 = vpop.f32.mrf.mxu0
        %v3579 = vpop.f32.mrf.mxu0
        %v3580 = vadd.f32 0.0, %v3579
        %v3581 = vpop.f32.mrf.mxu0
        %3582 = vmatprep.mubr.bf16.mxu0 %v2839
        %3583 = vmatmul.mubr.bf16.gmra.mxu0 %v2838
        %v3584 = vpop.f32.mrf.mxu0
        %v3585 = vadd.f32 0.0, %v3584
        %v3586 = vpop.f32.mrf.mxu0
        %v3587 = vpop.f32.mrf.mxu0
        %v3588 = vadd.f32 0.0, %v3587
        %v3589 = vpop.f32.mrf.mxu0
        %3590 = vmatprep.mubr.bf16.mxu0 %v2848
        %3591 = vmatmul.mubr.bf16.gmra.mxu0 %v2847
        %v3592 = vpop.f32.mrf.mxu0
        %v3593 = vadd.f32 0.0, %v3592
        %v3594 = vpop.f32.mrf.mxu0
        %v3595 = vpop.f32.mrf.mxu0
        %v3596 = vadd.f32 0.0, %v3595
        %v3597 = vpop.f32.mrf.mxu0
        %3598 = vmatprep.mubr.bf16.mxu0 %v2857
        %3599 = vmatmul.mubr.bf16.gmra.mxu0 %v2856
        %v3600 = vpop.f32.mrf.mxu0
        %v3601 = vadd.f32 0.0, %v3600
        %v3602 = vpop.f32.mrf.mxu0
        %v3603 = vpop.f32.mrf.mxu0
        %v3604 = vadd.f32 0.0, %v3603
        %v3605 = vpop.f32.mrf.mxu0
        %3606 = vmatprep.mubr.bf16.mxu0 %v2866
        %3607 = vmatmul.mubr.bf16.gmra.mxu0 %v2865
        %v3608 = vpop.f32.mrf.mxu0
        %v3609 = vadd.f32 0.0, %v3608
        %v3610 = vpop.f32.mrf.mxu0
        %v3611 = vpop.f32.mrf.mxu0
        %v3612 = vadd.f32 0.0, %v3611
        %v3613 = vpop.f32.mrf.mxu0
        %3614 = vmatprep.mubr.bf16.mxu0 %v2875
        %3615 = vmatmul.mubr.bf16.gmra.mxu0 %v2874
        %v3616 = vpop.f32.mrf.mxu0
        %v3617 = vadd.f32 0.0, %v3616
        %v3618 = vpop.f32.mrf.mxu0
        %v3619 = vpop.f32.mrf.mxu0
        %v3620 = vadd.f32 0.0, %v3619
        %v3621 = vpop.f32.mrf.mxu0
        %3622 = vmatprep.mubr.bf16.mxu0 %v2884
        %3623 = vmatmul.mubr.bf16.gmra.mxu0 %v2883
        %v3624 = vpop.f32.mrf.mxu0
        %v3625 = vadd.f32 0.0, %v3624
        %v3626 = vpop.f32.mrf.mxu0
        %v3627 = vpop.f32.mrf.mxu0
        %v3628 = vadd.f32 0.0, %v3627
        %v3629 = vpop.f32.mrf.mxu0
        %3630 = vmatprep.mubr.bf16.mxu0 %v2893
        %3631 = vmatmul.mubr.bf16.gmra.mxu0 %v2892
        %v3632 = vpop.f32.mrf.mxu0
        %v3633 = vadd.f32 0.0, %v3632
        %v3634 = vpop.f32.mrf.mxu0
        %v3635 = vpop.f32.mrf.mxu0
        %v3636 = vadd.f32 0.0, %v3635
        %v3637 = vpop.f32.mrf.mxu0
        %3638 = vmatprep.mubr.bf16.mxu0 %v2902
        %3639 = vmatmul.mubr.bf16.gmra.mxu0 %v2901
        %v3640 = vpop.f32.mrf.mxu0
        %v3641 = vadd.f32 0.0, %v3640
        %v3642 = vpop.f32.mrf.mxu0
        %v3643 = vpop.f32.mrf.mxu0
        %v3644 = vadd.f32 0.0, %v3643
        %v3645 = vpop.f32.mrf.mxu0
        %3646 = vdwg.mxu0
        %3647 = vmatprep.subr.bf16.mxu0 0
        %3648 = vmatpush1.bf16.msra.mxu0 %v3365
        %3649 = vmatprep.subr.bf16.mxu0 0
        %3650 = vmatpush1.bf16.msra.mxu0 %v3364
        %3651 = vmatprep.subr.bf16.mxu0 0
        %3652 = vmatpush1.bf16.msra.mxu0 %v3363
        %3653 = vmatprep.subr.bf16.mxu0 0
        %3654 = vmatpush1.bf16.msra.mxu0 %v3362
        %3655 = vmatprep.subr.bf16.mxu0 0
        %3656 = vmatpush1.bf16.msra.mxu0 %v3361
        %3657 = vmatprep.subr.bf16.mxu0 0
        %3658 = vmatpush1.bf16.msra.mxu0 %v3360
        %3659 = vmatprep.subr.bf16.mxu0 0
        %3660 = vmatpush1.bf16.msra.mxu0 %v3359
        %3661 = vmatprep.subr.bf16.mxu0 0
        %3662 = vmatpush1.bf16.msra.mxu0 %v3358
        %3663 = vmatprep.subr.bf16.mxu0 0
        %3664 = vmatpush2.bf16.msra.mxu0 %v3373
        %3665 = vmatprep.subr.bf16.mxu0 0
        %3666 = vmatpush2.bf16.msra.mxu0 %v3372
        %3667 = vmatprep.subr.bf16.mxu0 0
        %3668 = vmatpush2.bf16.msra.mxu0 %v3371
        %3669 = vmatprep.subr.bf16.mxu0 0
        %3670 = vmatpush2.bf16.msra.mxu0 %v3370
        %3671 = vmatprep.subr.bf16.mxu0 0
        %3672 = vmatpush2.bf16.msra.mxu0 %v3369
        %3673 = vmatprep.subr.bf16.mxu0 0
        %3674 = vmatpush2.bf16.msra.mxu0 %v3368
        %3675 = vmatprep.subr.bf16.mxu0 0
        %3676 = vmatpush2.bf16.msra.mxu0 %v3367
        %3677 = vmatprep.subr.bf16.mxu0 0
        %3678 = vmatpush2.bf16.msra.mxu0 %v3366
        %3679 = vmatprep.mubr.bf16.mxu0 %v2769
        %3680 = vmatmul.mubr.bf16.gmra.mxu0 %v2768
        %v3681 = vpop.f32.mrf.mxu0
        %v3682 = vadd.f32 %v3521, %v3681
        %v3683 = vpop.f32.mrf.mxu0
        %v3684 = vpop.f32.mrf.mxu0
        %v3685 = vadd.f32 %v3524, %v3684
        %v3686 = vpop.f32.mrf.mxu0
        %3687 = vmatprep.mubr.bf16.mxu0 %v2778
        %3688 = vmatmul.mubr.bf16.gmra.mxu0 %v2777
        %v3689 = vpop.f32.mrf.mxu0
        %v3690 = vadd.f32 %v3529, %v3689
        %v3691 = vpop.f32.mrf.mxu0
        %v3692 = vpop.f32.mrf.mxu0
        %v3693 = vadd.f32 %v3532, %v3692
        %v3694 = vpop.f32.mrf.mxu0
        %3695 = vmatprep.mubr.bf16.mxu0 %v2787
        %3696 = vmatmul.mubr.bf16.gmra.mxu0 %v2786
        %v3697 = vpop.f32.mrf.mxu0
        %v3698 = vadd.f32 %v3537, %v3697
        %v3699 = vpop.f32.mrf.mxu0
        %v3700 = vpop.f32.mrf.mxu0
        %v3701 = vadd.f32 %v3540, %v3700
        %v3702 = vpop.f32.mrf.mxu0
        %3703 = vmatprep.mubr.bf16.mxu0 %v2796
        %3704 = vmatmul.mubr.bf16.gmra.mxu0 %v2795
        %v3705 = vpop.f32.mrf.mxu0
        %v3706 = vadd.f32 %v3545, %v3705
        %v3707 = vpop.f32.mrf.mxu0
        %v3708 = vpop.f32.mrf.mxu0
        %v3709 = vadd.f32 %v3548, %v3708
        %v3710 = vpop.f32.mrf.mxu0
        %3711 = vmatprep.mubr.bf16.mxu0 %v2805
        %3712 = vmatmul.mubr.bf16.gmra.mxu0 %v2804
        %v3713 = vpop.f32.mrf.mxu0
        %v3714 = vadd.f32 %v3553, %v3713
        %v3715 = vpop.f32.mrf.mxu0
        %v3716 = vpop.f32.mrf.mxu0
        %v3717 = vadd.f32 %v3556, %v3716
        %v3718 = vpop.f32.mrf.mxu0
        %3719 = vmatprep.mubr.bf16.mxu0 %v2814
        %3720 = vmatmul.mubr.bf16.gmra.mxu0 %v2813
        %v3721 = vpop.f32.mrf.mxu0
        %v3722 = vadd.f32 %v3561, %v3721
        %v3723 = vpop.f32.mrf.mxu0
        %v3724 = vpop.f32.mrf.mxu0
        %v3725 = vadd.f32 %v3564, %v3724
        %v3726 = vpop.f32.mrf.mxu0
        %3727 = vmatprep.mubr.bf16.mxu0 %v2823
        %3728 = vmatmul.mubr.bf16.gmra.mxu0 %v2822
        %v3729 = vpop.f32.mrf.mxu0
        %v3730 = vadd.f32 %v3569, %v3729
        %v3731 = vpop.f32.mrf.mxu0
        %v3732 = vpop.f32.mrf.mxu0
        %v3733 = vadd.f32 %v3572, %v3732
        %v3734 = vpop.f32.mrf.mxu0
        %3735 = vmatprep.mubr.bf16.mxu0 %v2832
        %3736 = vmatmul.mubr.bf16.gmra.mxu0 %v2831
        %v3737 = vpop.f32.mrf.mxu0
        %v3738 = vadd.f32 %v3577, %v3737
        %v3739 = vpop.f32.mrf.mxu0
        %v3740 = vpop.f32.mrf.mxu0
        %v3741 = vadd.f32 %v3580, %v3740
        %v3742 = vpop.f32.mrf.mxu0
        %3743 = vmatprep.mubr.bf16.mxu0 %v2841
        %3744 = vmatmul.mubr.bf16.gmra.mxu0 %v2840
        %v3745 = vpop.f32.mrf.mxu0
        %v3746 = vadd.f32 %v3585, %v3745
        %v3747 = vpop.f32.mrf.mxu0
        %v3748 = vpop.f32.mrf.mxu0
        %v3749 = vadd.f32 %v3588, %v3748
        %v3750 = vpop.f32.mrf.mxu0
        %3751 = vmatprep.mubr.bf16.mxu0 %v2850
        %3752 = vmatmul.mubr.bf16.gmra.mxu0 %v2849
        %v3753 = vpop.f32.mrf.mxu0
        %v3754 = vadd.f32 %v3593, %v3753
        %v3755 = vpop.f32.mrf.mxu0
        %v3756 = vpop.f32.mrf.mxu0
        %v3757 = vadd.f32 %v3596, %v3756
        %v3758 = vpop.f32.mrf.mxu0
        %3759 = vmatprep.mubr.bf16.mxu0 %v2859
        %3760 = vmatmul.mubr.bf16.gmra.mxu0 %v2858
        %v3761 = vpop.f32.mrf.mxu0
        %v3762 = vadd.f32 %v3601, %v3761
        %v3763 = vpop.f32.mrf.mxu0
        %v3764 = vpop.f32.mrf.mxu0
        %v3765 = vadd.f32 %v3604, %v3764
        %v3766 = vpop.f32.mrf.mxu0
        %3767 = vmatprep.mubr.bf16.mxu0 %v2868
        %3768 = vmatmul.mubr.bf16.gmra.mxu0 %v2867
        %v3769 = vpop.f32.mrf.mxu0
        %v3770 = vadd.f32 %v3609, %v3769
        %v3771 = vpop.f32.mrf.mxu0
        %v3772 = vpop.f32.mrf.mxu0
        %v3773 = vadd.f32 %v3612, %v3772
        %v3774 = vpop.f32.mrf.mxu0
        %3775 = vmatprep.mubr.bf16.mxu0 %v2877
        %3776 = vmatmul.mubr.bf16.gmra.mxu0 %v2876
        %v3777 = vpop.f32.mrf.mxu0
        %v3778 = vadd.f32 %v3617, %v3777
        %v3779 = vpop.f32.mrf.mxu0
        %v3780 = vpop.f32.mrf.mxu0
        %v3781 = vadd.f32 %v3620, %v3780
        %v3782 = vpop.f32.mrf.mxu0
        %3783 = vmatprep.mubr.bf16.mxu0 %v2886
        %3784 = vmatmul.mubr.bf16.gmra.mxu0 %v2885
        %v3785 = vpop.f32.mrf.mxu0
        %v3786 = vadd.f32 %v3625, %v3785
        %v3787 = vpop.f32.mrf.mxu0
        %v3788 = vpop.f32.mrf.mxu0
        %v3789 = vadd.f32 %v3628, %v3788
        %v3790 = vpop.f32.mrf.mxu0
        %3791 = vmatprep.mubr.bf16.mxu0 %v2895
        %3792 = vmatmul.mubr.bf16.gmra.mxu0 %v2894
        %v3793 = vpop.f32.mrf.mxu0
        %v3794 = vadd.f32 %v3633, %v3793
        %v3795 = vpop.f32.mrf.mxu0
        %v3796 = vpop.f32.mrf.mxu0
        %v3797 = vadd.f32 %v3636, %v3796
        %v3798 = vpop.f32.mrf.mxu0
        %3799 = vmatprep.mubr.bf16.mxu0 %v2904
        %3800 = vmatmul.mubr.bf16.gmra.mxu0 %v2903
        %v3801 = vpop.f32.mrf.mxu0
        %v3802 = vadd.f32 %v3641, %v3801
        %v3803 = vpop.f32.mrf.mxu0
        %v3804 = vpop.f32.mrf.mxu0
        %v3805 = vadd.f32 %v3644, %v3804
        %v3806 = vpop.f32.mrf.mxu0
        %3807 = vdwg.mxu0
        %3808 = vmatprep.subr.bf16.mxu0 0
        %3809 = vmatpush1.bf16.msra.mxu0 %v3381
        %3810 = vmatprep.subr.bf16.mxu0 0
        %3811 = vmatpush1.bf16.msra.mxu0 %v3380
        %3812 = vmatprep.subr.bf16.mxu0 0
        %3813 = vmatpush1.bf16.msra.mxu0 %v3379
        %3814 = vmatprep.subr.bf16.mxu0 0
        %3815 = vmatpush1.bf16.msra.mxu0 %v3378
        %3816 = vmatprep.subr.bf16.mxu0 0
        %3817 = vmatpush1.bf16.msra.mxu0 %v3377
        %3818 = vmatprep.subr.bf16.mxu0 0
        %3819 = vmatpush1.bf16.msra.mxu0 %v3376
        %3820 = vmatprep.subr.bf16.mxu0 0
        %3821 = vmatpush1.bf16.msra.mxu0 %v3375
        %3822 = vmatprep.subr.bf16.mxu0 0
        %3823 = vmatpush1.bf16.msra.mxu0 %v3374
        %3824 = vmatprep.subr.bf16.mxu0 0
        %3825 = vmatpush2.bf16.msra.mxu0 %v3389
        %3826 = vmatprep.subr.bf16.mxu0 0
        %3827 = vmatpush2.bf16.msra.mxu0 %v3388
        %3828 = vmatprep.subr.bf16.mxu0 0
        %3829 = vmatpush2.bf16.msra.mxu0 %v3387
        %3830 = vmatprep.subr.bf16.mxu0 0
        %3831 = vmatpush2.bf16.msra.mxu0 %v3386
        %3832 = vmatprep.subr.bf16.mxu0 0
        %3833 = vmatpush2.bf16.msra.mxu0 %v3385
        %3834 = vmatprep.subr.bf16.mxu0 0
        %3835 = vmatpush2.bf16.msra.mxu0 %v3384
        %3836 = vmatprep.subr.bf16.mxu0 0
        %3837 = vmatpush2.bf16.msra.mxu0 %v3383
        %3838 = vmatprep.subr.bf16.mxu0 0
        %3839 = vmatpush2.bf16.msra.mxu0 %v3382
        %3840 = vmatprep.mubr.bf16.mxu0 %v2771
        %3841 = vmatmul.mubr.bf16.gmra.mxu0 %v2770
        %v3842 = vpop.f32.mrf.mxu0
        %v3843 = vadd.f32 %v3682, %v3842
        %v3844 = vpop.f32.mrf.mxu0
        %v3845 = vpop.f32.mrf.mxu0
        %v3846 = vadd.f32 %v3685, %v3845
        %v3847 = vpop.f32.mrf.mxu0
        %3848 = vmatprep.mubr.bf16.mxu0 %v2780
        %3849 = vmatmul.mubr.bf16.gmra.mxu0 %v2779
        %v3850 = vpop.f32.mrf.mxu0
        %v3851 = vadd.f32 %v3690, %v3850
        %v3852 = vpop.f32.mrf.mxu0
        %v3853 = vpop.f32.mrf.mxu0
        %v3854 = vadd.f32 %v3693, %v3853
        %v3855 = vpop.f32.mrf.mxu0
        %3856 = vmatprep.mubr.bf16.mxu0 %v2789
        %3857 = vmatmul.mubr.bf16.gmra.mxu0 %v2788
        %v3858 = vpop.f32.mrf.mxu0
        %v3859 = vadd.f32 %v3698, %v3858
        %v3860 = vpop.f32.mrf.mxu0
        %v3861 = vpop.f32.mrf.mxu0
        %v3862 = vadd.f32 %v3701, %v3861
        %v3863 = vpop.f32.mrf.mxu0
        %3864 = vmatprep.mubr.bf16.mxu0 %v2798
        %3865 = vmatmul.mubr.bf16.gmra.mxu0 %v2797
        %v3866 = vpop.f32.mrf.mxu0
        %v3867 = vadd.f32 %v3706, %v3866
        %v3868 = vpop.f32.mrf.mxu0
        %v3869 = vpop.f32.mrf.mxu0
        %v3870 = vadd.f32 %v3709, %v3869
        %v3871 = vpop.f32.mrf.mxu0
        %3872 = vmatprep.mubr.bf16.mxu0 %v2807
        %3873 = vmatmul.mubr.bf16.gmra.mxu0 %v2806
        %v3874 = vpop.f32.mrf.mxu0
        %v3875 = vadd.f32 %v3714, %v3874
        %v3876 = vpop.f32.mrf.mxu0
        %v3877 = vpop.f32.mrf.mxu0
        %v3878 = vadd.f32 %v3717, %v3877
        %v3879 = vpop.f32.mrf.mxu0
        %3880 = vmatprep.mubr.bf16.mxu0 %v2816
        %3881 = vmatmul.mubr.bf16.gmra.mxu0 %v2815
        %v3882 = vpop.f32.mrf.mxu0
        %v3883 = vadd.f32 %v3722, %v3882
        %v3884 = vpop.f32.mrf.mxu0
        %v3885 = vpop.f32.mrf.mxu0
        %v3886 = vadd.f32 %v3725, %v3885
        %v3887 = vpop.f32.mrf.mxu0
        %3888 = vmatprep.mubr.bf16.mxu0 %v2825
        %3889 = vmatmul.mubr.bf16.gmra.mxu0 %v2824
        %v3890 = vpop.f32.mrf.mxu0
        %v3891 = vadd.f32 %v3730, %v3890
        %v3892 = vpop.f32.mrf.mxu0
        %v3893 = vpop.f32.mrf.mxu0
        %v3894 = vadd.f32 %v3733, %v3893
        %v3895 = vpop.f32.mrf.mxu0
        %3896 = vmatprep.mubr.bf16.mxu0 %v2834
        %3897 = vmatmul.mubr.bf16.gmra.mxu0 %v2833
        %v3898 = vpop.f32.mrf.mxu0
        %v3899 = vadd.f32 %v3738, %v3898
        %v3900 = vpop.f32.mrf.mxu0
        %v3901 = vpop.f32.mrf.mxu0
        %v3902 = vadd.f32 %v3741, %v3901
        %v3903 = vpop.f32.mrf.mxu0
        %3904 = vmatprep.mubr.bf16.mxu0 %v2843
        %3905 = vmatmul.mubr.bf16.gmra.mxu0 %v2842
        %v3906 = vpop.f32.mrf.mxu0
        %v3907 = vadd.f32 %v3746, %v3906
        %v3908 = vpop.f32.mrf.mxu0
        %v3909 = vpop.f32.mrf.mxu0
        %v3910 = vadd.f32 %v3749, %v3909
        %v3911 = vpop.f32.mrf.mxu0
        %3912 = vmatprep.mubr.bf16.mxu0 %v2852
        %3913 = vmatmul.mubr.bf16.gmra.mxu0 %v2851
        %v3914 = vpop.f32.mrf.mxu0
        %v3915 = vadd.f32 %v3754, %v3914
        %v3916 = vpop.f32.mrf.mxu0
        %v3917 = vpop.f32.mrf.mxu0
        %v3918 = vadd.f32 %v3757, %v3917
        %v3919 = vpop.f32.mrf.mxu0
        %3920 = vmatprep.mubr.bf16.mxu0 %v2861
        %3921 = vmatmul.mubr.bf16.gmra.mxu0 %v2860
        %v3922 = vpop.f32.mrf.mxu0
        %v3923 = vadd.f32 %v3762, %v3922
        %v3924 = vpop.f32.mrf.mxu0
        %v3925 = vpop.f32.mrf.mxu0
        %v3926 = vadd.f32 %v3765, %v3925
        %v3927 = vpop.f32.mrf.mxu0
        %3928 = vmatprep.mubr.bf16.mxu0 %v2870
        %3929 = vmatmul.mubr.bf16.gmra.mxu0 %v2869
        %v3930 = vpop.f32.mrf.mxu0
        %v3931 = vadd.f32 %v3770, %v3930
        %v3932 = vpop.f32.mrf.mxu0
        %v3933 = vpop.f32.mrf.mxu0
        %v3934 = vadd.f32 %v3773, %v3933
        %v3935 = vpop.f32.mrf.mxu0
        %3936 = vmatprep.mubr.bf16.mxu0 %v2879
        %3937 = vmatmul.mubr.bf16.gmra.mxu0 %v2878
        %v3938 = vpop.f32.mrf.mxu0
        %v3939 = vadd.f32 %v3778, %v3938
        %v3940 = vpop.f32.mrf.mxu0
        %v3941 = vpop.f32.mrf.mxu0
        %v3942 = vadd.f32 %v3781, %v3941
        %v3943 = vpop.f32.mrf.mxu0
        %3944 = vmatprep.mubr.bf16.mxu0 %v2888
        %3945 = vmatmul.mubr.bf16.gmra.mxu0 %v2887
        %v3946 = vpop.f32.mrf.mxu0
        %v3947 = vadd.f32 %v3786, %v3946
        %v3948 = vpop.f32.mrf.mxu0
        %v3949 = vpop.f32.mrf.mxu0
        %v3950 = vadd.f32 %v3789, %v3949
        %v3951 = vpop.f32.mrf.mxu0
        %3952 = vmatprep.mubr.bf16.mxu0 %v2897
        %3953 = vmatmul.mubr.bf16.gmra.mxu0 %v2896
        %v3954 = vpop.f32.mrf.mxu0
        %v3955 = vadd.f32 %v3794, %v3954
        %v3956 = vpop.f32.mrf.mxu0
        %v3957 = vpop.f32.mrf.mxu0
        %v3958 = vadd.f32 %v3797, %v3957
        %v3959 = vpop.f32.mrf.mxu0
        %3960 = vmatprep.mubr.bf16.mxu0 %v2906
        %3961 = vmatmul.mubr.bf16.gmra.mxu0 %v2905
        %v3962 = vpop.f32.mrf.mxu0
        %v3963 = vadd.f32 %v3802, %v3962
        %v3964 = vpop.f32.mrf.mxu0
        %v3965 = vpop.f32.mrf.mxu0
        %v3966 = vadd.f32 %v3805, %v3965
        %v3967 = vpop.f32.mrf.mxu0
        %3968 = vdwg.mxu0
        %3969 = vmatprep.subr.bf16.mxu0 0
        %3970 = vmatpush1.bf16.msra.mxu0 %v3397
        %3971 = vmatprep.subr.bf16.mxu0 0
        %3972 = vmatpush1.bf16.msra.mxu0 %v3396
        %3973 = vmatprep.subr.bf16.mxu0 0
        %3974 = vmatpush1.bf16.msra.mxu0 %v3395
        %3975 = vmatprep.subr.bf16.mxu0 0
        %3976 = vmatpush1.bf16.msra.mxu0 %v3394
        %3977 = vmatprep.subr.bf16.mxu0 0
        %3978 = vmatpush1.bf16.msra.mxu0 %v3393
        %3979 = vmatprep.subr.bf16.mxu0 0
        %3980 = vmatpush1.bf16.msra.mxu0 %v3392
        %3981 = vmatprep.subr.bf16.mxu0 0
        %3982 = vmatpush1.bf16.msra.mxu0 %v3391
        %3983 = vmatprep.subr.bf16.mxu0 0
        %3984 = vmatpush1.bf16.msra.mxu0 %v3390
        %3985 = vmatprep.subr.bf16.mxu0 0
        %3986 = vmatpush2.bf16.msra.mxu0 %v3405
        %3987 = vmatprep.subr.bf16.mxu0 0
        %3988 = vmatpush2.bf16.msra.mxu0 %v3404
        %3989 = vmatprep.subr.bf16.mxu0 0
        %3990 = vmatpush2.bf16.msra.mxu0 %v3403
        %3991 = vmatprep.subr.bf16.mxu0 0
        %3992 = vmatpush2.bf16.msra.mxu0 %v3402
        %3993 = vmatprep.subr.bf16.mxu0 0
        %3994 = vmatpush2.bf16.msra.mxu0 %v3401
        %3995 = vmatprep.subr.bf16.mxu0 0
        %3996 = vmatpush2.bf16.msra.mxu0 %v3400
        %3997 = vmatprep.subr.bf16.mxu0 0
        %3998 = vmatpush2.bf16.msra.mxu0 %v3399
        %3999 = vmatprep.subr.bf16.mxu0 0
        %4000 = vmatpush2.bf16.msra.mxu0 %v3398
        %4001 = vmatprep.mubr.bf16.mxu0 %v2773
        %4002 = vmatmul.mubr.bf16.gmra.mxu0 %v2772
        %v4003 = vpop.f32.mrf.mxu0
        %v4004 = vadd.f32 %v3843, %v4003
        %v4005 = vpop.f32.mrf.mxu0
        %v4006 = vpop.f32.mrf.mxu0
        %v4007 = vadd.f32 %v3846, %v4006
        %v4008 = vpop.f32.mrf.mxu0
        %4009 = vmatprep.mubr.bf16.mxu0 %v2782
        %4010 = vmatmul.mubr.bf16.gmra.mxu0 %v2781
        %v4011 = vpop.f32.mrf.mxu0
        %v4012 = vadd.f32 %v3851, %v4011
        %v4013 = vpop.f32.mrf.mxu0
        %v4014 = vpop.f32.mrf.mxu0
        %v4015 = vadd.f32 %v3854, %v4014
        %v4016 = vpop.f32.mrf.mxu0
        %4017 = vmatprep.mubr.bf16.mxu0 %v2791
        %4018 = vmatmul.mubr.bf16.gmra.mxu0 %v2790
        %v4019 = vpop.f32.mrf.mxu0
        %v4020 = vadd.f32 %v3859, %v4019
        %v4021 = vpop.f32.mrf.mxu0
        %v4022 = vpop.f32.mrf.mxu0
        %v4023 = vadd.f32 %v3862, %v4022
        %v4024 = vpop.f32.mrf.mxu0
        %4025 = vmatprep.mubr.bf16.mxu0 %v2800
        %4026 = vmatmul.mubr.bf16.gmra.mxu0 %v2799
        %v4027 = vpop.f32.mrf.mxu0
        %v4028 = vadd.f32 %v3867, %v4027
        %v4029 = vpop.f32.mrf.mxu0
        %v4030 = vpop.f32.mrf.mxu0
        %v4031 = vadd.f32 %v3870, %v4030
        %v4032 = vpop.f32.mrf.mxu0
        %4033 = vmatprep.mubr.bf16.mxu0 %v2809
        %4034 = vmatmul.mubr.bf16.gmra.mxu0 %v2808
        %v4035 = vpop.f32.mrf.mxu0
        %v4036 = vadd.f32 %v3875, %v4035
        %v4037 = vpop.f32.mrf.mxu0
        %v4038 = vpop.f32.mrf.mxu0
        %v4039 = vadd.f32 %v3878, %v4038
        %v4040 = vpop.f32.mrf.mxu0
        %4041 = vmatprep.mubr.bf16.mxu0 %v2818
        %4042 = vmatmul.mubr.bf16.gmra.mxu0 %v2817
        %v4043 = vpop.f32.mrf.mxu0
        %v4044 = vadd.f32 %v3883, %v4043
        %v4045 = vpop.f32.mrf.mxu0
        %v4046 = vpop.f32.mrf.mxu0
        %v4047 = vadd.f32 %v3886, %v4046
        %v4048 = vpop.f32.mrf.mxu0
        %4049 = vmatprep.mubr.bf16.mxu0 %v2827
        %4050 = vmatmul.mubr.bf16.gmra.mxu0 %v2826
        %v4051 = vpop.f32.mrf.mxu0
        %v4052 = vadd.f32 %v3891, %v4051
        %v4053 = vpop.f32.mrf.mxu0
        %v4054 = vpop.f32.mrf.mxu0
        %v4055 = vadd.f32 %v3894, %v4054
        %v4056 = vpop.f32.mrf.mxu0
        %4057 = vmatprep.mubr.bf16.mxu0 %v2836
        %4058 = vmatmul.mubr.bf16.gmra.mxu0 %v2835
        %v4059 = vpop.f32.mrf.mxu0
        %v4060 = vadd.f32 %v3899, %v4059
        %v4061 = vpop.f32.mrf.mxu0
        %v4062 = vpop.f32.mrf.mxu0
        %v4063 = vadd.f32 %v3902, %v4062
        %v4064 = vpop.f32.mrf.mxu0
        %4065 = vmatprep.mubr.bf16.mxu0 %v2845
        %4066 = vmatmul.mubr.bf16.gmra.mxu0 %v2844
        %v4067 = vpop.f32.mrf.mxu0
        %v4068 = vadd.f32 %v3907, %v4067
        %v4069 = vpop.f32.mrf.mxu0
        %v4070 = vpop.f32.mrf.mxu0
        %v4071 = vadd.f32 %v3910, %v4070
        %v4072 = vpop.f32.mrf.mxu0
        %4073 = vmatprep.mubr.bf16.mxu0 %v2854
        %4074 = vmatmul.mubr.bf16.gmra.mxu0 %v2853
        %v4075 = vpop.f32.mrf.mxu0
        %v4076 = vadd.f32 %v3915, %v4075
        %v4077 = vpop.f32.mrf.mxu0
        %v4078 = vpop.f32.mrf.mxu0
        %v4079 = vadd.f32 %v3918, %v4078
        %v4080 = vpop.f32.mrf.mxu0
        %4081 = vmatprep.mubr.bf16.mxu0 %v2863
        %4082 = vmatmul.mubr.bf16.gmra.mxu0 %v2862
        %v4083 = vpop.f32.mrf.mxu0
        %v4084 = vadd.f32 %v3923, %v4083
        %v4085 = vpop.f32.mrf.mxu0
        %v4086 = vpop.f32.mrf.mxu0
        %v4087 = vadd.f32 %v3926, %v4086
        %v4088 = vpop.f32.mrf.mxu0
        %4089 = vmatprep.mubr.bf16.mxu0 %v2872
        %4090 = vmatmul.mubr.bf16.gmra.mxu0 %v2871
        %v4091 = vpop.f32.mrf.mxu0
        %v4092 = vadd.f32 %v3931, %v4091
        %v4093 = vpop.f32.mrf.mxu0
        %v4094 = vpop.f32.mrf.mxu0
        %v4095 = vadd.f32 %v3934, %v4094
        %v4096 = vpop.f32.mrf.mxu0
        %4097 = vmatprep.mubr.bf16.mxu0 %v2881
        %4098 = vmatmul.mubr.bf16.gmra.mxu0 %v2880
        %v4099 = vpop.f32.mrf.mxu0
        %v4100 = vadd.f32 %v3939, %v4099
        %v4101 = vpop.f32.mrf.mxu0
        %v4102 = vpop.f32.mrf.mxu0
        %v4103 = vadd.f32 %v3942, %v4102
        %v4104 = vpop.f32.mrf.mxu0
        %4105 = vmatprep.mubr.bf16.mxu0 %v2890
        %4106 = vmatmul.mubr.bf16.gmra.mxu0 %v2889
        %v4107 = vpop.f32.mrf.mxu0
        %v4108 = vadd.f32 %v3947, %v4107
        %v4109 = vpop.f32.mrf.mxu0
        %v4110 = vpop.f32.mrf.mxu0
        %v4111 = vadd.f32 %v3950, %v4110
        %v4112 = vpop.f32.mrf.mxu0
        %4113 = vmatprep.mubr.bf16.mxu0 %v2899
        %4114 = vmatmul.mubr.bf16.gmra.mxu0 %v2898
        %v4115 = vpop.f32.mrf.mxu0
        %v4116 = vadd.f32 %v3955, %v4115
        %v4117 = vpop.f32.mrf.mxu0
        %v4118 = vpop.f32.mrf.mxu0
        %v4119 = vadd.f32 %v3958, %v4118
        %v4120 = vpop.f32.mrf.mxu0
        %4121 = vmatprep.mubr.bf16.mxu0 %v2908
        %4122 = vmatmul.mubr.bf16.gmra.mxu0 %v2907
        %v4123 = vpop.f32.mrf.mxu0
        %v4124 = vadd.f32 %v3963, %v4123
        %v4125 = vpop.f32.mrf.mxu0
        %v4126 = vpop.f32.mrf.mxu0
        %v4127 = vadd.f32 %v3966, %v4126
        %v4128 = vpop.f32.mrf.mxu0
        %4129 = vdwg.mxu0
        %4130 = vmatprep.subr.bf16.mxu0 0
        %4131 = vmatpush1.bf16.msra.mxu0 %v3413
        %4132 = vmatprep.subr.bf16.mxu0 0
        %4133 = vmatpush1.bf16.msra.mxu0 %v3412
        %4134 = vmatprep.subr.bf16.mxu0 0
        %4135 = vmatpush1.bf16.msra.mxu0 %v3411
        %4136 = vmatprep.subr.bf16.mxu0 0
        %4137 = vmatpush1.bf16.msra.mxu0 %v3410
        %4138 = vmatprep.subr.bf16.mxu0 0
        %4139 = vmatpush1.bf16.msra.mxu0 %v3409
        %4140 = vmatprep.subr.bf16.mxu0 0
        %4141 = vmatpush1.bf16.msra.mxu0 %v3408
        %4142 = vmatprep.subr.bf16.mxu0 0
        %4143 = vmatpush1.bf16.msra.mxu0 %v3407
        %4144 = vmatprep.subr.bf16.mxu0 0
        %4145 = vmatpush1.bf16.msra.mxu0 %v3406
        %4146 = vmatprep.subr.bf16.mxu0 0
        %4147 = vmatpush2.bf16.msra.mxu0 0
        %4148 = vmatprep.subr.bf16.mxu0 0
        %4149 = vmatpush2.bf16.msra.mxu0 0
        %4150 = vmatprep.subr.bf16.mxu0 0
        %4151 = vmatpush2.bf16.msra.mxu0 0
        %4152 = vmatprep.subr.bf16.mxu0 0
        %4153 = vmatpush2.bf16.msra.mxu0 0
        %4154 = vmatprep.subr.bf16.mxu0 0
        %4155 = vmatpush2.bf16.msra.mxu0 0
        %4156 = vmatprep.subr.bf16.mxu0 0
        %4157 = vmatpush2.bf16.msra.mxu0 0
        %4158 = vmatprep.subr.bf16.mxu0 0
        %4159 = vmatpush2.bf16.msra.mxu0 0
        %4160 = vmatprep.subr.bf16.mxu0 0
        %4161 = vmatpush2.bf16.msra.mxu0 0
        %4162 = vmatprep.mubr.bf16.mxu0 0
        %4163 = vmatmul.mubr.bf16.gmra.mxu0 %v2774
        %v4164 = vpop.f32.mrf.mxu0
        %v4165 = vadd.f32 %v4004, %v4164
        %v4166 = vpop.f32.mrf.mxu0
        %v4167 = vpop.f32.mrf.mxu0
        %v4168 = vadd.f32 %v4007, %v4167
        %v4169 = vpop.f32.mrf.mxu0
        %4170 = vmatprep.mubr.bf16.mxu0 0
        %4171 = vmatmul.mubr.bf16.gmra.mxu0 %v2783
        %v4172 = vpop.f32.mrf.mxu0
        %v4173 = vadd.f32 %v4012, %v4172
        %v4174 = vpop.f32.mrf.mxu0
        %v4175 = vpop.f32.mrf.mxu0
        %v4176 = vadd.f32 %v4015, %v4175
        %v4177 = vpop.f32.mrf.mxu0
        %4178 = vmatprep.mubr.bf16.mxu0 0
        %4179 = vmatmul.mubr.bf16.gmra.mxu0 %v2792
        %v4180 = vpop.f32.mrf.mxu0
        %v4181 = vadd.f32 %v4020, %v4180
        %v4182 = vpop.f32.mrf.mxu0
        %v4183 = vpop.f32.mrf.mxu0
        %v4184 = vadd.f32 %v4023, %v4183
        %v4185 = vpop.f32.mrf.mxu0
        %4186 = vmatprep.mubr.bf16.mxu0 0
        %4187 = vmatmul.mubr.bf16.gmra.mxu0 %v2801
        %v4188 = vpop.f32.mrf.mxu0
        %v4189 = vadd.f32 %v4028, %v4188
        %v4190 = vpop.f32.mrf.mxu0
        %v4191 = vpop.f32.mrf.mxu0
        %v4192 = vadd.f32 %v4031, %v4191
        %v4193 = vpop.f32.mrf.mxu0
        %4194 = vmatprep.mubr.bf16.mxu0 0
        %4195 = vmatmul.mubr.bf16.gmra.mxu0 %v2810
        %v4196 = vpop.f32.mrf.mxu0
        %v4197 = vadd.f32 %v4036, %v4196
        %v4198 = vpop.f32.mrf.mxu0
        %v4199 = vpop.f32.mrf.mxu0
        %v4200 = vadd.f32 %v4039, %v4199
        %v4201 = vpop.f32.mrf.mxu0
        %4202 = vmatprep.mubr.bf16.mxu0 0
        %4203 = vmatmul.mubr.bf16.gmra.mxu0 %v2819
        %v4204 = vpop.f32.mrf.mxu0
        %v4205 = vadd.f32 %v4044, %v4204
        %v4206 = vpop.f32.mrf.mxu0
        %v4207 = vpop.f32.mrf.mxu0
        %v4208 = vadd.f32 %v4047, %v4207
        %v4209 = vpop.f32.mrf.mxu0
        %4210 = vmatprep.mubr.bf16.mxu0 0
        %4211 = vmatmul.mubr.bf16.gmra.mxu0 %v2828
        %v4212 = vpop.f32.mrf.mxu0
        %v4213 = vadd.f32 %v4052, %v4212
        %v4214 = vpop.f32.mrf.mxu0
        %v4215 = vpop.f32.mrf.mxu0
        %v4216 = vadd.f32 %v4055, %v4215
        %v4217 = vpop.f32.mrf.mxu0
        %4218 = vmatprep.mubr.bf16.mxu0 0
        %4219 = vmatmul.mubr.bf16.gmra.mxu0 %v2837
        %v4220 = vpop.f32.mrf.mxu0
        %v4221 = vadd.f32 %v4060, %v4220
        %v4222 = vpop.f32.mrf.mxu0
        %v4223 = vpop.f32.mrf.mxu0
        %v4224 = vadd.f32 %v4063, %v4223
        %v4225 = vpop.f32.mrf.mxu0
        %4226 = vmatprep.mubr.bf16.mxu0 0
        %4227 = vmatmul.mubr.bf16.gmra.mxu0 %v2846
        %v4228 = vpop.f32.mrf.mxu0
        %v4229 = vadd.f32 %v4068, %v4228
        %v4230 = vpop.f32.mrf.mxu0
        %v4231 = vpop.f32.mrf.mxu0
        %v4232 = vadd.f32 %v4071, %v4231
        %v4233 = vpop.f32.mrf.mxu0
        %4234 = vmatprep.mubr.bf16.mxu0 0
        %4235 = vmatmul.mubr.bf16.gmra.mxu0 %v2855
        %v4236 = vpop.f32.mrf.mxu0
        %v4237 = vadd.f32 %v4076, %v4236
        %v4238 = vpop.f32.mrf.mxu0
        %v4239 = vpop.f32.mrf.mxu0
        %v4240 = vadd.f32 %v4079, %v4239
        %v4241 = vpop.f32.mrf.mxu0
        %4242 = vmatprep.mubr.bf16.mxu0 0
        %4243 = vmatmul.mubr.bf16.gmra.mxu0 %v2864
        %v4244 = vpop.f32.mrf.mxu0
        %v4245 = vadd.f32 %v4084, %v4244
        %v4246 = vpop.f32.mrf.mxu0
        %v4247 = vpop.f32.mrf.mxu0
        %v4248 = vadd.f32 %v4087, %v4247
        %v4249 = vpop.f32.mrf.mxu0
        %4250 = vmatprep.mubr.bf16.mxu0 0
        %4251 = vmatmul.mubr.bf16.gmra.mxu0 %v2873
        %v4252 = vpop.f32.mrf.mxu0
        %v4253 = vadd.f32 %v4092, %v4252
        %v4254 = vpop.f32.mrf.mxu0
        %v4255 = vpop.f32.mrf.mxu0
        %v4256 = vadd.f32 %v4095, %v4255
        %v4257 = vpop.f32.mrf.mxu0
        %4258 = vmatprep.mubr.bf16.mxu0 0
        %4259 = vmatmul.mubr.bf16.gmra.mxu0 %v2882
        %v4260 = vpop.f32.mrf.mxu0
        %v4261 = vadd.f32 %v4100, %v4260
        %v4262 = vpop.f32.mrf.mxu0
        %v4263 = vpop.f32.mrf.mxu0
        %v4264 = vadd.f32 %v4103, %v4263
        %v4265 = vpop.f32.mrf.mxu0
        %4266 = vmatprep.mubr.bf16.mxu0 0
        %4267 = vmatmul.mubr.bf16.gmra.mxu0 %v2891
        %v4268 = vpop.f32.mrf.mxu0
        %v4269 = vadd.f32 %v4108, %v4268
        %v4270 = vpop.f32.mrf.mxu0
        %v4271 = vpop.f32.mrf.mxu0
        %v4272 = vadd.f32 %v4111, %v4271
        %v4273 = vpop.f32.mrf.mxu0
        %4274 = vmatprep.mubr.bf16.mxu0 0
        %4275 = vmatmul.mubr.bf16.gmra.mxu0 %v2900
        %v4276 = vpop.f32.mrf.mxu0
        %v4277 = vadd.f32 %v4116, %v4276
        %v4278 = vpop.f32.mrf.mxu0
        %v4279 = vpop.f32.mrf.mxu0
        %v4280 = vadd.f32 %v4119, %v4279
        %v4281 = vpop.f32.mrf.mxu0
        %4282 = vmatprep.mubr.bf16.mxu0 0
        %4283 = vmatmul.mubr.bf16.gmra.mxu0 %v2909
        %v4284 = vpop.f32.mrf.mxu0
        %v4285 = vadd.f32 %v4124, %v4284
        %v4286 = vpop.f32.mrf.mxu0
        %v4287 = vpop.f32.mrf.mxu0
        %v4288 = vadd.f32 %v4127, %v4287
        %v4289 = vpop.f32.mrf.mxu0
        %4290 = vdwg.mxu0
        %v4291 = vadd.f32 %v4165, %v4168
        %v4292 = vadd.f32 %v4291, %v4173
        %v4293 = vadd.f32 %v4292, %v4176
        %v4294 = vadd.f32 %v4293, %v4181
        %v4295 = vadd.f32 %v4294, %v4184
        %v4296 = vadd.f32 %v4295, %v4189
        %v4297 = vadd.f32 %v4296, %v4192
        %v4298 = vadd.f32 %v4297, %v4197
        %v4299 = vadd.f32 %v4298, %v4200
        %v4300 = vadd.f32 %v4299, %v4205
        %v4301 = vadd.f32 %v4300, %v4208
        %v4302 = vadd.f32 %v4301, %v4213
        %v4303 = vadd.f32 %v4302, %v4216
        %v4304 = vadd.f32 %v4303, %v4221
        %v4305 = vadd.f32 %v4304, %v4224
        %v4306 = vadd.f32 %v4305, %v4229
        %v4307 = vadd.f32 %v4306, %v4232
        %v4308 = vadd.f32 %v4307, %v4237
        %v4309 = vadd.f32 %v4308, %v4240
        %v4310 = vadd.f32 %v4309, %v4245
        %v4311 = vadd.f32 %v4310, %v4248
        %v4312 = vadd.f32 %v4311, %v4253
        %v4313 = vadd.f32 %v4312, %v4256
        %v4314 = vadd.f32 %v4313, %v4261
        %v4315 = vadd.f32 %v4314, %v4264
        %v4316 = vadd.f32 %v4315, %v4269
        %v4317 = vadd.f32 %v4316, %v4272
        %v4318 = vadd.f32 %v4317, %v4277
        %v4319 = vadd.f32 %v4318, %v4280
        %v4320 = vadd.f32 %v4319, %v4285
        %v4321 = vadd.f32 %v4320, %v4288
        %v4322 = vrot.slane %v4321, 4
        %v4323 = vadd.f32 %v4321, %v4322
        %v4324 = vrot.slane %v4323, 2
        %v4325 = vadd.f32 %v4323, %v4324
        %v4326 = vrot.slane %v4325, 1
        %v4327 = vadd.f32 %v4325, %v4326
        %v4328 = vmul.f32 %v4165, %v4165
        %v4329 = vmul.f32 %v4168, %v4168
        %v4330 = vmul.f32 %v4173, %v4173
        %v4331 = vmul.f32 %v4176, %v4176
        %v4332 = vmul.f32 %v4181, %v4181
        %v4333 = vmul.f32 %v4184, %v4184
        %v4334 = vmul.f32 %v4189, %v4189
        %v4335 = vmul.f32 %v4192, %v4192
        %v4336 = vmul.f32 %v4197, %v4197
        %v4337 = vmul.f32 %v4200, %v4200
        %v4338 = vmul.f32 %v4205, %v4205
        %v4339 = vmul.f32 %v4208, %v4208
        %v4340 = vmul.f32 %v4213, %v4213
        %v4341 = vmul.f32 %v4216, %v4216
        %v4342 = vmul.f32 %v4221, %v4221
        %v4343 = vmul.f32 %v4224, %v4224
        %v4344 = vmul.f32 %v4229, %v4229
        %v4345 = vmul.f32 %v4232, %v4232
        %v4346 = vmul.f32 %v4237, %v4237
        %v4347 = vmul.f32 %v4240, %v4240
        %v4348 = vmul.f32 %v4245, %v4245
        %v4349 = vmul.f32 %v4248, %v4248
        %v4350 = vmul.f32 %v4253, %v4253
        %v4351 = vmul.f32 %v4256, %v4256
        %v4352 = vmul.f32 %v4261, %v4261
        %v4353 = vmul.f32 %v4264, %v4264
        %v4354 = vmul.f32 %v4269, %v4269
        %v4355 = vmul.f32 %v4272, %v4272
        %v4356 = vmul.f32 %v4277, %v4277
        %v4357 = vmul.f32 %v4280, %v4280
        %v4358 = vmul.f32 %v4285, %v4285
        %v4359 = vmul.f32 %v4288, %v4288
        %v4360 = vadd.f32 %v4328, %v4329
        %v4361 = vadd.f32 %v4360, %v4330
        %v4362 = vadd.f32 %v4361, %v4331
        %v4363 = vadd.f32 %v4362, %v4332
        %v4364 = vadd.f32 %v4363, %v4333
        %v4365 = vadd.f32 %v4364, %v4334
        %v4366 = vadd.f32 %v4365, %v4335
        %v4367 = vadd.f32 %v4366, %v4336
        %v4368 = vadd.f32 %v4367, %v4337
        %v4369 = vadd.f32 %v4368, %v4338
        %v4370 = vadd.f32 %v4369, %v4339
        %v4371 = vadd.f32 %v4370, %v4340
        %v4372 = vadd.f32 %v4371, %v4341
        %v4373 = vadd.f32 %v4372, %v4342
        %v4374 = vadd.f32 %v4373, %v4343
        %v4375 = vadd.f32 %v4374, %v4344
        %v4376 = vadd.f32 %v4375, %v4345
        %v4377 = vadd.f32 %v4376, %v4346
        %v4378 = vadd.f32 %v4377, %v4347
        %v4379 = vadd.f32 %v4378, %v4348
        %v4380 = vadd.f32 %v4379, %v4349
        %v4381 = vadd.f32 %v4380, %v4350
        %v4382 = vadd.f32 %v4381, %v4351
        %v4383 = vadd.f32 %v4382, %v4352
        %v4384 = vadd.f32 %v4383, %v4353
        %v4385 = vadd.f32 %v4384, %v4354
        %v4386 = vadd.f32 %v4385, %v4355
        %v4387 = vadd.f32 %v4386, %v4356
        %v4388 = vadd.f32 %v4387, %v4357
        %v4389 = vadd.f32 %v4388, %v4358
        %v4390 = vadd.f32 %v4389, %v4359
        %v4391 = vrot.slane %v4390, 4
        %v4392 = vadd.f32 %v4390, %v4391
        %v4393 = vrot.slane %v4392, 2
        %v4394 = vadd.f32 %v4392, %v4393
        %v4395 = vrot.slane %v4394, 1
        %v4396 = vadd.f32 %v4394, %v4395
        %v4397 = vmul.f32 %v4327, 0.00390625
        %v4398 = vmul.f32 %v4396, 0.00390625
        %v4399 = vmul.f32 %v4397, %v4397
        %v4400 = vsub.f32 %v4398, %v4399
        %v4401 = vld [vmem:[%s3] sm:$0x1]
        %v4402 = vadd.f32 %v4400, 1e-05
        %v4403 = vrsqrt.pop %v4402
        %v4404 = vmul.f32 %v4401, %v4403
        %v4405 = vld [vmem:[%s4] sm:$0x1]
        %v4406 = vmul.f32 %v4397, %v4404
        %v4407 = vsub.f32 %v4405, %v4406
        %v4409 = vlaneseq
        %v4410 = vshrl.u32 %v4409, 7
        %v4411 = vsub.s32 0, %v4410
        %v4412 = vrot.slane %v4404, %v4411
        %v4414 = vmul.f32 %v4165, %v4412
        %v4415 = vmul.f32 %v4168, %v4412
        %v4416 = vmul.f32 %v4173, %v4412
        %v4417 = vmul.f32 %v4176, %v4412
        %v4418 = vmul.f32 %v4181, %v4412
        %v4419 = vmul.f32 %v4184, %v4412
        %v4420 = vmul.f32 %v4189, %v4412
        %v4421 = vmul.f32 %v4192, %v4412
        %v4422 = vmul.f32 %v4197, %v4412
        %v4423 = vmul.f32 %v4200, %v4412
        %v4424 = vmul.f32 %v4205, %v4412
        %v4425 = vmul.f32 %v4208, %v4412
        %v4426 = vmul.f32 %v4213, %v4412
        %v4427 = vmul.f32 %v4216, %v4412
        %v4428 = vmul.f32 %v4221, %v4412
        %v4429 = vmul.f32 %v4224, %v4412
        %v4430 = vmul.f32 %v4229, %v4412
        %v4431 = vmul.f32 %v4232, %v4412
        %v4432 = vmul.f32 %v4237, %v4412
        %v4433 = vmul.f32 %v4240, %v4412
        %v4434 = vmul.f32 %v4245, %v4412
        %v4435 = vmul.f32 %v4248, %v4412
        %v4436 = vmul.f32 %v4253, %v4412
        %v4437 = vmul.f32 %v4256, %v4412
        %v4438 = vmul.f32 %v4261, %v4412
        %v4439 = vmul.f32 %v4264, %v4412
        %v4440 = vmul.f32 %v4269, %v4412
        %v4441 = vmul.f32 %v4272, %v4412
        %v4442 = vmul.f32 %v4277, %v4412
        %v4443 = vmul.f32 %v4280, %v4412
        %v4444 = vmul.f32 %v4285, %v4412
        %v4445 = vmul.f32 %v4288, %v4412
        %v4447 = vlaneseq
        %v4448 = vshrl.u32 %v4447, 7
        %v4449 = vsub.s32 0, %v4448
        %v4450 = vrot.slane %v4407, %v4449
        %v4452 = vadd.f32 %v4414, %v4450
        %v4453 = vadd.f32 %v4415, %v4450
        %v4454 = vadd.f32 %v4416, %v4450
        %v4455 = vadd.f32 %v4417, %v4450
        %v4456 = vadd.f32 %v4418, %v4450
        %v4457 = vadd.f32 %v4419, %v4450
        %v4458 = vadd.f32 %v4420, %v4450
        %v4459 = vadd.f32 %v4421, %v4450
        %v4460 = vadd.f32 %v4422, %v4450
        %v4461 = vadd.f32 %v4423, %v4450
        %v4462 = vadd.f32 %v4424, %v4450
        %v4463 = vadd.f32 %v4425, %v4450
        %v4464 = vadd.f32 %v4426, %v4450
        %v4465 = vadd.f32 %v4427, %v4450
        %v4466 = vadd.f32 %v4428, %v4450
        %v4467 = vadd.f32 %v4429, %v4450
        %v4468 = vadd.f32 %v4430, %v4450
        %v4469 = vadd.f32 %v4431, %v4450
        %v4470 = vadd.f32 %v4432, %v4450
        %v4471 = vadd.f32 %v4433, %v4450
        %v4472 = vadd.f32 %v4434, %v4450
        %v4473 = vadd.f32 %v4435, %v4450
        %v4474 = vadd.f32 %v4436, %v4450
        %v4475 = vadd.f32 %v4437, %v4450
        %v4476 = vadd.f32 %v4438, %v4450
        %v4477 = vadd.f32 %v4439, %v4450
        %v4478 = vadd.f32 %v4440, %v4450
        %v4479 = vadd.f32 %v4441, %v4450
        %v4480 = vadd.f32 %v4442, %v4450
        %v4481 = vadd.f32 %v4443, %v4450
        %v4482 = vadd.f32 %v4444, %v4450
        %v4483 = vadd.f32 %v4445, %v4450
        %v4484 = vmax.f32 %v4452, 0.0
        %v4485 = vmax.f32 %v4453, 0.0
        %v4486 = vmax.f32 %v4454, 0.0
        %v4487 = vmax.f32 %v4455, 0.0
        %v4488 = vmax.f32 %v4456, 0.0
        %v4489 = vmax.f32 %v4457, 0.0
        %v4490 = vmax.f32 %v4458, 0.0
        %v4491 = vmax.f32 %v4459, 0.0
        %v4492 = vmax.f32 %v4460, 0.0
        %v4493 = vmax.f32 %v4461, 0.0
        %v4494 = vmax.f32 %v4462, 0.0
        %v4495 = vmax.f32 %v4463, 0.0
        %v4496 = vmax.f32 %v4464, 0.0
        %v4497 = vmax.f32 %v4465, 0.0
        %v4498 = vmax.f32 %v4466, 0.0
        %v4499 = vmax.f32 %v4467, 0.0
        %v4500 = vmax.f32 %v4468, 0.0
        %v4501 = vmax.f32 %v4469, 0.0
        %v4502 = vmax.f32 %v4470, 0.0
        %v4503 = vmax.f32 %v4471, 0.0
        %v4504 = vmax.f32 %v4472, 0.0
        %v4505 = vmax.f32 %v4473, 0.0
        %v4506 = vmax.f32 %v4474, 0.0
        %v4507 = vmax.f32 %v4475, 0.0
        %v4508 = vmax.f32 %v4476, 0.0
        %v4509 = vmax.f32 %v4477, 0.0
        %v4510 = vmax.f32 %v4478, 0.0
        %v4511 = vmax.f32 %v4479, 0.0
        %v4512 = vmax.f32 %v4480, 0.0
        %v4513 = vmax.f32 %v4481, 0.0
        %v4514 = vmax.f32 %v4482, 0.0
        %v4515 = vmax.f32 %v4483, 0.0
        %4516 = vst [vmem:[#allocation3] sm:$0xf] 0
        %4517 = vst [vmem:[#allocation3 + $0x4] sm:$0xf] 0
        %4518 = vst [vmem:[#allocation3 + $0x8] sm:$0x1] 0
        %4519 = vst [vmem:[#allocation3 + $0xc] sm:$0xf] 0
        %4520 = vst [vmem:[#allocation3 + $0x10] sm:$0xf] 0
        %4521 = vst [vmem:[#allocation3 + $0x14] sm:$0x1] 0
        %4522 = vst [vmem:[#allocation3 + $0x18] sm:$0xf] 0
        %4523 = vst [vmem:[#allocation3 + $0x1c] sm:$0xf] 0
        %4524 = vst [vmem:[#allocation3 + $0x20] sm:$0x1] 0
        %4525 = vst [vmem:[#allocation3 + $0x24] sm:$0xf] 0
        %4526 = vst [vmem:[#allocation3 + $0x28] sm:$0xf] 0
        %4527 = vst [vmem:[#allocation3 + $0x2c] sm:$0x1] 0
        %4528 = vst [vmem:[#allocation3 + $0x30] sm:$0xf] 0
        %4529 = vst [vmem:[#allocation3 + $0x34] sm:$0xf] 0
        %4530 = vst [vmem:[#allocation3 + $0x38] sm:$0x1] 0
        %4531 = vst [vmem:[#allocation3 + $0x3c] sm:$0xf] 0
        %4532 = vst [vmem:[#allocation3 + $0x40] sm:$0xf] 0
        %4533 = vst [vmem:[#allocation3 + $0x44] sm:$0x1] 0
        %4534 = vst [vmem:[#allocation3 + $0x48] sm:$0xf] 0
        %4535 = vst [vmem:[#allocation3 + $0x4c] sm:$0xf] 0
        %4536 = vst [vmem:[#allocation3 + $0x50] sm:$0x1] 0
        %4537 = vst [vmem:[#allocation3 + $0x54] sm:$0xf] 0
        %4538 = vst [vmem:[#allocation3 + $0x58] sm:$0xf] 0
        %4539 = vst [vmem:[#allocation3 + $0x5c] sm:$0x1] 0
        %4540 = vst [vmem:[#allocation3 + $0x60] sm:$0xf] 0
        %4541 = vst [vmem:[#allocation3 + $0x64] sm:$0xf] 0
        %4542 = vst [vmem:[#allocation3 + $0x68] sm:$0x1] 0
        %4543 = vst [vmem:[#allocation3 + $0x6c] sm:$0xf] 0
        %4544 = vst [vmem:[#allocation3 + $0x70] sm:$0xf] 0
        %4545 = vst [vmem:[#allocation3 + $0x74] sm:$0x1] 0
        %4546 = vst [vmem:[#allocation3 + $0x78] sm:$0xf] 0
        %4547 = vst [vmem:[#allocation3 + $0x7c] sm:$0xf] 0
        %4548 = vst [vmem:[#allocation3 + $0x80] sm:$0x1] 0
        %4549 = vst [vmem:[#allocation3 + $0x84] sm:$0xf] 0
        %4550 = vst [vmem:[#allocation3 + $0x88] sm:$0xf] 0
        %4551 = vst [vmem:[#allocation3 + $0x8c] sm:$0x1] 0
        %4552 = vst [vmem:[#allocation3 + $0x90] sm:$0xf] 0
        %4553 = vst [vmem:[#allocation3 + $0x94] sm:$0xf] 0
        %4554 = vst [vmem:[#allocation3 + $0x98] sm:$0x1] 0
        %4555 = vst [vmem:[#allocation3 + $0x9c] sm:$0xf] 0
        %4556 = vst [vmem:[#allocation3 + $0xa0] sm:$0xf] 0
        %4557 = vst [vmem:[#allocation3 + $0xa4] sm:$0x1] 0
        %4558 = vst [vmem:[#allocation3 + $0xa8] sm:$0xf] 0
        %4559 = vst [vmem:[#allocation3 + $0xac] sm:$0xf] 0
        %4560 = vst [vmem:[#allocation3 + $0xb0] sm:$0x1] 0
        %4561 = vst [vmem:[#allocation3 + $0xb4] sm:$0xf] 0
        %4562 = vst [vmem:[#allocation3 + $0xb8] sm:$0xf] 0
        %4563 = vst [vmem:[#allocation3 + $0xbc] sm:$0x1] 0
        %4564 = vst [vmem:[#allocation3 + $0xc0] sm:$0xf] 0
        %4565 = vst [vmem:[#allocation3 + $0xc4] sm:$0xf] 0
        %4566 = vst [vmem:[#allocation3 + $0xc8] sm:$0x1] 0
        %4567 = vst [vmem:[#allocation3 + $0xcc] sm:$0xf] 0
        %4568 = vst [vmem:[#allocation3 + $0xd0] sm:$0xf] 0
        %4569 = vst [vmem:[#allocation3 + $0xd4] sm:$0x1] 0
        %v4570 = vpack.c.bf16 %v4485, %v4484
        %v4571 = vpack.c.bf16 %v4487, %v4486
        %v4572 = vpack.c.bf16 %v4489, %v4488
        %v4573 = vpack.c.bf16 %v4491, %v4490
        %v4574 = vpack.c.bf16 %v4493, %v4492
        %v4575 = vpack.c.bf16 %v4495, %v4494
        %v4576 = vpack.c.bf16 %v4497, %v4496
        %v4577 = vpack.c.bf16 %v4499, %v4498
        %v4578 = vpack.c.bf16 %v4501, %v4500
        %v4579 = vpack.c.bf16 %v4503, %v4502
        %v4580 = vpack.c.bf16 %v4505, %v4504
        %v4581 = vpack.c.bf16 %v4507, %v4506
        %v4582 = vpack.c.bf16 %v4509, %v4508
        %v4583 = vpack.c.bf16 %v4511, %v4510
        %v4584 = vpack.c.bf16 %v4513, %v4512
        %v4585 = vpack.c.bf16 %v4515, %v4514
        %v4602 = vunpack.c.l.b16 %v4570
        %v4603 = vunpack.c.h.b16 %v4570
        %v4604 = vunpack.c.l.b16 %v4571
        %v4605 = vunpack.c.h.b16 %v4571
        %v4606 = vunpack.c.l.b16 %v4572
        %v4607 = vunpack.c.h.b16 %v4572
        %v4608 = vunpack.c.l.b16 %v4573
        %v4609 = vunpack.c.h.b16 %v4573
        %v4610 = vunpack.c.l.b16 %v4574
        %v4611 = vunpack.c.h.b16 %v4574
        %v4612 = vunpack.c.l.b16 %v4575
        %v4613 = vunpack.c.h.b16 %v4575
        %v4614 = vunpack.c.l.b16 %v4576
        %v4615 = vunpack.c.h.b16 %v4576
        %v4616 = vunpack.c.l.b16 %v4577
        %v4617 = vunpack.c.h.b16 %v4577
        %v4618 = vunpack.c.l.b16 %v4578
        %v4619 = vunpack.c.h.b16 %v4578
        %v4620 = vunpack.c.l.b16 %v4579
        %v4621 = vunpack.c.h.b16 %v4579
        %v4622 = vunpack.c.l.b16 %v4580
        %v4623 = vunpack.c.h.b16 %v4580
        %v4624 = vunpack.c.l.b16 %v4581
        %v4625 = vunpack.c.h.b16 %v4581
        %v4626 = vunpack.c.l.b16 %v4582
        %v4627 = vunpack.c.h.b16 %v4582
        %v4628 = vunpack.c.l.b16 %v4583
        %v4629 = vunpack.c.h.b16 %v4583
        %v4630 = vunpack.c.l.b16 %v4584
        %v4631 = vunpack.c.h.b16 %v4584
        %v4632 = vunpack.c.l.b16 %v4585
        %v4633 = vunpack.c.h.b16 %v4585
        %v4634 = vpack.c.b16 %v4602, %v4602
        %v4635 = vpack.c.b16 %v4603, %v4603
        %v4636 = vpack.c.b16 %v4604, %v4604
        %v4637 = vpack.c.b16 %v4605, %v4605
        %v4638 = vpack.c.b16 %v4606, %v4606
        %v4639 = vpack.c.b16 %v4607, %v4607
        %v4640 = vpack.c.b16 %v4608, %v4608
        %v4641 = vpack.c.b16 %v4609, %v4609
        %v4642 = vpack.c.b16 %v4610, %v4610
        %v4643 = vpack.c.b16 %v4611, %v4611
        %v4644 = vpack.c.b16 %v4612, %v4612
        %v4645 = vpack.c.b16 %v4613, %v4613
        %v4646 = vpack.c.b16 %v4614, %v4614
        %v4647 = vpack.c.b16 %v4615, %v4615
        %v4648 = vpack.c.b16 %v4616, %v4616
        %v4649 = vpack.c.b16 %v4617, %v4617
        %v4650 = vpack.c.b16 %v4618, %v4618
        %v4651 = vpack.c.b16 %v4619, %v4619
        %v4652 = vpack.c.b16 %v4620, %v4620
        %v4653 = vpack.c.b16 %v4621, %v4621
        %v4654 = vpack.c.b16 %v4622, %v4622
        %v4655 = vpack.c.b16 %v4623, %v4623
        %v4656 = vpack.c.b16 %v4624, %v4624
        %v4657 = vpack.c.b16 %v4625, %v4625
        %v4658 = vpack.c.b16 %v4626, %v4626
        %v4659 = vpack.c.b16 %v4627, %v4627
        %v4660 = vpack.c.b16 %v4628, %v4628
        %v4661 = vpack.c.b16 %v4629, %v4629
        %v4662 = vpack.c.b16 %v4630, %v4630
        %v4663 = vpack.c.b16 %v4631, %v4631
        %v4664 = vpack.c.b16 %v4632, %v4632
        %v4665 = vpack.c.b16 %v4633, %v4633
        %vm4666 = vsmask.f32 256
        %vm4667 = vsmask.f32 4368
        %vm4668 = vmor %vm4666, %vm4667
        %v4670 = vshrl.u32 %v4634, 16
        %v4672 = vrot.slane %v4670, 7
        %v4673 = vshll.u32 %v4634, 16
        %v4675 = vor.u32 %v4672, %v4673
        %v4676 = vrot.slane %v4672, 4
        %v4678 = vshrl.u32 %v4635, 16
        %v4680 = vrot.slane %v4678, 7
        %v4681 = vshll.u32 %v4635, 16
        %v4683 = vor.u32 %v4680, %v4681
        %v4684 = vsel %vm4668, %v4676, %v4683
        %v4685 = vrot.slane %v4680, 4
        %v4687 = vshrl.u32 %v4636, 16
        %v4689 = vrot.slane %v4687, 7
        %v4690 = vshll.u32 %v4636, 16
        %v4692 = vor.u32 %v4689, %v4690
        %v4693 = vrot.slane %v4689, 4
        %v4695 = vshrl.u32 %v4637, 16
        %v4697 = vrot.slane %v4695, 7
        %v4698 = vshll.u32 %v4637, 16
        %v4700 = vor.u32 %v4697, %v4698
        %v4701 = vsel %vm4668, %v4693, %v4700
        %v4702 = vrot.slane %v4697, 4
        %v4704 = vshrl.u32 %v4638, 16
        %v4706 = vrot.slane %v4704, 7
        %v4707 = vshll.u32 %v4638, 16
        %v4709 = vor.u32 %v4706, %v4707
        %v4710 = vrot.slane %v4706, 4
        %v4712 = vshrl.u32 %v4639, 16
        %v4714 = vrot.slane %v4712, 7
        %v4715 = vshll.u32 %v4639, 16
        %v4717 = vor.u32 %v4714, %v4715
        %v4718 = vsel %vm4668, %v4710, %v4717
        %v4719 = vrot.slane %v4714, 4
        %v4721 = vshrl.u32 %v4640, 16
        %v4723 = vrot.slane %v4721, 7
        %v4724 = vshll.u32 %v4640, 16
        %v4726 = vor.u32 %v4723, %v4724
        %v4727 = vrot.slane %v4723, 4
        %v4729 = vshrl.u32 %v4641, 16
        %v4731 = vrot.slane %v4729, 7
        %v4732 = vshll.u32 %v4641, 16
        %v4734 = vor.u32 %v4731, %v4732
        %v4735 = vsel %vm4668, %v4727, %v4734
        %v4736 = vrot.slane %v4731, 4
        %v4738 = vshrl.u32 %v4642, 16
        %v4740 = vrot.slane %v4738, 7
        %v4741 = vshll.u32 %v4642, 16
        %v4743 = vor.u32 %v4740, %v4741
        %v4744 = vrot.slane %v4740, 4
        %v4746 = vshrl.u32 %v4643, 16
        %v4748 = vrot.slane %v4746, 7
        %v4749 = vshll.u32 %v4643, 16
        %v4751 = vor.u32 %v4748, %v4749
        %v4752 = vsel %vm4668, %v4744, %v4751
        %v4753 = vrot.slane %v4748, 4
        %v4755 = vshrl.u32 %v4644, 16
        %v4757 = vrot.slane %v4755, 7
        %v4758 = vshll.u32 %v4644, 16
        %v4760 = vor.u32 %v4757, %v4758
        %v4761 = vrot.slane %v4757, 4
        %v4763 = vshrl.u32 %v4645, 16
        %v4765 = vrot.slane %v4763, 7
        %v4766 = vshll.u32 %v4645, 16
        %v4768 = vor.u32 %v4765, %v4766
        %v4769 = vsel %vm4668, %v4761, %v4768
        %v4770 = vrot.slane %v4765, 4
        %v4772 = vshrl.u32 %v4646, 16
        %v4774 = vrot.slane %v4772, 7
        %v4775 = vshll.u32 %v4646, 16
        %v4777 = vor.u32 %v4774, %v4775
        %v4778 = vrot.slane %v4774, 4
        %v4780 = vshrl.u32 %v4647, 16
        %v4782 = vrot.slane %v4780, 7
        %v4783 = vshll.u32 %v4647, 16
        %v4785 = vor.u32 %v4782, %v4783
        %v4786 = vsel %vm4668, %v4778, %v4785
        %v4787 = vrot.slane %v4782, 4
        %v4789 = vshrl.u32 %v4648, 16
        %v4791 = vrot.slane %v4789, 7
        %v4792 = vshll.u32 %v4648, 16
        %v4794 = vor.u32 %v4791, %v4792
        %v4795 = vrot.slane %v4791, 4
        %v4797 = vshrl.u32 %v4649, 16
        %v4799 = vrot.slane %v4797, 7
        %v4800 = vshll.u32 %v4649, 16
        %v4802 = vor.u32 %v4799, %v4800
        %v4803 = vsel %vm4668, %v4795, %v4802
        %v4804 = vrot.slane %v4799, 4
        %v4806 = vshrl.u32 %v4650, 16
        %v4808 = vrot.slane %v4806, 7
        %v4809 = vshll.u32 %v4650, 16
        %v4811 = vor.u32 %v4808, %v4809
        %v4812 = vrot.slane %v4808, 4
        %v4814 = vshrl.u32 %v4651, 16
        %v4816 = vrot.slane %v4814, 7
        %v4817 = vshll.u32 %v4651, 16
        %v4819 = vor.u32 %v4816, %v4817
        %v4820 = vsel %vm4668, %v4812, %v4819
        %v4821 = vrot.slane %v4816, 4
        %v4823 = vshrl.u32 %v4652, 16
        %v4825 = vrot.slane %v4823, 7
        %v4826 = vshll.u32 %v4652, 16
        %v4828 = vor.u32 %v4825, %v4826
        %v4829 = vrot.slane %v4825, 4
        %v4831 = vshrl.u32 %v4653, 16
        %v4833 = vrot.slane %v4831, 7
        %v4834 = vshll.u32 %v4653, 16
        %v4836 = vor.u32 %v4833, %v4834
        %v4837 = vsel %vm4668, %v4829, %v4836
        %v4838 = vrot.slane %v4833, 4
        %v4840 = vshrl.u32 %v4654, 16
        %v4842 = vrot.slane %v4840, 7
        %v4843 = vshll.u32 %v4654, 16
        %v4845 = vor.u32 %v4842, %v4843
        %v4846 = vrot.slane %v4842, 4
        %v4848 = vshrl.u32 %v4655, 16
        %v4850 = vrot.slane %v4848, 7
        %v4851 = vshll.u32 %v4655, 16
        %v4853 = vor.u32 %v4850, %v4851
        %v4854 = vsel %vm4668, %v4846, %v4853
        %v4855 = vrot.slane %v4850, 4
        %v4857 = vshrl.u32 %v4656, 16
        %v4859 = vrot.slane %v4857, 7
        %v4860 = vshll.u32 %v4656, 16
        %v4862 = vor.u32 %v4859, %v4860
        %v4863 = vrot.slane %v4859, 4
        %v4865 = vshrl.u32 %v4657, 16
        %v4867 = vrot.slane %v4865, 7
        %v4868 = vshll.u32 %v4657, 16
        %v4870 = vor.u32 %v4867, %v4868
        %v4871 = vsel %vm4668, %v4863, %v4870
        %v4872 = vrot.slane %v4867, 4
        %v4874 = vshrl.u32 %v4658, 16
        %v4876 = vrot.slane %v4874, 7
        %v4877 = vshll.u32 %v4658, 16
        %v4879 = vor.u32 %v4876, %v4877
        %v4880 = vrot.slane %v4876, 4
        %v4882 = vshrl.u32 %v4659, 16
        %v4884 = vrot.slane %v4882, 7
        %v4885 = vshll.u32 %v4659, 16
        %v4887 = vor.u32 %v4884, %v4885
        %v4888 = vsel %vm4668, %v4880, %v4887
        %v4889 = vrot.slane %v4884, 4
        %v4891 = vshrl.u32 %v4660, 16
        %v4893 = vrot.slane %v4891, 7
        %v4894 = vshll.u32 %v4660, 16
        %v4896 = vor.u32 %v4893, %v4894
        %v4897 = vrot.slane %v4893, 4
        %v4899 = vshrl.u32 %v4661, 16
        %v4901 = vrot.slane %v4899, 7
        %v4902 = vshll.u32 %v4661, 16
        %v4904 = vor.u32 %v4901, %v4902
        %v4905 = vsel %vm4668, %v4897, %v4904
        %v4906 = vrot.slane %v4901, 4
        %v4908 = vshrl.u32 %v4662, 16
        %v4910 = vrot.slane %v4908, 7
        %v4911 = vshll.u32 %v4662, 16
        %v4913 = vor.u32 %v4910, %v4911
        %v4914 = vrot.slane %v4910, 4
        %v4916 = vshrl.u32 %v4663, 16
        %v4918 = vrot.slane %v4916, 7
        %v4919 = vshll.u32 %v4663, 16
        %v4921 = vor.u32 %v4918, %v4919
        %v4922 = vsel %vm4668, %v4914, %v4921
        %v4923 = vrot.slane %v4918, 4
        %v4925 = vshrl.u32 %v4664, 16
        %v4927 = vrot.slane %v4925, 7
        %v4928 = vshll.u32 %v4664, 16
        %v4930 = vor.u32 %v4927, %v4928
        %v4931 = vrot.slane %v4927, 4
        %v4933 = vshrl.u32 %v4665, 16
        %v4935 = vrot.slane %v4933, 7
        %v4936 = vshll.u32 %v4665, 16
        %v4938 = vor.u32 %v4935, %v4936
        %v4939 = vsel %vm4668, %v4931, %v4938
        %v4940 = vrot.slane %v4935, 4
        %s4989 = scalar_lea.vmem [#allocation3], 12
        %vm4990 = vcmask 1043456
        %vm4991 = vsmask.f32 7938
        %vm4992 = vmand %vm4990, %vm4991
        %v4993 = vld [vmem:[%s4989] sm:$0xf]
        %v4994 = vsel %vm4992, %v4675, %v4993
        %4995 = vst [vmem:[%s4989] sm:$0xf] %v4994
        %4996 = vst [vmem:[%s4989 + $0x4] sm:$0xf] %v4684
        %vm4997 = vcmask 1040384
        %vm4998 = vmand %vm4997, %vm4666
        %v4999 = vld [vmem:[%s4989 + $0x8] sm:$0x1]
        %v5000 = vsel %vm4998, %v4685, %v4999
        %5001 = vst [vmem:[%s4989 + $0x8] sm:$0x1] %v5000
        %v5002 = vld [vmem:[%s4989 + $0xc] sm:$0xf]
        %v5003 = vsel %vm4992, %v4692, %v5002
        %5004 = vst [vmem:[%s4989 + $0xc] sm:$0xf] %v5003
        %5005 = vst [vmem:[%s4989 + $0x10] sm:$0xf] %v4701
        %v5006 = vld [vmem:[%s4989 + $0x14] sm:$0x1]
        %v5007 = vsel %vm4998, %v4702, %v5006
        %5008 = vst [vmem:[%s4989 + $0x14] sm:$0x1] %v5007
        %v5009 = vld [vmem:[%s4989 + $0x18] sm:$0xf]
        %v5010 = vsel %vm4992, %v4709, %v5009
        %5011 = vst [vmem:[%s4989 + $0x18] sm:$0xf] %v5010
        %5012 = vst [vmem:[%s4989 + $0x1c] sm:$0xf] %v4718
        %v5013 = vld [vmem:[%s4989 + $0x20] sm:$0x1]
        %v5014 = vsel %vm4998, %v4719, %v5013
        %5015 = vst [vmem:[%s4989 + $0x20] sm:$0x1] %v5014
        %v5016 = vld [vmem:[%s4989 + $0x24] sm:$0xf]
        %v5017 = vsel %vm4992, %v4726, %v5016
        %5018 = vst [vmem:[%s4989 + $0x24] sm:$0xf] %v5017
        %5019 = vst [vmem:[%s4989 + $0x28] sm:$0xf] %v4735
        %v5020 = vld [vmem:[%s4989 + $0x2c] sm:$0x1]
        %v5021 = vsel %vm4998, %v4736, %v5020
        %5022 = vst [vmem:[%s4989 + $0x2c] sm:$0x1] %v5021
        %v5023 = vld [vmem:[%s4989 + $0x30] sm:$0xf]
        %v5024 = vsel %vm4992, %v4743, %v5023
        %5025 = vst [vmem:[%s4989 + $0x30] sm:$0xf] %v5024
        %5026 = vst [vmem:[%s4989 + $0x34] sm:$0xf] %v4752
        %v5027 = vld [vmem:[%s4989 + $0x38] sm:$0x1]
        %v5028 = vsel %vm4998, %v4753, %v5027
        %5029 = vst [vmem:[%s4989 + $0x38] sm:$0x1] %v5028
        %v5030 = vld [vmem:[%s4989 + $0x3c] sm:$0xf]
        %v5031 = vsel %vm4992, %v4760, %v5030
        %5032 = vst [vmem:[%s4989 + $0x3c] sm:$0xf] %v5031
        %5033 = vst [vmem:[%s4989 + $0x40] sm:$0xf] %v4769
        %v5034 = vld [vmem:[%s4989 + $0x44] sm:$0x1]
        %v5035 = vsel %vm4998, %v4770, %v5034
        %5036 = vst [vmem:[%s4989 + $0x44] sm:$0x1] %v5035
        %v5037 = vld [vmem:[%s4989 + $0x48] sm:$0xf]
        %v5038 = vsel %vm4992, %v4777, %v5037
        %5039 = vst [vmem:[%s4989 + $0x48] sm:$0xf] %v5038
        %5040 = vst [vmem:[%s4989 + $0x4c] sm:$0xf] %v4786
        %v5041 = vld [vmem:[%s4989 + $0x50] sm:$0x1]
        %v5042 = vsel %vm4998, %v4787, %v5041
        %5043 = vst [vmem:[%s4989 + $0x50] sm:$0x1] %v5042
        %v5044 = vld [vmem:[%s4989 + $0x54] sm:$0xf]
        %v5045 = vsel %vm4992, %v4794, %v5044
        %5046 = vst [vmem:[%s4989 + $0x54] sm:$0xf] %v5045
        %5047 = vst [vmem:[%s4989 + $0x58] sm:$0xf] %v4803
        %v5048 = vld [vmem:[%s4989 + $0x5c] sm:$0x1]
        %v5049 = vsel %vm4998, %v4804, %v5048
        %5050 = vst [vmem:[%s4989 + $0x5c] sm:$0x1] %v5049
        %v5051 = vld [vmem:[%s4989 + $0x60] sm:$0xf]
        %v5052 = vsel %vm4992, %v4811, %v5051
        %5053 = vst [vmem:[%s4989 + $0x60] sm:$0xf] %v5052
        %5054 = vst [vmem:[%s4989 + $0x64] sm:$0xf] %v4820
        %v5055 = vld [vmem:[%s4989 + $0x68] sm:$0x1]
        %v5056 = vsel %vm4998, %v4821, %v5055
        %5057 = vst [vmem:[%s4989 + $0x68] sm:$0x1] %v5056
        %v5058 = vld [vmem:[%s4989 + $0x6c] sm:$0xf]
        %v5059 = vsel %vm4992, %v4828, %v5058
        %5060 = vst [vmem:[%s4989 + $0x6c] sm:$0xf] %v5059
        %5061 = vst [vmem:[%s4989 + $0x70] sm:$0xf] %v4837
        %v5062 = vld [vmem:[%s4989 + $0x74] sm:$0x1]
        %v5063 = vsel %vm4998, %v4838, %v5062
        %5064 = vst [vmem:[%s4989 + $0x74] sm:$0x1] %v5063
        %v5065 = vld [vmem:[%s4989 + $0x78] sm:$0xf]
        %v5066 = vsel %vm4992, %v4845, %v5065
        %5067 = vst [vmem:[%s4989 + $0x78] sm:$0xf] %v5066
        %5068 = vst [vmem:[%s4989 + $0x7c] sm:$0xf] %v4854
        %v5069 = vld [vmem:[%s4989 + $0x80] sm:$0x1]
        %v5070 = vsel %vm4998, %v4855, %v5069
        %5071 = vst [vmem:[%s4989 + $0x80] sm:$0x1] %v5070
        %v5072 = vld [vmem:[%s4989 + $0x84] sm:$0xf]
        %v5073 = vsel %vm4992, %v4862, %v5072
        %5074 = vst [vmem:[%s4989 + $0x84] sm:$0xf] %v5073
        %5075 = vst [vmem:[%s4989 + $0x88] sm:$0xf] %v4871
        %v5076 = vld [vmem:[%s4989 + $0x8c] sm:$0x1]
        %v5077 = vsel %vm4998, %v4872, %v5076
        %5078 = vst [vmem:[%s4989 + $0x8c] sm:$0x1] %v5077
        %v5079 = vld [vmem:[%s4989 + $0x90] sm:$0xf]
        %v5080 = vsel %vm4992, %v4879, %v5079
        %5081 = vst [vmem:[%s4989 + $0x90] sm:$0xf] %v5080
        %5082 = vst [vmem:[%s4989 + $0x94] sm:$0xf] %v4888
        %v5083 = vld [vmem:[%s4989 + $0x98] sm:$0x1]
        %v5084 = vsel %vm4998, %v4889, %v5083
        %5085 = vst [vmem:[%s4989 + $0x98] sm:$0x1] %v5084
        %v5086 = vld [vmem:[%s4989 + $0x9c] sm:$0xf]
        %v5087 = vsel %vm4992, %v4896, %v5086
        %5088 = vst [vmem:[%s4989 + $0x9c] sm:$0xf] %v5087
        %5089 = vst [vmem:[%s4989 + $0xa0] sm:$0xf] %v4905
        %v5090 = vld [vmem:[%s4989 + $0xa4] sm:$0x1]
        %v5091 = vsel %vm4998, %v4906, %v5090
        %5092 = vst [vmem:[%s4989 + $0xa4] sm:$0x1] %v5091
        %v5093 = vld [vmem:[%s4989 + $0xa8] sm:$0xf]
        %v5094 = vsel %vm4992, %v4913, %v5093
        %5095 = vst [vmem:[%s4989 + $0xa8] sm:$0xf] %v5094
        %5096 = vst [vmem:[%s4989 + $0xac] sm:$0xf] %v4922
        %v5097 = vld [vmem:[%s4989 + $0xb0] sm:$0x1]
        %v5098 = vsel %vm4998, %v4923, %v5097
        %5099 = vst [vmem:[%s4989 + $0xb0] sm:$0x1] %v5098
        %v5100 = vld [vmem:[%s4989 + $0xb4] sm:$0xf]
        %v5101 = vsel %vm4992, %v4930, %v5100
        %5102 = vst [vmem:[%s4989 + $0xb4] sm:$0xf] %v5101
        %5103 = vst [vmem:[%s4989 + $0xb8] sm:$0xf] %v4939
        %v5104 = vld [vmem:[%s4989 + $0xbc] sm:$0x1]
        %v5105 = vsel %vm4998, %v4940, %v5104
        %5106 = vst [vmem:[%s4989 + $0xbc] sm:$0x1] %v5105
        %v5107 = vld [vmem:[#allocation3] sm:$0xf]
        %v5108 = vld [vmem:[#allocation3 + $0x4] sm:$0xf]
        %v5109 = vld [vmem:[#allocation3 + $0xc] sm:$0xf]
        %v5110 = vld [vmem:[#allocation3 + $0x10] sm:$0xf]
        %v5111 = vld [vmem:[#allocation3 + $0x18] sm:$0xf]
        %v5112 = vld [vmem:[#allocation3 + $0x1c] sm:$0xf]
        %v5113 = vld [vmem:[#allocation3 + $0x24] sm:$0xf]
        %v5114 = vld [vmem:[#allocation3 + $0x28] sm:$0xf]
        %v5115 = vld [vmem:[#allocation3 + $0x30] sm:$0xf]
        %v5116 = vld [vmem:[#allocation3 + $0x34] sm:$0xf]
        %v5117 = vld [vmem:[#allocation3 + $0x3c] sm:$0xf]
        %v5118 = vld [vmem:[#allocation3 + $0x40] sm:$0xf]
        %v5119 = vld [vmem:[#allocation3 + $0x48] sm:$0xf]
        %v5120 = vld [vmem:[#allocation3 + $0x4c] sm:$0xf]
        %v5121 = vld [vmem:[#allocation3 + $0x54] sm:$0xf]
        %v5122 = vld [vmem:[#allocation3 + $0x58] sm:$0xf]
        %v5123 = vld [vmem:[#allocation3 + $0x60] sm:$0xf]
        %v5124 = vld [vmem:[#allocation3 + $0x64] sm:$0xf]
        %v5125 = vld [vmem:[#allocation3 + $0x6c] sm:$0xf]
        %v5126 = vld [vmem:[#allocation3 + $0x70] sm:$0xf]
        %v5127 = vld [vmem:[#allocation3 + $0x78] sm:$0xf]
        %v5128 = vld [vmem:[#allocation3 + $0x7c] sm:$0xf]
        %v5129 = vld [vmem:[#allocation3 + $0x84] sm:$0xf]
        %v5130 = vld [vmem:[#allocation3 + $0x88] sm:$0xf]
        %v5131 = vld [vmem:[#allocation3 + $0x90] sm:$0xf]
        %v5132 = vld [vmem:[#allocation3 + $0x94] sm:$0xf]
        %v5133 = vld [vmem:[#allocation3 + $0x9c] sm:$0xf]
        %v5134 = vld [vmem:[#allocation3 + $0xa0] sm:$0xf]
        %v5135 = vld [vmem:[#allocation3 + $0xa8] sm:$0xf]
        %v5136 = vld [vmem:[#allocation3 + $0xac] sm:$0xf]
        %v5137 = vld [vmem:[#allocation3 + $0xb4] sm:$0xf]
        %v5138 = vld [vmem:[#allocation3 + $0xb8] sm:$0xf]
        %5139 = vst [vmem:[#allocation2] sm:$0xf] %v5107
        %5140 = vst [vmem:[#allocation2 + $0x24] sm:$0xf] %v5108
        %5141 = vst [vmem:[#allocation2 + $0x48] sm:$0xf] %v5109
        %5142 = vst [vmem:[#allocation2 + $0x6c] sm:$0xf] %v5110
        %5143 = vst [vmem:[#allocation2 + $0x90] sm:$0xf] %v5111
        %5144 = vst [vmem:[#allocation2 + $0xb4] sm:$0xf] %v5112
        %5145 = vst [vmem:[#allocation2 + $0xd8] sm:$0xf] %v5113
        %5146 = vst [vmem:[#allocation2 + $0xfc] sm:$0xf] %v5114
        %5147 = vst [vmem:[#allocation2 + $0x120] sm:$0xf] %v5115
        %5148 = vst [vmem:[#allocation2 + $0x144] sm:$0xf] %v5116
        %5149 = vst [vmem:[#allocation2 + $0x168] sm:$0xf] %v5117
        %5150 = vst [vmem:[#allocation2 + $0x18c] sm:$0xf] %v5118
        %5151 = vst [vmem:[#allocation2 + $0x1b0] sm:$0xf] %v5119
        %5152 = vst [vmem:[#allocation2 + $0x1d4] sm:$0xf] %v5120
        %5153 = vst [vmem:[#allocation2 + $0x1f8] sm:$0xf] %v5121
        %5154 = vst [vmem:[#allocation2 + $0x21c] sm:$0xf] %v5122
        %5155 = vst [vmem:[#allocation2 + $0x240] sm:$0xf] %v5123
        %5156 = vst [vmem:[#allocation2 + $0x264] sm:$0xf] %v5124
        %5157 = vst [vmem:[#allocation2 + $0x288] sm:$0xf] %v5125
        %5158 = vst [vmem:[#allocation2 + $0x2ac] sm:$0xf] %v5126
        %5159 = vst [vmem:[#allocation2 + $0x2d0] sm:$0xf] %v5127
        %5160 = vst [vmem:[#allocation2 + $0x2f4] sm:$0xf] %v5128
        %5161 = vst [vmem:[#allocation2 + $0x318] sm:$0xf] %v5129
        %5162 = vst [vmem:[#allocation2 + $0x33c] sm:$0xf] %v5130
        %5163 = vst [vmem:[#allocation2 + $0x360] sm:$0xf] %v5131
        %5164 = vst [vmem:[#allocation2 + $0x384] sm:$0xf] %v5132
        %5165 = vst [vmem:[#allocation2 + $0x3a8] sm:$0xf] %v5133
        %5166 = vst [vmem:[#allocation2 + $0x3cc] sm:$0xf] %v5134
        %5167 = vst [vmem:[#allocation2 + $0x3f0] sm:$0xf] %v5135
        %5168 = vst [vmem:[#allocation2 + $0x414] sm:$0xf] %v5136
        %5169 = vst [vmem:[#allocation2 + $0x438] sm:$0xf] %v5137
        %5170 = vst [vmem:[#allocation2 + $0x45c] sm:$0xf] %v5138
        %v5171 = vld [vmem:[#allocation3] sm:$0xf]
        %v5172 = vld [vmem:[#allocation3 + $0x4] sm:$0xf]
        %v5173 = vld [vmem:[#allocation3 + $0x8] sm:$0x1]
        %v5174 = vld [vmem:[#allocation3 + $0xc] sm:$0xf]
        %v5175 = vld [vmem:[#allocation3 + $0x10] sm:$0xf]
        %v5176 = vld [vmem:[#allocation3 + $0x14] sm:$0x1]
        %v5177 = vld [vmem:[#allocation3 + $0x18] sm:$0xf]
        %v5178 = vld [vmem:[#allocation3 + $0x1c] sm:$0xf]
        %v5179 = vld [vmem:[#allocation3 + $0x20] sm:$0x1]
        %v5180 = vld [vmem:[#allocation3 + $0x24] sm:$0xf]
        %v5181 = vld [vmem:[#allocation3 + $0x28] sm:$0xf]
        %v5182 = vld [vmem:[#allocation3 + $0x2c] sm:$0x1]
        %v5183 = vld [vmem:[#allocation3 + $0x30] sm:$0xf]
        %v5184 = vld [vmem:[#allocation3 + $0x34] sm:$0xf]
        %v5185 = vld [vmem:[#allocation3 + $0x38] sm:$0x1]
        %v5186 = vld [vmem:[#allocation3 + $0x3c] sm:$0xf]
        %v5187 = vld [vmem:[#allocation3 + $0x40] sm:$0xf]
        %v5188 = vld [vmem:[#allocation3 + $0x44] sm:$0x1]
        %v5189 = vld [vmem:[#allocation3 + $0x48] sm:$0xf]
        %v5190 = vld [vmem:[#allocation3 + $0x4c] sm:$0xf]
        %v5191 = vld [vmem:[#allocation3 + $0x50] sm:$0x1]
        %v5192 = vld [vmem:[#allocation3 + $0x54] sm:$0xf]
        %v5193 = vld [vmem:[#allocation3 + $0x58] sm:$0xf]
        %v5194 = vld [vmem:[#allocation3 + $0x5c] sm:$0x1]
        %v5195 = vld [vmem:[#allocation3 + $0x60] sm:$0xf]
        %v5196 = vld [vmem:[#allocation3 + $0x64] sm:$0xf]
        %v5197 = vld [vmem:[#allocation3 + $0x68] sm:$0x1]
        %v5198 = vld [vmem:[#allocation3 + $0x6c] sm:$0xf]
        %v5199 = vld [vmem:[#allocation3 + $0x70] sm:$0xf]
        %v5200 = vld [vmem:[#allocation3 + $0x74] sm:$0x1]
        %v5201 = vld [vmem:[#allocation3 + $0x78] sm:$0xf]
        %v5202 = vld [vmem:[#allocation3 + $0x7c] sm:$0xf]
        %v5203 = vld [vmem:[#allocation3 + $0x80] sm:$0x1]
        %v5204 = vld [vmem:[#allocation3 + $0x84] sm:$0xf]
        %v5205 = vld [vmem:[#allocation3 + $0x88] sm:$0xf]
        %v5206 = vld [vmem:[#allocation3 + $0x8c] sm:$0x1]
        %v5207 = vld [vmem:[#allocation3 + $0x90] sm:$0xf]
        %v5208 = vld [vmem:[#allocation3 + $0x94] sm:$0xf]
        %v5209 = vld [vmem:[#allocation3 + $0x98] sm:$0x1]
        %v5210 = vld [vmem:[#allocation3 + $0x9c] sm:$0xf]
        %v5211 = vld [vmem:[#allocation3 + $0xa0] sm:$0xf]
        %v5212 = vld [vmem:[#allocation3 + $0xa4] sm:$0x1]
        %v5213 = vld [vmem:[#allocation3 + $0xa8] sm:$0xf]
        %v5214 = vld [vmem:[#allocation3 + $0xac] sm:$0xf]
        %v5215 = vld [vmem:[#allocation3 + $0xb0] sm:$0x1]
        %v5216 = vld [vmem:[#allocation3 + $0xb4] sm:$0xf]
        %v5217 = vld [vmem:[#allocation3 + $0xb8] sm:$0xf]
        %v5218 = vld [vmem:[#allocation3 + $0xbc] sm:$0x1]
        %vm5219 = vsmask.f32 3328
        %vm5220 = vsmask.f32 7440
        %vm5221 = vmor %vm5219, %vm5220
        %v5223 = vshrl.u32 %v5171, 16
        %v5225 = vrot.slane %v5223, 4
        %v5226 = vshll.u32 %v5171, 16
        %v5228 = vrot.slane %v5226, 5
        %v5229 = vor.u32 %v5225, %v5228
        %v5230 = vrot.slane %v5229, 4
        %v5232 = vshll.u32 %v5172, 16
        %v5234 = vrot.slane %v5232, 5
        %v5235 = vsel %vm5221, %v5230, %v5234
        %v5236 = vshrl.u32 %v5172, 16
        %v5238 = vrot.slane %v5236, 4
        %v5239 = vor.u32 %v5238, %v5234
        %v5240 = vrot.slane %v5239, 4
        %v5242 = vshll.u32 %v5173, 16
        %v5244 = vrot.slane %v5242, 5
        %v5245 = vsel %vm5221, %v5240, %v5244
        %v5247 = vshrl.u32 %v5174, 16
        %v5249 = vrot.slane %v5247, 4
        %v5250 = vshll.u32 %v5174, 16
        %v5252 = vrot.slane %v5250, 5
        %v5253 = vor.u32 %v5249, %v5252
        %v5254 = vrot.slane %v5253, 4
        %v5256 = vshll.u32 %v5175, 16
        %v5258 = vrot.slane %v5256, 5
        %v5259 = vsel %vm5221, %v5254, %v5258
        %v5260 = vshrl.u32 %v5175, 16
        %v5262 = vrot.slane %v5260, 4
        %v5263 = vor.u32 %v5262, %v5258
        %v5264 = vrot.slane %v5263, 4
        %v5266 = vshll.u32 %v5176, 16
        %v5268 = vrot.slane %v5266, 5
        %v5269 = vsel %vm5221, %v5264, %v5268
        %v5271 = vshrl.u32 %v5177, 16
        %v5273 = vrot.slane %v5271, 4
        %v5274 = vshll.u32 %v5177, 16
        %v5276 = vrot.slane %v5274, 5
        %v5277 = vor.u32 %v5273, %v5276
        %v5278 = vrot.slane %v5277, 4
        %v5280 = vshll.u32 %v5178, 16
        %v5282 = vrot.slane %v5280, 5
        %v5283 = vsel %vm5221, %v5278, %v5282
        %v5284 = vshrl.u32 %v5178, 16
        %v5286 = vrot.slane %v5284, 4
        %v5287 = vor.u32 %v5286, %v5282
        %v5288 = vrot.slane %v5287, 4
        %v5290 = vshll.u32 %v5179, 16
        %v5292 = vrot.slane %v5290, 5
        %v5293 = vsel %vm5221, %v5288, %v5292
        %v5295 = vshrl.u32 %v5180, 16
        %v5297 = vrot.slane %v5295, 4
        %v5298 = vshll.u32 %v5180, 16
        %v5300 = vrot.slane %v5298, 5
        %v5301 = vor.u32 %v5297, %v5300
        %v5302 = vrot.slane %v5301, 4
        %v5304 = vshll.u32 %v5181, 16
        %v5306 = vrot.slane %v5304, 5
        %v5307 = vsel %vm5221, %v5302, %v5306
        %v5308 = vshrl.u32 %v5181, 16
        %v5310 = vrot.slane %v5308, 4
        %v5311 = vor.u32 %v5310, %v5306
        %v5312 = vrot.slane %v5311, 4
        %v5314 = vshll.u32 %v5182, 16
        %v5316 = vrot.slane %v5314, 5
        %v5317 = vsel %vm5221, %v5312, %v5316
        %v5319 = vshrl.u32 %v5183, 16
        %v5321 = vrot.slane %v5319, 4
        %v5322 = vshll.u32 %v5183, 16
        %v5324 = vrot.slane %v5322, 5
        %v5325 = vor.u32 %v5321, %v5324
        %v5326 = vrot.slane %v5325, 4
        %v5328 = vshll.u32 %v5184, 16
        %v5330 = vrot.slane %v5328, 5
        %v5331 = vsel %vm5221, %v5326, %v5330
        %v5332 = vshrl.u32 %v5184, 16
        %v5334 = vrot.slane %v5332, 4
        %v5335 = vor.u32 %v5334, %v5330
        %v5336 = vrot.slane %v5335, 4
        %v5338 = vshll.u32 %v5185, 16
        %v5340 = vrot.slane %v5338, 5
        %v5341 = vsel %vm5221, %v5336, %v5340
        %v5343 = vshrl.u32 %v5186, 16
        %v5345 = vrot.slane %v5343, 4
        %v5346 = vshll.u32 %v5186, 16
        %v5348 = vrot.slane %v5346, 5
        %v5349 = vor.u32 %v5345, %v5348
        %v5350 = vrot.slane %v5349, 4
        %v5352 = vshll.u32 %v5187, 16
        %v5354 = vrot.slane %v5352, 5
        %v5355 = vsel %vm5221, %v5350, %v5354
        %v5356 = vshrl.u32 %v5187, 16
        %v5358 = vrot.slane %v5356, 4
        %v5359 = vor.u32 %v5358, %v5354
        %v5360 = vrot.slane %v5359, 4
        %v5362 = vshll.u32 %v5188, 16
        %v5364 = vrot.slane %v5362, 5
        %v5365 = vsel %vm5221, %v5360, %v5364
        %v5367 = vshrl.u32 %v5189, 16
        %v5369 = vrot.slane %v5367, 4
        %v5370 = vshll.u32 %v5189, 16
        %v5372 = vrot.slane %v5370, 5
        %v5373 = vor.u32 %v5369, %v5372
        %v5374 = vrot.slane %v5373, 4
        %v5376 = vshll.u32 %v5190, 16
        %v5378 = vrot.slane %v5376, 5
        %v5379 = vsel %vm5221, %v5374, %v5378
        %v5380 = vshrl.u32 %v5190, 16
        %v5382 = vrot.slane %v5380, 4
        %v5383 = vor.u32 %v5382, %v5378
        %v5384 = vrot.slane %v5383, 4
        %v5386 = vshll.u32 %v5191, 16
        %v5388 = vrot.slane %v5386, 5
        %v5389 = vsel %vm5221, %v5384, %v5388
        %v5391 = vshrl.u32 %v5192, 16
        %v5393 = vrot.slane %v5391, 4
        %v5394 = vshll.u32 %v5192, 16
        %v5396 = vrot.slane %v5394, 5
        %v5397 = vor.u32 %v5393, %v5396
        %v5398 = vrot.slane %v5397, 4
        %v5400 = vshll.u32 %v5193, 16
        %v5402 = vrot.slane %v5400, 5
        %v5403 = vsel %vm5221, %v5398, %v5402
        %v5404 = vshrl.u32 %v5193, 16
        %v5406 = vrot.slane %v5404, 4
        %v5407 = vor.u32 %v5406, %v5402
        %v5408 = vrot.slane %v5407, 4
        %v5410 = vshll.u32 %v5194, 16
        %v5412 = vrot.slane %v5410, 5
        %v5413 = vsel %vm5221, %v5408, %v5412
        %v5415 = vshrl.u32 %v5195, 16
        %v5417 = vrot.slane %v5415, 4
        %v5418 = vshll.u32 %v5195, 16
        %v5420 = vrot.slane %v5418, 5
        %v5421 = vor.u32 %v5417, %v5420
        %v5422 = vrot.slane %v5421, 4
        %v5424 = vshll.u32 %v5196, 16
        %v5426 = vrot.slane %v5424, 5
        %v5427 = vsel %vm5221, %v5422, %v5426
        %v5428 = vshrl.u32 %v5196, 16
        %v5430 = vrot.slane %v5428, 4
        %v5431 = vor.u32 %v5430, %v5426
        %v5432 = vrot.slane %v5431, 4
        %v5434 = vshll.u32 %v5197, 16
        %v5436 = vrot.slane %v5434, 5
        %v5437 = vsel %vm5221, %v5432, %v5436
        %v5439 = vshrl.u32 %v5198, 16
        %v5441 = vrot.slane %v5439, 4
        %v5442 = vshll.u32 %v5198, 16
        %v5444 = vrot.slane %v5442, 5
        %v5445 = vor.u32 %v5441, %v5444
        %v5446 = vrot.slane %v5445, 4
        %v5448 = vshll.u32 %v5199, 16
        %v5450 = vrot.slane %v5448, 5
        %v5451 = vsel %vm5221, %v5446, %v5450
        %v5452 = vshrl.u32 %v5199, 16
        %v5454 = vrot.slane %v5452, 4
        %v5455 = vor.u32 %v5454, %v5450
        %v5456 = vrot.slane %v5455, 4
        %v5458 = vshll.u32 %v5200, 16
        %v5460 = vrot.slane %v5458, 5
        %v5461 = vsel %vm5221, %v5456, %v5460
        %v5463 = vshrl.u32 %v5201, 16
        %v5465 = vrot.slane %v5463, 4
        %v5466 = vshll.u32 %v5201, 16
        %v5468 = vrot.slane %v5466, 5
        %v5469 = vor.u32 %v5465, %v5468
        %v5470 = vrot.slane %v5469, 4
        %v5472 = vshll.u32 %v5202, 16
        %v5474 = vrot.slane %v5472, 5
        %v5475 = vsel %vm5221, %v5470, %v5474
        %v5476 = vshrl.u32 %v5202, 16
        %v5478 = vrot.slane %v5476, 4
        %v5479 = vor.u32 %v5478, %v5474
        %v5480 = vrot.slane %v5479, 4
        %v5482 = vshll.u32 %v5203, 16
        %v5484 = vrot.slane %v5482, 5
        %v5485 = vsel %vm5221, %v5480, %v5484
        %v5487 = vshrl.u32 %v5204, 16
        %v5489 = vrot.slane %v5487, 4
        %v5490 = vshll.u32 %v5204, 16
        %v5492 = vrot.slane %v5490, 5
        %v5493 = vor.u32 %v5489, %v5492
        %v5494 = vrot.slane %v5493, 4
        %v5496 = vshll.u32 %v5205, 16
        %v5498 = vrot.slane %v5496, 5
        %v5499 = vsel %vm5221, %v5494, %v5498
        %v5500 = vshrl.u32 %v5205, 16
        %v5502 = vrot.slane %v5500, 4
        %v5503 = vor.u32 %v5502, %v5498
        %v5504 = vrot.slane %v5503, 4
        %v5506 = vshll.u32 %v5206, 16
        %v5508 = vrot.slane %v5506, 5
        %v5509 = vsel %vm5221, %v5504, %v5508
        %v5511 = vshrl.u32 %v5207, 16
        %v5513 = vrot.slane %v5511, 4
        %v5514 = vshll.u32 %v5207, 16
        %v5516 = vrot.slane %v5514, 5
        %v5517 = vor.u32 %v5513, %v5516
        %v5518 = vrot.slane %v5517, 4
        %v5520 = vshll.u32 %v5208, 16
        %v5522 = vrot.slane %v5520, 5
        %v5523 = vsel %vm5221, %v5518, %v5522
        %v5524 = vshrl.u32 %v5208, 16
        %v5526 = vrot.slane %v5524, 4
        %v5527 = vor.u32 %v5526, %v5522
        %v5528 = vrot.slane %v5527, 4
        %v5530 = vshll.u32 %v5209, 16
        %v5532 = vrot.slane %v5530, 5
        %v5533 = vsel %vm5221, %v5528, %v5532
        %v5535 = vshrl.u32 %v5210, 16
        %v5537 = vrot.slane %v5535, 4
        %v5538 = vshll.u32 %v5210, 16
        %v5540 = vrot.slane %v5538, 5
        %v5541 = vor.u32 %v5537, %v5540
        %v5542 = vrot.slane %v5541, 4
        %v5544 = vshll.u32 %v5211, 16
        %v5546 = vrot.slane %v5544, 5
        %v5547 = vsel %vm5221, %v5542, %v5546
        %v5548 = vshrl.u32 %v5211, 16
        %v5550 = vrot.slane %v5548, 4
        %v5551 = vor.u32 %v5550, %v5546
        %v5552 = vrot.slane %v5551, 4
        %v5554 = vshll.u32 %v5212, 16
        %v5556 = vrot.slane %v5554, 5
        %v5557 = vsel %vm5221, %v5552, %v5556
        %v5559 = vshrl.u32 %v5213, 16
        %v5561 = vrot.slane %v5559, 4
        %v5562 = vshll.u32 %v5213, 16
        %v5564 = vrot.slane %v5562, 5
        %v5565 = vor.u32 %v5561, %v5564
        %v5566 = vrot.slane %v5565, 4
        %v5568 = vshll.u32 %v5214, 16
        %v5570 = vrot.slane %v5568, 5
        %v5571 = vsel %vm5221, %v5566, %v5570
        %v5572 = vshrl.u32 %v5214, 16
        %v5574 = vrot.slane %v5572, 4
        %v5575 = vor.u32 %v5574, %v5570
        %v5576 = vrot.slane %v5575, 4
        %v5578 = vshll.u32 %v5215, 16
        %v5580 = vrot.slane %v5578, 5
        %v5581 = vsel %vm5221, %v5576, %v5580
        %v5583 = vshrl.u32 %v5216, 16
        %v5585 = vrot.slane %v5583, 4
        %v5586 = vshll.u32 %v5216, 16
        %v5588 = vrot.slane %v5586, 5
        %v5589 = vor.u32 %v5585, %v5588
        %v5590 = vrot.slane %v5589, 4
        %v5592 = vshll.u32 %v5217, 16
        %v5594 = vrot.slane %v5592, 5
        %v5595 = vsel %vm5221, %v5590, %v5594
        %v5596 = vshrl.u32 %v5217, 16
        %v5598 = vrot.slane %v5596, 4
        %v5599 = vor.u32 %v5598, %v5594
        %v5600 = vrot.slane %v5599, 4
        %v5602 = vshll.u32 %v5218, 16
        %v5604 = vrot.slane %v5602, 5
        %v5605 = vsel %vm5221, %v5600, %v5604
        %5638 = vst [vmem:[#allocation2 + $0x4] sm:$0xf] %v5235
        %5639 = vst [vmem:[#allocation2 + $0x28] sm:$0xf] %v5245
        %5640 = vst [vmem:[#allocation2 + $0x4c] sm:$0xf] %v5259
        %5641 = vst [vmem:[#allocation2 + $0x70] sm:$0xf] %v5269
        %5642 = vst [vmem:[#allocation2 + $0x94] sm:$0xf] %v5283
        %5643 = vst [vmem:[#allocation2 + $0xb8] sm:$0xf] %v5293
        %5644 = vst [vmem:[#allocation2 + $0xdc] sm:$0xf] %v5307
        %5645 = vst [vmem:[#allocation2 + $0x100] sm:$0xf] %v5317
        %5646 = vst [vmem:[#allocation2 + $0x124] sm:$0xf] %v5331
        %5647 = vst [vmem:[#allocation2 + $0x148] sm:$0xf] %v5341
        %5648 = vst [vmem:[#allocation2 + $0x16c] sm:$0xf] %v5355
        %5649 = vst [vmem:[#allocation2 + $0x190] sm:$0xf] %v5365
        %5650 = vst [vmem:[#allocation2 + $0x1b4] sm:$0xf] %v5379
        %5651 = vst [vmem:[#allocation2 + $0x1d8] sm:$0xf] %v5389
        %5652 = vst [vmem:[#allocation2 + $0x1fc] sm:$0xf] %v5403
        %5653 = vst [vmem:[#allocation2 + $0x220] sm:$0xf] %v5413
        %5654 = vst [vmem:[#allocation2 + $0x244] sm:$0xf] %v5427
        %5655 = vst [vmem:[#allocation2 + $0x268] sm:$0xf] %v5437
        %5656 = vst [vmem:[#allocation2 + $0x28c] sm:$0xf] %v5451
        %5657 = vst [vmem:[#allocation2 + $0x2b0] sm:$0xf] %v5461
        %5658 = vst [vmem:[#allocation2 + $0x2d4] sm:$0xf] %v5475
        %5659 = vst [vmem:[#allocation2 + $0x2f8] sm:$0xf] %v5485
        %5660 = vst [vmem:[#allocation2 + $0x31c] sm:$0xf] %v5499
        %5661 = vst [vmem:[#allocation2 + $0x340] sm:$0xf] %v5509
        %5662 = vst [vmem:[#allocation2 + $0x364] sm:$0xf] %v5523
        %5663 = vst [vmem:[#allocation2 + $0x388] sm:$0xf] %v5533
        %5664 = vst [vmem:[#allocation2 + $0x3ac] sm:$0xf] %v5547
        %5665 = vst [vmem:[#allocation2 + $0x3d0] sm:$0xf] %v5557
        %5666 = vst [vmem:[#allocation2 + $0x3f4] sm:$0xf] %v5571
        %5667 = vst [vmem:[#allocation2 + $0x418] sm:$0xf] %v5581
        %5668 = vst [vmem:[#allocation2 + $0x43c] sm:$0xf] %v5595
        %5669 = vst [vmem:[#allocation2 + $0x460] sm:$0xf] %v5605
        %v5670 = vld [vmem:[#allocation3] sm:$0xe]
        %v5671 = vld [vmem:[#allocation3 + $0x4] sm:$0xf]
        %v5672 = vld [vmem:[#allocation3 + $0x8] sm:$0x1]
        %v5673 = vld [vmem:[#allocation3 + $0xc] sm:$0xe]
        %v5674 = vld [vmem:[#allocation3 + $0x10] sm:$0xf]
        %v5675 = vld [vmem:[#allocation3 + $0x14] sm:$0x1]
        %v5676 = vld [vmem:[#allocation3 + $0x18] sm:$0xe]
        %v5677 = vld [vmem:[#allocation3 + $0x1c] sm:$0xf]
        %v5678 = vld [vmem:[#allocation3 + $0x20] sm:$0x1]
        %v5679 = vld [vmem:[#allocation3 + $0x24] sm:$0xe]
        %v5680 = vld [vmem:[#allocation3 + $0x28] sm:$0xf]
        %v5681 = vld [vmem:[#allocation3 + $0x2c] sm:$0x1]
        %v5682 = vld [vmem:[#allocation3 + $0x30] sm:$0xe]
        %v5683 = vld [vmem:[#allocation3 + $0x34] sm:$0xf]
        %v5684 = vld [vmem:[#allocation3 + $0x38] sm:$0x1]
        %v5685 = vld [vmem:[#allocation3 + $0x3c] sm:$0xe]
        %v5686 = vld [vmem:[#allocation3 + $0x40] sm:$0xf]
        %v5687 = vld [vmem:[#allocation3 + $0x44] sm:$0x1]
        %v5688 = vld [vmem:[#allocation3 + $0x48] sm:$0xe]
        %v5689 = vld [vmem:[#allocation3 + $0x4c] sm:$0xf]
        %v5690 = vld [vmem:[#allocation3 + $0x50] sm:$0x1]
        %v5691 = vld [vmem:[#allocation3 + $0x54] sm:$0xe]
        %v5692 = vld [vmem:[#allocation3 + $0x58] sm:$0xf]
        %v5693 = vld [vmem:[#allocation3 + $0x5c] sm:$0x1]
        %v5694 = vld [vmem:[#allocation3 + $0x60] sm:$0xe]
        %v5695 = vld [vmem:[#allocation3 + $0x64] sm:$0xf]
        %v5696 = vld [vmem:[#allocation3 + $0x68] sm:$0x1]
        %v5697 = vld [vmem:[#allocation3 + $0x6c] sm:$0xe]
        %v5698 = vld [vmem:[#allocation3 + $0x70] sm:$0xf]
        %v5699 = vld [vmem:[#allocation3 + $0x74] sm:$0x1]
        %v5700 = vld [vmem:[#allocation3 + $0x78] sm:$0xe]
        %v5701 = vld [vmem:[#allocation3 + $0x7c] sm:$0xf]
        %v5702 = vld [vmem:[#allocation3 + $0x80] sm:$0x1]
        %v5703 = vld [vmem:[#allocation3 + $0x84] sm:$0xe]
        %v5704 = vld [vmem:[#allocation3 + $0x88] sm:$0xf]
        %v5705 = vld [vmem:[#allocation3 + $0x8c] sm:$0x1]
        %v5706 = vld [vmem:[#allocation3 + $0x90] sm:$0xe]
        %v5707 = vld [vmem:[#allocation3 + $0x94] sm:$0xf]
        %v5708 = vld [vmem:[#allocation3 + $0x98] sm:$0x1]
        %v5709 = vld [vmem:[#allocation3 + $0x9c] sm:$0xe]
        %v5710 = vld [vmem:[#allocation3 + $0xa0] sm:$0xf]
        %v5711 = vld [vmem:[#allocation3 + $0xa4] sm:$0x1]
        %v5712 = vld [vmem:[#allocation3 + $0xa8] sm:$0xe]
        %v5713 = vld [vmem:[#allocation3 + $0xac] sm:$0xf]
        %v5714 = vld [vmem:[#allocation3 + $0xb0] sm:$0x1]
        %v5715 = vld [vmem:[#allocation3 + $0xb4] sm:$0xe]
        %v5716 = vld [vmem:[#allocation3 + $0xb8] sm:$0xf]
        %v5717 = vld [vmem:[#allocation3 + $0xbc] sm:$0x1]
        %vm5766 = vcmask 1042432
        %vm5767 = vcmask 1046532
        %vm5768 = vmor %vm5766, %vm5767
        %v5769 = vrot.slane %v5670, 5
        %v5770 = vrot.slane %v5769, 4
        %v5771 = vrot.slane %v5671, 5
        %v5772 = vsel %vm5768, %v5770, %v5771
        %v5773 = vrot.slane %v5771, 4
        %v5774 = vrot.slane %v5672, 5
        %v5775 = vsel %vm5768, %v5773, %v5774
        %v5776 = vrot.slane %v5673, 5
        %v5777 = vrot.slane %v5776, 4
        %v5778 = vrot.slane %v5674, 5
        %v5779 = vsel %vm5768, %v5777, %v5778
        %v5780 = vrot.slane %v5778, 4
        %v5781 = vrot.slane %v5675, 5
        %v5782 = vsel %vm5768, %v5780, %v5781
        %v5783 = vrot.slane %v5676, 5
        %v5784 = vrot.slane %v5783, 4
        %v5785 = vrot.slane %v5677, 5
        %v5786 = vsel %vm5768, %v5784, %v5785
        %v5787 = vrot.slane %v5785, 4
        %v5788 = vrot.slane %v5678, 5
        %v5789 = vsel %vm5768, %v5787, %v5788
        %v5790 = vrot.slane %v5679, 5
        %v5791 = vrot.slane %v5790, 4
        %v5792 = vrot.slane %v5680, 5
        %v5793 = vsel %vm5768, %v5791, %v5792
        %v5794 = vrot.slane %v5792, 4
        %v5795 = vrot.slane %v5681, 5
        %v5796 = vsel %vm5768, %v5794, %v5795
        %v5797 = vrot.slane %v5682, 5
        %v5798 = vrot.slane %v5797, 4
        %v5799 = vrot.slane %v5683, 5
        %v5800 = vsel %vm5768, %v5798, %v5799
        %v5801 = vrot.slane %v5799, 4
        %v5802 = vrot.slane %v5684, 5
        %v5803 = vsel %vm5768, %v5801, %v5802
        %v5804 = vrot.slane %v5685, 5
        %v5805 = vrot.slane %v5804, 4
        %v5806 = vrot.slane %v5686, 5
        %v5807 = vsel %vm5768, %v5805, %v5806
        %v5808 = vrot.slane %v5806, 4
        %v5809 = vrot.slane %v5687, 5
        %v5810 = vsel %vm5768, %v5808, %v5809
        %v5811 = vrot.slane %v5688, 5
        %v5812 = vrot.slane %v5811, 4
        %v5813 = vrot.slane %v5689, 5
        %v5814 = vsel %vm5768, %v5812, %v5813
        %v5815 = vrot.slane %v5813, 4
        %v5816 = vrot.slane %v5690, 5
        %v5817 = vsel %vm5768, %v5815, %v5816
        %v5818 = vrot.slane %v5691, 5
        %v5819 = vrot.slane %v5818, 4
        %v5820 = vrot.slane %v5692, 5
        %v5821 = vsel %vm5768, %v5819, %v5820
        %v5822 = vrot.slane %v5820, 4
        %v5823 = vrot.slane %v5693, 5
        %v5824 = vsel %vm5768, %v5822, %v5823
        %v5825 = vrot.slane %v5694, 5
        %v5826 = vrot.slane %v5825, 4
        %v5827 = vrot.slane %v5695, 5
        %v5828 = vsel %vm5768, %v5826, %v5827
        %v5829 = vrot.slane %v5827, 4
        %v5830 = vrot.slane %v5696, 5
        %v5831 = vsel %vm5768, %v5829, %v5830
        %v5832 = vrot.slane %v5697, 5
        %v5833 = vrot.slane %v5832, 4
        %v5834 = vrot.slane %v5698, 5
        %v5835 = vsel %vm5768, %v5833, %v5834
        %v5836 = vrot.slane %v5834, 4
        %v5837 = vrot.slane %v5699, 5
        %v5838 = vsel %vm5768, %v5836, %v5837
        %v5839 = vrot.slane %v5700, 5
        %v5840 = vrot.slane %v5839, 4
        %v5841 = vrot.slane %v5701, 5
        %v5842 = vsel %vm5768, %v5840, %v5841
        %v5843 = vrot.slane %v5841, 4
        %v5844 = vrot.slane %v5702, 5
        %v5845 = vsel %vm5768, %v5843, %v5844
        %v5846 = vrot.slane %v5703, 5
        %v5847 = vrot.slane %v5846, 4
        %v5848 = vrot.slane %v5704, 5
        %v5849 = vsel %vm5768, %v5847, %v5848
        %v5850 = vrot.slane %v5848, 4
        %v5851 = vrot.slane %v5705, 5
        %v5852 = vsel %vm5768, %v5850, %v5851
        %v5853 = vrot.slane %v5706, 5
        %v5854 = vrot.slane %v5853, 4
        %v5855 = vrot.slane %v5707, 5
        %v5856 = vsel %vm5768, %v5854, %v5855
        %v5857 = vrot.slane %v5855, 4
        %v5858 = vrot.slane %v5708, 5
        %v5859 = vsel %vm5768, %v5857, %v5858
        %v5860 = vrot.slane %v5709, 5
        %v5861 = vrot.slane %v5860, 4
        %v5862 = vrot.slane %v5710, 5
        %v5863 = vsel %vm5768, %v5861, %v5862
        %v5864 = vrot.slane %v5862, 4
        %v5865 = vrot.slane %v5711, 5
        %v5866 = vsel %vm5768, %v5864, %v5865
        %v5867 = vrot.slane %v5712, 5
        %v5868 = vrot.slane %v5867, 4
        %v5869 = vrot.slane %v5713, 5
        %v5870 = vsel %vm5768, %v5868, %v5869
        %v5871 = vrot.slane %v5869, 4
        %v5872 = vrot.slane %v5714, 5
        %v5873 = vsel %vm5768, %v5871, %v5872
        %v5874 = vrot.slane %v5715, 5
        %v5875 = vrot.slane %v5874, 4
        %v5876 = vrot.slane %v5716, 5
        %v5877 = vsel %vm5768, %v5875, %v5876
        %v5878 = vrot.slane %v5876, 4
        %v5879 = vrot.slane %v5717, 5
        %v5880 = vsel %vm5768, %v5878, %v5879
        %5913 = vst [vmem:[#allocation2 + $0x8] sm:$0xf] %v5772
        %5914 = vst [vmem:[#allocation2 + $0x2c] sm:$0xf] %v5775
        %5915 = vst [vmem:[#allocation2 + $0x50] sm:$0xf] %v5779
        %5916 = vst [vmem:[#allocation2 + $0x74] sm:$0xf] %v5782
        %5917 = vst [vmem:[#allocation2 + $0x98] sm:$0xf] %v5786
        %5918 = vst [vmem:[#allocation2 + $0xbc] sm:$0xf] %v5789
        %5919 = vst [vmem:[#allocation2 + $0xe0] sm:$0xf] %v5793
        %5920 = vst [vmem:[#allocation2 + $0x104] sm:$0xf] %v5796
        %5921 = vst [vmem:[#allocation2 + $0x128] sm:$0xf] %v5800
        %5922 = vst [vmem:[#allocation2 + $0x14c] sm:$0xf] %v5803
        %5923 = vst [vmem:[#allocation2 + $0x170] sm:$0xf] %v5807
        %5924 = vst [vmem:[#allocation2 + $0x194] sm:$0xf] %v5810
        %5925 = vst [vmem:[#allocation2 + $0x1b8] sm:$0xf] %v5814
        %5926 = vst [vmem:[#allocation2 + $0x1dc] sm:$0xf] %v5817
        %5927 = vst [vmem:[#allocation2 + $0x200] sm:$0xf] %v5821
        %5928 = vst [vmem:[#allocation2 + $0x224] sm:$0xf] %v5824
        %5929 = vst [vmem:[#allocation2 + $0x248] sm:$0xf] %v5828
        %5930 = vst [vmem:[#allocation2 + $0x26c] sm:$0xf] %v5831
        %5931 = vst [vmem:[#allocation2 + $0x290] sm:$0xf] %v5835
        %5932 = vst [vmem:[#allocation2 + $0x2b4] sm:$0xf] %v5838
        %5933 = vst [vmem:[#allocation2 + $0x2d8] sm:$0xf] %v5842
        %5934 = vst [vmem:[#allocation2 + $0x2fc] sm:$0xf] %v5845
        %5935 = vst [vmem:[#allocation2 + $0x320] sm:$0xf] %v5849
        %5936 = vst [vmem:[#allocation2 + $0x344] sm:$0xf] %v5852
        %5937 = vst [vmem:[#allocation2 + $0x368] sm:$0xf] %v5856
        %5938 = vst [vmem:[#allocation2 + $0x38c] sm:$0xf] %v5859
        %5939 = vst [vmem:[#allocation2 + $0x3b0] sm:$0xf] %v5863
        %5940 = vst [vmem:[#allocation2 + $0x3d4] sm:$0xf] %v5866
        %5941 = vst [vmem:[#allocation2 + $0x3f8] sm:$0xf] %v5870
        %5942 = vst [vmem:[#allocation2 + $0x41c] sm:$0xf] %v5873
        %5943 = vst [vmem:[#allocation2 + $0x440] sm:$0xf] %v5877
        %5944 = vst [vmem:[#allocation2 + $0x464] sm:$0xf] %v5880
        %v5945 = vld [vmem:[%s4989] sm:$0xf]
        %v5946 = vld [vmem:[%s4989 + $0x4] sm:$0xf]
        %v5947 = vld [vmem:[%s4989 + $0xc] sm:$0xf]
        %v5948 = vld [vmem:[%s4989 + $0x10] sm:$0xf]
        %v5949 = vld [vmem:[%s4989 + $0x18] sm:$0xf]
        %v5950 = vld [vmem:[%s4989 + $0x1c] sm:$0xf]
        %v5951 = vld [vmem:[%s4989 + $0x24] sm:$0xf]
        %v5952 = vld [vmem:[%s4989 + $0x28] sm:$0xf]
        %v5953 = vld [vmem:[%s4989 + $0x30] sm:$0xf]
        %v5954 = vld [vmem:[%s4989 + $0x34] sm:$0xf]
        %v5955 = vld [vmem:[%s4989 + $0x3c] sm:$0xf]
        %v5956 = vld [vmem:[%s4989 + $0x40] sm:$0xf]
        %v5957 = vld [vmem:[%s4989 + $0x48] sm:$0xf]
        %v5958 = vld [vmem:[%s4989 + $0x4c] sm:$0xf]
        %v5959 = vld [vmem:[%s4989 + $0x54] sm:$0xf]
        %v5960 = vld [vmem:[%s4989 + $0x58] sm:$0xf]
        %v5961 = vld [vmem:[%s4989 + $0x60] sm:$0xf]
        %v5962 = vld [vmem:[%s4989 + $0x64] sm:$0xf]
        %v5963 = vld [vmem:[%s4989 + $0x6c] sm:$0xf]
        %v5964 = vld [vmem:[%s4989 + $0x70] sm:$0xf]
        %v5965 = vld [vmem:[%s4989 + $0x78] sm:$0xf]
        %v5966 = vld [vmem:[%s4989 + $0x7c] sm:$0xf]
        %v5967 = vld [vmem:[%s4989 + $0x84] sm:$0xf]
        %v5968 = vld [vmem:[%s4989 + $0x88] sm:$0xf]
        %v5969 = vld [vmem:[%s4989 + $0x90] sm:$0xf]
        %v5970 = vld [vmem:[%s4989 + $0x94] sm:$0xf]
        %v5971 = vld [vmem:[%s4989 + $0x9c] sm:$0xf]
        %v5972 = vld [vmem:[%s4989 + $0xa0] sm:$0xf]
        %v5973 = vld [vmem:[%s4989 + $0xa8] sm:$0xf]
        %v5974 = vld [vmem:[%s4989 + $0xac] sm:$0xf]
        %v5975 = vld [vmem:[%s4989 + $0xb4] sm:$0xf]
        %v5976 = vld [vmem:[%s4989 + $0xb8] sm:$0xf]
        %5977 = vst [vmem:[#allocation2 + $0xc] sm:$0xf] %v5945
        %5978 = vst [vmem:[#allocation2 + $0x30] sm:$0xf] %v5946
        %5979 = vst [vmem:[#allocation2 + $0x54] sm:$0xf] %v5947
        %5980 = vst [vmem:[#allocation2 + $0x78] sm:$0xf] %v5948
        %5981 = vst [vmem:[#allocation2 + $0x9c] sm:$0xf] %v5949
        %5982 = vst [vmem:[#allocation2 + $0xc0] sm:$0xf] %v5950
        %5983 = vst [vmem:[#allocation2 + $0xe4] sm:$0xf] %v5951
        %5984 = vst [vmem:[#allocation2 + $0x108] sm:$0xf] %v5952
        %5985 = vst [vmem:[#allocation2 + $0x12c] sm:$0xf] %v5953
        %5986 = vst [vmem:[#allocation2 + $0x150] sm:$0xf] %v5954
        %5987 = vst [vmem:[#allocation2 + $0x174] sm:$0xf] %v5955
        %5988 = vst [vmem:[#allocation2 + $0x198] sm:$0xf] %v5956
        %5989 = vst [vmem:[#allocation2 + $0x1bc] sm:$0xf] %v5957
        %5990 = vst [vmem:[#allocation2 + $0x1e0] sm:$0xf] %v5958
        %5991 = vst [vmem:[#allocation2 + $0x204] sm:$0xf] %v5959
        %5992 = vst [vmem:[#allocation2 + $0x228] sm:$0xf] %v5960
        %5993 = vst [vmem:[#allocation2 + $0x24c] sm:$0xf] %v5961
        %5994 = vst [vmem:[#allocation2 + $0x270] sm:$0xf] %v5962
        %5995 = vst [vmem:[#allocation2 + $0x294] sm:$0xf] %v5963
        %5996 = vst [vmem:[#allocation2 + $0x2b8] sm:$0xf] %v5964
        %5997 = vst [vmem:[#allocation2 + $0x2dc] sm:$0xf] %v5965
        %5998 = vst [vmem:[#allocation2 + $0x300] sm:$0xf] %v5966
        %5999 = vst [vmem:[#allocation2 + $0x324] sm:$0xf] %v5967
        %6000 = vst [vmem:[#allocation2 + $0x348] sm:$0xf] %v5968
        %6001 = vst [vmem:[#allocation2 + $0x36c] sm:$0xf] %v5969
        %6002 = vst [vmem:[#allocation2 + $0x390] sm:$0xf] %v5970
        %6003 = vst [vmem:[#allocation2 + $0x3b4] sm:$0xf] %v5971
        %6004 = vst [vmem:[#allocation2 + $0x3d8] sm:$0xf] %v5972
        %6005 = vst [vmem:[#allocation2 + $0x3fc] sm:$0xf] %v5973
        %6006 = vst [vmem:[#allocation2 + $0x420] sm:$0xf] %v5974
        %6007 = vst [vmem:[#allocation2 + $0x444] sm:$0xf] %v5975
        %6008 = vst [vmem:[#allocation2 + $0x468] sm:$0xf] %v5976
        %v6009 = vld [vmem:[%s4989] sm:$0xf]
        %v6010 = vld [vmem:[%s4989 + $0x4] sm:$0xf]
        %v6011 = vld [vmem:[%s4989 + $0x8] sm:$0x1]
        %v6012 = vld [vmem:[%s4989 + $0xc] sm:$0xf]
        %v6013 = vld [vmem:[%s4989 + $0x10] sm:$0xf]
        %v6014 = vld [vmem:[%s4989 + $0x14] sm:$0x1]
        %v6015 = vld [vmem:[%s4989 + $0x18] sm:$0xf]
        %v6016 = vld [vmem:[%s4989 + $0x1c] sm:$0xf]
        %v6017 = vld [vmem:[%s4989 + $0x20] sm:$0x1]
        %v6018 = vld [vmem:[%s4989 + $0x24] sm:$0xf]
        %v6019 = vld [vmem:[%s4989 + $0x28] sm:$0xf]
        %v6020 = vld [vmem:[%s4989 + $0x2c] sm:$0x1]
        %v6021 = vld [vmem:[%s4989 + $0x30] sm:$0xf]
        %v6022 = vld [vmem:[%s4989 + $0x34] sm:$0xf]
        %v6023 = vld [vmem:[%s4989 + $0x38] sm:$0x1]
        %v6024 = vld [vmem:[%s4989 + $0x3c] sm:$0xf]
        %v6025 = vld [vmem:[%s4989 + $0x40] sm:$0xf]
        %v6026 = vld [vmem:[%s4989 + $0x44] sm:$0x1]
        %v6027 = vld [vmem:[%s4989 + $0x48] sm:$0xf]
        %v6028 = vld [vmem:[%s4989 + $0x4c] sm:$0xf]
        %v6029 = vld [vmem:[%s4989 + $0x50] sm:$0x1]
        %v6030 = vld [vmem:[%s4989 + $0x54] sm:$0xf]
        %v6031 = vld [vmem:[%s4989 + $0x58] sm:$0xf]
        %v6032 = vld [vmem:[%s4989 + $0x5c] sm:$0x1]
        %v6033 = vld [vmem:[%s4989 + $0x60] sm:$0xf]
        %v6034 = vld [vmem:[%s4989 + $0x64] sm:$0xf]
        %v6035 = vld [vmem:[%s4989 + $0x68] sm:$0x1]
        %v6036 = vld [vmem:[%s4989 + $0x6c] sm:$0xf]
        %v6037 = vld [vmem:[%s4989 + $0x70] sm:$0xf]
        %v6038 = vld [vmem:[%s4989 + $0x74] sm:$0x1]
        %v6039 = vld [vmem:[%s4989 + $0x78] sm:$0xf]
        %v6040 = vld [vmem:[%s4989 + $0x7c] sm:$0xf]
        %v6041 = vld [vmem:[%s4989 + $0x80] sm:$0x1]
        %v6042 = vld [vmem:[%s4989 + $0x84] sm:$0xf]
        %v6043 = vld [vmem:[%s4989 + $0x88] sm:$0xf]
        %v6044 = vld [vmem:[%s4989 + $0x8c] sm:$0x1]
        %v6045 = vld [vmem:[%s4989 + $0x90] sm:$0xf]
        %v6046 = vld [vmem:[%s4989 + $0x94] sm:$0xf]
        %v6047 = vld [vmem:[%s4989 + $0x98] sm:$0x1]
        %v6048 = vld [vmem:[%s4989 + $0x9c] sm:$0xf]
        %v6049 = vld [vmem:[%s4989 + $0xa0] sm:$0xf]
        %v6050 = vld [vmem:[%s4989 + $0xa4] sm:$0x1]
        %v6051 = vld [vmem:[%s4989 + $0xa8] sm:$0xf]
        %v6052 = vld [vmem:[%s4989 + $0xac] sm:$0xf]
        %v6053 = vld [vmem:[%s4989 + $0xb0] sm:$0x1]
        %v6054 = vld [vmem:[%s4989 + $0xb4] sm:$0xf]
        %v6055 = vld [vmem:[%s4989 + $0xb8] sm:$0xf]
        %v6056 = vld [vmem:[%s4989 + $0xbc] sm:$0x1]
        %v6058 = vshrl.u32 %v6009, 16
        %v6060 = vrot.slane %v6058, 4
        %v6061 = vshll.u32 %v6009, 16
        %v6063 = vrot.slane %v6061, 5
        %v6064 = vor.u32 %v6060, %v6063
        %v6065 = vrot.slane %v6064, 4
        %v6067 = vshll.u32 %v6010, 16
        %v6069 = vrot.slane %v6067, 5
        %v6070 = vsel %vm5221, %v6065, %v6069
        %v6071 = vshrl.u32 %v6010, 16
        %v6073 = vrot.slane %v6071, 4
        %v6074 = vor.u32 %v6073, %v6069
        %v6075 = vrot.slane %v6074, 4
        %v6077 = vshll.u32 %v6011, 16
        %v6079 = vrot.slane %v6077, 5
        %v6080 = vsel %vm5221, %v6075, %v6079
        %v6082 = vshrl.u32 %v6012, 16
        %v6084 = vrot.slane %v6082, 4
        %v6085 = vshll.u32 %v6012, 16
        %v6087 = vrot.slane %v6085, 5
        %v6088 = vor.u32 %v6084, %v6087
        %v6089 = vrot.slane %v6088, 4
        %v6091 = vshll.u32 %v6013, 16
        %v6093 = vrot.slane %v6091, 5
        %v6094 = vsel %vm5221, %v6089, %v6093
        %v6095 = vshrl.u32 %v6013, 16
        %v6097 = vrot.slane %v6095, 4
        %v6098 = vor.u32 %v6097, %v6093
        %v6099 = vrot.slane %v6098, 4
        %v6101 = vshll.u32 %v6014, 16
        %v6103 = vrot.slane %v6101, 5
        %v6104 = vsel %vm5221, %v6099, %v6103
        %v6106 = vshrl.u32 %v6015, 16
        %v6108 = vrot.slane %v6106, 4
        %v6109 = vshll.u32 %v6015, 16
        %v6111 = vrot.slane %v6109, 5
        %v6112 = vor.u32 %v6108, %v6111
        %v6113 = vrot.slane %v6112, 4
        %v6115 = vshll.u32 %v6016, 16
        %v6117 = vrot.slane %v6115, 5
        %v6118 = vsel %vm5221, %v6113, %v6117
        %v6119 = vshrl.u32 %v6016, 16
        %v6121 = vrot.slane %v6119, 4
        %v6122 = vor.u32 %v6121, %v6117
        %v6123 = vrot.slane %v6122, 4
        %v6125 = vshll.u32 %v6017, 16
        %v6127 = vrot.slane %v6125, 5
        %v6128 = vsel %vm5221, %v6123, %v6127
        %v6130 = vshrl.u32 %v6018, 16
        %v6132 = vrot.slane %v6130, 4
        %v6133 = vshll.u32 %v6018, 16
        %v6135 = vrot.slane %v6133, 5
        %v6136 = vor.u32 %v6132, %v6135
        %v6137 = vrot.slane %v6136, 4
        %v6139 = vshll.u32 %v6019, 16
        %v6141 = vrot.slane %v6139, 5
        %v6142 = vsel %vm5221, %v6137, %v6141
        %v6143 = vshrl.u32 %v6019, 16
        %v6145 = vrot.slane %v6143, 4
        %v6146 = vor.u32 %v6145, %v6141
        %v6147 = vrot.slane %v6146, 4
        %v6149 = vshll.u32 %v6020, 16
        %v6151 = vrot.slane %v6149, 5
        %v6152 = vsel %vm5221, %v6147, %v6151
        %v6154 = vshrl.u32 %v6021, 16
        %v6156 = vrot.slane %v6154, 4
        %v6157 = vshll.u32 %v6021, 16
        %v6159 = vrot.slane %v6157, 5
        %v6160 = vor.u32 %v6156, %v6159
        %v6161 = vrot.slane %v6160, 4
        %v6163 = vshll.u32 %v6022, 16
        %v6165 = vrot.slane %v6163, 5
        %v6166 = vsel %vm5221, %v6161, %v6165
        %v6167 = vshrl.u32 %v6022, 16
        %v6169 = vrot.slane %v6167, 4
        %v6170 = vor.u32 %v6169, %v6165
        %v6171 = vrot.slane %v6170, 4
        %v6173 = vshll.u32 %v6023, 16
        %v6175 = vrot.slane %v6173, 5
        %v6176 = vsel %vm5221, %v6171, %v6175
        %v6178 = vshrl.u32 %v6024, 16
        %v6180 = vrot.slane %v6178, 4
        %v6181 = vshll.u32 %v6024, 16
        %v6183 = vrot.slane %v6181, 5
        %v6184 = vor.u32 %v6180, %v6183
        %v6185 = vrot.slane %v6184, 4
        %v6187 = vshll.u32 %v6025, 16
        %v6189 = vrot.slane %v6187, 5
        %v6190 = vsel %vm5221, %v6185, %v6189
        %v6191 = vshrl.u32 %v6025, 16
        %v6193 = vrot.slane %v6191, 4
        %v6194 = vor.u32 %v6193, %v6189
        %v6195 = vrot.slane %v6194, 4
        %v6197 = vshll.u32 %v6026, 16
        %v6199 = vrot.slane %v6197, 5
        %v6200 = vsel %vm5221, %v6195, %v6199
        %v6202 = vshrl.u32 %v6027, 16
        %v6204 = vrot.slane %v6202, 4
        %v6205 = vshll.u32 %v6027, 16
        %v6207 = vrot.slane %v6205, 5
        %v6208 = vor.u32 %v6204, %v6207
        %v6209 = vrot.slane %v6208, 4
        %v6211 = vshll.u32 %v6028, 16
        %v6213 = vrot.slane %v6211, 5
        %v6214 = vsel %vm5221, %v6209, %v6213
        %v6215 = vshrl.u32 %v6028, 16
        %v6217 = vrot.slane %v6215, 4
        %v6218 = vor.u32 %v6217, %v6213
        %v6219 = vrot.slane %v6218, 4
        %v6221 = vshll.u32 %v6029, 16
        %v6223 = vrot.slane %v6221, 5
        %v6224 = vsel %vm5221, %v6219, %v6223
        %v6226 = vshrl.u32 %v6030, 16
        %v6228 = vrot.slane %v6226, 4
        %v6229 = vshll.u32 %v6030, 16
        %v6231 = vrot.slane %v6229, 5
        %v6232 = vor.u32 %v6228, %v6231
        %v6233 = vrot.slane %v6232, 4
        %v6235 = vshll.u32 %v6031, 16
        %v6237 = vrot.slane %v6235, 5
        %v6238 = vsel %vm5221, %v6233, %v6237
        %v6239 = vshrl.u32 %v6031, 16
        %v6241 = vrot.slane %v6239, 4
        %v6242 = vor.u32 %v6241, %v6237
        %v6243 = vrot.slane %v6242, 4
        %v6245 = vshll.u32 %v6032, 16
        %v6247 = vrot.slane %v6245, 5
        %v6248 = vsel %vm5221, %v6243, %v6247
        %v6250 = vshrl.u32 %v6033, 16
        %v6252 = vrot.slane %v6250, 4
        %v6253 = vshll.u32 %v6033, 16
        %v6255 = vrot.slane %v6253, 5
        %v6256 = vor.u32 %v6252, %v6255
        %v6257 = vrot.slane %v6256, 4
        %v6259 = vshll.u32 %v6034, 16
        %v6261 = vrot.slane %v6259, 5
        %v6262 = vsel %vm5221, %v6257, %v6261
        %v6263 = vshrl.u32 %v6034, 16
        %v6265 = vrot.slane %v6263, 4
        %v6266 = vor.u32 %v6265, %v6261
        %v6267 = vrot.slane %v6266, 4
        %v6269 = vshll.u32 %v6035, 16
        %v6271 = vrot.slane %v6269, 5
        %v6272 = vsel %vm5221, %v6267, %v6271
        %v6274 = vshrl.u32 %v6036, 16
        %v6276 = vrot.slane %v6274, 4
        %v6277 = vshll.u32 %v6036, 16
        %v6279 = vrot.slane %v6277, 5
        %v6280 = vor.u32 %v6276, %v6279
        %v6281 = vrot.slane %v6280, 4
        %v6283 = vshll.u32 %v6037, 16
        %v6285 = vrot.slane %v6283, 5
        %v6286 = vsel %vm5221, %v6281, %v6285
        %v6287 = vshrl.u32 %v6037, 16
        %v6289 = vrot.slane %v6287, 4
        %v6290 = vor.u32 %v6289, %v6285
        %v6291 = vrot.slane %v6290, 4
        %v6293 = vshll.u32 %v6038, 16
        %v6295 = vrot.slane %v6293, 5
        %v6296 = vsel %vm5221, %v6291, %v6295
        %v6298 = vshrl.u32 %v6039, 16
        %v6300 = vrot.slane %v6298, 4
        %v6301 = vshll.u32 %v6039, 16
        %v6303 = vrot.slane %v6301, 5
        %v6304 = vor.u32 %v6300, %v6303
        %v6305 = vrot.slane %v6304, 4
        %v6307 = vshll.u32 %v6040, 16
        %v6309 = vrot.slane %v6307, 5
        %v6310 = vsel %vm5221, %v6305, %v6309
        %v6311 = vshrl.u32 %v6040, 16
        %v6313 = vrot.slane %v6311, 4
        %v6314 = vor.u32 %v6313, %v6309
        %v6315 = vrot.slane %v6314, 4
        %v6317 = vshll.u32 %v6041, 16
        %v6319 = vrot.slane %v6317, 5
        %v6320 = vsel %vm5221, %v6315, %v6319
        %v6322 = vshrl.u32 %v6042, 16
        %v6324 = vrot.slane %v6322, 4
        %v6325 = vshll.u32 %v6042, 16
        %v6327 = vrot.slane %v6325, 5
        %v6328 = vor.u32 %v6324, %v6327
        %v6329 = vrot.slane %v6328, 4
        %v6331 = vshll.u32 %v6043, 16
        %v6333 = vrot.slane %v6331, 5
        %v6334 = vsel %vm5221, %v6329, %v6333
        %v6335 = vshrl.u32 %v6043, 16
        %v6337 = vrot.slane %v6335, 4
        %v6338 = vor.u32 %v6337, %v6333
        %v6339 = vrot.slane %v6338, 4
        %v6341 = vshll.u32 %v6044, 16
        %v6343 = vrot.slane %v6341, 5
        %v6344 = vsel %vm5221, %v6339, %v6343
        %v6346 = vshrl.u32 %v6045, 16
        %v6348 = vrot.slane %v6346, 4
        %v6349 = vshll.u32 %v6045, 16
        %v6351 = vrot.slane %v6349, 5
        %v6352 = vor.u32 %v6348, %v6351
        %v6353 = vrot.slane %v6352, 4
        %v6355 = vshll.u32 %v6046, 16
        %v6357 = vrot.slane %v6355, 5
        %v6358 = vsel %vm5221, %v6353, %v6357
        %v6359 = vshrl.u32 %v6046, 16
        %v6361 = vrot.slane %v6359, 4
        %v6362 = vor.u32 %v6361, %v6357
        %v6363 = vrot.slane %v6362, 4
        %v6365 = vshll.u32 %v6047, 16
        %v6367 = vrot.slane %v6365, 5
        %v6368 = vsel %vm5221, %v6363, %v6367
        %v6370 = vshrl.u32 %v6048, 16
        %v6372 = vrot.slane %v6370, 4
        %v6373 = vshll.u32 %v6048, 16
        %v6375 = vrot.slane %v6373, 5
        %v6376 = vor.u32 %v6372, %v6375
        %v6377 = vrot.slane %v6376, 4
        %v6379 = vshll.u32 %v6049, 16
        %v6381 = vrot.slane %v6379, 5
        %v6382 = vsel %vm5221, %v6377, %v6381
        %v6383 = vshrl.u32 %v6049, 16
        %v6385 = vrot.slane %v6383, 4
        %v6386 = vor.u32 %v6385, %v6381
        %v6387 = vrot.slane %v6386, 4
        %v6389 = vshll.u32 %v6050, 16
        %v6391 = vrot.slane %v6389, 5
        %v6392 = vsel %vm5221, %v6387, %v6391
        %v6394 = vshrl.u32 %v6051, 16
        %v6396 = vrot.slane %v6394, 4
        %v6397 = vshll.u32 %v6051, 16
        %v6399 = vrot.slane %v6397, 5
        %v6400 = vor.u32 %v6396, %v6399
        %v6401 = vrot.slane %v6400, 4
        %v6403 = vshll.u32 %v6052, 16
        %v6405 = vrot.slane %v6403, 5
        %v6406 = vsel %vm5221, %v6401, %v6405
        %v6407 = vshrl.u32 %v6052, 16
        %v6409 = vrot.slane %v6407, 4
        %v6410 = vor.u32 %v6409, %v6405
        %v6411 = vrot.slane %v6410, 4
        %v6413 = vshll.u32 %v6053, 16
        %v6415 = vrot.slane %v6413, 5
        %v6416 = vsel %vm5221, %v6411, %v6415
        %v6418 = vshrl.u32 %v6054, 16
        %v6420 = vrot.slane %v6418, 4
        %v6421 = vshll.u32 %v6054, 16
        %v6423 = vrot.slane %v6421, 5
        %v6424 = vor.u32 %v6420, %v6423
        %v6425 = vrot.slane %v6424, 4
        %v6427 = vshll.u32 %v6055, 16
        %v6429 = vrot.slane %v6427, 5
        %v6430 = vsel %vm5221, %v6425, %v6429
        %v6431 = vshrl.u32 %v6055, 16
        %v6433 = vrot.slane %v6431, 4
        %v6434 = vor.u32 %v6433, %v6429
        %v6435 = vrot.slane %v6434, 4
        %v6437 = vshll.u32 %v6056, 16
        %v6439 = vrot.slane %v6437, 5
        %v6440 = vsel %vm5221, %v6435, %v6439
        %6473 = vst [vmem:[#allocation2 + $0x10] sm:$0xf] %v6070
        %6474 = vst [vmem:[#allocation2 + $0x34] sm:$0xf] %v6080
        %6475 = vst [vmem:[#allocation2 + $0x58] sm:$0xf] %v6094
        %6476 = vst [vmem:[#allocation2 + $0x7c] sm:$0xf] %v6104
        %6477 = vst [vmem:[#allocation2 + $0xa0] sm:$0xf] %v6118
        %6478 = vst [vmem:[#allocation2 + $0xc4] sm:$0xf] %v6128
        %6479 = vst [vmem:[#allocation2 + $0xe8] sm:$0xf] %v6142
        %6480 = vst [vmem:[#allocation2 + $0x10c] sm:$0xf] %v6152
        %6481 = vst [vmem:[#allocation2 + $0x130] sm:$0xf] %v6166
        %6482 = vst [vmem:[#allocation2 + $0x154] sm:$0xf] %v6176
        %6483 = vst [vmem:[#allocation2 + $0x178] sm:$0xf] %v6190
        %6484 = vst [vmem:[#allocation2 + $0x19c] sm:$0xf] %v6200
        %6485 = vst [vmem:[#allocation2 + $0x1c0] sm:$0xf] %v6214
        %6486 = vst [vmem:[#allocation2 + $0x1e4] sm:$0xf] %v6224
        %6487 = vst [vmem:[#allocation2 + $0x208] sm:$0xf] %v6238
        %6488 = vst [vmem:[#allocation2 + $0x22c] sm:$0xf] %v6248
        %6489 = vst [vmem:[#allocation2 + $0x250] sm:$0xf] %v6262
        %6490 = vst [vmem:[#allocation2 + $0x274] sm:$0xf] %v6272
        %6491 = vst [vmem:[#allocation2 + $0x298] sm:$0xf] %v6286
        %6492 = vst [vmem:[#allocation2 + $0x2bc] sm:$0xf] %v6296
        %6493 = vst [vmem:[#allocation2 + $0x2e0] sm:$0xf] %v6310
        %6494 = vst [vmem:[#allocation2 + $0x304] sm:$0xf] %v6320
        %6495 = vst [vmem:[#allocation2 + $0x328] sm:$0xf] %v6334
        %6496 = vst [vmem:[#allocation2 + $0x34c] sm:$0xf] %v6344
        %6497 = vst [vmem:[#allocation2 + $0x370] sm:$0xf] %v6358
        %6498 = vst [vmem:[#allocation2 + $0x394] sm:$0xf] %v6368
        %6499 = vst [vmem:[#allocation2 + $0x3b8] sm:$0xf] %v6382
        %6500 = vst [vmem:[#allocation2 + $0x3dc] sm:$0xf] %v6392
        %6501 = vst [vmem:[#allocation2 + $0x400] sm:$0xf] %v6406
        %6502 = vst [vmem:[#allocation2 + $0x424] sm:$0xf] %v6416
        %6503 = vst [vmem:[#allocation2 + $0x448] sm:$0xf] %v6430
        %6504 = vst [vmem:[#allocation2 + $0x46c] sm:$0xf] %v6440
        %v6505 = vld [vmem:[%s4989] sm:$0xe]
        %v6506 = vld [vmem:[%s4989 + $0x4] sm:$0xf]
        %v6507 = vld [vmem:[%s4989 + $0x8] sm:$0x1]
        %v6508 = vld [vmem:[%s4989 + $0xc] sm:$0xe]
        %v6509 = vld [vmem:[%s4989 + $0x10] sm:$0xf]
        %v6510 = vld [vmem:[%s4989 + $0x14] sm:$0x1]
        %v6511 = vld [vmem:[%s4989 + $0x18] sm:$0xe]
        %v6512 = vld [vmem:[%s4989 + $0x1c] sm:$0xf]
        %v6513 = vld [vmem:[%s4989 + $0x20] sm:$0x1]
        %v6514 = vld [vmem:[%s4989 + $0x24] sm:$0xe]
        %v6515 = vld [vmem:[%s4989 + $0x28] sm:$0xf]
        %v6516 = vld [vmem:[%s4989 + $0x2c] sm:$0x1]
        %v6517 = vld [vmem:[%s4989 + $0x30] sm:$0xe]
        %v6518 = vld [vmem:[%s4989 + $0x34] sm:$0xf]
        %v6519 = vld [vmem:[%s4989 + $0x38] sm:$0x1]
        %v6520 = vld [vmem:[%s4989 + $0x3c] sm:$0xe]
        %v6521 = vld [vmem:[%s4989 + $0x40] sm:$0xf]
        %v6522 = vld [vmem:[%s4989 + $0x44] sm:$0x1]
        %v6523 = vld [vmem:[%s4989 + $0x48] sm:$0xe]
        %v6524 = vld [vmem:[%s4989 + $0x4c] sm:$0xf]
        %v6525 = vld [vmem:[%s4989 + $0x50] sm:$0x1]
        %v6526 = vld [vmem:[%s4989 + $0x54] sm:$0xe]
        %v6527 = vld [vmem:[%s4989 + $0x58] sm:$0xf]
        %v6528 = vld [vmem:[%s4989 + $0x5c] sm:$0x1]
        %v6529 = vld [vmem:[%s4989 + $0x60] sm:$0xe]
        %v6530 = vld [vmem:[%s4989 + $0x64] sm:$0xf]
        %v6531 = vld [vmem:[%s4989 + $0x68] sm:$0x1]
        %v6532 = vld [vmem:[%s4989 + $0x6c] sm:$0xe]
        %v6533 = vld [vmem:[%s4989 + $0x70] sm:$0xf]
        %v6534 = vld [vmem:[%s4989 + $0x74] sm:$0x1]
        %v6535 = vld [vmem:[%s4989 + $0x78] sm:$0xe]
        %v6536 = vld [vmem:[%s4989 + $0x7c] sm:$0xf]
        %v6537 = vld [vmem:[%s4989 + $0x80] sm:$0x1]
        %v6538 = vld [vmem:[%s4989 + $0x84] sm:$0xe]
        %v6539 = vld [vmem:[%s4989 + $0x88] sm:$0xf]
        %v6540 = vld [vmem:[%s4989 + $0x8c] sm:$0x1]
        %v6541 = vld [vmem:[%s4989 + $0x90] sm:$0xe]
        %v6542 = vld [vmem:[%s4989 + $0x94] sm:$0xf]
        %v6543 = vld [vmem:[%s4989 + $0x98] sm:$0x1]
        %v6544 = vld [vmem:[%s4989 + $0x9c] sm:$0xe]
        %v6545 = vld [vmem:[%s4989 + $0xa0] sm:$0xf]
        %v6546 = vld [vmem:[%s4989 + $0xa4] sm:$0x1]
        %v6547 = vld [vmem:[%s4989 + $0xa8] sm:$0xe]
        %v6548 = vld [vmem:[%s4989 + $0xac] sm:$0xf]
        %v6549 = vld [vmem:[%s4989 + $0xb0] sm:$0x1]
        %v6550 = vld [vmem:[%s4989 + $0xb4] sm:$0xe]
        %v6551 = vld [vmem:[%s4989 + $0xb8] sm:$0xf]
        %v6552 = vld [vmem:[%s4989 + $0xbc] sm:$0x1]
        %v6601 = vrot.slane %v6505, 5
        %v6602 = vrot.slane %v6601, 4
        %v6603 = vrot.slane %v6506, 5
        %v6604 = vsel %vm5768, %v6602, %v6603
        %v6605 = vrot.slane %v6603, 4
        %v6606 = vrot.slane %v6507, 5
        %v6607 = vsel %vm5768, %v6605, %v6606
        %v6608 = vrot.slane %v6508, 5
        %v6609 = vrot.slane %v6608, 4
        %v6610 = vrot.slane %v6509, 5
        %v6611 = vsel %vm5768, %v6609, %v6610
        %v6612 = vrot.slane %v6610, 4
        %v6613 = vrot.slane %v6510, 5
        %v6614 = vsel %vm5768, %v6612, %v6613
        %v6615 = vrot.slane %v6511, 5
        %v6616 = vrot.slane %v6615, 4
        %v6617 = vrot.slane %v6512, 5
        %v6618 = vsel %vm5768, %v6616, %v6617
        %v6619 = vrot.slane %v6617, 4
        %v6620 = vrot.slane %v6513, 5
        %v6621 = vsel %vm5768, %v6619, %v6620
        %v6622 = vrot.slane %v6514, 5
        %v6623 = vrot.slane %v6622, 4
        %v6624 = vrot.slane %v6515, 5
        %v6625 = vsel %vm5768, %v6623, %v6624
        %v6626 = vrot.slane %v6624, 4
        %v6627 = vrot.slane %v6516, 5
        %v6628 = vsel %vm5768, %v6626, %v6627
        %v6629 = vrot.slane %v6517, 5
        %v6630 = vrot.slane %v6629, 4
        %v6631 = vrot.slane %v6518, 5
        %v6632 = vsel %vm5768, %v6630, %v6631
        %v6633 = vrot.slane %v6631, 4
        %v6634 = vrot.slane %v6519, 5
        %v6635 = vsel %vm5768, %v6633, %v6634
        %v6636 = vrot.slane %v6520, 5
        %v6637 = vrot.slane %v6636, 4
        %v6638 = vrot.slane %v6521, 5
        %v6639 = vsel %vm5768, %v6637, %v6638
        %v6640 = vrot.slane %v6638, 4
        %v6641 = vrot.slane %v6522, 5
        %v6642 = vsel %vm5768, %v6640, %v6641
        %v6643 = vrot.slane %v6523, 5
        %v6644 = vrot.slane %v6643, 4
        %v6645 = vrot.slane %v6524, 5
        %v6646 = vsel %vm5768, %v6644, %v6645
        %v6647 = vrot.slane %v6645, 4
        %v6648 = vrot.slane %v6525, 5
        %v6649 = vsel %vm5768, %v6647, %v6648
        %v6650 = vrot.slane %v6526, 5
        %v6651 = vrot.slane %v6650, 4
        %v6652 = vrot.slane %v6527, 5
        %v6653 = vsel %vm5768, %v6651, %v6652
        %v6654 = vrot.slane %v6652, 4
        %v6655 = vrot.slane %v6528, 5
        %v6656 = vsel %vm5768, %v6654, %v6655
        %v6657 = vrot.slane %v6529, 5
        %v6658 = vrot.slane %v6657, 4
        %v6659 = vrot.slane %v6530, 5
        %v6660 = vsel %vm5768, %v6658, %v6659
        %v6661 = vrot.slane %v6659, 4
        %v6662 = vrot.slane %v6531, 5
        %v6663 = vsel %vm5768, %v6661, %v6662
        %v6664 = vrot.slane %v6532, 5
        %v6665 = vrot.slane %v6664, 4
        %v6666 = vrot.slane %v6533, 5
        %v6667 = vsel %vm5768, %v6665, %v6666
        %v6668 = vrot.slane %v6666, 4
        %v6669 = vrot.slane %v6534, 5
        %v6670 = vsel %vm5768, %v6668, %v6669
        %v6671 = vrot.slane %v6535, 5
        %v6672 = vrot.slane %v6671, 4
        %v6673 = vrot.slane %v6536, 5
        %v6674 = vsel %vm5768, %v6672, %v6673
        %v6675 = vrot.slane %v6673, 4
        %v6676 = vrot.slane %v6537, 5
        %v6677 = vsel %vm5768, %v6675, %v6676
        %v6678 = vrot.slane %v6538, 5
        %v6679 = vrot.slane %v6678, 4
        %v6680 = vrot.slane %v6539, 5
        %v6681 = vsel %vm5768, %v6679, %v6680
        %v6682 = vrot.slane %v6680, 4
        %v6683 = vrot.slane %v6540, 5
        %v6684 = vsel %vm5768, %v6682, %v6683
        %v6685 = vrot.slane %v6541, 5
        %v6686 = vrot.slane %v6685, 4
        %v6687 = vrot.slane %v6542, 5
        %v6688 = vsel %vm5768, %v6686, %v6687
        %v6689 = vrot.slane %v6687, 4
        %v6690 = vrot.slane %v6543, 5
        %v6691 = vsel %vm5768, %v6689, %v6690
        %v6692 = vrot.slane %v6544, 5
        %v6693 = vrot.slane %v6692, 4
        %v6694 = vrot.slane %v6545, 5
        %v6695 = vsel %vm5768, %v6693, %v6694
        %v6696 = vrot.slane %v6694, 4
        %v6697 = vrot.slane %v6546, 5
        %v6698 = vsel %vm5768, %v6696, %v6697
        %v6699 = vrot.slane %v6547, 5
        %v6700 = vrot.slane %v6699, 4
        %v6701 = vrot.slane %v6548, 5
        %v6702 = vsel %vm5768, %v6700, %v6701
        %v6703 = vrot.slane %v6701, 4
        %v6704 = vrot.slane %v6549, 5
        %v6705 = vsel %vm5768, %v6703, %v6704
        %v6706 = vrot.slane %v6550, 5
        %v6707 = vrot.slane %v6706, 4
        %v6708 = vrot.slane %v6551, 5
        %v6709 = vsel %vm5768, %v6707, %v6708
        %v6710 = vrot.slane %v6708, 4
        %v6711 = vrot.slane %v6552, 5
        %v6712 = vsel %vm5768, %v6710, %v6711
        %6745 = vst [vmem:[#allocation2 + $0x14] sm:$0xf] %v6604
        %6746 = vst [vmem:[#allocation2 + $0x38] sm:$0xf] %v6607
        %6747 = vst [vmem:[#allocation2 + $0x5c] sm:$0xf] %v6611
        %6748 = vst [vmem:[#allocation2 + $0x80] sm:$0xf] %v6614
        %6749 = vst [vmem:[#allocation2 + $0xa4] sm:$0xf] %v6618
        %6750 = vst [vmem:[#allocation2 + $0xc8] sm:$0xf] %v6621
        %6751 = vst [vmem:[#allocation2 + $0xec] sm:$0xf] %v6625
        %6752 = vst [vmem:[#allocation2 + $0x110] sm:$0xf] %v6628
        %6753 = vst [vmem:[#allocation2 + $0x134] sm:$0xf] %v6632
        %6754 = vst [vmem:[#allocation2 + $0x158] sm:$0xf] %v6635
        %6755 = vst [vmem:[#allocation2 + $0x17c] sm:$0xf] %v6639
        %6756 = vst [vmem:[#allocation2 + $0x1a0] sm:$0xf] %v6642
        %6757 = vst [vmem:[#allocation2 + $0x1c4] sm:$0xf] %v6646
        %6758 = vst [vmem:[#allocation2 + $0x1e8] sm:$0xf] %v6649
        %6759 = vst [vmem:[#allocation2 + $0x20c] sm:$0xf] %v6653
        %6760 = vst [vmem:[#allocation2 + $0x230] sm:$0xf] %v6656
        %6761 = vst [vmem:[#allocation2 + $0x254] sm:$0xf] %v6660
        %6762 = vst [vmem:[#allocation2 + $0x278] sm:$0xf] %v6663
        %6763 = vst [vmem:[#allocation2 + $0x29c] sm:$0xf] %v6667
        %6764 = vst [vmem:[#allocation2 + $0x2c0] sm:$0xf] %v6670
        %6765 = vst [vmem:[#allocation2 + $0x2e4] sm:$0xf] %v6674
        %6766 = vst [vmem:[#allocation2 + $0x308] sm:$0xf] %v6677
        %6767 = vst [vmem:[#allocation2 + $0x32c] sm:$0xf] %v6681
        %6768 = vst [vmem:[#allocation2 + $0x350] sm:$0xf] %v6684
        %6769 = vst [vmem:[#allocation2 + $0x374] sm:$0xf] %v6688
        %6770 = vst [vmem:[#allocation2 + $0x398] sm:$0xf] %v6691
        %6771 = vst [vmem:[#allocation2 + $0x3bc] sm:$0xf] %v6695
        %6772 = vst [vmem:[#allocation2 + $0x3e0] sm:$0xf] %v6698
        %6773 = vst [vmem:[#allocation2 + $0x404] sm:$0xf] %v6702
        %6774 = vst [vmem:[#allocation2 + $0x428] sm:$0xf] %v6705
        %6775 = vst [vmem:[#allocation2 + $0x44c] sm:$0xf] %v6709
        %6776 = vst [vmem:[#allocation2 + $0x470] sm:$0xf] %v6712
        %s6777 = scalar_lea.vmem [#allocation3], 24
        %v6778 = vld [vmem:[%s6777] sm:$0xf]
        %v6779 = vld [vmem:[%s6777 + $0x4] sm:$0xf]
        %v6780 = vld [vmem:[%s6777 + $0xc] sm:$0xf]
        %v6781 = vld [vmem:[%s6777 + $0x10] sm:$0xf]
        %v6782 = vld [vmem:[%s6777 + $0x18] sm:$0xf]
        %v6783 = vld [vmem:[%s6777 + $0x1c] sm:$0xf]
        %v6784 = vld [vmem:[%s6777 + $0x24] sm:$0xf]
        %v6785 = vld [vmem:[%s6777 + $0x28] sm:$0xf]
        %v6786 = vld [vmem:[%s6777 + $0x30] sm:$0xf]
        %v6787 = vld [vmem:[%s6777 + $0x34] sm:$0xf]
        %v6788 = vld [vmem:[%s6777 + $0x3c] sm:$0xf]
        %v6789 = vld [vmem:[%s6777 + $0x40] sm:$0xf]
        %v6790 = vld [vmem:[%s6777 + $0x48] sm:$0xf]
        %v6791 = vld [vmem:[%s6777 + $0x4c] sm:$0xf]
        %v6792 = vld [vmem:[%s6777 + $0x54] sm:$0xf]
        %v6793 = vld [vmem:[%s6777 + $0x58] sm:$0xf]
        %v6794 = vld [vmem:[%s6777 + $0x60] sm:$0xf]
        %v6795 = vld [vmem:[%s6777 + $0x64] sm:$0xf]
        %v6796 = vld [vmem:[%s6777 + $0x6c] sm:$0xf]
        %v6797 = vld [vmem:[%s6777 + $0x70] sm:$0xf]
        %v6798 = vld [vmem:[%s6777 + $0x78] sm:$0xf]
        %v6799 = vld [vmem:[%s6777 + $0x7c] sm:$0xf]
        %v6800 = vld [vmem:[%s6777 + $0x84] sm:$0xf]
        %v6801 = vld [vmem:[%s6777 + $0x88] sm:$0xf]
        %v6802 = vld [vmem:[%s6777 + $0x90] sm:$0xf]
        %v6803 = vld [vmem:[%s6777 + $0x94] sm:$0xf]
        %v6804 = vld [vmem:[%s6777 + $0x9c] sm:$0xf]
        %v6805 = vld [vmem:[%s6777 + $0xa0] sm:$0xf]
        %v6806 = vld [vmem:[%s6777 + $0xa8] sm:$0xf]
        %v6807 = vld [vmem:[%s6777 + $0xac] sm:$0xf]
        %v6808 = vld [vmem:[%s6777 + $0xb4] sm:$0xf]
        %v6809 = vld [vmem:[%s6777 + $0xb8] sm:$0xf]
        %6810 = vst [vmem:[#allocation2 + $0x18] sm:$0xf] %v6778
        %6811 = vst [vmem:[#allocation2 + $0x3c] sm:$0xf] %v6779
        %6812 = vst [vmem:[#allocation2 + $0x60] sm:$0xf] %v6780
        %6813 = vst [vmem:[#allocation2 + $0x84] sm:$0xf] %v6781
        %6814 = vst [vmem:[#allocation2 + $0xa8] sm:$0xf] %v6782
        %6815 = vst [vmem:[#allocation2 + $0xcc] sm:$0xf] %v6783
        %6816 = vst [vmem:[#allocation2 + $0xf0] sm:$0xf] %v6784
        %6817 = vst [vmem:[#allocation2 + $0x114] sm:$0xf] %v6785
        %6818 = vst [vmem:[#allocation2 + $0x138] sm:$0xf] %v6786
        %6819 = vst [vmem:[#allocation2 + $0x15c] sm:$0xf] %v6787
        %6820 = vst [vmem:[#allocation2 + $0x180] sm:$0xf] %v6788
        %6821 = vst [vmem:[#allocation2 + $0x1a4] sm:$0xf] %v6789
        %6822 = vst [vmem:[#allocation2 + $0x1c8] sm:$0xf] %v6790
        %6823 = vst [vmem:[#allocation2 + $0x1ec] sm:$0xf] %v6791
        %6824 = vst [vmem:[#allocation2 + $0x210] sm:$0xf] %v6792
        %6825 = vst [vmem:[#allocation2 + $0x234] sm:$0xf] %v6793
        %6826 = vst [vmem:[#allocation2 + $0x258] sm:$0xf] %v6794
        %6827 = vst [vmem:[#allocation2 + $0x27c] sm:$0xf] %v6795
        %6828 = vst [vmem:[#allocation2 + $0x2a0] sm:$0xf] %v6796
        %6829 = vst [vmem:[#allocation2 + $0x2c4] sm:$0xf] %v6797
        %6830 = vst [vmem:[#allocation2 + $0x2e8] sm:$0xf] %v6798
        %6831 = vst [vmem:[#allocation2 + $0x30c] sm:$0xf] %v6799
        %6832 = vst [vmem:[#allocation2 + $0x330] sm:$0xf] %v6800
        %6833 = vst [vmem:[#allocation2 + $0x354] sm:$0xf] %v6801
        %6834 = vst [vmem:[#allocation2 + $0x378] sm:$0xf] %v6802
        %6835 = vst [vmem:[#allocation2 + $0x39c] sm:$0xf] %v6803
        %6836 = vst [vmem:[#allocation2 + $0x3c0] sm:$0xf] %v6804
        %6837 = vst [vmem:[#allocation2 + $0x3e4] sm:$0xf] %v6805
        %6838 = vst [vmem:[#allocation2 + $0x408] sm:$0xf] %v6806
        %6839 = vst [vmem:[#allocation2 + $0x42c] sm:$0xf] %v6807
        %6840 = vst [vmem:[#allocation2 + $0x450] sm:$0xf] %v6808
        %6841 = vst [vmem:[#allocation2 + $0x474] sm:$0xf] %v6809
        %v6842 = vld [vmem:[%s6777] sm:$0xf]
        %v6843 = vld [vmem:[%s6777 + $0x4] sm:$0xf]
        %v6844 = vld [vmem:[%s6777 + $0x8] sm:$0x1]
        %v6845 = vld [vmem:[%s6777 + $0xc] sm:$0xf]
        %v6846 = vld [vmem:[%s6777 + $0x10] sm:$0xf]
        %v6847 = vld [vmem:[%s6777 + $0x14] sm:$0x1]
        %v6848 = vld [vmem:[%s6777 + $0x18] sm:$0xf]
        %v6849 = vld [vmem:[%s6777 + $0x1c] sm:$0xf]
        %v6850 = vld [vmem:[%s6777 + $0x20] sm:$0x1]
        %v6851 = vld [vmem:[%s6777 + $0x24] sm:$0xf]
        %v6852 = vld [vmem:[%s6777 + $0x28] sm:$0xf]
        %v6853 = vld [vmem:[%s6777 + $0x2c] sm:$0x1]
        %v6854 = vld [vmem:[%s6777 + $0x30] sm:$0xf]
        %v6855 = vld [vmem:[%s6777 + $0x34] sm:$0xf]
        %v6856 = vld [vmem:[%s6777 + $0x38] sm:$0x1]
        %v6857 = vld [vmem:[%s6777 + $0x3c] sm:$0xf]
        %v6858 = vld [vmem:[%s6777 + $0x40] sm:$0xf]
        %v6859 = vld [vmem:[%s6777 + $0x44] sm:$0x1]
        %v6860 = vld [vmem:[%s6777 + $0x48] sm:$0xf]
        %v6861 = vld [vmem:[%s6777 + $0x4c] sm:$0xf]
        %v6862 = vld [vmem:[%s6777 + $0x50] sm:$0x1]
        %v6863 = vld [vmem:[%s6777 + $0x54] sm:$0xf]
        %v6864 = vld [vmem:[%s6777 + $0x58] sm:$0xf]
        %v6865 = vld [vmem:[%s6777 + $0x5c] sm:$0x1]
        %v6866 = vld [vmem:[%s6777 + $0x60] sm:$0xf]
        %v6867 = vld [vmem:[%s6777 + $0x64] sm:$0xf]
        %v6868 = vld [vmem:[%s6777 + $0x68] sm:$0x1]
        %v6869 = vld [vmem:[%s6777 + $0x6c] sm:$0xf]
        %v6870 = vld [vmem:[%s6777 + $0x70] sm:$0xf]
        %v6871 = vld [vmem:[%s6777 + $0x74] sm:$0x1]
        %v6872 = vld [vmem:[%s6777 + $0x78] sm:$0xf]
        %v6873 = vld [vmem:[%s6777 + $0x7c] sm:$0xf]
        %v6874 = vld [vmem:[%s6777 + $0x80] sm:$0x1]
        %v6875 = vld [vmem:[%s6777 + $0x84] sm:$0xf]
        %v6876 = vld [vmem:[%s6777 + $0x88] sm:$0xf]
        %v6877 = vld [vmem:[%s6777 + $0x8c] sm:$0x1]
        %v6878 = vld [vmem:[%s6777 + $0x90] sm:$0xf]
        %v6879 = vld [vmem:[%s6777 + $0x94] sm:$0xf]
        %v6880 = vld [vmem:[%s6777 + $0x98] sm:$0x1]
        %v6881 = vld [vmem:[%s6777 + $0x9c] sm:$0xf]
        %v6882 = vld [vmem:[%s6777 + $0xa0] sm:$0xf]
        %v6883 = vld [vmem:[%s6777 + $0xa4] sm:$0x1]
        %v6884 = vld [vmem:[%s6777 + $0xa8] sm:$0xf]
        %v6885 = vld [vmem:[%s6777 + $0xac] sm:$0xf]
        %v6886 = vld [vmem:[%s6777 + $0xb0] sm:$0x1]
        %v6887 = vld [vmem:[%s6777 + $0xb4] sm:$0xf]
        %v6888 = vld [vmem:[%s6777 + $0xb8] sm:$0xf]
        %v6889 = vld [vmem:[%s6777 + $0xbc] sm:$0x1]
        %v6891 = vshrl.u32 %v6842, 16
        %v6893 = vrot.slane %v6891, 4
        %v6894 = vshll.u32 %v6842, 16
        %v6896 = vrot.slane %v6894, 5
        %v6897 = vor.u32 %v6893, %v6896
        %v6898 = vrot.slane %v6897, 4
        %v6900 = vshll.u32 %v6843, 16
        %v6902 = vrot.slane %v6900, 5
        %v6903 = vsel %vm5221, %v6898, %v6902
        %v6904 = vshrl.u32 %v6843, 16
        %v6906 = vrot.slane %v6904, 4
        %v6907 = vor.u32 %v6906, %v6902
        %v6908 = vrot.slane %v6907, 4
        %v6910 = vshll.u32 %v6844, 16
        %v6912 = vrot.slane %v6910, 5
        %v6913 = vsel %vm5221, %v6908, %v6912
        %v6915 = vshrl.u32 %v6845, 16
        %v6917 = vrot.slane %v6915, 4
        %v6918 = vshll.u32 %v6845, 16
        %v6920 = vrot.slane %v6918, 5
        %v6921 = vor.u32 %v6917, %v6920
        %v6922 = vrot.slane %v6921, 4
        %v6924 = vshll.u32 %v6846, 16
        %v6926 = vrot.slane %v6924, 5
        %v6927 = vsel %vm5221, %v6922, %v6926
        %v6928 = vshrl.u32 %v6846, 16
        %v6930 = vrot.slane %v6928, 4
        %v6931 = vor.u32 %v6930, %v6926
        %v6932 = vrot.slane %v6931, 4
        %v6934 = vshll.u32 %v6847, 16
        %v6936 = vrot.slane %v6934, 5
        %v6937 = vsel %vm5221, %v6932, %v6936
        %v6939 = vshrl.u32 %v6848, 16
        %v6941 = vrot.slane %v6939, 4
        %v6942 = vshll.u32 %v6848, 16
        %v6944 = vrot.slane %v6942, 5
        %v6945 = vor.u32 %v6941, %v6944
        %v6946 = vrot.slane %v6945, 4
        %v6948 = vshll.u32 %v6849, 16
        %v6950 = vrot.slane %v6948, 5
        %v6951 = vsel %vm5221, %v6946, %v6950
        %v6952 = vshrl.u32 %v6849, 16
        %v6954 = vrot.slane %v6952, 4
        %v6955 = vor.u32 %v6954, %v6950
        %v6956 = vrot.slane %v6955, 4
        %v6958 = vshll.u32 %v6850, 16
        %v6960 = vrot.slane %v6958, 5
        %v6961 = vsel %vm5221, %v6956, %v6960
        %v6963 = vshrl.u32 %v6851, 16
        %v6965 = vrot.slane %v6963, 4
        %v6966 = vshll.u32 %v6851, 16
        %v6968 = vrot.slane %v6966, 5
        %v6969 = vor.u32 %v6965, %v6968
        %v6970 = vrot.slane %v6969, 4
        %v6972 = vshll.u32 %v6852, 16
        %v6974 = vrot.slane %v6972, 5
        %v6975 = vsel %vm5221, %v6970, %v6974
        %v6976 = vshrl.u32 %v6852, 16
        %v6978 = vrot.slane %v6976, 4
        %v6979 = vor.u32 %v6978, %v6974
        %v6980 = vrot.slane %v6979, 4
        %v6982 = vshll.u32 %v6853, 16
        %v6984 = vrot.slane %v6982, 5
        %v6985 = vsel %vm5221, %v6980, %v6984
        %v6987 = vshrl.u32 %v6854, 16
        %v6989 = vrot.slane %v6987, 4
        %v6990 = vshll.u32 %v6854, 16
        %v6992 = vrot.slane %v6990, 5
        %v6993 = vor.u32 %v6989, %v6992
        %v6994 = vrot.slane %v6993, 4
        %v6996 = vshll.u32 %v6855, 16
        %v6998 = vrot.slane %v6996, 5
        %v6999 = vsel %vm5221, %v6994, %v6998
        %v7000 = vshrl.u32 %v6855, 16
        %v7002 = vrot.slane %v7000, 4
        %v7003 = vor.u32 %v7002, %v6998
        %v7004 = vrot.slane %v7003, 4
        %v7006 = vshll.u32 %v6856, 16
        %v7008 = vrot.slane %v7006, 5
        %v7009 = vsel %vm5221, %v7004, %v7008
        %v7011 = vshrl.u32 %v6857, 16
        %v7013 = vrot.slane %v7011, 4
        %v7014 = vshll.u32 %v6857, 16
        %v7016 = vrot.slane %v7014, 5
        %v7017 = vor.u32 %v7013, %v7016
        %v7018 = vrot.slane %v7017, 4
        %v7020 = vshll.u32 %v6858, 16
        %v7022 = vrot.slane %v7020, 5
        %v7023 = vsel %vm5221, %v7018, %v7022
        %v7024 = vshrl.u32 %v6858, 16
        %v7026 = vrot.slane %v7024, 4
        %v7027 = vor.u32 %v7026, %v7022
        %v7028 = vrot.slane %v7027, 4
        %v7030 = vshll.u32 %v6859, 16
        %v7032 = vrot.slane %v7030, 5
        %v7033 = vsel %vm5221, %v7028, %v7032
        %v7035 = vshrl.u32 %v6860, 16
        %v7037 = vrot.slane %v7035, 4
        %v7038 = vshll.u32 %v6860, 16
        %v7040 = vrot.slane %v7038, 5
        %v7041 = vor.u32 %v7037, %v7040
        %v7042 = vrot.slane %v7041, 4
        %v7044 = vshll.u32 %v6861, 16
        %v7046 = vrot.slane %v7044, 5
        %v7047 = vsel %vm5221, %v7042, %v7046
        %v7048 = vshrl.u32 %v6861, 16
        %v7050 = vrot.slane %v7048, 4
        %v7051 = vor.u32 %v7050, %v7046
        %v7052 = vrot.slane %v7051, 4
        %v7054 = vshll.u32 %v6862, 16
        %v7056 = vrot.slane %v7054, 5
        %v7057 = vsel %vm5221, %v7052, %v7056
        %v7059 = vshrl.u32 %v6863, 16
        %v7061 = vrot.slane %v7059, 4
        %v7062 = vshll.u32 %v6863, 16
        %v7064 = vrot.slane %v7062, 5
        %v7065 = vor.u32 %v7061, %v7064
        %v7066 = vrot.slane %v7065, 4
        %v7068 = vshll.u32 %v6864, 16
        %v7070 = vrot.slane %v7068, 5
        %v7071 = vsel %vm5221, %v7066, %v7070
        %v7072 = vshrl.u32 %v6864, 16
        %v7074 = vrot.slane %v7072, 4
        %v7075 = vor.u32 %v7074, %v7070
        %v7076 = vrot.slane %v7075, 4
        %v7078 = vshll.u32 %v6865, 16
        %v7080 = vrot.slane %v7078, 5
        %v7081 = vsel %vm5221, %v7076, %v7080
        %v7083 = vshrl.u32 %v6866, 16
        %v7085 = vrot.slane %v7083, 4
        %v7086 = vshll.u32 %v6866, 16
        %v7088 = vrot.slane %v7086, 5
        %v7089 = vor.u32 %v7085, %v7088
        %v7090 = vrot.slane %v7089, 4
        %v7092 = vshll.u32 %v6867, 16
        %v7094 = vrot.slane %v7092, 5
        %v7095 = vsel %vm5221, %v7090, %v7094
        %v7096 = vshrl.u32 %v6867, 16
        %v7098 = vrot.slane %v7096, 4
        %v7099 = vor.u32 %v7098, %v7094
        %v7100 = vrot.slane %v7099, 4
        %v7102 = vshll.u32 %v6868, 16
        %v7104 = vrot.slane %v7102, 5
        %v7105 = vsel %vm5221, %v7100, %v7104
        %v7107 = vshrl.u32 %v6869, 16
        %v7109 = vrot.slane %v7107, 4
        %v7110 = vshll.u32 %v6869, 16
        %v7112 = vrot.slane %v7110, 5
        %v7113 = vor.u32 %v7109, %v7112
        %v7114 = vrot.slane %v7113, 4
        %v7116 = vshll.u32 %v6870, 16
        %v7118 = vrot.slane %v7116, 5
        %v7119 = vsel %vm5221, %v7114, %v7118
        %v7120 = vshrl.u32 %v6870, 16
        %v7122 = vrot.slane %v7120, 4
        %v7123 = vor.u32 %v7122, %v7118
        %v7124 = vrot.slane %v7123, 4
        %v7126 = vshll.u32 %v6871, 16
        %v7128 = vrot.slane %v7126, 5
        %v7129 = vsel %vm5221, %v7124, %v7128
        %v7131 = vshrl.u32 %v6872, 16
        %v7133 = vrot.slane %v7131, 4
        %v7134 = vshll.u32 %v6872, 16
        %v7136 = vrot.slane %v7134, 5
        %v7137 = vor.u32 %v7133, %v7136
        %v7138 = vrot.slane %v7137, 4
        %v7140 = vshll.u32 %v6873, 16
        %v7142 = vrot.slane %v7140, 5
        %v7143 = vsel %vm5221, %v7138, %v7142
        %v7144 = vshrl.u32 %v6873, 16
        %v7146 = vrot.slane %v7144, 4
        %v7147 = vor.u32 %v7146, %v7142
        %v7148 = vrot.slane %v7147, 4
        %v7150 = vshll.u32 %v6874, 16
        %v7152 = vrot.slane %v7150, 5
        %v7153 = vsel %vm5221, %v7148, %v7152
        %v7155 = vshrl.u32 %v6875, 16
        %v7157 = vrot.slane %v7155, 4
        %v7158 = vshll.u32 %v6875, 16
        %v7160 = vrot.slane %v7158, 5
        %v7161 = vor.u32 %v7157, %v7160
        %v7162 = vrot.slane %v7161, 4
        %v7164 = vshll.u32 %v6876, 16
        %v7166 = vrot.slane %v7164, 5
        %v7167 = vsel %vm5221, %v7162, %v7166
        %v7168 = vshrl.u32 %v6876, 16
        %v7170 = vrot.slane %v7168, 4
        %v7171 = vor.u32 %v7170, %v7166
        %v7172 = vrot.slane %v7171, 4
        %v7174 = vshll.u32 %v6877, 16
        %v7176 = vrot.slane %v7174, 5
        %v7177 = vsel %vm5221, %v7172, %v7176
        %v7179 = vshrl.u32 %v6878, 16
        %v7181 = vrot.slane %v7179, 4
        %v7182 = vshll.u32 %v6878, 16
        %v7184 = vrot.slane %v7182, 5
        %v7185 = vor.u32 %v7181, %v7184
        %v7186 = vrot.slane %v7185, 4
        %v7188 = vshll.u32 %v6879, 16
        %v7190 = vrot.slane %v7188, 5
        %v7191 = vsel %vm5221, %v7186, %v7190
        %v7192 = vshrl.u32 %v6879, 16
        %v7194 = vrot.slane %v7192, 4
        %v7195 = vor.u32 %v7194, %v7190
        %v7196 = vrot.slane %v7195, 4
        %v7198 = vshll.u32 %v6880, 16
        %v7200 = vrot.slane %v7198, 5
        %v7201 = vsel %vm5221, %v7196, %v7200
        %v7203 = vshrl.u32 %v6881, 16
        %v7205 = vrot.slane %v7203, 4
        %v7206 = vshll.u32 %v6881, 16
        %v7208 = vrot.slane %v7206, 5
        %v7209 = vor.u32 %v7205, %v7208
        %v7210 = vrot.slane %v7209, 4
        %v7212 = vshll.u32 %v6882, 16
        %v7214 = vrot.slane %v7212, 5
        %v7215 = vsel %vm5221, %v7210, %v7214
        %v7216 = vshrl.u32 %v6882, 16
        %v7218 = vrot.slane %v7216, 4
        %v7219 = vor.u32 %v7218, %v7214
        %v7220 = vrot.slane %v7219, 4
        %v7222 = vshll.u32 %v6883, 16
        %v7224 = vrot.slane %v7222, 5
        %v7225 = vsel %vm5221, %v7220, %v7224
        %v7227 = vshrl.u32 %v6884, 16
        %v7229 = vrot.slane %v7227, 4
        %v7230 = vshll.u32 %v6884, 16
        %v7232 = vrot.slane %v7230, 5
        %v7233 = vor.u32 %v7229, %v7232
        %v7234 = vrot.slane %v7233, 4
        %v7236 = vshll.u32 %v6885, 16
        %v7238 = vrot.slane %v7236, 5
        %v7239 = vsel %vm5221, %v7234, %v7238
        %v7240 = vshrl.u32 %v6885, 16
        %v7242 = vrot.slane %v7240, 4
        %v7243 = vor.u32 %v7242, %v7238
        %v7244 = vrot.slane %v7243, 4
        %v7246 = vshll.u32 %v6886, 16
        %v7248 = vrot.slane %v7246, 5
        %v7249 = vsel %vm5221, %v7244, %v7248
        %v7251 = vshrl.u32 %v6887, 16
        %v7253 = vrot.slane %v7251, 4
        %v7254 = vshll.u32 %v6887, 16
        %v7256 = vrot.slane %v7254, 5
        %v7257 = vor.u32 %v7253, %v7256
        %v7258 = vrot.slane %v7257, 4
        %v7260 = vshll.u32 %v6888, 16
        %v7262 = vrot.slane %v7260, 5
        %v7263 = vsel %vm5221, %v7258, %v7262
        %v7264 = vshrl.u32 %v6888, 16
        %v7266 = vrot.slane %v7264, 4
        %v7267 = vor.u32 %v7266, %v7262
        %v7268 = vrot.slane %v7267, 4
        %v7270 = vshll.u32 %v6889, 16
        %v7272 = vrot.slane %v7270, 5
        %v7273 = vsel %vm5221, %v7268, %v7272
        %7306 = vst [vmem:[#allocation2 + $0x1c] sm:$0xf] %v6903
        %7307 = vst [vmem:[#allocation2 + $0x40] sm:$0xf] %v6913
        %7308 = vst [vmem:[#allocation2 + $0x64] sm:$0xf] %v6927
        %7309 = vst [vmem:[#allocation2 + $0x88] sm:$0xf] %v6937
        %7310 = vst [vmem:[#allocation2 + $0xac] sm:$0xf] %v6951
        %7311 = vst [vmem:[#allocation2 + $0xd0] sm:$0xf] %v6961
        %7312 = vst [vmem:[#allocation2 + $0xf4] sm:$0xf] %v6975
        %7313 = vst [vmem:[#allocation2 + $0x118] sm:$0xf] %v6985
        %7314 = vst [vmem:[#allocation2 + $0x13c] sm:$0xf] %v6999
        %7315 = vst [vmem:[#allocation2 + $0x160] sm:$0xf] %v7009
        %7316 = vst [vmem:[#allocation2 + $0x184] sm:$0xf] %v7023
        %7317 = vst [vmem:[#allocation2 + $0x1a8] sm:$0xf] %v7033
        %7318 = vst [vmem:[#allocation2 + $0x1cc] sm:$0xf] %v7047
        %7319 = vst [vmem:[#allocation2 + $0x1f0] sm:$0xf] %v7057
        %7320 = vst [vmem:[#allocation2 + $0x214] sm:$0xf] %v7071
        %7321 = vst [vmem:[#allocation2 + $0x238] sm:$0xf] %v7081
        %7322 = vst [vmem:[#allocation2 + $0x25c] sm:$0xf] %v7095
        %7323 = vst [vmem:[#allocation2 + $0x280] sm:$0xf] %v7105
        %7324 = vst [vmem:[#allocation2 + $0x2a4] sm:$0xf] %v7119
        %7325 = vst [vmem:[#allocation2 + $0x2c8] sm:$0xf] %v7129
        %7326 = vst [vmem:[#allocation2 + $0x2ec] sm:$0xf] %v7143
        %7327 = vst [vmem:[#allocation2 + $0x310] sm:$0xf] %v7153
        %7328 = vst [vmem:[#allocation2 + $0x334] sm:$0xf] %v7167
        %7329 = vst [vmem:[#allocation2 + $0x358] sm:$0xf] %v7177
        %7330 = vst [vmem:[#allocation2 + $0x37c] sm:$0xf] %v7191
        %7331 = vst [vmem:[#allocation2 + $0x3a0] sm:$0xf] %v7201
        %7332 = vst [vmem:[#allocation2 + $0x3c4] sm:$0xf] %v7215
        %7333 = vst [vmem:[#allocation2 + $0x3e8] sm:$0xf] %v7225
        %7334 = vst [vmem:[#allocation2 + $0x40c] sm:$0xf] %v7239
        %7335 = vst [vmem:[#allocation2 + $0x430] sm:$0xf] %v7249
        %7336 = vst [vmem:[#allocation2 + $0x454] sm:$0xf] %v7263
        %7337 = vst [vmem:[#allocation2 + $0x478] sm:$0xf] %v7273
        %v7338 = vld [vmem:[%s6777] sm:$0xe]
        %v7339 = vld [vmem:[%s6777 + $0x4] sm:$0xf]
        %v7340 = vld [vmem:[%s6777 + $0x8] sm:$0x1]
        %v7341 = vld [vmem:[%s6777 + $0xc] sm:$0xe]
        %v7342 = vld [vmem:[%s6777 + $0x10] sm:$0xf]
        %v7343 = vld [vmem:[%s6777 + $0x14] sm:$0x1]
        %v7344 = vld [vmem:[%s6777 + $0x18] sm:$0xe]
        %v7345 = vld [vmem:[%s6777 + $0x1c] sm:$0xf]
        %v7346 = vld [vmem:[%s6777 + $0x20] sm:$0x1]
        %v7347 = vld [vmem:[%s6777 + $0x24] sm:$0xe]
        %v7348 = vld [vmem:[%s6777 + $0x28] sm:$0xf]
        %v7349 = vld [vmem:[%s6777 + $0x2c] sm:$0x1]
        %v7350 = vld [vmem:[%s6777 + $0x30] sm:$0xe]
        %v7351 = vld [vmem:[%s6777 + $0x34] sm:$0xf]
        %v7352 = vld [vmem:[%s6777 + $0x38] sm:$0x1]
        %v7353 = vld [vmem:[%s6777 + $0x3c] sm:$0xe]
        %v7354 = vld [vmem:[%s6777 + $0x40] sm:$0xf]
        %v7355 = vld [vmem:[%s6777 + $0x44] sm:$0x1]
        %v7356 = vld [vmem:[%s6777 + $0x48] sm:$0xe]
        %v7357 = vld [vmem:[%s6777 + $0x4c] sm:$0xf]
        %v7358 = vld [vmem:[%s6777 + $0x50] sm:$0x1]
        %v7359 = vld [vmem:[%s6777 + $0x54] sm:$0xe]
        %v7360 = vld [vmem:[%s6777 + $0x58] sm:$0xf]
        %v7361 = vld [vmem:[%s6777 + $0x5c] sm:$0x1]
        %v7362 = vld [vmem:[%s6777 + $0x60] sm:$0xe]
        %v7363 = vld [vmem:[%s6777 + $0x64] sm:$0xf]
        %v7364 = vld [vmem:[%s6777 + $0x68] sm:$0x1]
        %v7365 = vld [vmem:[%s6777 + $0x6c] sm:$0xe]
        %v7366 = vld [vmem:[%s6777 + $0x70] sm:$0xf]
        %v7367 = vld [vmem:[%s6777 + $0x74] sm:$0x1]
        %v7368 = vld [vmem:[%s6777 + $0x78] sm:$0xe]
        %v7369 = vld [vmem:[%s6777 + $0x7c] sm:$0xf]
        %v7370 = vld [vmem:[%s6777 + $0x80] sm:$0x1]
        %v7371 = vld [vmem:[%s6777 + $0x84] sm:$0xe]
        %v7372 = vld [vmem:[%s6777 + $0x88] sm:$0xf]
        %v7373 = vld [vmem:[%s6777 + $0x8c] sm:$0x1]
        %v7374 = vld [vmem:[%s6777 + $0x90] sm:$0xe]
        %v7375 = vld [vmem:[%s6777 + $0x94] sm:$0xf]
        %v7376 = vld [vmem:[%s6777 + $0x98] sm:$0x1]
        %v7377 = vld [vmem:[%s6777 + $0x9c] sm:$0xe]
        %v7378 = vld [vmem:[%s6777 + $0xa0] sm:$0xf]
        %v7379 = vld [vmem:[%s6777 + $0xa4] sm:$0x1]
        %v7380 = vld [vmem:[%s6777 + $0xa8] sm:$0xe]
        %v7381 = vld [vmem:[%s6777 + $0xac] sm:$0xf]
        %v7382 = vld [vmem:[%s6777 + $0xb0] sm:$0x1]
        %v7383 = vld [vmem:[%s6777 + $0xb4] sm:$0xe]
        %v7384 = vld [vmem:[%s6777 + $0xb8] sm:$0xf]
        %v7385 = vld [vmem:[%s6777 + $0xbc] sm:$0x1]
        %v7434 = vrot.slane %v7338, 5
        %v7435 = vrot.slane %v7434, 4
        %v7436 = vrot.slane %v7339, 5
        %v7437 = vsel %vm5768, %v7435, %v7436
        %v7438 = vrot.slane %v7436, 4
        %v7439 = vrot.slane %v7340, 5
        %v7440 = vsel %vm5768, %v7438, %v7439
        %v7441 = vrot.slane %v7341, 5
        %v7442 = vrot.slane %v7441, 4
        %v7443 = vrot.slane %v7342, 5
        %v7444 = vsel %vm5768, %v7442, %v7443
        %v7445 = vrot.slane %v7443, 4
        %v7446 = vrot.slane %v7343, 5
        %v7447 = vsel %vm5768, %v7445, %v7446
        %v7448 = vrot.slane %v7344, 5
        %v7449 = vrot.slane %v7448, 4
        %v7450 = vrot.slane %v7345, 5
        %v7451 = vsel %vm5768, %v7449, %v7450
        %v7452 = vrot.slane %v7450, 4
        %v7453 = vrot.slane %v7346, 5
        %v7454 = vsel %vm5768, %v7452, %v7453
        %v7455 = vrot.slane %v7347, 5
        %v7456 = vrot.slane %v7455, 4
        %v7457 = vrot.slane %v7348, 5
        %v7458 = vsel %vm5768, %v7456, %v7457
        %v7459 = vrot.slane %v7457, 4
        %v7460 = vrot.slane %v7349, 5
        %v7461 = vsel %vm5768, %v7459, %v7460
        %v7462 = vrot.slane %v7350, 5
        %v7463 = vrot.slane %v7462, 4
        %v7464 = vrot.slane %v7351, 5
        %v7465 = vsel %vm5768, %v7463, %v7464
        %v7466 = vrot.slane %v7464, 4
        %v7467 = vrot.slane %v7352, 5
        %v7468 = vsel %vm5768, %v7466, %v7467
        %v7469 = vrot.slane %v7353, 5
        %v7470 = vrot.slane %v7469, 4
        %v7471 = vrot.slane %v7354, 5
        %v7472 = vsel %vm5768, %v7470, %v7471
        %v7473 = vrot.slane %v7471, 4
        %v7474 = vrot.slane %v7355, 5
        %v7475 = vsel %vm5768, %v7473, %v7474
        %v7476 = vrot.slane %v7356, 5
        %v7477 = vrot.slane %v7476, 4
        %v7478 = vrot.slane %v7357, 5
        %v7479 = vsel %vm5768, %v7477, %v7478
        %v7480 = vrot.slane %v7478, 4
        %v7481 = vrot.slane %v7358, 5
        %v7482 = vsel %vm5768, %v7480, %v7481
        %v7483 = vrot.slane %v7359, 5
        %v7484 = vrot.slane %v7483, 4
        %v7485 = vrot.slane %v7360, 5
        %v7486 = vsel %vm5768, %v7484, %v7485
        %v7487 = vrot.slane %v7485, 4
        %v7488 = vrot.slane %v7361, 5
        %v7489 = vsel %vm5768, %v7487, %v7488
        %v7490 = vrot.slane %v7362, 5
        %v7491 = vrot.slane %v7490, 4
        %v7492 = vrot.slane %v7363, 5
        %v7493 = vsel %vm5768, %v7491, %v7492
        %v7494 = vrot.slane %v7492, 4
        %v7495 = vrot.slane %v7364, 5
        %v7496 = vsel %vm5768, %v7494, %v7495
        %v7497 = vrot.slane %v7365, 5
        %v7498 = vrot.slane %v7497, 4
        %v7499 = vrot.slane %v7366, 5
        %v7500 = vsel %vm5768, %v7498, %v7499
        %v7501 = vrot.slane %v7499, 4
        %v7502 = vrot.slane %v7367, 5
        %v7503 = vsel %vm5768, %v7501, %v7502
        %v7504 = vrot.slane %v7368, 5
        %v7505 = vrot.slane %v7504, 4
        %v7506 = vrot.slane %v7369, 5
        %v7507 = vsel %vm5768, %v7505, %v7506
        %v7508 = vrot.slane %v7506, 4
        %v7509 = vrot.slane %v7370, 5
        %v7510 = vsel %vm5768, %v7508, %v7509
        %v7511 = vrot.slane %v7371, 5
        %v7512 = vrot.slane %v7511, 4
        %v7513 = vrot.slane %v7372, 5
        %v7514 = vsel %vm5768, %v7512, %v7513
        %v7515 = vrot.slane %v7513, 4
        %v7516 = vrot.slane %v7373, 5
        %v7517 = vsel %vm5768, %v7515, %v7516
        %v7518 = vrot.slane %v7374, 5
        %v7519 = vrot.slane %v7518, 4
        %v7520 = vrot.slane %v7375, 5
        %v7521 = vsel %vm5768, %v7519, %v7520
        %v7522 = vrot.slane %v7520, 4
        %v7523 = vrot.slane %v7376, 5
        %v7524 = vsel %vm5768, %v7522, %v7523
        %v7525 = vrot.slane %v7377, 5
        %v7526 = vrot.slane %v7525, 4
        %v7527 = vrot.slane %v7378, 5
        %v7528 = vsel %vm5768, %v7526, %v7527
        %v7529 = vrot.slane %v7527, 4
        %v7530 = vrot.slane %v7379, 5
        %v7531 = vsel %vm5768, %v7529, %v7530
        %v7532 = vrot.slane %v7380, 5
        %v7533 = vrot.slane %v7532, 4
        %v7534 = vrot.slane %v7381, 5
        %v7535 = vsel %vm5768, %v7533, %v7534
        %v7536 = vrot.slane %v7534, 4
        %v7537 = vrot.slane %v7382, 5
        %v7538 = vsel %vm5768, %v7536, %v7537
        %v7539 = vrot.slane %v7383, 5
        %v7540 = vrot.slane %v7539, 4
        %v7541 = vrot.slane %v7384, 5
        %v7542 = vsel %vm5768, %v7540, %v7541
        %v7543 = vrot.slane %v7541, 4
        %v7544 = vrot.slane %v7385, 5
        %v7545 = vsel %vm5768, %v7543, %v7544
        %7578 = vst [vmem:[#allocation2 + $0x20] sm:$0xf] %v7437
        %7579 = vst [vmem:[#allocation2 + $0x44] sm:$0xf] %v7440
        %7580 = vst [vmem:[#allocation2 + $0x68] sm:$0xf] %v7444
        %7581 = vst [vmem:[#allocation2 + $0x8c] sm:$0xf] %v7447
        %7582 = vst [vmem:[#allocation2 + $0xb0] sm:$0xf] %v7451
        %7583 = vst [vmem:[#allocation2 + $0xd4] sm:$0xf] %v7454
        %7584 = vst [vmem:[#allocation2 + $0xf8] sm:$0xf] %v7458
        %7585 = vst [vmem:[#allocation2 + $0x11c] sm:$0xf] %v7461
        %7586 = vst [vmem:[#allocation2 + $0x140] sm:$0xf] %v7465
        %7587 = vst [vmem:[#allocation2 + $0x164] sm:$0xf] %v7468
        %7588 = vst [vmem:[#allocation2 + $0x188] sm:$0xf] %v7472
        %7589 = vst [vmem:[#allocation2 + $0x1ac] sm:$0xf] %v7475
        %7590 = vst [vmem:[#allocation2 + $0x1d0] sm:$0xf] %v7479
        %7591 = vst [vmem:[#allocation2 + $0x1f4] sm:$0xf] %v7482
        %7592 = vst [vmem:[#allocation2 + $0x218] sm:$0xf] %v7486
        %7593 = vst [vmem:[#allocation2 + $0x23c] sm:$0xf] %v7489
        %7594 = vst [vmem:[#allocation2 + $0x260] sm:$0xf] %v7493
        %7595 = vst [vmem:[#allocation2 + $0x284] sm:$0xf] %v7496
        %7596 = vst [vmem:[#allocation2 + $0x2a8] sm:$0xf] %v7500
        %7597 = vst [vmem:[#allocation2 + $0x2cc] sm:$0xf] %v7503
        %7598 = vst [vmem:[#allocation2 + $0x2f0] sm:$0xf] %v7507
        %7599 = vst [vmem:[#allocation2 + $0x314] sm:$0xf] %v7510
        %7600 = vst [vmem:[#allocation2 + $0x338] sm:$0xf] %v7514
        %7601 = vst [vmem:[#allocation2 + $0x35c] sm:$0xf] %v7517
        %7602 = vst [vmem:[#allocation2 + $0x380] sm:$0xf] %v7521
        %7603 = vst [vmem:[#allocation2 + $0x3a4] sm:$0xf] %v7524
        %7604 = vst [vmem:[#allocation2 + $0x3c8] sm:$0xf] %v7528
        %7605 = vst [vmem:[#allocation2 + $0x3ec] sm:$0xf] %v7531
        %7606 = vst [vmem:[#allocation2 + $0x410] sm:$0xf] %v7535
        %7607 = vst [vmem:[#allocation2 + $0x434] sm:$0xf] %v7538
        %7608 = vst [vmem:[#allocation2 + $0x458] sm:$0xf] %v7542
        %7609 = vst [vmem:[#allocation2 + $0x47c] sm:$0xf] %v7545
        %v7610 = vld [vmem:[#allocation2] sm:$0xff]
        %v7611 = vld [vmem:[#allocation2 + $0x8] sm:$0xff]
        %v7612 = vld [vmem:[#allocation2 + $0x10] sm:$0xff]
        %v7613 = vld [vmem:[#allocation2 + $0x18] sm:$0xff]
        %v7614 = vld [vmem:[#allocation2 + $0x20] sm:$0xf]
        %v7615 = vld [vmem:[#allocation2 + $0x24] sm:$0xff]
        %v7616 = vld [vmem:[#allocation2 + $0x2c] sm:$0xff]
        %v7617 = vld [vmem:[#allocation2 + $0x34] sm:$0xff]
        %v7618 = vld [vmem:[#allocation2 + $0x3c] sm:$0xff]
        %v7619 = vld [vmem:[#allocation2 + $0x44] sm:$0xf]
        %v7620 = vld [vmem:[#allocation2 + $0x48] sm:$0xff]
        %v7621 = vld [vmem:[#allocation2 + $0x50] sm:$0xff]
        %v7622 = vld [vmem:[#allocation2 + $0x58] sm:$0xff]
        %v7623 = vld [vmem:[#allocation2 + $0x60] sm:$0xff]
        %v7624 = vld [vmem:[#allocation2 + $0x68] sm:$0xf]
        %v7625 = vld [vmem:[#allocation2 + $0x6c] sm:$0xff]
        %v7626 = vld [vmem:[#allocation2 + $0x74] sm:$0xff]
        %v7627 = vld [vmem:[#allocation2 + $0x7c] sm:$0xff]
        %v7628 = vld [vmem:[#allocation2 + $0x84] sm:$0xff]
        %v7629 = vld [vmem:[#allocation2 + $0x8c] sm:$0xf]
        %v7630 = vld [vmem:[#allocation2 + $0x90] sm:$0xff]
        %v7631 = vld [vmem:[#allocation2 + $0x98] sm:$0xff]
        %v7632 = vld [vmem:[#allocation2 + $0xa0] sm:$0xff]
        %v7633 = vld [vmem:[#allocation2 + $0xa8] sm:$0xff]
        %v7634 = vld [vmem:[#allocation2 + $0xb0] sm:$0xf]
        %v7635 = vld [vmem:[#allocation2 + $0xb4] sm:$0xff]
        %v7636 = vld [vmem:[#allocation2 + $0xbc] sm:$0xff]
        %v7637 = vld [vmem:[#allocation2 + $0xc4] sm:$0xff]
        %v7638 = vld [vmem:[#allocation2 + $0xcc] sm:$0xff]
        %v7639 = vld [vmem:[#allocation2 + $0xd4] sm:$0xf]
        %v7640 = vld [vmem:[#allocation2 + $0xd8] sm:$0xff]
        %v7641 = vld [vmem:[#allocation2 + $0xe0] sm:$0xff]
        %v7642 = vld [vmem:[#allocation2 + $0xe8] sm:$0xff]
        %v7643 = vld [vmem:[#allocation2 + $0xf0] sm:$0xff]
        %v7644 = vld [vmem:[#allocation2 + $0xf8] sm:$0xf]
        %v7645 = vld [vmem:[#allocation2 + $0xfc] sm:$0xff]
        %v7646 = vld [vmem:[#allocation2 + $0x104] sm:$0xff]
        %v7647 = vld [vmem:[#allocation2 + $0x10c] sm:$0xff]
        %v7648 = vld [vmem:[#allocation2 + $0x114] sm:$0xff]
        %v7649 = vld [vmem:[#allocation2 + $0x11c] sm:$0xf]
        %v7650 = vld [vmem:[#allocation2 + $0x120] sm:$0xff]
        %v7651 = vld [vmem:[#allocation2 + $0x128] sm:$0xff]
        %v7652 = vld [vmem:[#allocation2 + $0x130] sm:$0xff]
        %v7653 = vld [vmem:[#allocation2 + $0x138] sm:$0xff]
        %v7654 = vld [vmem:[#allocation2 + $0x140] sm:$0xf]
        %v7655 = vld [vmem:[#allocation2 + $0x144] sm:$0xff]
        %v7656 = vld [vmem:[#allocation2 + $0x14c] sm:$0xff]
        %v7657 = vld [vmem:[#allocation2 + $0x154] sm:$0xff]
        %v7658 = vld [vmem:[#allocation2 + $0x15c] sm:$0xff]
        %v7659 = vld [vmem:[#allocation2 + $0x164] sm:$0xf]
        %v7660 = vld [vmem:[#allocation2 + $0x168] sm:$0xff]
        %v7661 = vld [vmem:[#allocation2 + $0x170] sm:$0xff]
        %v7662 = vld [vmem:[#allocation2 + $0x178] sm:$0xff]
        %v7663 = vld [vmem:[#allocation2 + $0x180] sm:$0xff]
        %v7664 = vld [vmem:[#allocation2 + $0x188] sm:$0xf]
        %v7665 = vld [vmem:[#allocation2 + $0x18c] sm:$0xff]
        %v7666 = vld [vmem:[#allocation2 + $0x194] sm:$0xff]
        %v7667 = vld [vmem:[#allocation2 + $0x19c] sm:$0xff]
        %v7668 = vld [vmem:[#allocation2 + $0x1a4] sm:$0xff]
        %v7669 = vld [vmem:[#allocation2 + $0x1ac] sm:$0xf]
        %v7670 = vld [vmem:[#allocation2 + $0x1b0] sm:$0xff]
        %v7671 = vld [vmem:[#allocation2 + $0x1b8] sm:$0xff]
        %v7672 = vld [vmem:[#allocation2 + $0x1c0] sm:$0xff]
        %v7673 = vld [vmem:[#allocation2 + $0x1c8] sm:$0xff]
        %v7674 = vld [vmem:[#allocation2 + $0x1d0] sm:$0xf]
        %v7675 = vld [vmem:[#allocation2 + $0x1d4] sm:$0xff]
        %v7676 = vld [vmem:[#allocation2 + $0x1dc] sm:$0xff]
        %v7677 = vld [vmem:[#allocation2 + $0x1e4] sm:$0xff]
        %v7678 = vld [vmem:[#allocation2 + $0x1ec] sm:$0xff]
        %v7679 = vld [vmem:[#allocation2 + $0x1f4] sm:$0xf]
        %v7680 = vld [vmem:[#allocation2 + $0x1f8] sm:$0xff]
        %v7681 = vld [vmem:[#allocation2 + $0x200] sm:$0xff]
        %v7682 = vld [vmem:[#allocation2 + $0x208] sm:$0xff]
        %v7683 = vld [vmem:[#allocation2 + $0x210] sm:$0xff]
        %v7684 = vld [vmem:[#allocation2 + $0x218] sm:$0xf]
        %v7685 = vld [vmem:[#allocation2 + $0x21c] sm:$0xff]
        %v7686 = vld [vmem:[#allocation2 + $0x224] sm:$0xff]
        %v7687 = vld [vmem:[#allocation2 + $0x22c] sm:$0xff]
        %v7688 = vld [vmem:[#allocation2 + $0x234] sm:$0xff]
        %v7689 = vld [vmem:[#allocation2 + $0x23c] sm:$0xf]
        %v7690 = vld [vmem:[#allocation2 + $0x240] sm:$0xff]
        %v7691 = vld [vmem:[#allocation2 + $0x248] sm:$0xff]
        %v7692 = vld [vmem:[#allocation2 + $0x250] sm:$0xff]
        %v7693 = vld [vmem:[#allocation2 + $0x258] sm:$0xff]
        %v7694 = vld [vmem:[#allocation2 + $0x260] sm:$0xf]
        %v7695 = vld [vmem:[#allocation2 + $0x264] sm:$0xff]
        %v7696 = vld [vmem:[#allocation2 + $0x26c] sm:$0xff]
        %v7697 = vld [vmem:[#allocation2 + $0x274] sm:$0xff]
        %v7698 = vld [vmem:[#allocation2 + $0x27c] sm:$0xff]
        %v7699 = vld [vmem:[#allocation2 + $0x284] sm:$0xf]
        %v7700 = vld [vmem:[#allocation2 + $0x288] sm:$0xff]
        %v7701 = vld [vmem:[#allocation2 + $0x290] sm:$0xff]
        %v7702 = vld [vmem:[#allocation2 + $0x298] sm:$0xff]
        %v7703 = vld [vmem:[#allocation2 + $0x2a0] sm:$0xff]
        %v7704 = vld [vmem:[#allocation2 + $0x2a8] sm:$0xf]
        %v7705 = vld [vmem:[#allocation2 + $0x2ac] sm:$0xff]
        %v7706 = vld [vmem:[#allocation2 + $0x2b4] sm:$0xff]
        %v7707 = vld [vmem:[#allocation2 + $0x2bc] sm:$0xff]
        %v7708 = vld [vmem:[#allocation2 + $0x2c4] sm:$0xff]
        %v7709 = vld [vmem:[#allocation2 + $0x2cc] sm:$0xf]
        %v7710 = vld [vmem:[#allocation2 + $0x2d0] sm:$0xff]
        %v7711 = vld [vmem:[#allocation2 + $0x2d8] sm:$0xff]
        %v7712 = vld [vmem:[#allocation2 + $0x2e0] sm:$0xff]
        %v7713 = vld [vmem:[#allocation2 + $0x2e8] sm:$0xff]
        %v7714 = vld [vmem:[#allocation2 + $0x2f0] sm:$0xf]
        %v7715 = vld [vmem:[#allocation2 + $0x2f4] sm:$0xff]
        %v7716 = vld [vmem:[#allocation2 + $0x2fc] sm:$0xff]
        %v7717 = vld [vmem:[#allocation2 + $0x304] sm:$0xff]
        %v7718 = vld [vmem:[#allocation2 + $0x30c] sm:$0xff]
        %v7719 = vld [vmem:[#allocation2 + $0x314] sm:$0xf]
        %v7720 = vld [vmem:[#allocation2 + $0x318] sm:$0xff]
        %v7721 = vld [vmem:[#allocation2 + $0x320] sm:$0xff]
        %v7722 = vld [vmem:[#allocation2 + $0x328] sm:$0xff]
        %v7723 = vld [vmem:[#allocation2 + $0x330] sm:$0xff]
        %v7724 = vld [vmem:[#allocation2 + $0x338] sm:$0xf]
        %v7725 = vld [vmem:[#allocation2 + $0x33c] sm:$0xff]
        %v7726 = vld [vmem:[#allocation2 + $0x344] sm:$0xff]
        %v7727 = vld [vmem:[#allocation2 + $0x34c] sm:$0xff]
        %v7728 = vld [vmem:[#allocation2 + $0x354] sm:$0xff]
        %v7729 = vld [vmem:[#allocation2 + $0x35c] sm:$0xf]
        %v7730 = vld [vmem:[#allocation2 + $0x360] sm:$0xff]
        %v7731 = vld [vmem:[#allocation2 + $0x368] sm:$0xff]
        %v7732 = vld [vmem:[#allocation2 + $0x370] sm:$0xff]
        %v7733 = vld [vmem:[#allocation2 + $0x378] sm:$0xff]
        %v7734 = vld [vmem:[#allocation2 + $0x380] sm:$0xf]
        %v7735 = vld [vmem:[#allocation2 + $0x384] sm:$0xff]
        %v7736 = vld [vmem:[#allocation2 + $0x38c] sm:$0xff]
        %v7737 = vld [vmem:[#allocation2 + $0x394] sm:$0xff]
        %v7738 = vld [vmem:[#allocation2 + $0x39c] sm:$0xff]
        %v7739 = vld [vmem:[#allocation2 + $0x3a4] sm:$0xf]
        %v7740 = vld [vmem:[#allocation2 + $0x3a8] sm:$0xff]
        %v7741 = vld [vmem:[#allocation2 + $0x3b0] sm:$0xff]
        %v7742 = vld [vmem:[#allocation2 + $0x3b8] sm:$0xff]
        %v7743 = vld [vmem:[#allocation2 + $0x3c0] sm:$0xff]
        %v7744 = vld [vmem:[#allocation2 + $0x3c8] sm:$0xf]
        %v7745 = vld [vmem:[#allocation2 + $0x3cc] sm:$0xff]
        %v7746 = vld [vmem:[#allocation2 + $0x3d4] sm:$0xff]
        %v7747 = vld [vmem:[#allocation2 + $0x3dc] sm:$0xff]
        %v7748 = vld [vmem:[#allocation2 + $0x3e4] sm:$0xff]
        %v7749 = vld [vmem:[#allocation2 + $0x3ec] sm:$0xf]
        %v7750 = vld [vmem:[#allocation2 + $0x3f0] sm:$0xff]
        %v7751 = vld [vmem:[#allocation2 + $0x3f8] sm:$0xff]
        %v7752 = vld [vmem:[#allocation2 + $0x400] sm:$0xff]
        %v7753 = vld [vmem:[#allocation2 + $0x408] sm:$0xff]
        %v7754 = vld [vmem:[#allocation2 + $0x410] sm:$0xf]
        %v7755 = vld [vmem:[#allocation2 + $0x414] sm:$0xff]
        %v7756 = vld [vmem:[#allocation2 + $0x41c] sm:$0xff]
        %v7757 = vld [vmem:[#allocation2 + $0x424] sm:$0xff]
        %v7758 = vld [vmem:[#allocation2 + $0x42c] sm:$0xff]
        %v7759 = vld [vmem:[#allocation2 + $0x434] sm:$0xf]
        %v7760 = vld [vmem:[#allocation2 + $0x438] sm:$0xff]
        %v7761 = vld [vmem:[#allocation2 + $0x440] sm:$0xff]
        %v7762 = vld [vmem:[#allocation2 + $0x448] sm:$0xff]
        %v7763 = vld [vmem:[#allocation2 + $0x450] sm:$0xff]
        %v7764 = vld [vmem:[#allocation2 + $0x458] sm:$0xf]
        %v7765 = vld [vmem:[#allocation2 + $0x45c] sm:$0xff]
        %v7766 = vld [vmem:[#allocation2 + $0x464] sm:$0xff]
        %v7767 = vld [vmem:[#allocation2 + $0x46c] sm:$0xff]
        %v7768 = vld [vmem:[#allocation2 + $0x474] sm:$0xff]
        %v7769 = vld [vmem:[#allocation2 + $0x47c] sm:$0xf]
        %v7770 = vld [vmem:[%s2] sm:$0xf]
        %v7771 = vld [vmem:[%s2 + $0x4] sm:$0xf]
        %v7772 = vld [vmem:[%s2 + $0x8] sm:$0xf]
        %v7773 = vld [vmem:[%s2 + $0xc] sm:$0xf]
        %v7774 = vld [vmem:[%s2 + $0x10] sm:$0xf]
        %v7775 = vld [vmem:[%s2 + $0x14] sm:$0xf]
        %v7776 = vld [vmem:[%s2 + $0x18] sm:$0xf]
        %v7777 = vld [vmem:[%s2 + $0x1c] sm:$0xf]
        %v7778 = vld [vmem:[%s2 + $0x20] sm:$0xf]
        %v7779 = vld [vmem:[%s2 + $0x24] sm:$0xf]
        %v7780 = vld [vmem:[%s2 + $0x28] sm:$0xf]
        %v7781 = vld [vmem:[%s2 + $0x2c] sm:$0xf]
        %v7782 = vld [vmem:[%s2 + $0x30] sm:$0xf]
        %v7783 = vld [vmem:[%s2 + $0x34] sm:$0xf]
        %v7784 = vld [vmem:[%s2 + $0x38] sm:$0xf]
        %v7785 = vld [vmem:[%s2 + $0x3c] sm:$0xf]
        %v7786 = vld [vmem:[%s2 + $0x40] sm:$0xf]
        %v7787 = vld [vmem:[%s2 + $0x44] sm:$0xf]
        %v7788 = vld [vmem:[%s2 + $0x48] sm:$0xf]
        %v7789 = vld [vmem:[%s2 + $0x4c] sm:$0xf]
        %v7790 = vld [vmem:[%s2 + $0x50] sm:$0xf]
        %v7791 = vld [vmem:[%s2 + $0x54] sm:$0xf]
        %v7792 = vld [vmem:[%s2 + $0x58] sm:$0xf]
        %v7793 = vld [vmem:[%s2 + $0x5c] sm:$0xf]
        %v7794 = vld [vmem:[%s2 + $0x60] sm:$0xf]
        %v7795 = vld [vmem:[%s2 + $0x64] sm:$0xf]
        %v7796 = vld [vmem:[%s2 + $0x68] sm:$0xf]
        %v7797 = vld [vmem:[%s2 + $0x6c] sm:$0xf]
        %v7798 = vld [vmem:[%s2 + $0x70] sm:$0xf]
        %v7799 = vld [vmem:[%s2 + $0x74] sm:$0xf]
        %v7800 = vld [vmem:[%s2 + $0x78] sm:$0xf]
        %v7801 = vld [vmem:[%s2 + $0x7c] sm:$0xf]
        %v7802 = vld [vmem:[%s2 + $0x80] sm:$0xf]
        %v7803 = vld [vmem:[%s2 + $0x84] sm:$0xf]
        %v7804 = vld [vmem:[%s2 + $0x88] sm:$0xf]
        %v7805 = vld [vmem:[%s2 + $0x8c] sm:$0xf]
        %v7806 = vld [vmem:[%s2 + $0x90] sm:$0xf]
        %v7807 = vld [vmem:[%s2 + $0x94] sm:$0xf]
        %v7808 = vld [vmem:[%s2 + $0x98] sm:$0xf]
        %v7809 = vld [vmem:[%s2 + $0x9c] sm:$0xf]
        %v7810 = vld [vmem:[%s2 + $0xa0] sm:$0xf]
        %v7811 = vld [vmem:[%s2 + $0xa4] sm:$0xf]
        %v7812 = vld [vmem:[%s2 + $0xa8] sm:$0xf]
        %v7813 = vld [vmem:[%s2 + $0xac] sm:$0xf]
        %v7814 = vld [vmem:[%s2 + $0xb0] sm:$0xf]
        %v7815 = vld [vmem:[%s2 + $0xb4] sm:$0xf]
        %v7816 = vld [vmem:[%s2 + $0xb8] sm:$0xf]
        %v7817 = vld [vmem:[%s2 + $0xbc] sm:$0xf]
        %v7818 = vld [vmem:[%s2 + $0xc0] sm:$0xf]
        %v7819 = vld [vmem:[%s2 + $0xc4] sm:$0xf]
        %v7820 = vld [vmem:[%s2 + $0xc8] sm:$0xf]
        %v7821 = vld [vmem:[%s2 + $0xcc] sm:$0xf]
        %v7822 = vld [vmem:[%s2 + $0xd0] sm:$0xf]
        %v7823 = vld [vmem:[%s2 + $0xd4] sm:$0xf]
        %v7824 = vld [vmem:[%s2 + $0xd8] sm:$0xf]
        %v7825 = vld [vmem:[%s2 + $0xdc] sm:$0xf]
        %v7826 = vld [vmem:[%s2 + $0xe0] sm:$0xf]
        %v7827 = vld [vmem:[%s2 + $0xe4] sm:$0xf]
        %v7828 = vld [vmem:[%s2 + $0xe8] sm:$0xf]
        %v7829 = vld [vmem:[%s2 + $0xec] sm:$0xf]
        %v7830 = vld [vmem:[%s2 + $0xf0] sm:$0xf]
        %v7831 = vld [vmem:[%s2 + $0xf4] sm:$0xf]
        %v7832 = vld [vmem:[%s2 + $0xf8] sm:$0xf]
        %v7833 = vld [vmem:[%s2 + $0xfc] sm:$0xf]
        %v7834 = vld [vmem:[%s2 + $0x100] sm:$0xf]
        %v7835 = vld [vmem:[%s2 + $0x104] sm:$0xf]
        %v7836 = vld [vmem:[%s2 + $0x108] sm:$0xf]
        %v7837 = vld [vmem:[%s2 + $0x10c] sm:$0xf]
        %v7838 = vld [vmem:[%s2 + $0x110] sm:$0xf]
        %v7839 = vld [vmem:[%s2 + $0x114] sm:$0xf]
        %v7840 = vld [vmem:[%s2 + $0x118] sm:$0xf]
        %v7841 = vld [vmem:[%s2 + $0x11c] sm:$0xf]
        %v7842 = vld [vmem:[%s2 + $0x120] sm:$0xf]
        %v7843 = vld [vmem:[%s2 + $0x124] sm:$0xf]
        %v7844 = vld [vmem:[%s2 + $0x128] sm:$0xf]
        %v7845 = vld [vmem:[%s2 + $0x12c] sm:$0xf]
        %v7846 = vld [vmem:[%s2 + $0x130] sm:$0xf]
        %v7847 = vld [vmem:[%s2 + $0x134] sm:$0xf]
        %v7848 = vld [vmem:[%s2 + $0x138] sm:$0xf]
        %v7849 = vld [vmem:[%s2 + $0x13c] sm:$0xf]
        %v7850 = vld [vmem:[%s2 + $0x140] sm:$0xf]
        %v7851 = vld [vmem:[%s2 + $0x144] sm:$0xf]
        %v7852 = vld [vmem:[%s2 + $0x148] sm:$0xf]
        %v7853 = vld [vmem:[%s2 + $0x14c] sm:$0xf]
        %v7854 = vld [vmem:[%s2 + $0x150] sm:$0xf]
        %v7855 = vld [vmem:[%s2 + $0x154] sm:$0xf]
        %v7856 = vld [vmem:[%s2 + $0x158] sm:$0xf]
        %v7857 = vld [vmem:[%s2 + $0x15c] sm:$0xf]
        %v7858 = vld [vmem:[%s2 + $0x160] sm:$0xf]
        %v7859 = vld [vmem:[%s2 + $0x164] sm:$0xf]
        %v7860 = vld [vmem:[%s2 + $0x168] sm:$0xf]
        %v7861 = vld [vmem:[%s2 + $0x16c] sm:$0xf]
        %v7862 = vld [vmem:[%s2 + $0x170] sm:$0xf]
        %v7863 = vld [vmem:[%s2 + $0x174] sm:$0xf]
        %v7864 = vld [vmem:[%s2 + $0x178] sm:$0xf]
        %v7865 = vld [vmem:[%s2 + $0x17c] sm:$0xf]
        %v7866 = vld [vmem:[%s2 + $0x180] sm:$0xf]
        %v7867 = vld [vmem:[%s2 + $0x184] sm:$0xf]
        %v7868 = vld [vmem:[%s2 + $0x188] sm:$0xf]
        %v7869 = vld [vmem:[%s2 + $0x18c] sm:$0xf]
        %v7870 = vld [vmem:[%s2 + $0x190] sm:$0xf]
        %v7871 = vld [vmem:[%s2 + $0x194] sm:$0xf]
        %v7872 = vld [vmem:[%s2 + $0x198] sm:$0xf]
        %v7873 = vld [vmem:[%s2 + $0x19c] sm:$0xf]
        %v7874 = vld [vmem:[%s2 + $0x1a0] sm:$0xf]
        %v7875 = vld [vmem:[%s2 + $0x1a4] sm:$0xf]
        %v7876 = vld [vmem:[%s2 + $0x1a8] sm:$0xf]
        %v7877 = vld [vmem:[%s2 + $0x1ac] sm:$0xf]
        %v7878 = vld [vmem:[%s2 + $0x1b0] sm:$0xf]
        %v7879 = vld [vmem:[%s2 + $0x1b4] sm:$0xf]
        %v7880 = vld [vmem:[%s2 + $0x1b8] sm:$0xf]
        %v7881 = vld [vmem:[%s2 + $0x1bc] sm:$0xf]
        %v7882 = vld [vmem:[%s2 + $0x1c0] sm:$0xf]
        %v7883 = vld [vmem:[%s2 + $0x1c4] sm:$0xf]
        %v7884 = vld [vmem:[%s2 + $0x1c8] sm:$0xf]
        %v7885 = vld [vmem:[%s2 + $0x1cc] sm:$0xf]
        %v7886 = vld [vmem:[%s2 + $0x1d0] sm:$0xf]
        %v7887 = vld [vmem:[%s2 + $0x1d4] sm:$0xf]
        %v7888 = vld [vmem:[%s2 + $0x1d8] sm:$0xf]
        %v7889 = vld [vmem:[%s2 + $0x1dc] sm:$0xf]
        %v7890 = vld [vmem:[%s2 + $0x1e0] sm:$0xf]
        %v7891 = vld [vmem:[%s2 + $0x1e4] sm:$0xf]
        %v7892 = vld [vmem:[%s2 + $0x1e8] sm:$0xf]
        %v7893 = vld [vmem:[%s2 + $0x1ec] sm:$0xf]
        %v7894 = vld [vmem:[%s2 + $0x1f0] sm:$0xf]
        %v7895 = vld [vmem:[%s2 + $0x1f4] sm:$0xf]
        %v7896 = vld [vmem:[%s2 + $0x1f8] sm:$0xf]
        %v7897 = vld [vmem:[%s2 + $0x1fc] sm:$0xf]
        %v7898 = vld [vmem:[%s2 + $0x200] sm:$0xf]
        %v7899 = vld [vmem:[%s2 + $0x204] sm:$0xf]
        %v7900 = vld [vmem:[%s2 + $0x208] sm:$0xf]
        %v7901 = vld [vmem:[%s2 + $0x20c] sm:$0xf]
        %v7902 = vld [vmem:[%s2 + $0x210] sm:$0xf]
        %v7903 = vld [vmem:[%s2 + $0x214] sm:$0xf]
        %v7904 = vld [vmem:[%s2 + $0x218] sm:$0xf]
        %v7905 = vld [vmem:[%s2 + $0x21c] sm:$0xf]
        %v7906 = vld [vmem:[%s2 + $0x220] sm:$0xf]
        %v7907 = vld [vmem:[%s2 + $0x224] sm:$0xf]
        %v7908 = vld [vmem:[%s2 + $0x228] sm:$0xf]
        %v7909 = vld [vmem:[%s2 + $0x22c] sm:$0xf]
        %v7910 = vld [vmem:[%s2 + $0x230] sm:$0xf]
        %v7911 = vld [vmem:[%s2 + $0x234] sm:$0xf]
        %v7912 = vld [vmem:[%s2 + $0x238] sm:$0xf]
        %v7913 = vld [vmem:[%s2 + $0x23c] sm:$0xf]
        %v8074 = vunpack.c.l.b16 %v7610
        %v8075 = vunpack.c.h.b16 %v7610
        %v8076 = vunpack.c.l.b16 %v7611
        %v8077 = vunpack.c.h.b16 %v7611
        %v8078 = vunpack.c.l.b16 %v7612
        %v8079 = vunpack.c.h.b16 %v7612
        %v8080 = vunpack.c.l.b16 %v7613
        %v8081 = vunpack.c.h.b16 %v7613
        %v8082 = vunpack.c.l.b16 %v7614
        %v8083 = vunpack.c.l.b16 %v7615
        %v8084 = vunpack.c.h.b16 %v7615
        %v8085 = vunpack.c.l.b16 %v7616
        %v8086 = vunpack.c.h.b16 %v7616
        %v8087 = vunpack.c.l.b16 %v7617
        %v8088 = vunpack.c.h.b16 %v7617
        %v8089 = vunpack.c.l.b16 %v7618
        %v8090 = vunpack.c.h.b16 %v7618
        %v8091 = vunpack.c.l.b16 %v7619
        %v8092 = vunpack.c.l.b16 %v7620
        %v8093 = vunpack.c.h.b16 %v7620
        %v8094 = vunpack.c.l.b16 %v7621
        %v8095 = vunpack.c.h.b16 %v7621
        %v8096 = vunpack.c.l.b16 %v7622
        %v8097 = vunpack.c.h.b16 %v7622
        %v8098 = vunpack.c.l.b16 %v7623
        %v8099 = vunpack.c.h.b16 %v7623
        %v8100 = vunpack.c.l.b16 %v7624
        %v8101 = vunpack.c.l.b16 %v7625
        %v8102 = vunpack.c.h.b16 %v7625
        %v8103 = vunpack.c.l.b16 %v7626
        %v8104 = vunpack.c.h.b16 %v7626
        %v8105 = vunpack.c.l.b16 %v7627
        %v8106 = vunpack.c.h.b16 %v7627
        %v8107 = vunpack.c.l.b16 %v7628
        %v8108 = vunpack.c.h.b16 %v7628
        %v8109 = vunpack.c.l.b16 %v7629
        %v8110 = vunpack.c.l.b16 %v7630
        %v8111 = vunpack.c.h.b16 %v7630
        %v8112 = vunpack.c.l.b16 %v7631
        %v8113 = vunpack.c.h.b16 %v7631
        %v8114 = vunpack.c.l.b16 %v7632
        %v8115 = vunpack.c.h.b16 %v7632
        %v8116 = vunpack.c.l.b16 %v7633
        %v8117 = vunpack.c.h.b16 %v7633
        %v8118 = vunpack.c.l.b16 %v7634
        %v8119 = vunpack.c.l.b16 %v7635
        %v8120 = vunpack.c.h.b16 %v7635
        %v8121 = vunpack.c.l.b16 %v7636
        %v8122 = vunpack.c.h.b16 %v7636
        %v8123 = vunpack.c.l.b16 %v7637
        %v8124 = vunpack.c.h.b16 %v7637
        %v8125 = vunpack.c.l.b16 %v7638
        %v8126 = vunpack.c.h.b16 %v7638
        %v8127 = vunpack.c.l.b16 %v7639
        %v8128 = vunpack.c.l.b16 %v7640
        %v8129 = vunpack.c.h.b16 %v7640
        %v8130 = vunpack.c.l.b16 %v7641
        %v8131 = vunpack.c.h.b16 %v7641
        %v8132 = vunpack.c.l.b16 %v7642
        %v8133 = vunpack.c.h.b16 %v7642
        %v8134 = vunpack.c.l.b16 %v7643
        %v8135 = vunpack.c.h.b16 %v7643
        %v8136 = vunpack.c.l.b16 %v7644
        %v8137 = vunpack.c.l.b16 %v7645
        %v8138 = vunpack.c.h.b16 %v7645
        %v8139 = vunpack.c.l.b16 %v7646
        %v8140 = vunpack.c.h.b16 %v7646
        %v8141 = vunpack.c.l.b16 %v7647
        %v8142 = vunpack.c.h.b16 %v7647
        %v8143 = vunpack.c.l.b16 %v7648
        %v8144 = vunpack.c.h.b16 %v7648
        %v8145 = vunpack.c.l.b16 %v7649
        %v8146 = vunpack.c.l.b16 %v7650
        %v8147 = vunpack.c.h.b16 %v7650
        %v8148 = vunpack.c.l.b16 %v7651
        %v8149 = vunpack.c.h.b16 %v7651
        %v8150 = vunpack.c.l.b16 %v7652
        %v8151 = vunpack.c.h.b16 %v7652
        %v8152 = vunpack.c.l.b16 %v7653
        %v8153 = vunpack.c.h.b16 %v7653
        %v8154 = vunpack.c.l.b16 %v7654
        %v8155 = vunpack.c.l.b16 %v7655
        %v8156 = vunpack.c.h.b16 %v7655
        %v8157 = vunpack.c.l.b16 %v7656
        %v8158 = vunpack.c.h.b16 %v7656
        %v8159 = vunpack.c.l.b16 %v7657
        %v8160 = vunpack.c.h.b16 %v7657
        %v8161 = vunpack.c.l.b16 %v7658
        %v8162 = vunpack.c.h.b16 %v7658
        %v8163 = vunpack.c.l.b16 %v7659
        %v8164 = vunpack.c.l.b16 %v7660
        %v8165 = vunpack.c.h.b16 %v7660
        %v8166 = vunpack.c.l.b16 %v7661
        %v8167 = vunpack.c.h.b16 %v7661
        %v8168 = vunpack.c.l.b16 %v7662
        %v8169 = vunpack.c.h.b16 %v7662
        %v8170 = vunpack.c.l.b16 %v7663
        %v8171 = vunpack.c.h.b16 %v7663
        %v8172 = vunpack.c.l.b16 %v7664
        %v8173 = vunpack.c.l.b16 %v7665
        %v8174 = vunpack.c.h.b16 %v7665
        %v8175 = vunpack.c.l.b16 %v7666
        %v8176 = vunpack.c.h.b16 %v7666
        %v8177 = vunpack.c.l.b16 %v7667
        %v8178 = vunpack.c.h.b16 %v7667
        %v8179 = vunpack.c.l.b16 %v7668
        %v8180 = vunpack.c.h.b16 %v7668
        %v8181 = vunpack.c.l.b16 %v7669
        %v8182 = vunpack.c.l.b16 %v7670
        %v8183 = vunpack.c.h.b16 %v7670
        %v8184 = vunpack.c.l.b16 %v7671
        %v8185 = vunpack.c.h.b16 %v7671
        %v8186 = vunpack.c.l.b16 %v7672
        %v8187 = vunpack.c.h.b16 %v7672
        %v8188 = vunpack.c.l.b16 %v7673
        %v8189 = vunpack.c.h.b16 %v7673
        %v8190 = vunpack.c.l.b16 %v7674
        %v8191 = vunpack.c.l.b16 %v7675
        %v8192 = vunpack.c.h.b16 %v7675
        %v8193 = vunpack.c.l.b16 %v7676
        %v8194 = vunpack.c.h.b16 %v7676
        %v8195 = vunpack.c.l.b16 %v7677
        %v8196 = vunpack.c.h.b16 %v7677
        %v8197 = vunpack.c.l.b16 %v7678
        %v8198 = vunpack.c.h.b16 %v7678
        %v8199 = vunpack.c.l.b16 %v7679
        %v8200 = vunpack.c.l.b16 %v7680
        %v8201 = vunpack.c.h.b16 %v7680
        %v8202 = vunpack.c.l.b16 %v7681
        %v8203 = vunpack.c.h.b16 %v7681
        %v8204 = vunpack.c.l.b16 %v7682
        %v8205 = vunpack.c.h.b16 %v7682
        %v8206 = vunpack.c.l.b16 %v7683
        %v8207 = vunpack.c.h.b16 %v7683
        %v8208 = vunpack.c.l.b16 %v7684
        %v8209 = vunpack.c.l.b16 %v7685
        %v8210 = vunpack.c.h.b16 %v7685
        %v8211 = vunpack.c.l.b16 %v7686
        %v8212 = vunpack.c.h.b16 %v7686
        %v8213 = vunpack.c.l.b16 %v7687
        %v8214 = vunpack.c.h.b16 %v7687
        %v8215 = vunpack.c.l.b16 %v7688
        %v8216 = vunpack.c.h.b16 %v7688
        %v8217 = vunpack.c.l.b16 %v7689
        %v8218 = vunpack.c.l.b16 %v7690
        %v8219 = vunpack.c.h.b16 %v7690
        %v8220 = vunpack.c.l.b16 %v7691
        %v8221 = vunpack.c.h.b16 %v7691
        %v8222 = vunpack.c.l.b16 %v7692
        %v8223 = vunpack.c.h.b16 %v7692
        %v8224 = vunpack.c.l.b16 %v7693
        %v8225 = vunpack.c.h.b16 %v7693
        %v8226 = vunpack.c.l.b16 %v7694
        %v8227 = vunpack.c.l.b16 %v7695
        %v8228 = vunpack.c.h.b16 %v7695
        %v8229 = vunpack.c.l.b16 %v7696
        %v8230 = vunpack.c.h.b16 %v7696
        %v8231 = vunpack.c.l.b16 %v7697
        %v8232 = vunpack.c.h.b16 %v7697
        %v8233 = vunpack.c.l.b16 %v7698
        %v8234 = vunpack.c.h.b16 %v7698
        %v8235 = vunpack.c.l.b16 %v7699
        %v8236 = vunpack.c.l.b16 %v7700
        %v8237 = vunpack.c.h.b16 %v7700
        %v8238 = vunpack.c.l.b16 %v7701
        %v8239 = vunpack.c.h.b16 %v7701
        %v8240 = vunpack.c.l.b16 %v7702
        %v8241 = vunpack.c.h.b16 %v7702
        %v8242 = vunpack.c.l.b16 %v7703
        %v8243 = vunpack.c.h.b16 %v7703
        %v8244 = vunpack.c.l.b16 %v7704
        %v8245 = vunpack.c.l.b16 %v7705
        %v8246 = vunpack.c.h.b16 %v7705
        %v8247 = vunpack.c.l.b16 %v7706
        %v8248 = vunpack.c.h.b16 %v7706
        %v8249 = vunpack.c.l.b16 %v7707
        %v8250 = vunpack.c.h.b16 %v7707
        %v8251 = vunpack.c.l.b16 %v7708
        %v8252 = vunpack.c.h.b16 %v7708
        %v8253 = vunpack.c.l.b16 %v7709
        %v8254 = vunpack.c.l.b16 %v7710
        %v8255 = vunpack.c.h.b16 %v7710
        %v8256 = vunpack.c.l.b16 %v7711
        %v8257 = vunpack.c.h.b16 %v7711
        %v8258 = vunpack.c.l.b16 %v7712
        %v8259 = vunpack.c.h.b16 %v7712
        %v8260 = vunpack.c.l.b16 %v7713
        %v8261 = vunpack.c.h.b16 %v7713
        %v8262 = vunpack.c.l.b16 %v7714
        %v8263 = vunpack.c.l.b16 %v7715
        %v8264 = vunpack.c.h.b16 %v7715
        %v8265 = vunpack.c.l.b16 %v7716
        %v8266 = vunpack.c.h.b16 %v7716
        %v8267 = vunpack.c.l.b16 %v7717
        %v8268 = vunpack.c.h.b16 %v7717
        %v8269 = vunpack.c.l.b16 %v7718
        %v8270 = vunpack.c.h.b16 %v7718
        %v8271 = vunpack.c.l.b16 %v7719
        %v8272 = vunpack.c.l.b16 %v7720
        %v8273 = vunpack.c.h.b16 %v7720
        %v8274 = vunpack.c.l.b16 %v7721
        %v8275 = vunpack.c.h.b16 %v7721
        %v8276 = vunpack.c.l.b16 %v7722
        %v8277 = vunpack.c.h.b16 %v7722
        %v8278 = vunpack.c.l.b16 %v7723
        %v8279 = vunpack.c.h.b16 %v7723
        %v8280 = vunpack.c.l.b16 %v7724
        %v8281 = vunpack.c.l.b16 %v7725
        %v8282 = vunpack.c.h.b16 %v7725
        %v8283 = vunpack.c.l.b16 %v7726
        %v8284 = vunpack.c.h.b16 %v7726
        %v8285 = vunpack.c.l.b16 %v7727
        %v8286 = vunpack.c.h.b16 %v7727
        %v8287 = vunpack.c.l.b16 %v7728
        %v8288 = vunpack.c.h.b16 %v7728
        %v8289 = vunpack.c.l.b16 %v7729
        %v8290 = vunpack.c.l.b16 %v7730
        %v8291 = vunpack.c.h.b16 %v7730
        %v8292 = vunpack.c.l.b16 %v7731
        %v8293 = vunpack.c.h.b16 %v7731
        %v8294 = vunpack.c.l.b16 %v7732
        %v8295 = vunpack.c.h.b16 %v7732
        %v8296 = vunpack.c.l.b16 %v7733
        %v8297 = vunpack.c.h.b16 %v7733
        %v8298 = vunpack.c.l.b16 %v7734
        %v8299 = vunpack.c.l.b16 %v7735
        %v8300 = vunpack.c.h.b16 %v7735
        %v8301 = vunpack.c.l.b16 %v7736
        %v8302 = vunpack.c.h.b16 %v7736
        %v8303 = vunpack.c.l.b16 %v7737
        %v8304 = vunpack.c.h.b16 %v7737
        %v8305 = vunpack.c.l.b16 %v7738
        %v8306 = vunpack.c.h.b16 %v7738
        %v8307 = vunpack.c.l.b16 %v7739
        %v8308 = vunpack.c.l.b16 %v7740
        %v8309 = vunpack.c.h.b16 %v7740
        %v8310 = vunpack.c.l.b16 %v7741
        %v8311 = vunpack.c.h.b16 %v7741
        %v8312 = vunpack.c.l.b16 %v7742
        %v8313 = vunpack.c.h.b16 %v7742
        %v8314 = vunpack.c.l.b16 %v7743
        %v8315 = vunpack.c.h.b16 %v7743
        %v8316 = vunpack.c.l.b16 %v7744
        %v8317 = vunpack.c.l.b16 %v7745
        %v8318 = vunpack.c.h.b16 %v7745
        %v8319 = vunpack.c.l.b16 %v7746
        %v8320 = vunpack.c.h.b16 %v7746
        %v8321 = vunpack.c.l.b16 %v7747
        %v8322 = vunpack.c.h.b16 %v7747
        %v8323 = vunpack.c.l.b16 %v7748
        %v8324 = vunpack.c.h.b16 %v7748
        %v8325 = vunpack.c.l.b16 %v7749
        %v8326 = vunpack.c.l.b16 %v7750
        %v8327 = vunpack.c.h.b16 %v7750
        %v8328 = vunpack.c.l.b16 %v7751
        %v8329 = vunpack.c.h.b16 %v7751
        %v8330 = vunpack.c.l.b16 %v7752
        %v8331 = vunpack.c.h.b16 %v7752
        %v8332 = vunpack.c.l.b16 %v7753
        %v8333 = vunpack.c.h.b16 %v7753
        %v8334 = vunpack.c.l.b16 %v7754
        %v8335 = vunpack.c.l.b16 %v7755
        %v8336 = vunpack.c.h.b16 %v7755
        %v8337 = vunpack.c.l.b16 %v7756
        %v8338 = vunpack.c.h.b16 %v7756
        %v8339 = vunpack.c.l.b16 %v7757
        %v8340 = vunpack.c.h.b16 %v7757
        %v8341 = vunpack.c.l.b16 %v7758
        %v8342 = vunpack.c.h.b16 %v7758
        %v8343 = vunpack.c.l.b16 %v7759
        %v8344 = vunpack.c.l.b16 %v7760
        %v8345 = vunpack.c.h.b16 %v7760
        %v8346 = vunpack.c.l.b16 %v7761
        %v8347 = vunpack.c.h.b16 %v7761
        %v8348 = vunpack.c.l.b16 %v7762
        %v8349 = vunpack.c.h.b16 %v7762
        %v8350 = vunpack.c.l.b16 %v7763
        %v8351 = vunpack.c.h.b16 %v7763
        %v8352 = vunpack.c.l.b16 %v7764
        %v8353 = vunpack.c.l.b16 %v7765
        %v8354 = vunpack.c.h.b16 %v7765
        %v8355 = vunpack.c.l.b16 %v7766
        %v8356 = vunpack.c.h.b16 %v7766
        %v8357 = vunpack.c.l.b16 %v7767
        %v8358 = vunpack.c.h.b16 %v7767
        %v8359 = vunpack.c.l.b16 %v7768
        %v8360 = vunpack.c.h.b16 %v7768
        %v8361 = vunpack.c.l.b16 %v7769
        %v8362 = vpack.c.b16 %v8083, %v8074
        %v8363 = vpack.c.b16 %v8084, %v8075
        %v8364 = vpack.c.b16 %v8085, %v8076
        %v8365 = vpack.c.b16 %v8086, %v8077
        %v8366 = vpack.c.b16 %v8087, %v8078
        %v8367 = vpack.c.b16 %v8088, %v8079
        %v8368 = vpack.c.b16 %v8089, %v8080
        %v8369 = vpack.c.b16 %v8090, %v8081
        %v8370 = vpack.c.b16 %v8091, %v8082
        %v8371 = vpack.c.b16 %v8101, %v8092
        %v8372 = vpack.c.b16 %v8102, %v8093
        %v8373 = vpack.c.b16 %v8103, %v8094
        %v8374 = vpack.c.b16 %v8104, %v8095
        %v8375 = vpack.c.b16 %v8105, %v8096
        %v8376 = vpack.c.b16 %v8106, %v8097
        %v8377 = vpack.c.b16 %v8107, %v8098
        %v8378 = vpack.c.b16 %v8108, %v8099
        %v8379 = vpack.c.b16 %v8109, %v8100
        %v8380 = vpack.c.b16 %v8119, %v8110
        %v8381 = vpack.c.b16 %v8120, %v8111
        %v8382 = vpack.c.b16 %v8121, %v8112
        %v8383 = vpack.c.b16 %v8122, %v8113
        %v8384 = vpack.c.b16 %v8123, %v8114
        %v8385 = vpack.c.b16 %v8124, %v8115
        %v8386 = vpack.c.b16 %v8125, %v8116
        %v8387 = vpack.c.b16 %v8126, %v8117
        %v8388 = vpack.c.b16 %v8127, %v8118
        %v8389 = vpack.c.b16 %v8137, %v8128
        %v8390 = vpack.c.b16 %v8138, %v8129
        %v8391 = vpack.c.b16 %v8139, %v8130
        %v8392 = vpack.c.b16 %v8140, %v8131
        %v8393 = vpack.c.b16 %v8141, %v8132
        %v8394 = vpack.c.b16 %v8142, %v8133
        %v8395 = vpack.c.b16 %v8143, %v8134
        %v8396 = vpack.c.b16 %v8144, %v8135
        %v8397 = vpack.c.b16 %v8145, %v8136
        %v8398 = vpack.c.b16 %v8155, %v8146
        %v8399 = vpack.c.b16 %v8156, %v8147
        %v8400 = vpack.c.b16 %v8157, %v8148
        %v8401 = vpack.c.b16 %v8158, %v8149
        %v8402 = vpack.c.b16 %v8159, %v8150
        %v8403 = vpack.c.b16 %v8160, %v8151
        %v8404 = vpack.c.b16 %v8161, %v8152
        %v8405 = vpack.c.b16 %v8162, %v8153
        %v8406 = vpack.c.b16 %v8163, %v8154
        %v8407 = vpack.c.b16 %v8173, %v8164
        %v8408 = vpack.c.b16 %v8174, %v8165
        %v8409 = vpack.c.b16 %v8175, %v8166
        %v8410 = vpack.c.b16 %v8176, %v8167
        %v8411 = vpack.c.b16 %v8177, %v8168
        %v8412 = vpack.c.b16 %v8178, %v8169
        %v8413 = vpack.c.b16 %v8179, %v8170
        %v8414 = vpack.c.b16 %v8180, %v8171
        %v8415 = vpack.c.b16 %v8181, %v8172
        %v8416 = vpack.c.b16 %v8191, %v8182
        %v8417 = vpack.c.b16 %v8192, %v8183
        %v8418 = vpack.c.b16 %v8193, %v8184
        %v8419 = vpack.c.b16 %v8194, %v8185
        %v8420 = vpack.c.b16 %v8195, %v8186
        %v8421 = vpack.c.b16 %v8196, %v8187
        %v8422 = vpack.c.b16 %v8197, %v8188
        %v8423 = vpack.c.b16 %v8198, %v8189
        %v8424 = vpack.c.b16 %v8199, %v8190
        %v8425 = vpack.c.b16 %v8209, %v8200
        %v8426 = vpack.c.b16 %v8210, %v8201
        %v8427 = vpack.c.b16 %v8211, %v8202
        %v8428 = vpack.c.b16 %v8212, %v8203
        %v8429 = vpack.c.b16 %v8213, %v8204
        %v8430 = vpack.c.b16 %v8214, %v8205
        %v8431 = vpack.c.b16 %v8215, %v8206
        %v8432 = vpack.c.b16 %v8216, %v8207
        %v8433 = vpack.c.b16 %v8217, %v8208
        %v8434 = vpack.c.b16 %v8227, %v8218
        %v8435 = vpack.c.b16 %v8228, %v8219
        %v8436 = vpack.c.b16 %v8229, %v8220
        %v8437 = vpack.c.b16 %v8230, %v8221
        %v8438 = vpack.c.b16 %v8231, %v8222
        %v8439 = vpack.c.b16 %v8232, %v8223
        %v8440 = vpack.c.b16 %v8233, %v8224
        %v8441 = vpack.c.b16 %v8234, %v8225
        %v8442 = vpack.c.b16 %v8235, %v8226
        %v8443 = vpack.c.b16 %v8245, %v8236
        %v8444 = vpack.c.b16 %v8246, %v8237
        %v8445 = vpack.c.b16 %v8247, %v8238
        %v8446 = vpack.c.b16 %v8248, %v8239
        %v8447 = vpack.c.b16 %v8249, %v8240
        %v8448 = vpack.c.b16 %v8250, %v8241
        %v8449 = vpack.c.b16 %v8251, %v8242
        %v8450 = vpack.c.b16 %v8252, %v8243
        %v8451 = vpack.c.b16 %v8253, %v8244
        %v8452 = vpack.c.b16 %v8263, %v8254
        %v8453 = vpack.c.b16 %v8264, %v8255
        %v8454 = vpack.c.b16 %v8265, %v8256
        %v8455 = vpack.c.b16 %v8266, %v8257
        %v8456 = vpack.c.b16 %v8267, %v8258
        %v8457 = vpack.c.b16 %v8268, %v8259
        %v8458 = vpack.c.b16 %v8269, %v8260
        %v8459 = vpack.c.b16 %v8270, %v8261
        %v8460 = vpack.c.b16 %v8271, %v8262
        %v8461 = vpack.c.b16 %v8281, %v8272
        %v8462 = vpack.c.b16 %v8282, %v8273
        %v8463 = vpack.c.b16 %v8283, %v8274
        %v8464 = vpack.c.b16 %v8284, %v8275
        %v8465 = vpack.c.b16 %v8285, %v8276
        %v8466 = vpack.c.b16 %v8286, %v8277
        %v8467 = vpack.c.b16 %v8287, %v8278
        %v8468 = vpack.c.b16 %v8288, %v8279
        %v8469 = vpack.c.b16 %v8289, %v8280
        %v8470 = vpack.c.b16 %v8299, %v8290
        %v8471 = vpack.c.b16 %v8300, %v8291
        %v8472 = vpack.c.b16 %v8301, %v8292
        %v8473 = vpack.c.b16 %v8302, %v8293
        %v8474 = vpack.c.b16 %v8303, %v8294
        %v8475 = vpack.c.b16 %v8304, %v8295
        %v8476 = vpack.c.b16 %v8305, %v8296
        %v8477 = vpack.c.b16 %v8306, %v8297
        %v8478 = vpack.c.b16 %v8307, %v8298
        %v8479 = vpack.c.b16 %v8317, %v8308
        %v8480 = vpack.c.b16 %v8318, %v8309
        %v8481 = vpack.c.b16 %v8319, %v8310
        %v8482 = vpack.c.b16 %v8320, %v8311
        %v8483 = vpack.c.b16 %v8321, %v8312
        %v8484 = vpack.c.b16 %v8322, %v8313
        %v8485 = vpack.c.b16 %v8323, %v8314
        %v8486 = vpack.c.b16 %v8324, %v8315
        %v8487 = vpack.c.b16 %v8325, %v8316
        %v8488 = vpack.c.b16 %v8335, %v8326
        %v8489 = vpack.c.b16 %v8336, %v8327
        %v8490 = vpack.c.b16 %v8337, %v8328
        %v8491 = vpack.c.b16 %v8338, %v8329
        %v8492 = vpack.c.b16 %v8339, %v8330
        %v8493 = vpack.c.b16 %v8340, %v8331
        %v8494 = vpack.c.b16 %v8341, %v8332
        %v8495 = vpack.c.b16 %v8342, %v8333
        %v8496 = vpack.c.b16 %v8343, %v8334
        %v8497 = vpack.c.b16 %v8353, %v8344
        %v8498 = vpack.c.b16 %v8354, %v8345
        %v8499 = vpack.c.b16 %v8355, %v8346
        %v8500 = vpack.c.b16 %v8356, %v8347
        %v8501 = vpack.c.b16 %v8357, %v8348
        %v8502 = vpack.c.b16 %v8358, %v8349
        %v8503 = vpack.c.b16 %v8359, %v8350
        %v8504 = vpack.c.b16 %v8360, %v8351
        %v8505 = vpack.c.b16 %v8361, %v8352
        %v8794 = vunpack.c.l.b16 %v7770
        %v8795 = vunpack.c.l.b16 %v7771
        %v8796 = vunpack.c.l.b16 %v7772
        %v8797 = vunpack.c.l.b16 %v7773
        %v8798 = vunpack.c.l.b16 %v7774
        %v8799 = vunpack.c.l.b16 %v7775
        %v8800 = vunpack.c.l.b16 %v7776
        %v8801 = vunpack.c.l.b16 %v7777
        %v8802 = vunpack.c.l.b16 %v7778
        %v8803 = vunpack.c.l.b16 %v7779
        %v8804 = vunpack.c.l.b16 %v7780
        %v8805 = vunpack.c.l.b16 %v7781
        %v8806 = vunpack.c.l.b16 %v7782
        %v8807 = vunpack.c.l.b16 %v7783
        %v8808 = vunpack.c.l.b16 %v7784
        %v8809 = vunpack.c.l.b16 %v7785
        %v8810 = vunpack.c.l.b16 %v7786
        %v8811 = vunpack.c.l.b16 %v7787
        %v8812 = vunpack.c.l.b16 %v7788
        %v8813 = vunpack.c.l.b16 %v7789
        %v8814 = vunpack.c.l.b16 %v7790
        %v8815 = vunpack.c.l.b16 %v7791
        %v8816 = vunpack.c.l.b16 %v7792
        %v8817 = vunpack.c.l.b16 %v7793
        %v8818 = vunpack.c.l.b16 %v7794
        %v8819 = vunpack.c.l.b16 %v7795
        %v8820 = vunpack.c.l.b16 %v7796
        %v8821 = vunpack.c.l.b16 %v7797
        %v8822 = vunpack.c.l.b16 %v7798
        %v8823 = vunpack.c.l.b16 %v7799
        %v8824 = vunpack.c.l.b16 %v7800
        %v8825 = vunpack.c.l.b16 %v7801
        %v8826 = vunpack.c.l.b16 %v7802
        %v8827 = vunpack.c.l.b16 %v7803
        %v8828 = vunpack.c.l.b16 %v7804
        %v8829 = vunpack.c.l.b16 %v7805
        %v8830 = vunpack.c.l.b16 %v7806
        %v8831 = vunpack.c.l.b16 %v7807
        %v8832 = vunpack.c.l.b16 %v7808
        %v8833 = vunpack.c.l.b16 %v7809
        %v8834 = vunpack.c.l.b16 %v7810
        %v8835 = vunpack.c.l.b16 %v7811
        %v8836 = vunpack.c.l.b16 %v7812
        %v8837 = vunpack.c.l.b16 %v7813
        %v8838 = vunpack.c.l.b16 %v7814
        %v8839 = vunpack.c.l.b16 %v7815
        %v8840 = vunpack.c.l.b16 %v7816
        %v8841 = vunpack.c.l.b16 %v7817
        %v8842 = vunpack.c.l.b16 %v7818
        %v8843 = vunpack.c.l.b16 %v7819
        %v8844 = vunpack.c.l.b16 %v7820
        %v8845 = vunpack.c.l.b16 %v7821
        %v8846 = vunpack.c.l.b16 %v7822
        %v8847 = vunpack.c.l.b16 %v7823
        %v8848 = vunpack.c.l.b16 %v7824
        %v8849 = vunpack.c.l.b16 %v7825
        %v8850 = vunpack.c.l.b16 %v7826
        %v8851 = vunpack.c.l.b16 %v7827
        %v8852 = vunpack.c.l.b16 %v7828
        %v8853 = vunpack.c.l.b16 %v7829
        %v8854 = vunpack.c.l.b16 %v7830
        %v8855 = vunpack.c.l.b16 %v7831
        %v8856 = vunpack.c.l.b16 %v7832
        %v8857 = vunpack.c.l.b16 %v7833
        %v8858 = vunpack.c.l.b16 %v7834
        %v8859 = vunpack.c.l.b16 %v7835
        %v8860 = vunpack.c.l.b16 %v7836
        %v8861 = vunpack.c.l.b16 %v7837
        %v8862 = vunpack.c.l.b16 %v7838
        %v8863 = vunpack.c.l.b16 %v7839
        %v8864 = vunpack.c.l.b16 %v7840
        %v8865 = vunpack.c.l.b16 %v7841
        %v8866 = vunpack.c.l.b16 %v7842
        %v8867 = vunpack.c.l.b16 %v7843
        %v8868 = vunpack.c.l.b16 %v7844
        %v8869 = vunpack.c.l.b16 %v7845
        %v8870 = vunpack.c.l.b16 %v7846
        %v8871 = vunpack.c.l.b16 %v7847
        %v8872 = vunpack.c.l.b16 %v7848
        %v8873 = vunpack.c.l.b16 %v7849
        %v8874 = vunpack.c.l.b16 %v7850
        %v8875 = vunpack.c.l.b16 %v7851
        %v8876 = vunpack.c.l.b16 %v7852
        %v8877 = vunpack.c.l.b16 %v7853
        %v8878 = vunpack.c.l.b16 %v7854
        %v8879 = vunpack.c.l.b16 %v7855
        %v8880 = vunpack.c.l.b16 %v7856
        %v8881 = vunpack.c.l.b16 %v7857
        %v8882 = vunpack.c.l.b16 %v7858
        %v8883 = vunpack.c.l.b16 %v7859
        %v8884 = vunpack.c.l.b16 %v7860
        %v8885 = vunpack.c.l.b16 %v7861
        %v8886 = vunpack.c.l.b16 %v7862
        %v8887 = vunpack.c.l.b16 %v7863
        %v8888 = vunpack.c.l.b16 %v7864
        %v8889 = vunpack.c.l.b16 %v7865
        %v8890 = vunpack.c.l.b16 %v7866
        %v8891 = vunpack.c.l.b16 %v7867
        %v8892 = vunpack.c.l.b16 %v7868
        %v8893 = vunpack.c.l.b16 %v7869
        %v8894 = vunpack.c.l.b16 %v7870
        %v8895 = vunpack.c.l.b16 %v7871
        %v8896 = vunpack.c.l.b16 %v7872
        %v8897 = vunpack.c.l.b16 %v7873
        %v8898 = vunpack.c.l.b16 %v7874
        %v8899 = vunpack.c.l.b16 %v7875
        %v8900 = vunpack.c.l.b16 %v7876
        %v8901 = vunpack.c.l.b16 %v7877
        %v8902 = vunpack.c.l.b16 %v7878
        %v8903 = vunpack.c.l.b16 %v7879
        %v8904 = vunpack.c.l.b16 %v7880
        %v8905 = vunpack.c.l.b16 %v7881
        %v8906 = vunpack.c.l.b16 %v7882
        %v8907 = vunpack.c.l.b16 %v7883
        %v8908 = vunpack.c.l.b16 %v7884
        %v8909 = vunpack.c.l.b16 %v7885
        %v8910 = vunpack.c.l.b16 %v7886
        %v8911 = vunpack.c.l.b16 %v7887
        %v8912 = vunpack.c.l.b16 %v7888
        %v8913 = vunpack.c.l.b16 %v7889
        %v8914 = vunpack.c.l.b16 %v7890
        %v8915 = vunpack.c.l.b16 %v7891
        %v8916 = vunpack.c.l.b16 %v7892
        %v8917 = vunpack.c.l.b16 %v7893
        %v8918 = vunpack.c.l.b16 %v7894
        %v8919 = vunpack.c.l.b16 %v7895
        %v8920 = vunpack.c.l.b16 %v7896
        %v8921 = vunpack.c.l.b16 %v7897
        %v8922 = vunpack.c.l.b16 %v7898
        %v8923 = vunpack.c.l.b16 %v7899
        %v8924 = vunpack.c.l.b16 %v7900
        %v8925 = vunpack.c.l.b16 %v7901
        %v8926 = vunpack.c.l.b16 %v7902
        %v8927 = vunpack.c.l.b16 %v7903
        %v8928 = vunpack.c.l.b16 %v7904
        %v8929 = vunpack.c.l.b16 %v7905
        %v8930 = vunpack.c.l.b16 %v7906
        %v8931 = vunpack.c.l.b16 %v7907
        %v8932 = vunpack.c.l.b16 %v7908
        %v8933 = vunpack.c.l.b16 %v7909
        %v8934 = vunpack.c.l.b16 %v7910
        %v8935 = vunpack.c.l.b16 %v7911
        %v8936 = vunpack.c.l.b16 %v7912
        %v8937 = vunpack.c.l.b16 %v7913
        %v8938 = vpack.c.b16 %v8795, %v8794
        %v8939 = vpack.c.b16 %v8797, %v8796
        %v8940 = vpack.c.b16 %v8799, %v8798
        %v8941 = vpack.c.b16 %v8801, %v8800
        %v8942 = vpack.c.b16 %v8803, %v8802
        %v8943 = vpack.c.b16 %v8805, %v8804
        %v8944 = vpack.c.b16 %v8807, %v8806
        %v8945 = vpack.c.b16 %v8809, %v8808
        %v8946 = vpack.c.b16 %v8811, %v8810
        %v8947 = vpack.c.b16 %v8813, %v8812
        %v8948 = vpack.c.b16 %v8815, %v8814
        %v8949 = vpack.c.b16 %v8817, %v8816
        %v8950 = vpack.c.b16 %v8819, %v8818
        %v8951 = vpack.c.b16 %v8821, %v8820
        %v8952 = vpack.c.b16 %v8823, %v8822
        %v8953 = vpack.c.b16 %v8825, %v8824
        %v8954 = vpack.c.b16 %v8827, %v8826
        %v8955 = vpack.c.b16 %v8829, %v8828
        %v8956 = vpack.c.b16 %v8831, %v8830
        %v8957 = vpack.c.b16 %v8833, %v8832
        %v8958 = vpack.c.b16 %v8835, %v8834
        %v8959 = vpack.c.b16 %v8837, %v8836
        %v8960 = vpack.c.b16 %v8839, %v8838
        %v8961 = vpack.c.b16 %v8841, %v8840
        %v8962 = vpack.c.b16 %v8843, %v8842
        %v8963 = vpack.c.b16 %v8845, %v8844
        %v8964 = vpack.c.b16 %v8847, %v8846
        %v8965 = vpack.c.b16 %v8849, %v8848
        %v8966 = vpack.c.b16 %v8851, %v8850
        %v8967 = vpack.c.b16 %v8853, %v8852
        %v8968 = vpack.c.b16 %v8855, %v8854
        %v8969 = vpack.c.b16 %v8857, %v8856
        %v8970 = vpack.c.b16 %v8859, %v8858
        %v8971 = vpack.c.b16 %v8861, %v8860
        %v8972 = vpack.c.b16 %v8863, %v8862
        %v8973 = vpack.c.b16 %v8865, %v8864
        %v8974 = vpack.c.b16 %v8867, %v8866
        %v8975 = vpack.c.b16 %v8869, %v8868
        %v8976 = vpack.c.b16 %v8871, %v8870
        %v8977 = vpack.c.b16 %v8873, %v8872
        %v8978 = vpack.c.b16 %v8875, %v8874
        %v8979 = vpack.c.b16 %v8877, %v8876
        %v8980 = vpack.c.b16 %v8879, %v8878
        %v8981 = vpack.c.b16 %v8881, %v8880
        %v8982 = vpack.c.b16 %v8883, %v8882
        %v8983 = vpack.c.b16 %v8885, %v8884
        %v8984 = vpack.c.b16 %v8887, %v8886
        %v8985 = vpack.c.b16 %v8889, %v8888
        %v8986 = vpack.c.b16 %v8891, %v8890
        %v8987 = vpack.c.b16 %v8893, %v8892
        %v8988 = vpack.c.b16 %v8895, %v8894
        %v8989 = vpack.c.b16 %v8897, %v8896
        %v8990 = vpack.c.b16 %v8899, %v8898
        %v8991 = vpack.c.b16 %v8901, %v8900
        %v8992 = vpack.c.b16 %v8903, %v8902
        %v8993 = vpack.c.b16 %v8905, %v8904
        %v8994 = vpack.c.b16 %v8907, %v8906
        %v8995 = vpack.c.b16 %v8909, %v8908
        %v8996 = vpack.c.b16 %v8911, %v8910
        %v8997 = vpack.c.b16 %v8913, %v8912
        %v8998 = vpack.c.b16 %v8915, %v8914
        %v8999 = vpack.c.b16 %v8917, %v8916
        %v9000 = vpack.c.b16 %v8919, %v8918
        %v9001 = vpack.c.b16 %v8921, %v8920
        %v9002 = vpack.c.b16 %v8923, %v8922
        %v9003 = vpack.c.b16 %v8925, %v8924
        %v9004 = vpack.c.b16 %v8927, %v8926
        %v9005 = vpack.c.b16 %v8929, %v8928
        %v9006 = vpack.c.b16 %v8931, %v8930
        %v9007 = vpack.c.b16 %v8933, %v8932
        %v9008 = vpack.c.b16 %v8935, %v8934
        %v9009 = vpack.c.b16 %v8937, %v8936
        %9082 = vmatprep.subr.bf16.mxu0 0
        %9083 = vmatpush1.bf16.msra.mxu0 %v8945
        %9084 = vmatprep.subr.bf16.mxu0 0
        %9085 = vmatpush1.bf16.msra.mxu0 %v8944
        %9086 = vmatprep.subr.bf16.mxu0 0
        %9087 = vmatpush1.bf16.msra.mxu0 %v8943
        %9088 = vmatprep.subr.bf16.mxu0 0
        %9089 = vmatpush1.bf16.msra.mxu0 %v8942
        %9090 = vmatprep.subr.bf16.mxu0 0
        %9091 = vmatpush1.bf16.msra.mxu0 %v8941
        %9092 = vmatprep.subr.bf16.mxu0 0
        %9093 = vmatpush1.bf16.msra.mxu0 %v8940
        %9094 = vmatprep.subr.bf16.mxu0 0
        %9095 = vmatpush1.bf16.msra.mxu0 %v8939
        %9096 = vmatprep.subr.bf16.mxu0 0
        %9097 = vmatpush1.bf16.msra.mxu0 %v8938
        %9098 = vmatprep.subr.bf16.mxu0 0
        %9099 = vmatpush2.bf16.msra.mxu0 %v8953
        %9100 = vmatprep.subr.bf16.mxu0 0
        %9101 = vmatpush2.bf16.msra.mxu0 %v8952
        %9102 = vmatprep.subr.bf16.mxu0 0
        %9103 = vmatpush2.bf16.msra.mxu0 %v8951
        %9104 = vmatprep.subr.bf16.mxu0 0
        %9105 = vmatpush2.bf16.msra.mxu0 %v8950
        %9106 = vmatprep.subr.bf16.mxu0 0
        %9107 = vmatpush2.bf16.msra.mxu0 %v8949
        %9108 = vmatprep.subr.bf16.mxu0 0
        %9109 = vmatpush2.bf16.msra.mxu0 %v8948
        %9110 = vmatprep.subr.bf16.mxu0 0
        %9111 = vmatpush2.bf16.msra.mxu0 %v8947
        %9112 = vmatprep.subr.bf16.mxu0 0
        %9113 = vmatpush2.bf16.msra.mxu0 %v8946
        %9114 = vmatprep.mubr.bf16.mxu0 %v8363
        %9115 = vmatmul.mubr.bf16.gmra.mxu0 %v8362
        %v9116 = vpop.f32.mrf.mxu0
        %v9117 = vadd.f32 0.0, %v9116
        %v9118 = vpop.f32.mrf.mxu0
        %v9119 = vpop.f32.mrf.mxu0
        %v9120 = vadd.f32 0.0, %v9119
        %v9121 = vpop.f32.mrf.mxu0
        %9122 = vmatprep.mubr.bf16.mxu0 %v8372
        %9123 = vmatmul.mubr.bf16.gmra.mxu0 %v8371
        %v9124 = vpop.f32.mrf.mxu0
        %v9125 = vadd.f32 0.0, %v9124
        %v9126 = vpop.f32.mrf.mxu0
        %v9127 = vpop.f32.mrf.mxu0
        %v9128 = vadd.f32 0.0, %v9127
        %v9129 = vpop.f32.mrf.mxu0
        %9130 = vmatprep.mubr.bf16.mxu0 %v8381
        %9131 = vmatmul.mubr.bf16.gmra.mxu0 %v8380
        %v9132 = vpop.f32.mrf.mxu0
        %v9133 = vadd.f32 0.0, %v9132
        %v9134 = vpop.f32.mrf.mxu0
        %v9135 = vpop.f32.mrf.mxu0
        %v9136 = vadd.f32 0.0, %v9135
        %v9137 = vpop.f32.mrf.mxu0
        %9138 = vmatprep.mubr.bf16.mxu0 %v8390
        %9139 = vmatmul.mubr.bf16.gmra.mxu0 %v8389
        %v9140 = vpop.f32.mrf.mxu0
        %v9141 = vadd.f32 0.0, %v9140
        %v9142 = vpop.f32.mrf.mxu0
        %v9143 = vpop.f32.mrf.mxu0
        %v9144 = vadd.f32 0.0, %v9143
        %v9145 = vpop.f32.mrf.mxu0
        %9146 = vmatprep.mubr.bf16.mxu0 %v8399
        %9147 = vmatmul.mubr.bf16.gmra.mxu0 %v8398
        %v9148 = vpop.f32.mrf.mxu0
        %v9149 = vadd.f32 0.0, %v9148
        %v9150 = vpop.f32.mrf.mxu0
        %v9151 = vpop.f32.mrf.mxu0
        %v9152 = vadd.f32 0.0, %v9151
        %v9153 = vpop.f32.mrf.mxu0
        %9154 = vmatprep.mubr.bf16.mxu0 %v8408
        %9155 = vmatmul.mubr.bf16.gmra.mxu0 %v8407
        %v9156 = vpop.f32.mrf.mxu0
        %v9157 = vadd.f32 0.0, %v9156
        %v9158 = vpop.f32.mrf.mxu0
        %v9159 = vpop.f32.mrf.mxu0
        %v9160 = vadd.f32 0.0, %v9159
        %v9161 = vpop.f32.mrf.mxu0
        %9162 = vmatprep.mubr.bf16.mxu0 %v8417
        %9163 = vmatmul.mubr.bf16.gmra.mxu0 %v8416
        %v9164 = vpop.f32.mrf.mxu0
        %v9165 = vadd.f32 0.0, %v9164
        %v9166 = vpop.f32.mrf.mxu0
        %v9167 = vpop.f32.mrf.mxu0
        %v9168 = vadd.f32 0.0, %v9167
        %v9169 = vpop.f32.mrf.mxu0
        %9170 = vmatprep.mubr.bf16.mxu0 %v8426
        %9171 = vmatmul.mubr.bf16.gmra.mxu0 %v8425
        %v9172 = vpop.f32.mrf.mxu0
        %v9173 = vadd.f32 0.0, %v9172
        %v9174 = vpop.f32.mrf.mxu0
        %v9175 = vpop.f32.mrf.mxu0
        %v9176 = vadd.f32 0.0, %v9175
        %v9177 = vpop.f32.mrf.mxu0
        %9178 = vmatprep.mubr.bf16.mxu0 %v8435
        %9179 = vmatmul.mubr.bf16.gmra.mxu0 %v8434
        %v9180 = vpop.f32.mrf.mxu0
        %v9181 = vadd.f32 0.0, %v9180
        %v9182 = vpop.f32.mrf.mxu0
        %v9183 = vpop.f32.mrf.mxu0
        %v9184 = vadd.f32 0.0, %v9183
        %v9185 = vpop.f32.mrf.mxu0
        %9186 = vmatprep.mubr.bf16.mxu0 %v8444
        %9187 = vmatmul.mubr.bf16.gmra.mxu0 %v8443
        %v9188 = vpop.f32.mrf.mxu0
        %v9189 = vadd.f32 0.0, %v9188
        %v9190 = vpop.f32.mrf.mxu0
        %v9191 = vpop.f32.mrf.mxu0
        %v9192 = vadd.f32 0.0, %v9191
        %v9193 = vpop.f32.mrf.mxu0
        %9194 = vmatprep.mubr.bf16.mxu0 %v8453
        %9195 = vmatmul.mubr.bf16.gmra.mxu0 %v8452
        %v9196 = vpop.f32.mrf.mxu0
        %v9197 = vadd.f32 0.0, %v9196
        %v9198 = vpop.f32.mrf.mxu0
        %v9199 = vpop.f32.mrf.mxu0
        %v9200 = vadd.f32 0.0, %v9199
        %v9201 = vpop.f32.mrf.mxu0
        %9202 = vmatprep.mubr.bf16.mxu0 %v8462
        %9203 = vmatmul.mubr.bf16.gmra.mxu0 %v8461
        %v9204 = vpop.f32.mrf.mxu0
        %v9205 = vadd.f32 0.0, %v9204
        %v9206 = vpop.f32.mrf.mxu0
        %v9207 = vpop.f32.mrf.mxu0
        %v9208 = vadd.f32 0.0, %v9207
        %v9209 = vpop.f32.mrf.mxu0
        %9210 = vmatprep.mubr.bf16.mxu0 %v8471
        %9211 = vmatmul.mubr.bf16.gmra.mxu0 %v8470
        %v9212 = vpop.f32.mrf.mxu0
        %v9213 = vadd.f32 0.0, %v9212
        %v9214 = vpop.f32.mrf.mxu0
        %v9215 = vpop.f32.mrf.mxu0
        %v9216 = vadd.f32 0.0, %v9215
        %v9217 = vpop.f32.mrf.mxu0
        %9218 = vmatprep.mubr.bf16.mxu0 %v8480
        %9219 = vmatmul.mubr.bf16.gmra.mxu0 %v8479
        %v9220 = vpop.f32.mrf.mxu0
        %v9221 = vadd.f32 0.0, %v9220
        %v9222 = vpop.f32.mrf.mxu0
        %v9223 = vpop.f32.mrf.mxu0
        %v9224 = vadd.f32 0.0, %v9223
        %v9225 = vpop.f32.mrf.mxu0
        %9226 = vmatprep.mubr.bf16.mxu0 %v8489
        %9227 = vmatmul.mubr.bf16.gmra.mxu0 %v8488
        %v9228 = vpop.f32.mrf.mxu0
        %v9229 = vadd.f32 0.0, %v9228
        %v9230 = vpop.f32.mrf.mxu0
        %v9231 = vpop.f32.mrf.mxu0
        %v9232 = vadd.f32 0.0, %v9231
        %v9233 = vpop.f32.mrf.mxu0
        %9234 = vmatprep.mubr.bf16.mxu0 %v8498
        %9235 = vmatmul.mubr.bf16.gmra.mxu0 %v8497
        %v9236 = vpop.f32.mrf.mxu0
        %v9237 = vadd.f32 0.0, %v9236
        %v9238 = vpop.f32.mrf.mxu0
        %v9239 = vpop.f32.mrf.mxu0
        %v9240 = vadd.f32 0.0, %v9239
        %v9241 = vpop.f32.mrf.mxu0
        %9242 = vdwg.mxu0
        %9243 = vmatprep.subr.bf16.mxu0 0
        %9244 = vmatpush1.bf16.msra.mxu0 %v8961
        %9245 = vmatprep.subr.bf16.mxu0 0
        %9246 = vmatpush1.bf16.msra.mxu0 %v8960
        %9247 = vmatprep.subr.bf16.mxu0 0
        %9248 = vmatpush1.bf16.msra.mxu0 %v8959
        %9249 = vmatprep.subr.bf16.mxu0 0
        %9250 = vmatpush1.bf16.msra.mxu0 %v8958
        %9251 = vmatprep.subr.bf16.mxu0 0
        %9252 = vmatpush1.bf16.msra.mxu0 %v8957
        %9253 = vmatprep.subr.bf16.mxu0 0
        %9254 = vmatpush1.bf16.msra.mxu0 %v8956
        %9255 = vmatprep.subr.bf16.mxu0 0
        %9256 = vmatpush1.bf16.msra.mxu0 %v8955
        %9257 = vmatprep.subr.bf16.mxu0 0
        %9258 = vmatpush1.bf16.msra.mxu0 %v8954
        %9259 = vmatprep.subr.bf16.mxu0 0
        %9260 = vmatpush2.bf16.msra.mxu0 %v8969
        %9261 = vmatprep.subr.bf16.mxu0 0
        %9262 = vmatpush2.bf16.msra.mxu0 %v8968
        %9263 = vmatprep.subr.bf16.mxu0 0
        %9264 = vmatpush2.bf16.msra.mxu0 %v8967
        %9265 = vmatprep.subr.bf16.mxu0 0
        %9266 = vmatpush2.bf16.msra.mxu0 %v8966
        %9267 = vmatprep.subr.bf16.mxu0 0
        %9268 = vmatpush2.bf16.msra.mxu0 %v8965
        %9269 = vmatprep.subr.bf16.mxu0 0
        %9270 = vmatpush2.bf16.msra.mxu0 %v8964
        %9271 = vmatprep.subr.bf16.mxu0 0
        %9272 = vmatpush2.bf16.msra.mxu0 %v8963
        %9273 = vmatprep.subr.bf16.mxu0 0
        %9274 = vmatpush2.bf16.msra.mxu0 %v8962
        %9275 = vmatprep.mubr.bf16.mxu0 %v8365
        %9276 = vmatmul.mubr.bf16.gmra.mxu0 %v8364
        %v9277 = vpop.f32.mrf.mxu0
        %v9278 = vadd.f32 %v9117, %v9277
        %v9279 = vpop.f32.mrf.mxu0
        %v9280 = vpop.f32.mrf.mxu0
        %v9281 = vadd.f32 %v9120, %v9280
        %v9282 = vpop.f32.mrf.mxu0
        %9283 = vmatprep.mubr.bf16.mxu0 %v8374
        %9284 = vmatmul.mubr.bf16.gmra.mxu0 %v8373
        %v9285 = vpop.f32.mrf.mxu0
        %v9286 = vadd.f32 %v9125, %v9285
        %v9287 = vpop.f32.mrf.mxu0
        %v9288 = vpop.f32.mrf.mxu0
        %v9289 = vadd.f32 %v9128, %v9288
        %v9290 = vpop.f32.mrf.mxu0
        %9291 = vmatprep.mubr.bf16.mxu0 %v8383
        %9292 = vmatmul.mubr.bf16.gmra.mxu0 %v8382
        %v9293 = vpop.f32.mrf.mxu0
        %v9294 = vadd.f32 %v9133, %v9293
        %v9295 = vpop.f32.mrf.mxu0
        %v9296 = vpop.f32.mrf.mxu0
        %v9297 = vadd.f32 %v9136, %v9296
        %v9298 = vpop.f32.mrf.mxu0
        %9299 = vmatprep.mubr.bf16.mxu0 %v8392
        %9300 = vmatmul.mubr.bf16.gmra.mxu0 %v8391
        %v9301 = vpop.f32.mrf.mxu0
        %v9302 = vadd.f32 %v9141, %v9301
        %v9303 = vpop.f32.mrf.mxu0
        %v9304 = vpop.f32.mrf.mxu0
        %v9305 = vadd.f32 %v9144, %v9304
        %v9306 = vpop.f32.mrf.mxu0
        %9307 = vmatprep.mubr.bf16.mxu0 %v8401
        %9308 = vmatmul.mubr.bf16.gmra.mxu0 %v8400
        %v9309 = vpop.f32.mrf.mxu0
        %v9310 = vadd.f32 %v9149, %v9309
        %v9311 = vpop.f32.mrf.mxu0
        %v9312 = vpop.f32.mrf.mxu0
        %v9313 = vadd.f32 %v9152, %v9312
        %v9314 = vpop.f32.mrf.mxu0
        %9315 = vmatprep.mubr.bf16.mxu0 %v8410
        %9316 = vmatmul.mubr.bf16.gmra.mxu0 %v8409
        %v9317 = vpop.f32.mrf.mxu0
        %v9318 = vadd.f32 %v9157, %v9317
        %v9319 = vpop.f32.mrf.mxu0
        %v9320 = vpop.f32.mrf.mxu0
        %v9321 = vadd.f32 %v9160, %v9320
        %v9322 = vpop.f32.mrf.mxu0
        %9323 = vmatprep.mubr.bf16.mxu0 %v8419
        %9324 = vmatmul.mubr.bf16.gmra.mxu0 %v8418
        %v9325 = vpop.f32.mrf.mxu0
        %v9326 = vadd.f32 %v9165, %v9325
        %v9327 = vpop.f32.mrf.mxu0
        %v9328 = vpop.f32.mrf.mxu0
        %v9329 = vadd.f32 %v9168, %v9328
        %v9330 = vpop.f32.mrf.mxu0
        %9331 = vmatprep.mubr.bf16.mxu0 %v8428
        %9332 = vmatmul.mubr.bf16.gmra.mxu0 %v8427
        %v9333 = vpop.f32.mrf.mxu0
        %v9334 = vadd.f32 %v9173, %v9333
        %v9335 = vpop.f32.mrf.mxu0
        %v9336 = vpop.f32.mrf.mxu0
        %v9337 = vadd.f32 %v9176, %v9336
        %v9338 = vpop.f32.mrf.mxu0
        %9339 = vmatprep.mubr.bf16.mxu0 %v8437
        %9340 = vmatmul.mubr.bf16.gmra.mxu0 %v8436
        %v9341 = vpop.f32.mrf.mxu0
        %v9342 = vadd.f32 %v9181, %v9341
        %v9343 = vpop.f32.mrf.mxu0
        %v9344 = vpop.f32.mrf.mxu0
        %v9345 = vadd.f32 %v9184, %v9344
        %v9346 = vpop.f32.mrf.mxu0
        %9347 = vmatprep.mubr.bf16.mxu0 %v8446
        %9348 = vmatmul.mubr.bf16.gmra.mxu0 %v8445
        %v9349 = vpop.f32.mrf.mxu0
        %v9350 = vadd.f32 %v9189, %v9349
        %v9351 = vpop.f32.mrf.mxu0
        %v9352 = vpop.f32.mrf.mxu0
        %v9353 = vadd.f32 %v9192, %v9352
        %v9354 = vpop.f32.mrf.mxu0
        %9355 = vmatprep.mubr.bf16.mxu0 %v8455
        %9356 = vmatmul.mubr.bf16.gmra.mxu0 %v8454
        %v9357 = vpop.f32.mrf.mxu0
        %v9358 = vadd.f32 %v9197, %v9357
        %v9359 = vpop.f32.mrf.mxu0
        %v9360 = vpop.f32.mrf.mxu0
        %v9361 = vadd.f32 %v9200, %v9360
        %v9362 = vpop.f32.mrf.mxu0
        %9363 = vmatprep.mubr.bf16.mxu0 %v8464
        %9364 = vmatmul.mubr.bf16.gmra.mxu0 %v8463
        %v9365 = vpop.f32.mrf.mxu0
        %v9366 = vadd.f32 %v9205, %v9365
        %v9367 = vpop.f32.mrf.mxu0
        %v9368 = vpop.f32.mrf.mxu0
        %v9369 = vadd.f32 %v9208, %v9368
        %v9370 = vpop.f32.mrf.mxu0
        %9371 = vmatprep.mubr.bf16.mxu0 %v8473
        %9372 = vmatmul.mubr.bf16.gmra.mxu0 %v8472
        %v9373 = vpop.f32.mrf.mxu0
        %v9374 = vadd.f32 %v9213, %v9373
        %v9375 = vpop.f32.mrf.mxu0
        %v9376 = vpop.f32.mrf.mxu0
        %v9377 = vadd.f32 %v9216, %v9376
        %v9378 = vpop.f32.mrf.mxu0
        %9379 = vmatprep.mubr.bf16.mxu0 %v8482
        %9380 = vmatmul.mubr.bf16.gmra.mxu0 %v8481
        %v9381 = vpop.f32.mrf.mxu0
        %v9382 = vadd.f32 %v9221, %v9381
        %v9383 = vpop.f32.mrf.mxu0
        %v9384 = vpop.f32.mrf.mxu0
        %v9385 = vadd.f32 %v9224, %v9384
        %v9386 = vpop.f32.mrf.mxu0
        %9387 = vmatprep.mubr.bf16.mxu0 %v8491
        %9388 = vmatmul.mubr.bf16.gmra.mxu0 %v8490
        %v9389 = vpop.f32.mrf.mxu0
        %v9390 = vadd.f32 %v9229, %v9389
        %v9391 = vpop.f32.mrf.mxu0
        %v9392 = vpop.f32.mrf.mxu0
        %v9393 = vadd.f32 %v9232, %v9392
        %v9394 = vpop.f32.mrf.mxu0
        %9395 = vmatprep.mubr.bf16.mxu0 %v8500
        %9396 = vmatmul.mubr.bf16.gmra.mxu0 %v8499
        %v9397 = vpop.f32.mrf.mxu0
        %v9398 = vadd.f32 %v9237, %v9397
        %v9399 = vpop.f32.mrf.mxu0
        %v9400 = vpop.f32.mrf.mxu0
        %v9401 = vadd.f32 %v9240, %v9400
        %v9402 = vpop.f32.mrf.mxu0
        %9403 = vdwg.mxu0
        %9404 = vmatprep.subr.bf16.mxu0 0
        %9405 = vmatpush1.bf16.msra.mxu0 %v8977
        %9406 = vmatprep.subr.bf16.mxu0 0
        %9407 = vmatpush1.bf16.msra.mxu0 %v8976
        %9408 = vmatprep.subr.bf16.mxu0 0
        %9409 = vmatpush1.bf16.msra.mxu0 %v8975
        %9410 = vmatprep.subr.bf16.mxu0 0
        %9411 = vmatpush1.bf16.msra.mxu0 %v8974
        %9412 = vmatprep.subr.bf16.mxu0 0
        %9413 = vmatpush1.bf16.msra.mxu0 %v8973
        %9414 = vmatprep.subr.bf16.mxu0 0
        %9415 = vmatpush1.bf16.msra.mxu0 %v8972
        %9416 = vmatprep.subr.bf16.mxu0 0
        %9417 = vmatpush1.bf16.msra.mxu0 %v8971
        %9418 = vmatprep.subr.bf16.mxu0 0
        %9419 = vmatpush1.bf16.msra.mxu0 %v8970
        %9420 = vmatprep.subr.bf16.mxu0 0
        %9421 = vmatpush2.bf16.msra.mxu0 %v8985
        %9422 = vmatprep.subr.bf16.mxu0 0
        %9423 = vmatpush2.bf16.msra.mxu0 %v8984
        %9424 = vmatprep.subr.bf16.mxu0 0
        %9425 = vmatpush2.bf16.msra.mxu0 %v8983
        %9426 = vmatprep.subr.bf16.mxu0 0
        %9427 = vmatpush2.bf16.msra.mxu0 %v8982
        %9428 = vmatprep.subr.bf16.mxu0 0
        %9429 = vmatpush2.bf16.msra.mxu0 %v8981
        %9430 = vmatprep.subr.bf16.mxu0 0
        %9431 = vmatpush2.bf16.msra.mxu0 %v8980
        %9432 = vmatprep.subr.bf16.mxu0 0
        %9433 = vmatpush2.bf16.msra.mxu0 %v8979
        %9434 = vmatprep.subr.bf16.mxu0 0
        %9435 = vmatpush2.bf16.msra.mxu0 %v8978
        %9436 = vmatprep.mubr.bf16.mxu0 %v8367
        %9437 = vmatmul.mubr.bf16.gmra.mxu0 %v8366
        %v9438 = vpop.f32.mrf.mxu0
        %v9439 = vadd.f32 %v9278, %v9438
        %v9440 = vpop.f32.mrf.mxu0
        %v9441 = vpop.f32.mrf.mxu0
        %v9442 = vadd.f32 %v9281, %v9441
        %v9443 = vpop.f32.mrf.mxu0
        %9444 = vmatprep.mubr.bf16.mxu0 %v8376
        %9445 = vmatmul.mubr.bf16.gmra.mxu0 %v8375
        %v9446 = vpop.f32.mrf.mxu0
        %v9447 = vadd.f32 %v9286, %v9446
        %v9448 = vpop.f32.mrf.mxu0
        %v9449 = vpop.f32.mrf.mxu0
        %v9450 = vadd.f32 %v9289, %v9449
        %v9451 = vpop.f32.mrf.mxu0
        %9452 = vmatprep.mubr.bf16.mxu0 %v8385
        %9453 = vmatmul.mubr.bf16.gmra.mxu0 %v8384
        %v9454 = vpop.f32.mrf.mxu0
        %v9455 = vadd.f32 %v9294, %v9454
        %v9456 = vpop.f32.mrf.mxu0
        %v9457 = vpop.f32.mrf.mxu0
        %v9458 = vadd.f32 %v9297, %v9457
        %v9459 = vpop.f32.mrf.mxu0
        %9460 = vmatprep.mubr.bf16.mxu0 %v8394
        %9461 = vmatmul.mubr.bf16.gmra.mxu0 %v8393
        %v9462 = vpop.f32.mrf.mxu0
        %v9463 = vadd.f32 %v9302, %v9462
        %v9464 = vpop.f32.mrf.mxu0
        %v9465 = vpop.f32.mrf.mxu0
        %v9466 = vadd.f32 %v9305, %v9465
        %v9467 = vpop.f32.mrf.mxu0
        %9468 = vmatprep.mubr.bf16.mxu0 %v8403
        %9469 = vmatmul.mubr.bf16.gmra.mxu0 %v8402
        %v9470 = vpop.f32.mrf.mxu0
        %v9471 = vadd.f32 %v9310, %v9470
        %v9472 = vpop.f32.mrf.mxu0
        %v9473 = vpop.f32.mrf.mxu0
        %v9474 = vadd.f32 %v9313, %v9473
        %v9475 = vpop.f32.mrf.mxu0
        %9476 = vmatprep.mubr.bf16.mxu0 %v8412
        %9477 = vmatmul.mubr.bf16.gmra.mxu0 %v8411
        %v9478 = vpop.f32.mrf.mxu0
        %v9479 = vadd.f32 %v9318, %v9478
        %v9480 = vpop.f32.mrf.mxu0
        %v9481 = vpop.f32.mrf.mxu0
        %v9482 = vadd.f32 %v9321, %v9481
        %v9483 = vpop.f32.mrf.mxu0
        %9484 = vmatprep.mubr.bf16.mxu0 %v8421
        %9485 = vmatmul.mubr.bf16.gmra.mxu0 %v8420
        %v9486 = vpop.f32.mrf.mxu0
        %v9487 = vadd.f32 %v9326, %v9486
        %v9488 = vpop.f32.mrf.mxu0
        %v9489 = vpop.f32.mrf.mxu0
        %v9490 = vadd.f32 %v9329, %v9489
        %v9491 = vpop.f32.mrf.mxu0
        %9492 = vmatprep.mubr.bf16.mxu0 %v8430
        %9493 = vmatmul.mubr.bf16.gmra.mxu0 %v8429
        %v9494 = vpop.f32.mrf.mxu0
        %v9495 = vadd.f32 %v9334, %v9494
        %v9496 = vpop.f32.mrf.mxu0
        %v9497 = vpop.f32.mrf.mxu0
        %v9498 = vadd.f32 %v9337, %v9497
        %v9499 = vpop.f32.mrf.mxu0
        %9500 = vmatprep.mubr.bf16.mxu0 %v8439
        %9501 = vmatmul.mubr.bf16.gmra.mxu0 %v8438
        %v9502 = vpop.f32.mrf.mxu0
        %v9503 = vadd.f32 %v9342, %v9502
        %v9504 = vpop.f32.mrf.mxu0
        %v9505 = vpop.f32.mrf.mxu0
        %v9506 = vadd.f32 %v9345, %v9505
        %v9507 = vpop.f32.mrf.mxu0
        %9508 = vmatprep.mubr.bf16.mxu0 %v8448
        %9509 = vmatmul.mubr.bf16.gmra.mxu0 %v8447
        %v9510 = vpop.f32.mrf.mxu0
        %v9511 = vadd.f32 %v9350, %v9510
        %v9512 = vpop.f32.mrf.mxu0
        %v9513 = vpop.f32.mrf.mxu0
        %v9514 = vadd.f32 %v9353, %v9513
        %v9515 = vpop.f32.mrf.mxu0
        %9516 = vmatprep.mubr.bf16.mxu0 %v8457
        %9517 = vmatmul.mubr.bf16.gmra.mxu0 %v8456
        %v9518 = vpop.f32.mrf.mxu0
        %v9519 = vadd.f32 %v9358, %v9518
        %v9520 = vpop.f32.mrf.mxu0
        %v9521 = vpop.f32.mrf.mxu0
        %v9522 = vadd.f32 %v9361, %v9521
        %v9523 = vpop.f32.mrf.mxu0
        %9524 = vmatprep.mubr.bf16.mxu0 %v8466
        %9525 = vmatmul.mubr.bf16.gmra.mxu0 %v8465
        %v9526 = vpop.f32.mrf.mxu0
        %v9527 = vadd.f32 %v9366, %v9526
        %v9528 = vpop.f32.mrf.mxu0
        %v9529 = vpop.f32.mrf.mxu0
        %v9530 = vadd.f32 %v9369, %v9529
        %v9531 = vpop.f32.mrf.mxu0
        %9532 = vmatprep.mubr.bf16.mxu0 %v8475
        %9533 = vmatmul.mubr.bf16.gmra.mxu0 %v8474
        %v9534 = vpop.f32.mrf.mxu0
        %v9535 = vadd.f32 %v9374, %v9534
        %v9536 = vpop.f32.mrf.mxu0
        %v9537 = vpop.f32.mrf.mxu0
        %v9538 = vadd.f32 %v9377, %v9537
        %v9539 = vpop.f32.mrf.mxu0
        %9540 = vmatprep.mubr.bf16.mxu0 %v8484
        %9541 = vmatmul.mubr.bf16.gmra.mxu0 %v8483
        %v9542 = vpop.f32.mrf.mxu0
        %v9543 = vadd.f32 %v9382, %v9542
        %v9544 = vpop.f32.mrf.mxu0
        %v9545 = vpop.f32.mrf.mxu0
        %v9546 = vadd.f32 %v9385, %v9545
        %v9547 = vpop.f32.mrf.mxu0
        %9548 = vmatprep.mubr.bf16.mxu0 %v8493
        %9549 = vmatmul.mubr.bf16.gmra.mxu0 %v8492
        %v9550 = vpop.f32.mrf.mxu0
        %v9551 = vadd.f32 %v9390, %v9550
        %v9552 = vpop.f32.mrf.mxu0
        %v9553 = vpop.f32.mrf.mxu0
        %v9554 = vadd.f32 %v9393, %v9553
        %v9555 = vpop.f32.mrf.mxu0
        %9556 = vmatprep.mubr.bf16.mxu0 %v8502
        %9557 = vmatmul.mubr.bf16.gmra.mxu0 %v8501
        %v9558 = vpop.f32.mrf.mxu0
        %v9559 = vadd.f32 %v9398, %v9558
        %v9560 = vpop.f32.mrf.mxu0
        %v9561 = vpop.f32.mrf.mxu0
        %v9562 = vadd.f32 %v9401, %v9561
        %v9563 = vpop.f32.mrf.mxu0
        %9564 = vdwg.mxu0
        %9565 = vmatprep.subr.bf16.mxu0 0
        %9566 = vmatpush1.bf16.msra.mxu0 %v8993
        %9567 = vmatprep.subr.bf16.mxu0 0
        %9568 = vmatpush1.bf16.msra.mxu0 %v8992
        %9569 = vmatprep.subr.bf16.mxu0 0
        %9570 = vmatpush1.bf16.msra.mxu0 %v8991
        %9571 = vmatprep.subr.bf16.mxu0 0
        %9572 = vmatpush1.bf16.msra.mxu0 %v8990
        %9573 = vmatprep.subr.bf16.mxu0 0
        %9574 = vmatpush1.bf16.msra.mxu0 %v8989
        %9575 = vmatprep.subr.bf16.mxu0 0
        %9576 = vmatpush1.bf16.msra.mxu0 %v8988
        %9577 = vmatprep.subr.bf16.mxu0 0
        %9578 = vmatpush1.bf16.msra.mxu0 %v8987
        %9579 = vmatprep.subr.bf16.mxu0 0
        %9580 = vmatpush1.bf16.msra.mxu0 %v8986
        %9581 = vmatprep.subr.bf16.mxu0 0
        %9582 = vmatpush2.bf16.msra.mxu0 %v9001
        %9583 = vmatprep.subr.bf16.mxu0 0
        %9584 = vmatpush2.bf16.msra.mxu0 %v9000
        %9585 = vmatprep.subr.bf16.mxu0 0
        %9586 = vmatpush2.bf16.msra.mxu0 %v8999
        %9587 = vmatprep.subr.bf16.mxu0 0
        %9588 = vmatpush2.bf16.msra.mxu0 %v8998
        %9589 = vmatprep.subr.bf16.mxu0 0
        %9590 = vmatpush2.bf16.msra.mxu0 %v8997
        %9591 = vmatprep.subr.bf16.mxu0 0
        %9592 = vmatpush2.bf16.msra.mxu0 %v8996
        %9593 = vmatprep.subr.bf16.mxu0 0
        %9594 = vmatpush2.bf16.msra.mxu0 %v8995
        %9595 = vmatprep.subr.bf16.mxu0 0
        %9596 = vmatpush2.bf16.msra.mxu0 %v8994
        %9597 = vmatprep.mubr.bf16.mxu0 %v8369
        %9598 = vmatmul.mubr.bf16.gmra.mxu0 %v8368
        %v9599 = vpop.f32.mrf.mxu0
        %v9600 = vadd.f32 %v9439, %v9599
        %v9601 = vpop.f32.mrf.mxu0
        %v9602 = vpop.f32.mrf.mxu0
        %v9603 = vadd.f32 %v9442, %v9602
        %v9604 = vpop.f32.mrf.mxu0
        %9605 = vmatprep.mubr.bf16.mxu0 %v8378
        %9606 = vmatmul.mubr.bf16.gmra.mxu0 %v8377
        %v9607 = vpop.f32.mrf.mxu0
        %v9608 = vadd.f32 %v9447, %v9607
        %v9609 = vpop.f32.mrf.mxu0
        %v9610 = vpop.f32.mrf.mxu0
        %v9611 = vadd.f32 %v9450, %v9610
        %v9612 = vpop.f32.mrf.mxu0
        %9613 = vmatprep.mubr.bf16.mxu0 %v8387
        %9614 = vmatmul.mubr.bf16.gmra.mxu0 %v8386
        %v9615 = vpop.f32.mrf.mxu0
        %v9616 = vadd.f32 %v9455, %v9615
        %v9617 = vpop.f32.mrf.mxu0
        %v9618 = vpop.f32.mrf.mxu0
        %v9619 = vadd.f32 %v9458, %v9618
        %v9620 = vpop.f32.mrf.mxu0
        %9621 = vmatprep.mubr.bf16.mxu0 %v8396
        %9622 = vmatmul.mubr.bf16.gmra.mxu0 %v8395
        %v9623 = vpop.f32.mrf.mxu0
        %v9624 = vadd.f32 %v9463, %v9623
        %v9625 = vpop.f32.mrf.mxu0
        %v9626 = vpop.f32.mrf.mxu0
        %v9627 = vadd.f32 %v9466, %v9626
        %v9628 = vpop.f32.mrf.mxu0
        %9629 = vmatprep.mubr.bf16.mxu0 %v8405
        %9630 = vmatmul.mubr.bf16.gmra.mxu0 %v8404
        %v9631 = vpop.f32.mrf.mxu0
        %v9632 = vadd.f32 %v9471, %v9631
        %v9633 = vpop.f32.mrf.mxu0
        %v9634 = vpop.f32.mrf.mxu0
        %v9635 = vadd.f32 %v9474, %v9634
        %v9636 = vpop.f32.mrf.mxu0
        %9637 = vmatprep.mubr.bf16.mxu0 %v8414
        %9638 = vmatmul.mubr.bf16.gmra.mxu0 %v8413
        %v9639 = vpop.f32.mrf.mxu0
        %v9640 = vadd.f32 %v9479, %v9639
        %v9641 = vpop.f32.mrf.mxu0
        %v9642 = vpop.f32.mrf.mxu0
        %v9643 = vadd.f32 %v9482, %v9642
        %v9644 = vpop.f32.mrf.mxu0
        %9645 = vmatprep.mubr.bf16.mxu0 %v8423
        %9646 = vmatmul.mubr.bf16.gmra.mxu0 %v8422
        %v9647 = vpop.f32.mrf.mxu0
        %v9648 = vadd.f32 %v9487, %v9647
        %v9649 = vpop.f32.mrf.mxu0
        %v9650 = vpop.f32.mrf.mxu0
        %v9651 = vadd.f32 %v9490, %v9650
        %v9652 = vpop.f32.mrf.mxu0
        %9653 = vmatprep.mubr.bf16.mxu0 %v8432
        %9654 = vmatmul.mubr.bf16.gmra.mxu0 %v8431
        %v9655 = vpop.f32.mrf.mxu0
        %v9656 = vadd.f32 %v9495, %v9655
        %v9657 = vpop.f32.mrf.mxu0
        %v9658 = vpop.f32.mrf.mxu0
        %v9659 = vadd.f32 %v9498, %v9658
        %v9660 = vpop.f32.mrf.mxu0
        %9661 = vmatprep.mubr.bf16.mxu0 %v8441
        %9662 = vmatmul.mubr.bf16.gmra.mxu0 %v8440
        %v9663 = vpop.f32.mrf.mxu0
        %v9664 = vadd.f32 %v9503, %v9663
        %v9665 = vpop.f32.mrf.mxu0
        %v9666 = vpop.f32.mrf.mxu0
        %v9667 = vadd.f32 %v9506, %v9666
        %v9668 = vpop.f32.mrf.mxu0
        %9669 = vmatprep.mubr.bf16.mxu0 %v8450
        %9670 = vmatmul.mubr.bf16.gmra.mxu0 %v8449
        %v9671 = vpop.f32.mrf.mxu0
        %v9672 = vadd.f32 %v9511, %v9671
        %v9673 = vpop.f32.mrf.mxu0
        %v9674 = vpop.f32.mrf.mxu0
        %v9675 = vadd.f32 %v9514, %v9674
        %v9676 = vpop.f32.mrf.mxu0
        %9677 = vmatprep.mubr.bf16.mxu0 %v8459
        %9678 = vmatmul.mubr.bf16.gmra.mxu0 %v8458
        %v9679 = vpop.f32.mrf.mxu0
        %v9680 = vadd.f32 %v9519, %v9679
        %v9681 = vpop.f32.mrf.mxu0
        %v9682 = vpop.f32.mrf.mxu0
        %v9683 = vadd.f32 %v9522, %v9682
        %v9684 = vpop.f32.mrf.mxu0
        %9685 = vmatprep.mubr.bf16.mxu0 %v8468
        %9686 = vmatmul.mubr.bf16.gmra.mxu0 %v8467
        %v9687 = vpop.f32.mrf.mxu0
        %v9688 = vadd.f32 %v9527, %v9687
        %v9689 = vpop.f32.mrf.mxu0
        %v9690 = vpop.f32.mrf.mxu0
        %v9691 = vadd.f32 %v9530, %v9690
        %v9692 = vpop.f32.mrf.mxu0
        %9693 = vmatprep.mubr.bf16.mxu0 %v8477
        %9694 = vmatmul.mubr.bf16.gmra.mxu0 %v8476
        %v9695 = vpop.f32.mrf.mxu0
        %v9696 = vadd.f32 %v9535, %v9695
        %v9697 = vpop.f32.mrf.mxu0
        %v9698 = vpop.f32.mrf.mxu0
        %v9699 = vadd.f32 %v9538, %v9698
        %v9700 = vpop.f32.mrf.mxu0
        %9701 = vmatprep.mubr.bf16.mxu0 %v8486
        %9702 = vmatmul.mubr.bf16.gmra.mxu0 %v8485
        %v9703 = vpop.f32.mrf.mxu0
        %v9704 = vadd.f32 %v9543, %v9703
        %v9705 = vpop.f32.mrf.mxu0
        %v9706 = vpop.f32.mrf.mxu0
        %v9707 = vadd.f32 %v9546, %v9706
        %v9708 = vpop.f32.mrf.mxu0
        %9709 = vmatprep.mubr.bf16.mxu0 %v8495
        %9710 = vmatmul.mubr.bf16.gmra.mxu0 %v8494
        %v9711 = vpop.f32.mrf.mxu0
        %v9712 = vadd.f32 %v9551, %v9711
        %v9713 = vpop.f32.mrf.mxu0
        %v9714 = vpop.f32.mrf.mxu0
        %v9715 = vadd.f32 %v9554, %v9714
        %v9716 = vpop.f32.mrf.mxu0
        %9717 = vmatprep.mubr.bf16.mxu0 %v8504
        %9718 = vmatmul.mubr.bf16.gmra.mxu0 %v8503
        %v9719 = vpop.f32.mrf.mxu0
        %v9720 = vadd.f32 %v9559, %v9719
        %v9721 = vpop.f32.mrf.mxu0
        %v9722 = vpop.f32.mrf.mxu0
        %v9723 = vadd.f32 %v9562, %v9722
        %v9724 = vpop.f32.mrf.mxu0
        %9725 = vdwg.mxu0
        %9726 = vmatprep.subr.bf16.mxu0 0
        %9727 = vmatpush1.bf16.msra.mxu0 %v9009
        %9728 = vmatprep.subr.bf16.mxu0 0
        %9729 = vmatpush1.bf16.msra.mxu0 %v9008
        %9730 = vmatprep.subr.bf16.mxu0 0
        %9731 = vmatpush1.bf16.msra.mxu0 %v9007
        %9732 = vmatprep.subr.bf16.mxu0 0
        %9733 = vmatpush1.bf16.msra.mxu0 %v9006
        %9734 = vmatprep.subr.bf16.mxu0 0
        %9735 = vmatpush1.bf16.msra.mxu0 %v9005
        %9736 = vmatprep.subr.bf16.mxu0 0
        %9737 = vmatpush1.bf16.msra.mxu0 %v9004
        %9738 = vmatprep.subr.bf16.mxu0 0
        %9739 = vmatpush1.bf16.msra.mxu0 %v9003
        %9740 = vmatprep.subr.bf16.mxu0 0
        %9741 = vmatpush1.bf16.msra.mxu0 %v9002
        %9742 = vmatprep.subr.bf16.mxu0 0
        %9743 = vmatpush2.bf16.msra.mxu0 0
        %9744 = vmatprep.subr.bf16.mxu0 0
        %9745 = vmatpush2.bf16.msra.mxu0 0
        %9746 = vmatprep.subr.bf16.mxu0 0
        %9747 = vmatpush2.bf16.msra.mxu0 0
        %9748 = vmatprep.subr.bf16.mxu0 0
        %9749 = vmatpush2.bf16.msra.mxu0 0
        %9750 = vmatprep.subr.bf16.mxu0 0
        %9751 = vmatpush2.bf16.msra.mxu0 0
        %9752 = vmatprep.subr.bf16.mxu0 0
        %9753 = vmatpush2.bf16.msra.mxu0 0
        %9754 = vmatprep.subr.bf16.mxu0 0
        %9755 = vmatpush2.bf16.msra.mxu0 0
        %9756 = vmatprep.subr.bf16.mxu0 0
        %9757 = vmatpush2.bf16.msra.mxu0 0
        %9758 = vmatprep.mubr.bf16.mxu0 0
        %9759 = vmatmul.mubr.bf16.gmra.mxu0 %v8370
        %v9760 = vpop.f32.mrf.mxu0
        %v9761 = vadd.f32 %v9600, %v9760
        %v9762 = vpop.f32.mrf.mxu0
        %v9763 = vpop.f32.mrf.mxu0
        %v9764 = vadd.f32 %v9603, %v9763
        %v9765 = vpop.f32.mrf.mxu0
        %9766 = vmatprep.mubr.bf16.mxu0 0
        %9767 = vmatmul.mubr.bf16.gmra.mxu0 %v8379
        %v9768 = vpop.f32.mrf.mxu0
        %v9769 = vadd.f32 %v9608, %v9768
        %v9770 = vpop.f32.mrf.mxu0
        %v9771 = vpop.f32.mrf.mxu0
        %v9772 = vadd.f32 %v9611, %v9771
        %v9773 = vpop.f32.mrf.mxu0
        %9774 = vmatprep.mubr.bf16.mxu0 0
        %9775 = vmatmul.mubr.bf16.gmra.mxu0 %v8388
        %v9776 = vpop.f32.mrf.mxu0
        %v9777 = vadd.f32 %v9616, %v9776
        %v9778 = vpop.f32.mrf.mxu0
        %v9779 = vpop.f32.mrf.mxu0
        %v9780 = vadd.f32 %v9619, %v9779
        %v9781 = vpop.f32.mrf.mxu0
        %9782 = vmatprep.mubr.bf16.mxu0 0
        %9783 = vmatmul.mubr.bf16.gmra.mxu0 %v8397
        %v9784 = vpop.f32.mrf.mxu0
        %v9785 = vadd.f32 %v9624, %v9784
        %v9786 = vpop.f32.mrf.mxu0
        %v9787 = vpop.f32.mrf.mxu0
        %v9788 = vadd.f32 %v9627, %v9787
        %v9789 = vpop.f32.mrf.mxu0
        %9790 = vmatprep.mubr.bf16.mxu0 0
        %9791 = vmatmul.mubr.bf16.gmra.mxu0 %v8406
        %v9792 = vpop.f32.mrf.mxu0
        %v9793 = vadd.f32 %v9632, %v9792
        %v9794 = vpop.f32.mrf.mxu0
        %v9795 = vpop.f32.mrf.mxu0
        %v9796 = vadd.f32 %v9635, %v9795
        %v9797 = vpop.f32.mrf.mxu0
        %9798 = vmatprep.mubr.bf16.mxu0 0
        %9799 = vmatmul.mubr.bf16.gmra.mxu0 %v8415
        %v9800 = vpop.f32.mrf.mxu0
        %v9801 = vadd.f32 %v9640, %v9800
        %v9802 = vpop.f32.mrf.mxu0
        %v9803 = vpop.f32.mrf.mxu0
        %v9804 = vadd.f32 %v9643, %v9803
        %v9805 = vpop.f32.mrf.mxu0
        %9806 = vmatprep.mubr.bf16.mxu0 0
        %9807 = vmatmul.mubr.bf16.gmra.mxu0 %v8424
        %v9808 = vpop.f32.mrf.mxu0
        %v9809 = vadd.f32 %v9648, %v9808
        %v9810 = vpop.f32.mrf.mxu0
        %v9811 = vpop.f32.mrf.mxu0
        %v9812 = vadd.f32 %v9651, %v9811
        %v9813 = vpop.f32.mrf.mxu0
        %9814 = vmatprep.mubr.bf16.mxu0 0
        %9815 = vmatmul.mubr.bf16.gmra.mxu0 %v8433
        %v9816 = vpop.f32.mrf.mxu0
        %v9817 = vadd.f32 %v9656, %v9816
        %v9818 = vpop.f32.mrf.mxu0
        %v9819 = vpop.f32.mrf.mxu0
        %v9820 = vadd.f32 %v9659, %v9819
        %v9821 = vpop.f32.mrf.mxu0
        %9822 = vmatprep.mubr.bf16.mxu0 0
        %9823 = vmatmul.mubr.bf16.gmra.mxu0 %v8442
        %v9824 = vpop.f32.mrf.mxu0
        %v9825 = vadd.f32 %v9664, %v9824
        %v9826 = vpop.f32.mrf.mxu0
        %v9827 = vpop.f32.mrf.mxu0
        %v9828 = vadd.f32 %v9667, %v9827
        %v9829 = vpop.f32.mrf.mxu0
        %9830 = vmatprep.mubr.bf16.mxu0 0
        %9831 = vmatmul.mubr.bf16.gmra.mxu0 %v8451
        %v9832 = vpop.f32.mrf.mxu0
        %v9833 = vadd.f32 %v9672, %v9832
        %v9834 = vpop.f32.mrf.mxu0
        %v9835 = vpop.f32.mrf.mxu0
        %v9836 = vadd.f32 %v9675, %v9835
        %v9837 = vpop.f32.mrf.mxu0
        %9838 = vmatprep.mubr.bf16.mxu0 0
        %9839 = vmatmul.mubr.bf16.gmra.mxu0 %v8460
        %v9840 = vpop.f32.mrf.mxu0
        %v9841 = vadd.f32 %v9680, %v9840
        %v9842 = vpop.f32.mrf.mxu0
        %v9843 = vpop.f32.mrf.mxu0
        %v9844 = vadd.f32 %v9683, %v9843
        %v9845 = vpop.f32.mrf.mxu0
        %9846 = vmatprep.mubr.bf16.mxu0 0
        %9847 = vmatmul.mubr.bf16.gmra.mxu0 %v8469
        %v9848 = vpop.f32.mrf.mxu0
        %v9849 = vadd.f32 %v9688, %v9848
        %v9850 = vpop.f32.mrf.mxu0
        %v9851 = vpop.f32.mrf.mxu0
        %v9852 = vadd.f32 %v9691, %v9851
        %v9853 = vpop.f32.mrf.mxu0
        %9854 = vmatprep.mubr.bf16.mxu0 0
        %9855 = vmatmul.mubr.bf16.gmra.mxu0 %v8478
        %v9856 = vpop.f32.mrf.mxu0
        %v9857 = vadd.f32 %v9696, %v9856
        %v9858 = vpop.f32.mrf.mxu0
        %v9859 = vpop.f32.mrf.mxu0
        %v9860 = vadd.f32 %v9699, %v9859
        %v9861 = vpop.f32.mrf.mxu0
        %9862 = vmatprep.mubr.bf16.mxu0 0
        %9863 = vmatmul.mubr.bf16.gmra.mxu0 %v8487
        %v9864 = vpop.f32.mrf.mxu0
        %v9865 = vadd.f32 %v9704, %v9864
        %v9866 = vpop.f32.mrf.mxu0
        %v9867 = vpop.f32.mrf.mxu0
        %v9868 = vadd.f32 %v9707, %v9867
        %v9869 = vpop.f32.mrf.mxu0
        %9870 = vmatprep.mubr.bf16.mxu0 0
        %9871 = vmatmul.mubr.bf16.gmra.mxu0 %v8496
        %v9872 = vpop.f32.mrf.mxu0
        %v9873 = vadd.f32 %v9712, %v9872
        %v9874 = vpop.f32.mrf.mxu0
        %v9875 = vpop.f32.mrf.mxu0
        %v9876 = vadd.f32 %v9715, %v9875
        %v9877 = vpop.f32.mrf.mxu0
        %9878 = vmatprep.mubr.bf16.mxu0 0
        %9879 = vmatmul.mubr.bf16.gmra.mxu0 %v8505
        %v9880 = vpop.f32.mrf.mxu0
        %v9881 = vadd.f32 %v9720, %v9880
        %v9882 = vpop.f32.mrf.mxu0
        %v9883 = vpop.f32.mrf.mxu0
        %v9884 = vadd.f32 %v9723, %v9883
        %v9885 = vpop.f32.mrf.mxu0
        %9886 = vdwg.mxu0
        %v9887 = vadd.f32 %v9761, %v9764
        %v9888 = vadd.f32 %v9887, %v9769
        %v9889 = vadd.f32 %v9888, %v9772
        %v9890 = vadd.f32 %v9889, %v9777
        %v9891 = vadd.f32 %v9890, %v9780
        %v9892 = vadd.f32 %v9891, %v9785
        %v9893 = vadd.f32 %v9892, %v9788
        %v9894 = vadd.f32 %v9893, %v9793
        %v9895 = vadd.f32 %v9894, %v9796
        %v9896 = vadd.f32 %v9895, %v9801
        %v9897 = vadd.f32 %v9896, %v9804
        %v9898 = vadd.f32 %v9897, %v9809
        %v9899 = vadd.f32 %v9898, %v9812
        %v9900 = vadd.f32 %v9899, %v9817
        %v9901 = vadd.f32 %v9900, %v9820
        %v9902 = vadd.f32 %v9901, %v9825
        %v9903 = vadd.f32 %v9902, %v9828
        %v9904 = vadd.f32 %v9903, %v9833
        %v9905 = vadd.f32 %v9904, %v9836
        %v9906 = vadd.f32 %v9905, %v9841
        %v9907 = vadd.f32 %v9906, %v9844
        %v9908 = vadd.f32 %v9907, %v9849
        %v9909 = vadd.f32 %v9908, %v9852
        %v9910 = vadd.f32 %v9909, %v9857
        %v9911 = vadd.f32 %v9910, %v9860
        %v9912 = vadd.f32 %v9911, %v9865
        %v9913 = vadd.f32 %v9912, %v9868
        %v9914 = vadd.f32 %v9913, %v9873
        %v9915 = vadd.f32 %v9914, %v9876
        %v9916 = vadd.f32 %v9915, %v9881
        %v9917 = vadd.f32 %v9916, %v9884
        %v9918 = vrot.slane %v9917, 4
        %v9919 = vadd.f32 %v9917, %v9918
        %v9920 = vrot.slane %v9919, 2
        %v9921 = vadd.f32 %v9919, %v9920
        %v9922 = vrot.slane %v9921, 1
        %v9923 = vadd.f32 %v9921, %v9922
        %v9924 = vmul.f32 %v9761, %v9761
        %v9925 = vmul.f32 %v9764, %v9764
        %v9926 = vmul.f32 %v9769, %v9769
        %v9927 = vmul.f32 %v9772, %v9772
        %v9928 = vmul.f32 %v9777, %v9777
        %v9929 = vmul.f32 %v9780, %v9780
        %v9930 = vmul.f32 %v9785, %v9785
        %v9931 = vmul.f32 %v9788, %v9788
        %v9932 = vmul.f32 %v9793, %v9793
        %v9933 = vmul.f32 %v9796, %v9796
        %v9934 = vmul.f32 %v9801, %v9801
        %v9935 = vmul.f32 %v9804, %v9804
        %v9936 = vmul.f32 %v9809, %v9809
        %v9937 = vmul.f32 %v9812, %v9812
        %v9938 = vmul.f32 %v9817, %v9817
        %v9939 = vmul.f32 %v9820, %v9820
        %v9940 = vmul.f32 %v9825, %v9825
        %v9941 = vmul.f32 %v9828, %v9828
        %v9942 = vmul.f32 %v9833, %v9833
        %v9943 = vmul.f32 %v9836, %v9836
        %v9944 = vmul.f32 %v9841, %v9841
        %v9945 = vmul.f32 %v9844, %v9844
        %v9946 = vmul.f32 %v9849, %v9849
        %v9947 = vmul.f32 %v9852, %v9852
        %v9948 = vmul.f32 %v9857, %v9857
        %v9949 = vmul.f32 %v9860, %v9860
        %v9950 = vmul.f32 %v9865, %v9865
        %v9951 = vmul.f32 %v9868, %v9868
        %v9952 = vmul.f32 %v9873, %v9873
        %v9953 = vmul.f32 %v9876, %v9876
        %v9954 = vmul.f32 %v9881, %v9881
        %v9955 = vmul.f32 %v9884, %v9884
        %v9956 = vadd.f32 %v9924, %v9925
        %v9957 = vadd.f32 %v9956, %v9926
        %v9958 = vadd.f32 %v9957, %v9927
        %v9959 = vadd.f32 %v9958, %v9928
        %v9960 = vadd.f32 %v9959, %v9929
        %v9961 = vadd.f32 %v9960, %v9930
        %v9962 = vadd.f32 %v9961, %v9931
        %v9963 = vadd.f32 %v9962, %v9932
        %v9964 = vadd.f32 %v9963, %v9933
        %v9965 = vadd.f32 %v9964, %v9934
        %v9966 = vadd.f32 %v9965, %v9935
        %v9967 = vadd.f32 %v9966, %v9936
        %v9968 = vadd.f32 %v9967, %v9937
        %v9969 = vadd.f32 %v9968, %v9938
        %v9970 = vadd.f32 %v9969, %v9939
        %v9971 = vadd.f32 %v9970, %v9940
        %v9972 = vadd.f32 %v9971, %v9941
        %v9973 = vadd.f32 %v9972, %v9942
        %v9974 = vadd.f32 %v9973, %v9943
        %v9975 = vadd.f32 %v9974, %v9944
        %v9976 = vadd.f32 %v9975, %v9945
        %v9977 = vadd.f32 %v9976, %v9946
        %v9978 = vadd.f32 %v9977, %v9947
        %v9979 = vadd.f32 %v9978, %v9948
        %v9980 = vadd.f32 %v9979, %v9949
        %v9981 = vadd.f32 %v9980, %v9950
        %v9982 = vadd.f32 %v9981, %v9951
        %v9983 = vadd.f32 %v9982, %v9952
        %v9984 = vadd.f32 %v9983, %v9953
        %v9985 = vadd.f32 %v9984, %v9954
        %v9986 = vadd.f32 %v9985, %v9955
        %v9987 = vrot.slane %v9986, 4
        %v9988 = vadd.f32 %v9986, %v9987
        %v9989 = vrot.slane %v9988, 2
        %v9990 = vadd.f32 %v9988, %v9989
        %v9991 = vrot.slane %v9990, 1
        %v9992 = vadd.f32 %v9990, %v9991
        %v9993 = vmul.f32 %v9923, 0.00390625
        %v9994 = vmul.f32 %v9992, 0.00390625
        %v9995 = vmul.f32 %v9993, %v9993
        %v9996 = vsub.f32 %v9994, %v9995
        %v9997 = vld [vmem:[%s5] sm:$0x1]
        %v9998 = vadd.f32 %v9996, 1e-05
        %v9999 = vrsqrt.pop %v9998
        %v10000 = vmul.f32 %v9997, %v9999
        %v10001 = vld [vmem:[%s6] sm:$0x1]
        %v10002 = vmul.f32 %v9993, %v10000
        %v10003 = vsub.f32 %v10001, %v10002
        %v10005 = vlaneseq
        %v10006 = vshrl.u32 %v10005, 7
        %v10007 = vsub.s32 0, %v10006
        %v10008 = vrot.slane %v10000, %v10007
        %v10010 = vmul.f32 %v9761, %v10008
        %v10011 = vmul.f32 %v9764, %v10008
        %v10012 = vmul.f32 %v9769, %v10008
        %v10013 = vmul.f32 %v9772, %v10008
        %v10014 = vmul.f32 %v9777, %v10008
        %v10015 = vmul.f32 %v9780, %v10008
        %v10016 = vmul.f32 %v9785, %v10008
        %v10017 = vmul.f32 %v9788, %v10008
        %v10018 = vmul.f32 %v9793, %v10008
        %v10019 = vmul.f32 %v9796, %v10008
        %v10020 = vmul.f32 %v9801, %v10008
        %v10021 = vmul.f32 %v9804, %v10008
        %v10022 = vmul.f32 %v9809, %v10008
        %v10023 = vmul.f32 %v9812, %v10008
        %v10024 = vmul.f32 %v9817, %v10008
        %v10025 = vmul.f32 %v9820, %v10008
        %v10026 = vmul.f32 %v9825, %v10008
        %v10027 = vmul.f32 %v9828, %v10008
        %v10028 = vmul.f32 %v9833, %v10008
        %v10029 = vmul.f32 %v9836, %v10008
        %v10030 = vmul.f32 %v9841, %v10008
        %v10031 = vmul.f32 %v9844, %v10008
        %v10032 = vmul.f32 %v9849, %v10008
        %v10033 = vmul.f32 %v9852, %v10008
        %v10034 = vmul.f32 %v9857, %v10008
        %v10035 = vmul.f32 %v9860, %v10008
        %v10036 = vmul.f32 %v9865, %v10008
        %v10037 = vmul.f32 %v9868, %v10008
        %v10038 = vmul.f32 %v9873, %v10008
        %v10039 = vmul.f32 %v9876, %v10008
        %v10040 = vmul.f32 %v9881, %v10008
        %v10041 = vmul.f32 %v9884, %v10008
        %v10043 = vlaneseq
        %v10044 = vshrl.u32 %v10043, 7
        %v10045 = vsub.s32 0, %v10044
        %v10046 = vrot.slane %v10003, %v10045
        %v10048 = vadd.f32 %v10010, %v10046
        %v10049 = vadd.f32 %v10011, %v10046
        %v10050 = vadd.f32 %v10012, %v10046
        %v10051 = vadd.f32 %v10013, %v10046
        %v10052 = vadd.f32 %v10014, %v10046
        %v10053 = vadd.f32 %v10015, %v10046
        %v10054 = vadd.f32 %v10016, %v10046
        %v10055 = vadd.f32 %v10017, %v10046
        %v10056 = vadd.f32 %v10018, %v10046
        %v10057 = vadd.f32 %v10019, %v10046
        %v10058 = vadd.f32 %v10020, %v10046
        %v10059 = vadd.f32 %v10021, %v10046
        %v10060 = vadd.f32 %v10022, %v10046
        %v10061 = vadd.f32 %v10023, %v10046
        %v10062 = vadd.f32 %v10024, %v10046
        %v10063 = vadd.f32 %v10025, %v10046
        %v10064 = vadd.f32 %v10026, %v10046
        %v10065 = vadd.f32 %v10027, %v10046
        %v10066 = vadd.f32 %v10028, %v10046
        %v10067 = vadd.f32 %v10029, %v10046
        %v10068 = vadd.f32 %v10030, %v10046
        %v10069 = vadd.f32 %v10031, %v10046
        %v10070 = vadd.f32 %v10032, %v10046
        %v10071 = vadd.f32 %v10033, %v10046
        %v10072 = vadd.f32 %v10034, %v10046
        %v10073 = vadd.f32 %v10035, %v10046
        %v10074 = vadd.f32 %v10036, %v10046
        %v10075 = vadd.f32 %v10037, %v10046
        %v10076 = vadd.f32 %v10038, %v10046
        %v10077 = vadd.f32 %v10039, %v10046
        %v10078 = vadd.f32 %v10040, %v10046
        %v10079 = vadd.f32 %v10041, %v10046
        %v10080 = vld [vmem:[%s860 + $0x1] sm:$0xff]
        %v10081 = vld [vmem:[%s860 + $0x9] sm:$0xff]
        %v10082 = vld [vmem:[%s860 + $0x19] sm:$0xff]
        %v10083 = vld [vmem:[%s860 + $0x21] sm:$0xff]
        %v10084 = vld [vmem:[%s860 + $0x31] sm:$0xff]
        %v10085 = vld [vmem:[%s860 + $0x39] sm:$0xff]
        %v10086 = vld [vmem:[%s860 + $0x49] sm:$0xff]
        %v10087 = vld [vmem:[%s860 + $0x51] sm:$0xff]
        %v10088 = vld [vmem:[%s860 + $0x61] sm:$0xff]
        %v10089 = vld [vmem:[%s860 + $0x69] sm:$0xff]
        %v10090 = vld [vmem:[%s860 + $0x79] sm:$0xff]
        %v10091 = vld [vmem:[%s860 + $0x81] sm:$0xff]
        %v10092 = vld [vmem:[%s860 + $0x91] sm:$0xff]
        %v10093 = vld [vmem:[%s860 + $0x99] sm:$0xff]
        %v10094 = vld [vmem:[%s860 + $0xa9] sm:$0xff]
        %v10095 = vld [vmem:[%s860 + $0xb1] sm:$0xff]
        %v10096 = vld [vmem:[%s860 + $0xc1] sm:$0xff]
        %v10097 = vld [vmem:[%s860 + $0xc9] sm:$0xff]
        %v10098 = vld [vmem:[%s860 + $0xd9] sm:$0xff]
        %v10099 = vld [vmem:[%s860 + $0xe1] sm:$0xff]
        %v10100 = vld [vmem:[%s860 + $0xf1] sm:$0xff]
        %v10101 = vld [vmem:[%s860 + $0xf9] sm:$0xff]
        %v10102 = vld [vmem:[%s860 + $0x109] sm:$0xff]
        %v10103 = vld [vmem:[%s860 + $0x111] sm:$0xff]
        %v10104 = vld [vmem:[%s860 + $0x121] sm:$0xff]
        %v10105 = vld [vmem:[%s860 + $0x129] sm:$0xff]
        %v10106 = vld [vmem:[%s860 + $0x139] sm:$0xff]
        %v10107 = vld [vmem:[%s860 + $0x141] sm:$0xff]
        %v10108 = vld [vmem:[%s860 + $0x151] sm:$0xff]
        %v10109 = vld [vmem:[%s860 + $0x159] sm:$0xff]
        %v10110 = vld [vmem:[%s860 + $0x169] sm:$0xff]
        %v10111 = vld [vmem:[%s860 + $0x171] sm:$0xff]
        %v10112 = vadd.f32 %v10080, %v10048
        %v10113 = vadd.f32 %v10081, %v10049
        %v10114 = vadd.f32 %v10082, %v10050
        %v10115 = vadd.f32 %v10083, %v10051
        %v10116 = vadd.f32 %v10084, %v10052
        %v10117 = vadd.f32 %v10085, %v10053
        %v10118 = vadd.f32 %v10086, %v10054
        %v10119 = vadd.f32 %v10087, %v10055
        %v10120 = vadd.f32 %v10088, %v10056
        %v10121 = vadd.f32 %v10089, %v10057
        %v10122 = vadd.f32 %v10090, %v10058
        %v10123 = vadd.f32 %v10091, %v10059
        %v10124 = vadd.f32 %v10092, %v10060
        %v10125 = vadd.f32 %v10093, %v10061
        %v10126 = vadd.f32 %v10094, %v10062
        %v10127 = vadd.f32 %v10095, %v10063
        %v10128 = vadd.f32 %v10096, %v10064
        %v10129 = vadd.f32 %v10097, %v10065
        %v10130 = vadd.f32 %v10098, %v10066
        %v10131 = vadd.f32 %v10099, %v10067
        %v10132 = vadd.f32 %v10100, %v10068
        %v10133 = vadd.f32 %v10101, %v10069
        %v10134 = vadd.f32 %v10102, %v10070
        %v10135 = vadd.f32 %v10103, %v10071
        %v10136 = vadd.f32 %v10104, %v10072
        %v10137 = vadd.f32 %v10105, %v10073
        %v10138 = vadd.f32 %v10106, %v10074
        %v10139 = vadd.f32 %v10107, %v10075
        %v10140 = vadd.f32 %v10108, %v10076
        %v10141 = vadd.f32 %v10109, %v10077
        %v10142 = vadd.f32 %v10110, %v10078
        %v10143 = vadd.f32 %v10111, %v10079
        %10144 = vst [vmem:[%s274] sm:$0xff] %v10112
        %10145 = vst [vmem:[%s274 + $0x8] sm:$0xff] %v10113
        %10146 = vst [vmem:[%s274 + $0x10] sm:$0xff] %v10114
        %10147 = vst [vmem:[%s274 + $0x18] sm:$0xff] %v10115
        %10148 = vst [vmem:[%s274 + $0x20] sm:$0xff] %v10116
        %10149 = vst [vmem:[%s274 + $0x28] sm:$0xff] %v10117
        %10150 = vst [vmem:[%s274 + $0x30] sm:$0xff] %v10118
        %10151 = vst [vmem:[%s274 + $0x38] sm:$0xff] %v10119
        %10152 = vst [vmem:[%s274 + $0x40] sm:$0xff] %v10120
        %10153 = vst [vmem:[%s274 + $0x48] sm:$0xff] %v10121
        %10154 = vst [vmem:[%s274 + $0x50] sm:$0xff] %v10122
        %10155 = vst [vmem:[%s274 + $0x58] sm:$0xff] %v10123
        %10156 = vst [vmem:[%s274 + $0x60] sm:$0xff] %v10124
        %10157 = vst [vmem:[%s274 + $0x68] sm:$0xff] %v10125
        %10158 = vst [vmem:[%s274 + $0x70] sm:$0xff] %v10126
        %10159 = vst [vmem:[%s274 + $0x78] sm:$0xff] %v10127
        %10160 = vst [vmem:[%s274 + $0x80] sm:$0xff] %v10128
        %10161 = vst [vmem:[%s274 + $0x88] sm:$0xff] %v10129
        %10162 = vst [vmem:[%s274 + $0x90] sm:$0xff] %v10130
        %10163 = vst [vmem:[%s274 + $0x98] sm:$0xff] %v10131
        %10164 = vst [vmem:[%s274 + $0xa0] sm:$0xff] %v10132
        %10165 = vst [vmem:[%s274 + $0xa8] sm:$0xff] %v10133
        %10166 = vst [vmem:[%s274 + $0xb0] sm:$0xff] %v10134
        %10167 = vst [vmem:[%s274 + $0xb8] sm:$0xff] %v10135
        %10168 = vst [vmem:[%s274 + $0xc0] sm:$0xff] %v10136
        %10169 = vst [vmem:[%s274 + $0xc8] sm:$0xff] %v10137
        %10170 = vst [vmem:[%s274 + $0xd0] sm:$0xff] %v10138
        %10171 = vst [vmem:[%s274 + $0xd8] sm:$0xff] %v10139
        %10172 = vst [vmem:[%s274 + $0xe0] sm:$0xff] %v10140
        %10173 = vst [vmem:[%s274 + $0xe8] sm:$0xff] %v10141
        %10174 = vst [vmem:[%s274 + $0xf0] sm:$0xff] %v10142
        %10175 = vst [vmem:[%s274 + $0xf8] sm:$0xff] %v10143
        %s10176 = sand.u32 %s181, 1
        %s10177 = scalar_lea.sflag [#allocation5], %s10176
        %s10178 = sand.u32 %s181, 1
        %s10179 = smul.addr %s10178, 256
        %s10180 = scalar_lea.vmem [#allocation4], %s10179
        // Predicated region
        $region49: #{residual_block_forward.1} parent=47 // pred_check
          %p10181 = pneg %p191
        $region50: #{residual_block_forward.1} parent=47 // pred_check_branch
          %10183 = sbr.rel (%p10181) target = $region52
        $region51: #{residual_block_forward.1} parent=47 // pred_region
          %s10184 = smul.u32 32, %s21
          %s10186 = ssub.s32 4096, 4096
          %10187 = vsyncadd %s10177, %s10186
          %s10188 = smul.addr %s10184, 128
          %s10189 = scalar_lea.hbm %s7, %s10188
          %s10190 = sshll.u32 %s10180, 4
          %s10191 = int_to_ptr.vmem [resolvable:$true] %s10190
          %10196 = dma.vmem_to_hbm [thread:$0]  %s10191, 4096, %s10189, %s10177, 128, 128, 8
        $region52: #{residual_block_forward.1} parent=47 // pred_fallthru
          _
      $region48: #{residual_block_forward.1} parent=5 // pred_fallthru
        _
      %p10197 = scmp.le.s32.totalorder 2, %s16
      // Predicated region
      $region53: #{residual_block_forward.1} parent=5 // pred_check
        %p10198 = pneg %p10197
      $region54: #{residual_block_forward.1} parent=5 // pred_check_branch
        %10200 = sbr.rel (%p10198) target = $region56
      $region55: #{residual_block_forward.1} parent=5 // pred_region
        %s10201 = ssub.s32 %s16, 2
        // Predicated region
        $region57: #{residual_block_forward.1} parent=55 // pred_check
          %p10202 = pneg %p197
        $region58: #{residual_block_forward.1} parent=55 // pred_check_branch
          %10204 = sbr.rel (%p10202) target = $region60
        $region59: #{residual_block_forward.1} parent=55 // pred_region
          %s10205 = sand.u32 %s182, 1
          %s10206 = scalar_lea.sflag [#allocation5], %s10205
          %s10207 = sand.u32 %s182, 1
          %s10208 = smul.addr %s10207, 256
          %s10209 = scalar_lea.vmem [#allocation4], %s10208
          %10210 = dma.done %s10206, 4096
        $region60: #{residual_block_forward.1} parent=55 // pred_fallthru
          _
      $region56: #{residual_block_forward.1} parent=5 // pred_fallthru
        _
    $region6: #{residual_block_forward.1} parent=1 // loop_footer
      %s20 = sadd.s32 1, %s16
    $region7: #{residual_block_forward.1} parent=1 // loop_footer_branch
      %15 = sbr.rel target = $region3
    $region8: #{residual_block_forward.1} parent=1 // loop_exit
      _
    %10211 = vsyncpa [#allocation5], 1
    %s10212 = scalar_lea.sflag [#allocation5], 1
    %10213 = vsyncpa %s10212, 1

</llo_original>
